<compile_context>
chip_gen: v7x
topology: tpu7x:2x2x1
jax: 0.10.0
libtpu: 0.0.40
codegen_flags: <defaults>
</compile_context>

<pallas_src>
import functools

import numpy as np
import jax
import jax.numpy as jnp
from jax.experimental import pallas as pl
from jax.experimental.pallas import tpu as pltpu

# ----------------------------- configuration ------------------------------ #
N_FFT = 64
HOP = 32
WIN = 64
N_MELS = 16
MIN_AMP = 1e-10
SAMPLE_RATE = 16000.0
F_MIN = 60.0
F_MAX = 7600.0

CONV1_CH = CONV2_CH = CONV3_CH = CONV4_CH = 8
CONFORMER_SIZE = 64
FF_DIM = 128
NUM_HEADS = 4
CONV_KERNEL = 7          # depthwise conv kernel in the conformer conv module
NUM_LAYERS = 2
NUM_LABELS = 40          # +1 blank -> 41 outputs

LN_EPS = 1e-5
LOG10_INV = np.float32(1.0 / np.log(10.0))


def _recip(x):
    """Reciprocal on the EUP slot when available (free alongside VALU work)."""
    if hasattr(pl, "reciprocal"):
        return pl.reciprocal(x, approx=True)
    return 1.0 / x


# ------------------------------ Pallas kernels ----------------------------- #
def _frontend_kernel(frames_ref, win, dr, di, mel,
                     cw1, cb1, cw2, cb2, cw3, cb3, cw4, cb4,
                     e1m, o1m, e2m, o2m, lin_w, lin_b,
                     out_ref, pin, pact_a, pact_b, *, t0, t1, t2, min_amp):
    """Fused logmel + VGG4LayerActFrontendV1 for one batch element.

    3x3 convs are expressed as 3 time-tap matmuls with precomputed
    frequency-band matrices, keeping activations lane-dense ([T, F*C = 128]).
    Time max-pooling (k=2, s=2) uses 0/1 selection matmuls on the MXU (exact).
    Time 'same' padding is realized via zeroed VMEM scratch borders.
    """
    # --- LogMelFeatureExtractionV1: window -> DFT -> power -> mel -> log10 ---
    xw = frames_ref[0] * win[...]                                    # [t0, N_FFT]
    re = jnp.dot(xw, dr[...], preferred_element_type=jnp.float32)
    im = jnp.dot(xw, di[...], preferred_element_type=jnp.float32)
    power = re * re + im * im                                        # [t0, n_bins]
    melspec = jnp.dot(power, mel[...], preferred_element_type=jnp.float32)
    feats = jnp.log(jnp.maximum(melspec, min_amp)) * LOG10_INV       # [t0, N_MELS]

    def band_conv(pad_ref, tlen, cw_ref, cb_ref):
        acc = jnp.zeros((tlen, cw_ref.shape[-1]), jnp.float32) + cb_ref[...]
        for tap in range(3):
            acc = acc + jnp.dot(pad_ref[tap:tap + tlen, :].astype(jnp.bfloat16),
                                cw_ref[tap], preferred_element_type=jnp.float32)
        return acc

    # conv1 (Cin=1, no activation)
    pin[...] = jnp.zeros_like(pin)
    pin[1:1 + t0, :] = feats
    y = band_conv(pin, t0, cw1, cb1)                                 # [t0, 128]
    # conv2 + ReLU
    pact_a[...] = jnp.zeros_like(pact_a)
    pact_a[1:1 + t0, :] = y
    y = jnp.maximum(band_conv(pact_a, t0, cw2, cb2), 0.0)
    # max-pool over time (kernel 2, stride 2)
    y = jnp.maximum(jnp.dot(e1m[...], y, preferred_element_type=jnp.float32),
                    jnp.dot(o1m[...], y, preferred_element_type=jnp.float32))  # [t1, 128]
    # conv3 (no activation)
    pact_b[...] = jnp.zeros_like(pact_b)
    pact_b[1:1 + t1, :] = y
    y = band_conv(pact_b, t1, cw3, cb3)
    # conv4 + ReLU
    pact_a[...] = jnp.zeros_like(pact_a)
    pact_a[1:1 + t1, :] = y
    y = jnp.maximum(band_conv(pact_a, t1, cw4, cb4), 0.0)
    # max-pool over time (kernel 2, stride 2)
    y = jnp.maximum(jnp.dot(e2m[...], y, preferred_element_type=jnp.float32),
                    jnp.dot(o2m[...], y, preferred_element_type=jnp.float32))  # [t2, 128]
    # frontend linear: [t2, F*C=128] -> [t2, D]
    out_ref[0] = (jnp.dot(y.astype(jnp.bfloat16), lin_w[...],
                          preferred_element_type=jnp.float32) + lin_b[...])


def _encoder_kernel(
        x_ref, bias_ref,
        ff1_lng, ff1_lnb, ff1_w1, ff1_b1, ff1_w2, ff1_b2,
        mh_lng, mh_lnb, mh_wqkv, mh_bqkv, mh_wo, mh_bo,
        cv_lng, cv_lnb, cv_pw1, cv_pb1, cv_dww, cv_dwb, cv_ng, cv_nb, cv_pw2, cv_pb2,
        ff2_lng, ff2_lnb, ff2_w1, ff2_b1, ff2_w2, ff2_b2,
        fin_g, fin_b,
        final_w, final_b,
        o_ref, carry, dwpad, *, num_heads, conv_kernel):
    """One grid step = one ConformerBlockV2 (0.5*FF + MHSA + Conv + 0.5*FF + LN)
    for one batch element.  grid = (batch, layer); the running activation lives
    in the `carry` VMEM scratch across the layer axis.  The last layer also
    applies final linear + log_softmax and writes the log-prob output."""
    layer = pl.program_id(1)
    n_layers = pl.num_programs(1)

    @pl.when(layer == 0)
    def _():
        carry[...] = x_ref[0]

    def ln(v, g, b):
        m = jnp.mean(v, axis=-1, keepdims=True)
        c = v - m
        var = jnp.mean(c * c, axis=-1, keepdims=True)
        return c * jax.lax.rsqrt(var + LN_EPS) * g + b

    def silu(v):
        return v * jax.nn.sigmoid(v)

    def mm(a, w, b):
        return jnp.dot(a.astype(jnp.bfloat16), w,
                       preferred_element_type=jnp.float32) + b

    x = carry[...]                             # [T, D] f32
    bias = bias_ref[0]                         # [1, T] (0 valid / -1e9 padded keys)
    T, D = x.shape
    hd = D // num_heads
    scale = np.float32(1.0 / np.sqrt(hd))

    # ---- positionwise FF module #1 (residual scale 0.5) ----
    h = ln(x, ff1_lng[0], ff1_lnb[0])
    h = silu(mm(h, ff1_w1[0], ff1_b1[0]))
    h = mm(h, ff1_w2[0], ff1_b2[0])
    x = x + 0.5 * h

    # ---- MHSA module: all heads inside one kernel invocation ----
    h = ln(x, mh_lng[0], mh_lnb[0])
    qkv = mm(h, mh_wqkv[0], mh_bqkv[0])        # [T, 3D]
    heads = []
    for hh in range(num_heads):
        q = qkv[:, hh * hd:(hh + 1) * hd]
        k = qkv[:, D + hh * hd:D + (hh + 1) * hd]
        v = qkv[:, 2 * D + hh * hd:2 * D + (hh + 1) * hd]
        s = jnp.dot(q.astype(jnp.bfloat16), k.T.astype(jnp.bfloat16),
                    preferred_element_type=jnp.float32) * scale + bias
        m = jnp.max(s, axis=-1, keepdims=True)
        p = jnp.exp(s - m)
        o = jnp.dot(p.astype(jnp.bfloat16), v.astype(jnp.bfloat16),
                    preferred_element_type=jnp.float32)
        heads.append(o * _recip(jnp.sum(p, axis=-1, keepdims=True)))
    attn = jnp.concatenate(heads, axis=-1)     # [T, D]
    x = x + mm(attn, mh_wo[0], mh_bo[0])

    # ---- convolution module ----
    h = ln(x, cv_lng[0], cv_lnb[0])
    h = mm(h, cv_pw1[0], cv_pb1[0])            # pointwise conv 1: D -> 2D
    h = h[:, :D] * jax.nn.sigmoid(h[:, D:])    # GLU -> D
    pad = (conv_kernel - 1) // 2
    dwpad[...] = jnp.zeros_like(dwpad)
    dwpad[pad:pad + T, :] = h
    dw = cv_dww[0]                             # [K, D]
    acc = jnp.zeros((T, D), jnp.float32)
    for kk in range(conv_kernel):              # depthwise conv, 'same' padding
        acc = acc + dwpad[kk:kk + T, :] * dw[kk:kk + 1, :]
    h = acc + cv_dwb[0]
    h = silu(ln(h, cv_ng[0], cv_nb[0]))        # LayerNormNC over channels + SiLU
    x = x + mm(h, cv_pw2[0], cv_pb2[0])        # pointwise conv 2: D -> D

    # ---- positionwise FF module #2 (residual scale 0.5) ----
    h = ln(x, ff2_lng[0], ff2_lnb[0])
    h = silu(mm(h, ff2_w1[0], ff2_b1[0]))
    h = mm(h, ff2_w2[0], ff2_b2[0])
    x = x + 0.5 * h

    # ---- final block layer norm ----
    x = ln(x, fin_g[0], fin_b[0])
    carry[...] = x

    # ---- last layer: final linear + log_softmax, fused ----
    @pl.when(layer == n_layers - 1)
    def _():
        logits = jnp.dot(x.astype(jnp.bfloat16), final_w[...],
                         preferred_element_type=jnp.float32) + final_b[...]
        mx = jnp.max(logits, axis=-1, keepdims=True)
        sh = logits - mx
        lse = jnp.log(jnp.sum(jnp.exp(sh), axis=-1, keepdims=True))
        o_ref[0] = sh - lse


# ------------------------------ call wrappers ------------------------------ #
def mask_pool2(mask):
    """mask max-pool with kernel=2, stride=2 (time subsampling of seq mask)."""
    t2 = mask.shape[1] // 2
    return jnp.logical_or(mask[:, 0:2 * t2:2], mask[:, 1:2 * t2:2])


def frontend_forward(fe, pf, frames, mask):
    B, T0, _ = frames.shape
    T1 = T0 // 2
    T2 = T1 // 2
    FC = N_MELS * CONV4_CH
    D = pf["lin_w"].shape[-1]

    def sel(rows, cols, off):
        m = np.zeros((rows, cols), np.float32)
        m[np.arange(rows), 2 * np.arange(rows) + off] = 1.0
        return jnp.asarray(m)

    weights = [fe["window"], fe["dft_real"], fe["dft_imag"], fe["mel_fb"],
               pf["cw1"], pf["cb1"], pf["cw2"], pf["cb2"], pf["cw3"], pf["cb3"],
               pf["cw4"], pf["cb4"], sel(T1, T0, 0), sel(T1, T0, 1),
               sel(T2, T1, 0), sel(T2, T1, 1), pf["lin_w"], pf["lin_b"]]

    def fullspec(a):
        nd = a.ndim
        return pl.BlockSpec(a.shape, lambda b, _n=nd: (0,) * _n)

    h = pl.pallas_call(
        functools.partial(_frontend_kernel, t0=T0, t1=T1, t2=T2, min_amp=MIN_AMP),
        out_shape=jax.ShapeDtypeStruct((B, T2, D), jnp.float32),
        grid=(B,),
        in_specs=[pl.BlockSpec((1, T0, N_FFT), lambda b: (b, 0, 0))]
                 + [fullspec(w) for w in weights],
        out_specs=pl.BlockSpec((1, T2, D), lambda b: (b, 0, 0)),
        scratch_shapes=[pltpu.VMEM((T0 + 2, N_MELS), jnp.float32),
                        pltpu.VMEM((T0 + 2, FC), jnp.float32),
                        pltpu.VMEM((T0 + 2, FC), jnp.float32)],
        compiler_params=pltpu.CompilerParams(dimension_semantics=("parallel",)),
    )(frames, *weights)
    return h, mask_pool2(mask_pool2(mask))


def conformer_encoder(stacked, final_w, final_b, x, bias):
    """All conformer layers + final linear + log_softmax in one pallas_call.

    grid = (B, L); per-layer weights are stacked along a leading layer axis and
    streamed per grid step; the activation carry lives in VMEM scratch."""
    B, T, D = x.shape
    L = stacked[0].shape[0]
    V = final_w.shape[-1]

    def wspec(a):
        nd = a.ndim
        return pl.BlockSpec((1,) + a.shape[1:],
                            lambda b, l, _n=nd: (l,) + (0,) * (_n - 1))

    def fullspec(a):
        nd = a.ndim
        return pl.BlockSpec(a.shape, lambda b, l, _n=nd: (0,) * _n)

    return pl.pallas_call(
        functools.partial(_encoder_kernel, num_heads=NUM_HEADS,
                          conv_kernel=CONV_KERNEL),
        out_shape=jax.ShapeDtypeStruct((B, T, V), jnp.float32),
        grid=(B, L),
        in_specs=[pl.BlockSpec((1, T, D), lambda b, l: (b, 0, 0)),
                  pl.BlockSpec((1, 1, T), lambda b, l: (b, 0, 0))]
                 + [wspec(w) for w in stacked]
                 + [fullspec(final_w), fullspec(final_b)],
        out_specs=pl.BlockSpec((1, T, V), lambda b, l: (b, 0, 0)),
        scratch_shapes=[pltpu.VMEM((T, D), jnp.float32),
                        pltpu.VMEM((T + CONV_KERNEL - 1, D), jnp.float32)],
        compiler_params=pltpu.CompilerParams(
            dimension_semantics=("parallel", "arbitrary")),
    )(x, bias, *stacked, final_w, final_b)


# --------------------------------- forward --------------------------------- #
def model_forward(params, raw_audio, raw_audio_len):
    """raw_audio: [B, T, 1]; raw_audio_len: [B] -> (log_probs [B,T',V], out_len [B])."""
    B, T_audio, _ = raw_audio.shape
    x = raw_audio[..., 0].astype(jnp.float32)              # squeeze(-1)

    # --- framing for LogMelFeatureExtractionV1 (center=False; eval path) ---
    # TODO(synk): SpecAugment (training-only branch) not implemented; eval path only.
    n_frames = (T_audio - N_FFT) // HOP + 1
    idx = np.arange(n_frames)[:, None] * HOP + np.arange(N_FFT)[None, :]
    frames = x[:, idx]                                     # [B, n_frames, N_FFT]
    feat_len = (raw_audio_len - N_FFT) // HOP + 1
    mask = jnp.arange(n_frames)[None, :] < feat_len[:, None]   # mask_tensor

    # --- fused logmel + VGG frontend (one kernel, per-batch grid) ---
    h, mask = frontend_forward(params["fe"], params["frontend"], frames, mask)

    # --- fused conformer encoder + final linear + log_softmax ---
    bias = jnp.where(mask, 0.0, -1e9).astype(jnp.float32)[:, None, :]   # [B,1,T]
    log_probs = conformer_encoder(params["blocks_stacked"], params["final_w"],
                                  params["final_b"], h, bias)
    out_len = jnp.sum(mask.astype(jnp.int32), axis=1)
    return log_probs, out_len


# ---------------------------- parameter creation ---------------------------- #
def _mel_filterbank(n_mels, n_fft, sample_rate, f_min, f_max):
    n_freqs = n_fft // 2 + 1
    hz2mel = lambda f: 2595.0 * np.log10(1.0 + f / 700.0)
    mel2hz = lambda m: 700.0 * (10.0 ** (m / 2595.0) - 1.0)
    all_freqs = np.linspace(0.0, sample_rate / 2.0, n_freqs)
    f_pts = mel2hz(np.linspace(hz2mel(f_min), hz2mel(f_max), n_mels + 2))
    f_diff = f_pts[1:] - f_pts[:-1]
    slopes = f_pts[None, :] - all_freqs[:, None]
    down = -slopes[:, :-2] / f_diff[:-1]
    up = slopes[:, 2:] / f_diff[1:]
    return np.maximum(0.0, np.minimum(down, up)).astype(np.float32)   # [n_freqs, n_mels]


def init_params(key):
    """Parameters in 'torch layout' (conv [kh,kw,Cin,Cout], linear [in,out])."""
    D, FF, V = CONFORMER_SIZE, FF_DIM, NUM_LABELS + 1
    keys = iter(jax.random.split(key, 64))

    def w(shape, fan_in):
        return jax.random.normal(next(keys), shape, jnp.float32) / np.float32(np.sqrt(fan_in))

    zeros = lambda s: jnp.zeros(s, jnp.float32)
    ones = lambda s: jnp.ones(s, jnp.float32)

    # feature-extraction buffers (deterministic, analytic)
    n = np.arange(N_FFT)
    window = (0.5 - 0.5 * np.cos(2.0 * np.pi * n / WIN)).astype(np.float32)
    n_bins = N_FFT // 2 + 1
    freqs = np.arange(n_bins)
    ang = 2.0 * np.pi * np.outer(n, freqs) / N_FFT
    fe = dict(
        window=jnp.asarray(window.reshape(1, N_FFT)),
        dft_real=jnp.asarray(np.cos(ang).astype(np.float32)),
        dft_imag=jnp.asarray((-np.sin(ang)).astype(np.float32)),
        mel_fb=jnp.asarray(_mel_filterbank(N_MELS, N_FFT, SAMPLE_RATE, F_MIN, F_MAX)),
    )

    frontend_p = dict(
        conv1_w=w((3, 3, 1, CONV1_CH), 9 * 1), conv1_b=zeros((CONV1_CH,)),
        conv2_w=w((3, 3, CONV1_CH, CONV2_CH), 9 * CONV1_CH), conv2_b=zeros((CONV2_CH,)),
        conv3_w=w((3, 3, CONV2_CH, CONV3_CH), 9 * CONV2_CH), conv3_b=zeros((CONV3_CH,)),
        conv4_w=w((3, 3, CONV3_CH, CONV4_CH), 9 * CONV3_CH), conv4_b=zeros((CONV4_CH,)),
        lin_w=w((CONV4_CH * N_MELS, D), CONV4_CH * N_MELS), lin_b=zeros((D,)),
    )

    def ff_params():
        return dict(ln_g=ones((D,)), ln_b=zeros((D,)),
                    w1=w((D, FF), D), b1=zeros((FF,)),
                    w2=w((FF, D), FF), b2=zeros((D,)))

    def block_params():
        return dict(
            ff1=ff_params(),
            mhsa=dict(ln_g=ones((D,)), ln_b=zeros((D,)),
                      wqkv=w((D, 3 * D), D), bqkv=zeros((3 * D,)),
                      wo=w((D, D), D), bo=zeros((D,))),
            conv=dict(ln_g=ones((D,)), ln_b=zeros((D,)),
                      pw1_w=w((D, 2 * D), D), pw1_b=zeros((2 * D,)),
                      dw_w=w((CONV_KERNEL, D), CONV_KERNEL), dw_b=zeros((D,)),
                      norm_g=ones((D,)), norm_b=zeros((D,)),
                      pw2_w=w((D, D), D), pw2_b=zeros((D,))),
            ff2=ff_params(),
            final_ln_g=ones((D,)), final_ln_b=zeros((D,)),
        )

    return dict(
        fe=fe,
        frontend=frontend_p,
        blocks=[block_params() for _ in range(NUM_LAYERS)],
        final_w=w((D, V), D),
        final_b=zeros((V,)),
    )


# ---- transform torch-layout params into kernel-ready (lane-dense / bf16) ---- #
def _conv_band(w):
    """[3,3,Cin,Cout] conv weight -> 3 band matrices [F*Cin, F*Cout] so that
       y[t, (f,co)] = sum_tap x_timepad[t+tap, (f',ci)] @ band[tap];
       rows/cols are frequency-major, channel-minor (lane dim = F*C)."""
    w = np.asarray(w, np.float32)
    kh, kw, cin, cout = w.shape
    band = np.zeros((kh, N_MELS * cin, N_MELS * cout), np.float32)
    for dh in range(kh):
        for fo in range(N_MELS):
            for dw in range(kw):
                fi = fo + dw - 1
                if 0 <= fi < N_MELS:
                    band[dh, fi * cin:(fi + 1) * cin, fo * cout:(fo + 1) * cout] = w[dh, dw]
    return jnp.asarray(band, jnp.bfloat16)


def _prep_frontend(p):
    C, F, D = CONV4_CH, N_MELS, CONFORMER_SIZE
    tile_b = lambda b: jnp.asarray(np.tile(np.asarray(b, np.float32), F)[None, :])
    # torch flatten order after [B,T,C,F] transpose is (c*F + f); kernel rows are (f*C + c)
    lin_w = np.asarray(p["lin_w"], np.float32).reshape(C, F, D)
    lin_w = lin_w.transpose(1, 0, 2).reshape(F * C, D)
    return dict(
        cw1=_conv_band(p["conv1_w"]), cb1=tile_b(p["conv1_b"]),
        cw2=_conv_band(p["conv2_w"]), cb2=tile_b(p["conv2_b"]),
        cw3=_conv_band(p["conv3_w"]), cb3=tile_b(p["conv3_b"]),
        cw4=_conv_band(p["conv4_w"]), cb4=tile_b(p["conv4_b"]),
        lin_w=jnp.asarray(lin_w, jnp.bfloat16),
        lin_b=jnp.asarray(np.asarray(p["lin_b"], np.float32)[None, :]),
    )


def _prep_block(p):
    w16 = lambda a: jnp.asarray(a, jnp.bfloat16)
    row = lambda a: jnp.asarray(a, jnp.float32).reshape(1, -1)
    ff1, mh, cv, ff2 = p["ff1"], p["mhsa"], p["conv"], p["ff2"]
    return [
        row(ff1["ln_g"]), row(ff1["ln_b"]), w16(ff1["w1"]), row(ff1["b1"]),
        w16(ff1["w2"]), row(ff1["b2"]),
        row(mh["ln_g"]), row(mh["ln_b"]), w16(mh["wqkv"]), row(mh["bqkv"]),
        w16(mh["wo"]), row(mh["bo"]),
        row(cv["ln_g"]), row(cv["ln_b"]), w16(cv["pw1_w"]), row(cv["pw1_b"]),
        jnp.asarray(cv["dw_w"], jnp.float32), row(cv["dw_b"]),
        row(cv["norm_g"]), row(cv["norm_b"]), w16(cv["pw2_w"]), row(cv["pw2_b"]),
        row(ff2["ln_g"]), row(ff2["ln_b"]), w16(ff2["w1"]), row(ff2["b1"]),
        w16(ff2["w2"]), row(ff2["b2"]),
        row(p["final_ln_g"]), row(p["final_ln_b"]),
    ]


def prepare_params(params):
    per_layer = [_prep_block(b) for b in params["blocks"]]
    # stack each of the 30 per-layer weight tensors along a leading layer axis
    stacked = [jnp.stack([lay[i] for lay in per_layer], axis=0)
               for i in range(len(per_layer[0]))]
    return dict(
        fe=params["fe"],
        frontend=_prep_frontend(params["frontend"]),
        blocks_stacked=stacked,
        final_w=jnp.asarray(params["final_w"], jnp.bfloat16),
        final_b=jnp.asarray(params["final_b"], jnp.float32).reshape(1, -1),
    )


# ----------------------------------- main ----------------------------------- #
if __name__ == "__main__":
    key = jax.random.PRNGKey(0)
    k_audio, k_params = jax.random.split(key)

    B, T_AUDIO = 2, 2048
    raw_audio = jax.random.normal(k_audio, (B, T_AUDIO, 1), jnp.float32)
    raw_audio_len = jnp.array([2048, 1600], dtype=jnp.int32)

    params = prepare_params(init_params(k_params))

    fwd = jax.jit(model_forward)
    log_probs, out_len = fwd(params, raw_audio, raw_audio_len)
    jax.block_until_ready(log_probs)
    jax.block_until_ready(out_len)

    assert log_probs.shape == (B, 15, NUM_LABELS + 1), log_probs.shape
    assert out_len.shape == (B,), out_len.shape
    assert bool(jnp.all(jnp.isfinite(log_probs)))
    print("KERNEL_OK")
</pallas_src>

<mosaic_0001>
module attributes {stable_mosaic.version = 11 : i64} {
  func.func private @main(%arg0: i32) attributes {dimension_semantics = [#tpu.dimension_semantics<core_parallel>], iteration_bounds = array<i64: 2>, tpu.core_type = #tpu.core_type<sc_scalar_subcore>, window_params = []} {
    return
  }
}

module attributes {stable_mosaic.version = 11 : i64} {
  func.func private @main(%arg0: i32) attributes {dimension_semantics = [#tpu.dimension_semantics<core_parallel>], iteration_bounds = array<i64: 2>, tpu.core_type = #tpu.core_type<sc_scalar_subcore>, window_params = []} {
    return
  }
}

module attributes {stable_mosaic.version = 11 : i64} {
  func.func @_frontend_kernel(%arg0: i32, %arg1: memref<1x63x64xf32, #tpu.memory_space<vmem>>, %arg2: memref<1x64xf32, #tpu.memory_space<vmem>>, %arg3: memref<64x33xf32, #tpu.memory_space<vmem>>, %arg4: memref<64x33xf32, #tpu.memory_space<vmem>>, %arg5: memref<33x16xf32, #tpu.memory_space<vmem>>, %arg6: memref<3x16x128xbf16, #tpu.memory_space<vmem>>, %arg7: memref<1x128xf32, #tpu.memory_space<vmem>>, %arg8: memref<3x128x128xbf16, #tpu.memory_space<vmem>>, %arg9: memref<1x128xf32, #tpu.memory_space<vmem>>, %arg10: memref<3x128x128xbf16, #tpu.memory_space<vmem>>, %arg11: memref<1x128xf32, #tpu.memory_space<vmem>>, %arg12: memref<3x128x128xbf16, #tpu.memory_space<vmem>>, %arg13: memref<1x128xf32, #tpu.memory_space<vmem>>, %arg14: memref<31x63xf32, #tpu.memory_space<vmem>>, %arg15: memref<31x63xf32, #tpu.memory_space<vmem>>, %arg16: memref<15x31xf32, #tpu.memory_space<vmem>>, %arg17: memref<15x31xf32, #tpu.memory_space<vmem>>, %arg18: memref<128x64xbf16, #tpu.memory_space<vmem>>, %arg19: memref<1x64xf32, #tpu.memory_space<vmem>>, %arg20: memref<1x15x64xf32, #tpu.memory_space<vmem>>, %arg21: memref<65x16xf32, #tpu.memory_space<vmem>>, %arg22: memref<65x128xf32, #tpu.memory_space<vmem>>, %arg23: memref<65x128xf32, #tpu.memory_space<vmem>>) attributes {dimension_semantics = [#tpu.dimension_semantics<parallel>], iteration_bounds = array<i64: 2>, scalar_prefetch = 0 : i64, scratch_operands = 3 : i64, tpu.core_type = #tpu.core_type<tc>, window_params = [{transform_indices = @transform_0, window_bounds = array<i64: 1, 63, 64>}, {pipeline_mode = #tpu.pipeline_mode<synchronous>, transform_indices = @transform_1, window_bounds = array<i64: 1, 64>}, {pipeline_mode = #tpu.pipeline_mode<synchronous>, transform_indices = @transform_2, window_bounds = array<i64: 64, 33>}, {pipeline_mode = #tpu.pipeline_mode<synchronous>, transform_indices = @transform_3, window_bounds = array<i64: 64, 33>}, {pipeline_mode = #tpu.pipeline_mode<synchronous>, transform_indices = @transform_4, window_bounds = array<i64: 33, 16>}, {pipeline_mode = #tpu.pipeline_mode<synchronous>, transform_indices = @transform_5, window_bounds = array<i64: 3, 16, 128>}, {pipeline_mode = #tpu.pipeline_mode<synchronous>, transform_indices = @transform_6, window_bounds = array<i64: 1, 128>}, {pipeline_mode = #tpu.pipeline_mode<synchronous>, transform_indices = @transform_7, window_bounds = array<i64: 3, 128, 128>}, {pipeline_mode = #tpu.pipeline_mode<synchronous>, transform_indices = @transform_8, window_bounds = array<i64: 1, 128>}, {pipeline_mode = #tpu.pipeline_mode<synchronous>, transform_indices = @transform_9, window_bounds = array<i64: 3, 128, 128>}, {pipeline_mode = #tpu.pipeline_mode<synchronous>, transform_indices = @transform_10, window_bounds = array<i64: 1, 128>}, {pipeline_mode = #tpu.pipeline_mode<synchronous>, transform_indices = @transform_11, window_bounds = array<i64: 3, 128, 128>}, {pipeline_mode = #tpu.pipeline_mode<synchronous>, transform_indices = @transform_12, window_bounds = array<i64: 1, 128>}, {pipeline_mode = #tpu.pipeline_mode<synchronous>, transform_indices = @transform_13, window_bounds = array<i64: 31, 63>}, {pipeline_mode = #tpu.pipeline_mode<synchronous>, transform_indices = @transform_14, window_bounds = array<i64: 31, 63>}, {pipeline_mode = #tpu.pipeline_mode<synchronous>, transform_indices = @transform_15, window_bounds = array<i64: 15, 31>}, {pipeline_mode = #tpu.pipeline_mode<synchronous>, transform_indices = @transform_16, window_bounds = array<i64: 15, 31>}, {pipeline_mode = #tpu.pipeline_mode<synchronous>, transform_indices = @transform_17, window_bounds = array<i64: 128, 64>}, {pipeline_mode = #tpu.pipeline_mode<synchronous>, transform_indices = @transform_18, window_bounds = array<i64: 1, 64>}, {transform_indices = @transform_19, window_bounds = array<i64: 1, 15, 64>}]} {
    %c0 = arith.constant 0 : index
    %c0_0 = arith.constant 0 : index
    %c0_1 = arith.constant 0 : index
    %0 = vector.load %arg1[%c0, %c0_0, %c0_1] : memref<1x63x64xf32, #tpu.memory_space<vmem>>, vector<1x63x64xf32>
    %1 = vector.shape_cast %0 : vector<1x63x64xf32> to vector<63x64xf32>
    %c0_2 = arith.constant 0 : index
    %c0_3 = arith.constant 0 : index
    %2 = vector.load %arg2[%c0_2, %c0_3] : memref<1x64xf32, #tpu.memory_space<vmem>>, vector<1x64xf32>
    %3 = vector.broadcast %2 : vector<1x64xf32> to vector<63x64xf32>
    %4 = arith.mulf %1, %3 : vector<63x64xf32>
    %c0_4 = arith.constant 0 : index
    %c0_5 = arith.constant 0 : index
    %5 = vector.load %arg3[%c0_4, %c0_5] : memref<64x33xf32, #tpu.memory_space<vmem>>, vector<64x33xf32>
    %cst = arith.constant dense<0.000000e+00> : vector<63x33xf32>
    %6 = tpu.matmul %4, %5, %cst {dimension_numbers = #tpu.dot_dimension_numbers<[1], [0], [0], [1], [0, 0, 1, 1], [], []>} : vector<63x64xf32>, vector<64x33xf32>, vector<63x33xf32> -> vector<63x33xf32>
    %c0_6 = arith.constant 0 : index
    %c0_7 = arith.constant 0 : index
    %7 = vector.load %arg4[%c0_6, %c0_7] : memref<64x33xf32, #tpu.memory_space<vmem>>, vector<64x33xf32>
    %cst_8 = arith.constant dense<0.000000e+00> : vector<63x33xf32>
    %8 = tpu.matmul %4, %7, %cst_8 {dimension_numbers = #tpu.dot_dimension_numbers<[1], [0], [0], [1], [0, 0, 1, 1], [], []>} : vector<63x64xf32>, vector<64x33xf32>, vector<63x33xf32> -> vector<63x33xf32>
    %9 = arith.mulf %6, %6 : vector<63x33xf32>
    %10 = arith.mulf %8, %8 : vector<63x33xf32>
    %11 = arith.addf %9, %10 : vector<63x33xf32>
    %c0_9 = arith.constant 0 : index
    %c0_10 = arith.constant 0 : index
    %12 = vector.load %arg5[%c0_9, %c0_10] : memref<33x16xf32, #tpu.memory_space<vmem>>, vector<33x16xf32>
    %cst_11 = arith.constant dense<0.000000e+00> : vector<63x16xf32>
    %13 = tpu.matmul %11, %12, %cst_11 {dimension_numbers = #tpu.dot_dimension_numbers<[1], [0], [0], [1], [0, 0, 1, 1], [], []>} : vector<63x33xf32>, vector<33x16xf32>, vector<63x16xf32> -> vector<63x16xf32>
    %cst_12 = arith.constant 1.000000e-10 : f32
    %14 = vector.broadcast %cst_12 : f32 to vector<63x16xf32>
    %15 = arith.maximumf %13, %14 : vector<63x16xf32>
    %16 = math.log %15 : vector<63x16xf32>
    %cst_13 = arith.constant 0.434294492 : f32
    %17 = vector.broadcast %cst_13 : f32 to vector<63x16xf32>
    %18 = arith.mulf %16, %17 : vector<63x16xf32>
    %cst_14 = arith.constant 0.000000e+00 : f32
    %19 = vector.broadcast %cst_14 : f32 to vector<65x16xf32>
    %c0_15 = arith.constant 0 : index
    %c0_16 = arith.constant 0 : index
    %20 = vector.load %arg21[%c0_15, %c0_16] : memref<65x16xf32, #tpu.memory_space<vmem>>, vector<65x16xf32>
    tpu.vector_store %arg21[%c0_15, %c0_16], %19 {strides = array<i32>} : memref<65x16xf32, #tpu.memory_space<vmem>>, vector<65x16xf32>,
    %c1 = arith.constant 1 : index
    %c0_17 = arith.constant 0 : index
    %21 = vector.load %arg21[%c1, %c0_17] : memref<65x16xf32, #tpu.memory_space<vmem>>, vector<63x16xf32>
    tpu.vector_store %arg21[%c1, %c0_17], %18 {strides = array<i32>} : memref<65x16xf32, #tpu.memory_space<vmem>>, vector<63x16xf32>,
    %cst_18 = arith.constant 0.000000e+00 : f32
    %22 = vector.broadcast %cst_18 : f32 to vector<63x128xf32>
    %c0_19 = arith.constant 0 : index
    %c0_20 = arith.constant 0 : index
    %23 = vector.load %arg7[%c0_19, %c0_20] : memref<1x128xf32, #tpu.memory_space<vmem>>, vector<1x128xf32>
    %24 = vector.broadcast %23 : vector<1x128xf32> to vector<63x128xf32>
    %25 = arith.addf %22, %24 : vector<63x128xf32>
    %c0_21 = arith.constant 0 : index
    %c0_22 = arith.constant 0 : index
    %26 = vector.load %arg21[%c0_21, %c0_22] : memref<65x16xf32, #tpu.memory_space<vmem>>, vector<63x16xf32>
    %27 = arith.truncf %26 : vector<63x16xf32> to vector<63x16xbf16>
    %c0_23 = arith.constant 0 : index
    %c0_24 = arith.constant 0 : index
    %c0_25 = arith.constant 0 : index
    %28 = vector.load %arg6[%c0_23, %c0_24, %c0_25] : memref<3x16x128xbf16, #tpu.memory_space<vmem>>, vector<1x16x128xbf16>
    %29 = vector.shape_cast %28 : vector<1x16x128xbf16> to vector<16x128xbf16>
    %cst_26 = arith.constant dense<0.000000e+00> : vector<63x128xf32>
    %30 = tpu.matmul %27, %29, %cst_26 {dimension_numbers = #tpu.dot_dimension_numbers<[1], [0], [0], [1], [0, 0, 1, 1], [], []>} : vector<63x16xbf16>, vector<16x128xbf16>, vector<63x128xf32> -> vector<63x128xf32>
    %31 = arith.addf %25, %30 : vector<63x128xf32>
    %c1_27 = arith.constant 1 : index
    %c0_28 = arith.constant 0 : index
    %32 = vector.load %arg21[%c1_27, %c0_28] : memref<65x16xf32, #tpu.memory_space<vmem>>, vector<63x16xf32>
    %33 = arith.truncf %32 : vector<63x16xf32> to vector<63x16xbf16>
    %c1_29 = arith.constant 1 : index
    %c0_30 = arith.constant 0 : index
    %c0_31 = arith.constant 0 : index
    %34 = vector.load %arg6[%c1_29, %c0_30, %c0_31] : memref<3x16x128xbf16, #tpu.memory_space<vmem>>, vector<1x16x128xbf16>
    %35 = vector.shape_cast %34 : vector<1x16x128xbf16> to vector<16x128xbf16>
    %cst_32 = arith.constant dense<0.000000e+00> : vector<63x128xf32>
    %36 = tpu.matmul %33, %35, %cst_32 {dimension_numbers = #tpu.dot_dimension_numbers<[1], [0], [0], [1], [0, 0, 1, 1], [], []>} : vector<63x16xbf16>, vector<16x128xbf16>, vector<63x128xf32> -> vector<63x128xf32>
    %37 = arith.addf %31, %36 : vector<63x128xf32>
    %c2 = arith.constant 2 : index
    %c0_33 = arith.constant 0 : index
    %38 = vector.load %arg21[%c2, %c0_33] : memref<65x16xf32, #tpu.memory_space<vmem>>, vector<63x16xf32>
    %39 = arith.truncf %38 : vector<63x16xf32> to vector<63x16xbf16>
    %c2_34 = arith.constant 2 : index
    %c0_35 = arith.constant 0 : index
    %c0_36 = arith.constant 0 : index
    %40 = vector.load %arg6[%c2_34, %c0_35, %c0_36] : memref<3x16x128xbf16, #tpu.memory_space<vmem>>, vector<1x16x128xbf16>
    %41 = vector.shape_cast %40 : vector<1x16x128xbf16> to vector<16x128xbf16>
    %cst_37 = arith.constant dense<0.000000e+00> : vector<63x128xf32>
    %42 = tpu.matmul %39, %41, %cst_37 {dimension_numbers = #tpu.dot_dimension_numbers<[1], [0], [0], [1], [0, 0, 1, 1], [], []>} : vector<63x16xbf16>, vector<16x128xbf16>, vector<63x128xf32> -> vector<63x128xf32>
    %43 = arith.addf %37, %42 : vector<63x128xf32>
    %cst_38 = arith.constant 0.000000e+00 : f32
    %44 = vector.broadcast %cst_38 : f32 to vector<65x128xf32>
    %c0_39 = arith.constant 0 : index
    %c0_40 = arith.constant 0 : index
    %45 = vector.load %arg22[%c0_39, %c0_40] : memref<65x128xf32, #tpu.memory_space<vmem>>, vector<65x128xf32>
    tpu.vector_store %arg22[%c0_39, %c0_40], %44 {strides = array<i32>} : memref<65x128xf32, #tpu.memory_space<vmem>>, vector<65x128xf32>,
    %c1_41 = arith.constant 1 : index
    %c0_42 = arith.constant 0 : index
    %46 = vector.load %arg22[%c1_41, %c0_42] : memref<65x128xf32, #tpu.memory_space<vmem>>, vector<63x128xf32>
    tpu.vector_store %arg22[%c1_41, %c0_42], %43 {strides = array<i32>} : memref<65x128xf32, #tpu.memory_space<vmem>>, vector<63x128xf32>,
    %cst_43 = arith.constant 0.000000e+00 : f32
    %47 = vector.broadcast %cst_43 : f32 to vector<63x128xf32>
    %c0_44 = arith.constant 0 : index
    %c0_45 = arith.constant 0 : index
    %48 = vector.load %arg9[%c0_44, %c0_45] : memref<1x128xf32, #tpu.memory_space<vmem>>, vector<1x128xf32>
    %49 = vector.broadcast %48 : vector<1x128xf32> to vector<63x128xf32>
    %50 = arith.addf %47, %49 : vector<63x128xf32>
    %c0_46 = arith.constant 0 : index
    %c0_47 = arith.constant 0 : index
    %51 = vector.load %arg22[%c0_46, %c0_47] : memref<65x128xf32, #tpu.memory_space<vmem>>, vector<63x128xf32>
    %52 = arith.truncf %51 : vector<63x128xf32> to vector<63x128xbf16>
    %c0_48 = arith.constant 0 : index
    %c0_49 = arith.constant 0 : index
    %c0_50 = arith.constant 0 : index
    %53 = vector.load %arg8[%c0_48, %c0_49, %c0_50] : memref<3x128x128xbf16, #tpu.memory_space<vmem>>, vector<1x128x128xbf16>
    %54 = vector.shape_cast %53 : vector<1x128x128xbf16> to vector<128x128xbf16>
    %cst_51 = arith.constant dense<0.000000e+00> : vector<63x128xf32>
    %55 = tpu.matmul %52, %54, %cst_51 {dimension_numbers = #tpu.dot_dimension_numbers<[1], [0], [0], [1], [0, 0, 1, 1], [], []>} : vector<63x128xbf16>, vector<128x128xbf16>, vector<63x128xf32> -> vector<63x128xf32>
    %56 = arith.addf %50, %55 : vector<63x128xf32>
    %c1_52 = arith.constant 1 : index
    %c0_53 = arith.constant 0 : index
    %57 = vector.load %arg22[%c1_52, %c0_53] : memref<65x128xf32, #tpu.memory_space<vmem>>, vector<63x128xf32>
    %58 = arith.truncf %57 : vector<63x128xf32> to vector<63x128xbf16>
    %c1_54 = arith.constant 1 : index
    %c0_55 = arith.constant 0 : index
    %c0_56 = arith.constant 0 : index
    %59 = vector.load %arg8[%c1_54, %c0_55, %c0_56] : memref<3x128x128xbf16, #tpu.memory_space<vmem>>, vector<1x128x128xbf16>
    %60 = vector.shape_cast %59 : vector<1x128x128xbf16> to vector<128x128xbf16>
    %cst_57 = arith.constant dense<0.000000e+00> : vector<63x128xf32>
    %61 = tpu.matmul %58, %60, %cst_57 {dimension_numbers = #tpu.dot_dimension_numbers<[1], [0], [0], [1], [0, 0, 1, 1], [], []>} : vector<63x128xbf16>, vector<128x128xbf16>, vector<63x128xf32> -> vector<63x128xf32>
    %62 = arith.addf %56, %61 : vector<63x128xf32>
    %c2_58 = arith.constant 2 : index
    %c0_59 = arith.constant 0 : index
    %63 = vector.load %arg22[%c2_58, %c0_59] : memref<65x128xf32, #tpu.memory_space<vmem>>, vector<63x128xf32>
    %64 = arith.truncf %63 : vector<63x128xf32> to vector<63x128xbf16>
    %c2_60 = arith.constant 2 : index
    %c0_61 = arith.constant 0 : index
    %c0_62 = arith.constant 0 : index
    %65 = vector.load %arg8[%c2_60, %c0_61, %c0_62] : memref<3x128x128xbf16, #tpu.memory_space<vmem>>, vector<1x128x128xbf16>
    %66 = vector.shape_cast %65 : vector<1x128x128xbf16> to vector<128x128xbf16>
    %cst_63 = arith.constant dense<0.000000e+00> : vector<63x128xf32>
    %67 = tpu.matmul %64, %66, %cst_63 {dimension_numbers = #tpu.dot_dimension_numbers<[1], [0], [0], [1], [0, 0, 1, 1], [], []>} : vector<63x128xbf16>, vector<128x128xbf16>, vector<63x128xf32> -> vector<63x128xf32>
    %68 = arith.addf %62, %67 : vector<63x128xf32>
    %cst_64 = arith.constant 0.000000e+00 : f32
    %69 = vector.broadcast %cst_64 : f32 to vector<63x128xf32>
    %70 = arith.maximumf %68, %69 : vector<63x128xf32>
    %c0_65 = arith.constant 0 : index
    %c0_66 = arith.constant 0 : index
    %71 = vector.load %arg14[%c0_65, %c0_66] : memref<31x63xf32, #tpu.memory_space<vmem>>, vector<31x63xf32>
    %cst_67 = arith.constant dense<0.000000e+00> : vector<31x128xf32>
    %72 = tpu.matmul %71, %70, %cst_67 {dimension_numbers = #tpu.dot_dimension_numbers<[1], [0], [0], [1], [0, 0, 1, 1], [], []>} : vector<31x63xf32>, vector<63x128xf32>, vector<31x128xf32> -> vector<31x128xf32>
    %c0_68 = arith.constant 0 : index
    %c0_69 = arith.constant 0 : index
    %73 = vector.load %arg15[%c0_68, %c0_69] : memref<31x63xf32, #tpu.memory_space<vmem>>, vector<31x63xf32>
    %cst_70 = arith.constant dense<0.000000e+00> : vector<31x128xf32>
    %74 = tpu.matmul %73, %70, %cst_70 {dimension_numbers = #tpu.dot_dimension_numbers<[1], [0], [0], [1], [0, 0, 1, 1], [], []>} : vector<31x63xf32>, vector<63x128xf32>, vector<31x128xf32> -> vector<31x128xf32>
    %75 = arith.maximumf %72, %74 : vector<31x128xf32>
    %cst_71 = arith.constant 0.000000e+00 : f32
    %76 = vector.broadcast %cst_71 : f32 to vector<65x128xf32>
    %c0_72 = arith.constant 0 : index
    %c0_73 = arith.constant 0 : index
    %77 = vector.load %arg23[%c0_72, %c0_73] : memref<65x128xf32, #tpu.memory_space<vmem>>, vector<65x128xf32>
    tpu.vector_store %arg23[%c0_72, %c0_73], %76 {strides = array<i32>} : memref<65x128xf32, #tpu.memory_space<vmem>>, vector<65x128xf32>,
    %c1_74 = arith.constant 1 : index
    %c0_75 = arith.constant 0 : index
    %78 = vector.load %arg23[%c1_74, %c0_75] : memref<65x128xf32, #tpu.memory_space<vmem>>, vector<31x128xf32>
    tpu.vector_store %arg23[%c1_74, %c0_75], %75 {strides = array<i32>} : memref<65x128xf32, #tpu.memory_space<vmem>>, vector<31x128xf32>,
    %cst_76 = arith.constant 0.000000e+00 : f32
    %79 = vector.broadcast %cst_76 : f32 to vector<31x128xf32>
    %c0_77 = arith.constant 0 : index
    %c0_78 = arith.constant 0 : index
    %80 = vector.load %arg11[%c0_77, %c0_78] : memref<1x128xf32, #tpu.memory_space<vmem>>, vector<1x128xf32>
    %81 = vector.broadcast %80 : vector<1x128xf32> to vector<31x128xf32>
    %82 = arith.addf %79, %81 : vector<31x128xf32>
    %c0_79 = arith.constant 0 : index
    %c0_80 = arith.constant 0 : index
    %83 = vector.load %arg23[%c0_79, %c0_80] : memref<65x128xf32, #tpu.memory_space<vmem>>, vector<31x128xf32>
    %84 = arith.truncf %83 : vector<31x128xf32> to vector<31x128xbf16>
    %c0_81 = arith.constant 0 : index
    %c0_82 = arith.constant 0 : index
    %c0_83 = arith.constant 0 : index
    %85 = vector.load %arg10[%c0_81, %c0_82, %c0_83] : memref<3x128x128xbf16, #tpu.memory_space<vmem>>, vector<1x128x128xbf16>
    %86 = vector.shape_cast %85 : vector<1x128x128xbf16> to vector<128x128xbf16>
    %cst_84 = arith.constant dense<0.000000e+00> : vector<31x128xf32>
    %87 = tpu.matmul %84, %86, %cst_84 {dimension_numbers = #tpu.dot_dimension_numbers<[1], [0], [0], [1], [0, 0, 1, 1], [], []>} : vector<31x128xbf16>, vector<128x128xbf16>, vector<31x128xf32> -> vector<31x128xf32>
    %88 = arith.addf %82, %87 : vector<31x128xf32>
    %c1_85 = arith.constant 1 : index
    %c0_86 = arith.constant 0 : index
    %89 = vector.load %arg23[%c1_85, %c0_86] : memref<65x128xf32, #tpu.memory_space<vmem>>, vector<31x128xf32>
    %90 = arith.truncf %89 : vector<31x128xf32> to vector<31x128xbf16>
    %c1_87 = arith.constant 1 : index
    %c0_88 = arith.constant 0 : index
    %c0_89 = arith.constant 0 : index
    %91 = vector.load %arg10[%c1_87, %c0_88, %c0_89] : memref<3x128x128xbf16, #tpu.memory_space<vmem>>, vector<1x128x128xbf16>
    %92 = vector.shape_cast %91 : vector<1x128x128xbf16> to vector<128x128xbf16>
    %cst_90 = arith.constant dense<0.000000e+00> : vector<31x128xf32>
    %93 = tpu.matmul %90, %92, %cst_90 {dimension_numbers = #tpu.dot_dimension_numbers<[1], [0], [0], [1], [0, 0, 1, 1], [], []>} : vector<31x128xbf16>, vector<128x128xbf16>, vector<31x128xf32> -> vector<31x128xf32>
    %94 = arith.addf %88, %93 : vector<31x128xf32>
    %c2_91 = arith.constant 2 : index
    %c0_92 = arith.constant 0 : index
    %95 = vector.load %arg23[%c2_91, %c0_92] : memref<65x128xf32, #tpu.memory_space<vmem>>, vector<31x128xf32>
    %96 = arith.truncf %95 : vector<31x128xf32> to vector<31x128xbf16>
    %c2_93 = arith.constant 2 : index
    %c0_94 = arith.constant 0 : index
    %c0_95 = arith.constant 0 : index
    %97 = vector.load %arg10[%c2_93, %c0_94, %c0_95] : memref<3x128x128xbf16, #tpu.memory_space<vmem>>, vector<1x128x128xbf16>
    %98 = vector.shape_cast %97 : vector<1x128x128xbf16> to vector<128x128xbf16>
    %cst_96 = arith.constant dense<0.000000e+00> : vector<31x128xf32>
    %99 = tpu.matmul %96, %98, %cst_96 {dimension_numbers = #tpu.dot_dimension_numbers<[1], [0], [0], [1], [0, 0, 1, 1], [], []>} : vector<31x128xbf16>, vector<128x128xbf16>, vector<31x128xf32> -> vector<31x128xf32>
    %100 = arith.addf %94, %99 : vector<31x128xf32>
    %cst_97 = arith.constant 0.000000e+00 : f32
    %101 = vector.broadcast %cst_97 : f32 to vector<65x128xf32>
    %c0_98 = arith.constant 0 : index
    %c0_99 = arith.constant 0 : index
    %102 = vector.load %arg22[%c0_98, %c0_99] : memref<65x128xf32, #tpu.memory_space<vmem>>, vector<65x128xf32>
    tpu.vector_store %arg22[%c0_98, %c0_99], %101 {strides = array<i32>} : memref<65x128xf32, #tpu.memory_space<vmem>>, vector<65x128xf32>,
    %c1_100 = arith.constant 1 : index
    %c0_101 = arith.constant 0 : index
    %103 = vector.load %arg22[%c1_100, %c0_101] : memref<65x128xf32, #tpu.memory_space<vmem>>, vector<31x128xf32>
    tpu.vector_store %arg22[%c1_100, %c0_101], %100 {strides = array<i32>} : memref<65x128xf32, #tpu.memory_space<vmem>>, vector<31x128xf32>,
    %cst_102 = arith.constant 0.000000e+00 : f32
    %104 = vector.broadcast %cst_102 : f32 to vector<31x128xf32>
    %c0_103 = arith.constant 0 : index
    %c0_104 = arith.constant 0 : index
    %105 = vector.load %arg13[%c0_103, %c0_104] : memref<1x128xf32, #tpu.memory_space<vmem>>, vector<1x128xf32>
    %106 = vector.broadcast %105 : vector<1x128xf32> to vector<31x128xf32>
    %107 = arith.addf %104, %106 : vector<31x128xf32>
    %c0_105 = arith.constant 0 : index
    %c0_106 = arith.constant 0 : index
    %108 = vector.load %arg22[%c0_105, %c0_106] : memref<65x128xf32, #tpu.memory_space<vmem>>, vector<31x128xf32>
    %109 = arith.truncf %108 : vector<31x128xf32> to vector<31x128xbf16>
    %c0_107 = arith.constant 0 : index
    %c0_108 = arith.constant 0 : index
    %c0_109 = arith.constant 0 : index
    %110 = vector.load %arg12[%c0_107, %c0_108, %c0_109] : memref<3x128x128xbf16, #tpu.memory_space<vmem>>, vector<1x128x128xbf16>
    %111 = vector.shape_cast %110 : vector<1x128x128xbf16> to vector<128x128xbf16>
    %cst_110 = arith.constant dense<0.000000e+00> : vector<31x128xf32>
    %112 = tpu.matmul %109, %111, %cst_110 {dimension_numbers = #tpu.dot_dimension_numbers<[1], [0], [0], [1], [0, 0, 1, 1], [], []>} : vector<31x128xbf16>, vector<128x128xbf16>, vector<31x128xf32> -> vector<31x128xf32>
    %113 = arith.addf %107, %112 : vector<31x128xf32>
    %c1_111 = arith.constant 1 : index
    %c0_112 = arith.constant 0 : index
    %114 = vector.load %arg22[%c1_111, %c0_112] : memref<65x128xf32, #tpu.memory_space<vmem>>, vector<31x128xf32>
    %115 = arith.truncf %114 : vector<31x128xf32> to vector<31x128xbf16>
    %c1_113 = arith.constant 1 : index
    %c0_114 = arith.constant 0 : index
    %c0_115 = arith.constant 0 : index
    %116 = vector.load %arg12[%c1_113, %c0_114, %c0_115] : memref<3x128x128xbf16, #tpu.memory_space<vmem>>, vector<1x128x128xbf16>
    %117 = vector.shape_cast %116 : vector<1x128x128xbf16> to vector<128x128xbf16>
    %cst_116 = arith.constant dense<0.000000e+00> : vector<31x128xf32>
    %118 = tpu.matmul %115, %117, %cst_116 {dimension_numbers = #tpu.dot_dimension_numbers<[1], [0], [0], [1], [0, 0, 1, 1], [], []>} : vector<31x128xbf16>, vector<128x128xbf16>, vector<31x128xf32> -> vector<31x128xf32>
    %119 = arith.addf %113, %118 : vector<31x128xf32>
    %c2_117 = arith.constant 2 : index
    %c0_118 = arith.constant 0 : index
    %120 = vector.load %arg22[%c2_117, %c0_118] : memref<65x128xf32, #tpu.memory_space<vmem>>, vector<31x128xf32>
    %121 = arith.truncf %120 : vector<31x128xf32> to vector<31x128xbf16>
    %c2_119 = arith.constant 2 : index
    %c0_120 = arith.constant 0 : index
    %c0_121 = arith.constant 0 : index
    %122 = vector.load %arg12[%c2_119, %c0_120, %c0_121] : memref<3x128x128xbf16, #tpu.memory_space<vmem>>, vector<1x128x128xbf16>
    %123 = vector.shape_cast %122 : vector<1x128x128xbf16> to vector<128x128xbf16>
    %cst_122 = arith.constant dense<0.000000e+00> : vector<31x128xf32>
    %124 = tpu.matmul %121, %123, %cst_122 {dimension_numbers = #tpu.dot_dimension_numbers<[1], [0], [0], [1], [0, 0, 1, 1], [], []>} : vector<31x128xbf16>, vector<128x128xbf16>, vector<31x128xf32> -> vector<31x128xf32>
    %125 = arith.addf %119, %124 : vector<31x128xf32>
    %cst_123 = arith.constant 0.000000e+00 : f32
    %126 = vector.broadcast %cst_123 : f32 to vector<31x128xf32>
    %127 = arith.maximumf %125, %126 : vector<31x128xf32>
    %c0_124 = arith.constant 0 : index
    %c0_125 = arith.constant 0 : index
    %128 = vector.load %arg16[%c0_124, %c0_125] : memref<15x31xf32, #tpu.memory_space<vmem>>, vector<15x31xf32>
    %cst_126 = arith.constant dense<0.000000e+00> : vector<15x128xf32>
    %129 = tpu.matmul %128, %127, %cst_126 {dimension_numbers = #tpu.dot_dimension_numbers<[1], [0], [0], [1], [0, 0, 1, 1], [], []>} : vector<15x31xf32>, vector<31x128xf32>, vector<15x128xf32> -> vector<15x128xf32>
    %c0_127 = arith.constant 0 : index
    %c0_128 = arith.constant 0 : index
    %130 = vector.load %arg17[%c0_127, %c0_128] : memref<15x31xf32, #tpu.memory_space<vmem>>, vector<15x31xf32>
    %cst_129 = arith.constant dense<0.000000e+00> : vector<15x128xf32>
    %131 = tpu.matmul %130, %127, %cst_129 {dimension_numbers = #tpu.dot_dimension_numbers<[1], [0], [0], [1], [0, 0, 1, 1], [], []>} : vector<15x31xf32>, vector<31x128xf32>, vector<15x128xf32> -> vector<15x128xf32>
    %132 = arith.maximumf %129, %131 : vector<15x128xf32>
    %133 = arith.truncf %132 : vector<15x128xf32> to vector<15x128xbf16>
    %c0_130 = arith.constant 0 : index
    %c0_131 = arith.constant 0 : index
    %134 = vector.load %arg18[%c0_130, %c0_131] : memref<128x64xbf16, #tpu.memory_space<vmem>>, vector<128x64xbf16>
    %cst_132 = arith.constant dense<0.000000e+00> : vector<15x64xf32>
    %135 = tpu.matmul %133, %134, %cst_132 {dimension_numbers = #tpu.dot_dimension_numbers<[1], [0], [0], [1], [0, 0, 1, 1], [], []>} : vector<15x128xbf16>, vector<128x64xbf16>, vector<15x64xf32> -> vector<15x64xf32>
    %c0_133 = arith.constant 0 : index
    %c0_134 = arith.constant 0 : index
    %136 = vector.load %arg19[%c0_133, %c0_134] : memref<1x64xf32, #tpu.memory_space<vmem>>, vector<1x64xf32>
    %137 = vector.broadcast %136 : vector<1x64xf32> to vector<15x64xf32>
    %138 = arith.addf %135, %137 : vector<15x64xf32>
    %c0_135 = arith.constant 0 : index
    %c0_136 = arith.constant 0 : index
    %c0_137 = arith.constant 0 : index
    %139 = vector.load %arg20[%c0_135, %c0_136, %c0_137] : memref<1x15x64xf32, #tpu.memory_space<vmem>>, vector<1x15x64xf32>
    %140 = vector.shape_cast %139 : vector<1x15x64xf32> to vector<15x64xf32>
    %141 = vector.shape_cast %138 : vector<15x64xf32> to vector<1x15x64xf32>
    tpu.vector_store %arg20[%c0_135, %c0_136, %c0_137], %141 {strides = array<i32>} : memref<1x15x64xf32, #tpu.memory_space<vmem>>, vector<1x15x64xf32>,
    return
  }
  func.func @transform_0(%arg0: i32) -> (i32, i32, i32) {
    %c0_i32 = arith.constant 0 : i32
    %c0_i32_0 = arith.constant 0 : i32
    %c0_i32_1 = arith.constant 0 : i32
    return %arg0, %c0_i32, %c0_i32_0 : i32, i32, i32
  }
  func.func @transform_1(%arg0: i32) -> (i32, i32) {
    %c0_i32 = arith.constant 0 : i32
    %c0_i32_0 = arith.constant 0 : i32
    %c0_i32_1 = arith.constant 0 : i32
    return %c0_i32, %c0_i32_0 : i32, i32
  }
  func.func @transform_2(%arg0: i32) -> (i32, i32) {
    %c0_i32 = arith.constant 0 : i32
    %c0_i32_0 = arith.constant 0 : i32
    %c0_i32_1 = arith.constant 0 : i32
    return %c0_i32, %c0_i32_0 : i32, i32
  }
  func.func @transform_3(%arg0: i32) -> (i32, i32) {
    %c0_i32 = arith.constant 0 : i32
    %c0_i32_0 = arith.constant 0 : i32
    %c0_i32_1 = arith.constant 0 : i32
    return %c0_i32, %c0_i32_0 : i32, i32
  }
  func.func @transform_4(%arg0: i32) -> (i32, i32) {
    %c0_i32 = arith.constant 0 : i32
    %c0_i32_0 = arith.constant 0 : i32
    %c0_i32_1 = arith.constant 0 : i32
    return %c0_i32, %c0_i32_0 : i32, i32
  }
  func.func @transform_5(%arg0: i32) -> (i32, i32, i32) {
    %c0_i32 = arith.constant 0 : i32
    %c0_i32_0 = arith.constant 0 : i32
    %c0_i32_1 = arith.constant 0 : i32
    %c0_i32_2 = arith.constant 0 : i32
    return %c0_i32, %c0_i32_0, %c0_i32_1 : i32, i32, i32
  }
  func.func @transform_6(%arg0: i32) -> (i32, i32) {
    %c0_i32 = arith.constant 0 : i32
    %c0_i32_0 = arith.constant 0 : i32
    %c0_i32_1 = arith.constant 0 : i32
    return %c0_i32, %c0_i32_0 : i32, i32
  }
  func.func @transform_7(%arg0: i32) -> (i32, i32, i32) {
    %c0_i32 = arith.constant 0 : i32
    %c0_i32_0 = arith.constant 0 : i32
    %c0_i32_1 = arith.constant 0 : i32
    %c0_i32_2 = arith.constant 0 : i32
    return %c0_i32, %c0_i32_0, %c0_i32_1 : i32, i32, i32
  }
  func.func @transform_8(%arg0: i32) -> (i32, i32) {
    %c0_i32 = arith.constant 0 : i32
    %c0_i32_0 = arith.constant 0 : i32
    %c0_i32_1 = arith.constant 0 : i32
    return %c0_i32, %c0_i32_0 : i32, i32
  }
  func.func @transform_9(%arg0: i32) -> (i32, i32, i32) {
    %c0_i32 = arith.constant 0 : i32
    %c0_i32_0 = arith.constant 0 : i32
    %c0_i32_1 = arith.constant 0 : i32
    %c0_i32_2 = arith.constant 0 : i32
    return %c0_i32, %c0_i32_0, %c0_i32_1 : i32, i32, i32
  }
  func.func @transform_10(%arg0: i32) -> (i32, i32) {
    %c0_i32 = arith.constant 0 : i32
    %c0_i32_0 = arith.constant 0 : i32
    %c0_i32_1 = arith.constant 0 : i32
    return %c0_i32, %c0_i32_0 : i32, i32
  }
  func.func @transform_11(%arg0: i32) -> (i32, i32, i32) {
    %c0_i32 = arith.constant 0 : i32
    %c0_i32_0 = arith.constant 0 : i32
    %c0_i32_1 = arith.constant 0 : i32
    %c0_i32_2 = arith.constant 0 : i32
    return %c0_i32, %c0_i32_0, %c0_i32_1 : i32, i32, i32
  }
  func.func @transform_12(%arg0: i32) -> (i32, i32) {
    %c0_i32 = arith.constant 0 : i32
    %c0_i32_0 = arith.constant 0 : i32
    %c0_i32_1 = arith.constant 0 : i32
    return %c0_i32, %c0_i32_0 : i32, i32
  }
  func.func @transform_13(%arg0: i32) -> (i32, i32) {
    %c0_i32 = arith.constant 0 : i32
    %c0_i32_0 = arith.constant 0 : i32
    %c0_i32_1 = arith.constant 0 : i32
    return %c0_i32, %c0_i32_0 : i32, i32
  }
  func.func @transform_14(%arg0: i32) -> (i32, i32) {
    %c0_i32 = arith.constant 0 : i32
    %c0_i32_0 = arith.constant 0 : i32
    %c0_i32_1 = arith.constant 0 : i32
    return %c0_i32, %c0_i32_0 : i32, i32
  }
  func.func @transform_15(%arg0: i32) -> (i32, i32) {
    %c0_i32 = arith.constant 0 : i32
    %c0_i32_0 = arith.constant 0 : i32
    %c0_i32_1 = arith.constant 0 : i32
    return %c0_i32, %c0_i32_0 : i32, i32
  }
  func.func @transform_16(%arg0: i32) -> (i32, i32) {
    %c0_i32 = arith.constant 0 : i32
    %c0_i32_0 = arith.constant 0 : i32
    %c0_i32_1 = arith.constant 0 : i32
    return %c0_i32, %c0_i32_0 : i32, i32
  }
  func.func @transform_17(%arg0: i32) -> (i32, i32) {
    %c0_i32 = arith.constant 0 : i32
    %c0_i32_0 = arith.constant 0 : i32
    %c0_i32_1 = arith.constant 0 : i32
    return %c0_i32, %c0_i32_0 : i32, i32
  }
  func.func @transform_18(%arg0: i32) -> (i32, i32) {
    %c0_i32 = arith.constant 0 : i32
    %c0_i32_0 = arith.constant 0 : i32
    %c0_i32_1 = arith.constant 0 : i32
    return %c0_i32, %c0_i32_0 : i32, i32
  }
  func.func @transform_19(%arg0: i32) -> (i32, i32, i32) {
    %c0_i32 = arith.constant 0 : i32
    %c0_i32_0 = arith.constant 0 : i32
    %c0_i32_1 = arith.constant 0 : i32
    return %arg0, %c0_i32, %c0_i32_0 : i32, i32, i32
  }
}

module attributes {stable_mosaic.version = 11 : i64} {
  func.func @_encoder_kernel(%arg0: i32, %arg1: i32, %arg2: memref<1x15x64xf32, #tpu.memory_space<vmem>>, %arg3: memref<1x1x15xf32, #tpu.memory_space<vmem>>, %arg4: memref<1x1x64xf32, #tpu.memory_space<vmem>>, %arg5: memref<1x1x64xf32, #tpu.memory_space<vmem>>, %arg6: memref<1x64x128xbf16, #tpu.memory_space<vmem>>, %arg7: memref<1x1x128xf32, #tpu.memory_space<vmem>>, %arg8: memref<1x128x64xbf16, #tpu.memory_space<vmem>>, %arg9: memref<1x1x64xf32, #tpu.memory_space<vmem>>, %arg10: memref<1x1x64xf32, #tpu.memory_space<vmem>>, %arg11: memref<1x1x64xf32, #tpu.memory_space<vmem>>, %arg12: memref<1x64x192xbf16, #tpu.memory_space<vmem>>, %arg13: memref<1x1x192xf32, #tpu.memory_space<vmem>>, %arg14: memref<1x64x64xbf16, #tpu.memory_space<vmem>>, %arg15: memref<1x1x64xf32, #tpu.memory_space<vmem>>, %arg16: memref<1x1x64xf32, #tpu.memory_space<vmem>>, %arg17: memref<1x1x64xf32, #tpu.memory_space<vmem>>, %arg18: memref<1x64x128xbf16, #tpu.memory_space<vmem>>, %arg19: memref<1x1x128xf32, #tpu.memory_space<vmem>>, %arg20: memref<1x7x64xf32, #tpu.memory_space<vmem>>, %arg21: memref<1x1x64xf32, #tpu.memory_space<vmem>>, %arg22: memref<1x1x64xf32, #tpu.memory_space<vmem>>, %arg23: memref<1x1x64xf32, #tpu.memory_space<vmem>>, %arg24: memref<1x64x64xbf16, #tpu.memory_space<vmem>>, %arg25: memref<1x1x64xf32, #tpu.memory_space<vmem>>, %arg26: memref<1x1x64xf32, #tpu.memory_space<vmem>>, %arg27: memref<1x1x64xf32, #tpu.memory_space<vmem>>, %arg28: memref<1x64x128xbf16, #tpu.memory_space<vmem>>, %arg29: memref<1x1x128xf32, #tpu.memory_space<vmem>>, %arg30: memref<1x128x64xbf16, #tpu.memory_space<vmem>>, %arg31: memref<1x1x64xf32, #tpu.memory_space<vmem>>, %arg32: memref<1x1x64xf32, #tpu.memory_space<vmem>>, %arg33: memref<1x1x64xf32, #tpu.memory_space<vmem>>, %arg34: memref<64x41xbf16, #tpu.memory_space<vmem>>, %arg35: memref<1x41xf32, #tpu.memory_space<vmem>>, %arg36: memref<1x15x41xf32, #tpu.memory_space<vmem>>, %arg37: memref<15x64xf32, #tpu.memory_space<vmem>>, %arg38: memref<21x64xf32, #tpu.memory_space<vmem>>) attributes {dimension_semantics = [#tpu.dimension_semantics<parallel>, #tpu.dimension_semantics<arbitrary>], iteration_bounds = array<i64: 2, 2>, scalar_prefetch = 0 : i64, scratch_operands = 2 : i64, tpu.core_type = #tpu.core_type<tc>, window_params = [{transform_indices = @transform_0, window_bounds = array<i64: 1, 15, 64>}, {transform_indices = @transform_1, window_bounds = array<i64: 1, 1, 15>}, {transform_indices = @transform_2, window_bounds = array<i64: 1, 1, 64>}, {transform_indices = @transform_3, window_bounds = array<i64: 1, 1, 64>}, {transform_indices = @transform_4, window_bounds = array<i64: 1, 64, 128>}, {transform_indices = @transform_5, window_bounds = array<i64: 1, 1, 128>}, {transform_indices = @transform_6, window_bounds = array<i64: 1, 128, 64>}, {transform_indices = @transform_7, window_bounds = array<i64: 1, 1, 64>}, {transform_indices = @transform_8, window_bounds = array<i64: 1, 1, 64>}, {transform_indices = @transform_9, window_bounds = array<i64: 1, 1, 64>}, {transform_indices = @transform_10, window_bounds = array<i64: 1, 64, 192>}, {transform_indices = @transform_11, window_bounds = array<i64: 1, 1, 192>}, {transform_indices = @transform_12, window_bounds = array<i64: 1, 64, 64>}, {transform_indices = @transform_13, window_bounds = array<i64: 1, 1, 64>}, {transform_indices = @transform_14, window_bounds = array<i64: 1, 1, 64>}, {transform_indices = @transform_15, window_bounds = array<i64: 1, 1, 64>}, {transform_indices = @transform_16, window_bounds = array<i64: 1, 64, 128>}, {transform_indices = @transform_17, window_bounds = array<i64: 1, 1, 128>}, {transform_indices = @transform_18, window_bounds = array<i64: 1, 7, 64>}, {transform_indices = @transform_19, window_bounds = array<i64: 1, 1, 64>}, {transform_indices = @transform_20, window_bounds = array<i64: 1, 1, 64>}, {transform_indices = @transform_21, window_bounds = array<i64: 1, 1, 64>}, {transform_indices = @transform_22, window_bounds = array<i64: 1, 64, 64>}, {transform_indices = @transform_23, window_bounds = array<i64: 1, 1, 64>}, {transform_indices = @transform_24, window_bounds = array<i64: 1, 1, 64>}, {transform_indices = @transform_25, window_bounds = array<i64: 1, 1, 64>}, {transform_indices = @transform_26, window_bounds = array<i64: 1, 64, 128>}, {transform_indices = @transform_27, window_bounds = array<i64: 1, 1, 128>}, {transform_indices = @transform_28, window_bounds = array<i64: 1, 128, 64>}, {transform_indices = @transform_29, window_bounds = array<i64: 1, 1, 64>}, {transform_indices = @transform_30, window_bounds = array<i64: 1, 1, 64>}, {transform_indices = @transform_31, window_bounds = array<i64: 1, 1, 64>}, {pipeline_mode = #tpu.pipeline_mode<synchronous>, transform_indices = @transform_32, window_bounds = array<i64: 64, 41>}, {pipeline_mode = #tpu.pipeline_mode<synchronous>, transform_indices = @transform_33, window_bounds = array<i64: 1, 41>}, {transform_indices = @transform_34, window_bounds = array<i64: 1, 15, 41>}]} {
    %c0_i32 = arith.constant 0 : i32
    %0 = arith.cmpi eq, %arg1, %c0_i32 : i32
    %1 = arith.extui %0 : i1 to i32
    %c0_i32_0 = arith.constant 0 : i32
    %2 = arith.cmpi ne, %1, %c0_i32_0 : i32
    scf.if %2 {
      %c0_175 = arith.constant 0 : index
      %c0_176 = arith.constant 0 : index
      %c0_177 = arith.constant 0 : index
      %394 = vector.load %arg2[%c0_175, %c0_176, %c0_177] : memref<1x15x64xf32, #tpu.memory_space<vmem>>, vector<1x15x64xf32>
      %395 = vector.shape_cast %394 : vector<1x15x64xf32> to vector<15x64xf32>
      %c0_178 = arith.constant 0 : index
      %c0_179 = arith.constant 0 : index
      %396 = vector.load %arg37[%c0_178, %c0_179] : memref<15x64xf32, #tpu.memory_space<vmem>>, vector<15x64xf32>
      tpu.vector_store %arg37[%c0_178, %c0_179], %395 {strides = array<i32>} : memref<15x64xf32, #tpu.memory_space<vmem>>, vector<15x64xf32>,
    } else {
    }
    %c0 = arith.constant 0 : index
    %c0_1 = arith.constant 0 : index
    %3 = vector.load %arg37[%c0, %c0_1] : memref<15x64xf32, #tpu.memory_space<vmem>>, vector<15x64xf32>
    %c0_2 = arith.constant 0 : index
    %c0_3 = arith.constant 0 : index
    %c0_4 = arith.constant 0 : index
    %4 = vector.load %arg3[%c0_2, %c0_3, %c0_4] : memref<1x1x15xf32, #tpu.memory_space<vmem>>, vector<1x1x15xf32>
    %5 = vector.shape_cast %4 : vector<1x1x15xf32> to vector<1x15xf32>
    %c0_5 = arith.constant 0 : index
    %c0_6 = arith.constant 0 : index
    %c0_7 = arith.constant 0 : index
    %6 = vector.load %arg4[%c0_5, %c0_6, %c0_7] : memref<1x1x64xf32, #tpu.memory_space<vmem>>, vector<1x1x64xf32>
    %7 = vector.shape_cast %6 : vector<1x1x64xf32> to vector<1x64xf32>
    %c0_8 = arith.constant 0 : index
    %c0_9 = arith.constant 0 : index
    %c0_10 = arith.constant 0 : index
    %8 = vector.load %arg5[%c0_8, %c0_9, %c0_10] : memref<1x1x64xf32, #tpu.memory_space<vmem>>, vector<1x1x64xf32>
    %9 = vector.shape_cast %8 : vector<1x1x64xf32> to vector<1x64xf32>
    %cst = arith.constant dense<0.000000e+00> : vector<15xf32>
    %10 = vector.multi_reduction <add>, %3, %cst [1] : vector<15x64xf32> to vector<15xf32>
    %11 = vector.shape_cast %10 : vector<15xf32> to vector<15x1xf32>
    %cst_11 = arith.constant 6.400000e+01 : f32
    %12 = vector.broadcast %cst_11 : f32 to vector<15x1xf32>
    %13 = arith.divf %11, %12 : vector<15x1xf32>
    %14 = vector.broadcast %13 : vector<15x1xf32> to vector<15x64xf32>
    %15 = arith.subf %3, %14 : vector<15x64xf32>
    %16 = arith.mulf %15, %15 : vector<15x64xf32>
    %cst_12 = arith.constant dense<0.000000e+00> : vector<15xf32>
    %17 = vector.multi_reduction <add>, %16, %cst_12 [1] : vector<15x64xf32> to vector<15xf32>
    %18 = vector.shape_cast %17 : vector<15xf32> to vector<15x1xf32>
    %cst_13 = arith.constant 6.400000e+01 : f32
    %19 = vector.broadcast %cst_13 : f32 to vector<15x1xf32>
    %20 = arith.divf %18, %19 : vector<15x1xf32>
    %cst_14 = arith.constant 9.99999974E-6 : f32
    %21 = vector.broadcast %cst_14 : f32 to vector<15x1xf32>
    %22 = arith.addf %20, %21 : vector<15x1xf32>
    %23 = math.rsqrt %22 : vector<15x1xf32>
    %24 = vector.broadcast %23 : vector<15x1xf32> to vector<15x64xf32>
    %25 = arith.mulf %15, %24 : vector<15x64xf32>
    %26 = vector.broadcast %7 : vector<1x64xf32> to vector<15x64xf32>
    %27 = arith.mulf %25, %26 : vector<15x64xf32>
    %28 = vector.broadcast %9 : vector<1x64xf32> to vector<15x64xf32>
    %29 = arith.addf %27, %28 : vector<15x64xf32>
    %c0_15 = arith.constant 0 : index
    %c0_16 = arith.constant 0 : index
    %c0_17 = arith.constant 0 : index
    %30 = vector.load %arg6[%c0_15, %c0_16, %c0_17] : memref<1x64x128xbf16, #tpu.memory_space<vmem>>, vector<1x64x128xbf16>
    %31 = vector.shape_cast %30 : vector<1x64x128xbf16> to vector<64x128xbf16>
    %c0_18 = arith.constant 0 : index
    %c0_19 = arith.constant 0 : index
    %c0_20 = arith.constant 0 : index
    %32 = vector.load %arg7[%c0_18, %c0_19, %c0_20] : memref<1x1x128xf32, #tpu.memory_space<vmem>>, vector<1x1x128xf32>
    %33 = vector.shape_cast %32 : vector<1x1x128xf32> to vector<1x128xf32>
    %34 = arith.truncf %29 : vector<15x64xf32> to vector<15x64xbf16>
    %cst_21 = arith.constant dense<0.000000e+00> : vector<15x128xf32>
    %35 = tpu.matmul %34, %31, %cst_21 {dimension_numbers = #tpu.dot_dimension_numbers<[1], [0], [0], [1], [0, 0, 1, 1], [], []>} : vector<15x64xbf16>, vector<64x128xbf16>, vector<15x128xf32> -> vector<15x128xf32>
    %36 = vector.broadcast %33 : vector<1x128xf32> to vector<15x128xf32>
    %37 = arith.addf %35, %36 : vector<15x128xf32>
    %38 = arith.negf %37 : vector<15x128xf32>
    %39 = math.exp %38 : vector<15x128xf32>
    %cst_22 = arith.constant 1.000000e+00 : f32
    %40 = vector.broadcast %cst_22 : f32 to vector<15x128xf32>
    %41 = arith.addf %40, %39 : vector<15x128xf32>
    %42 = arith.divf %40, %41 : vector<15x128xf32>
    %43 = arith.mulf %37, %42 : vector<15x128xf32>
    %c0_23 = arith.constant 0 : index
    %c0_24 = arith.constant 0 : index
    %c0_25 = arith.constant 0 : index
    %44 = vector.load %arg8[%c0_23, %c0_24, %c0_25] : memref<1x128x64xbf16, #tpu.memory_space<vmem>>, vector<1x128x64xbf16>
    %45 = vector.shape_cast %44 : vector<1x128x64xbf16> to vector<128x64xbf16>
    %c0_26 = arith.constant 0 : index
    %c0_27 = arith.constant 0 : index
    %c0_28 = arith.constant 0 : index
    %46 = vector.load %arg9[%c0_26, %c0_27, %c0_28] : memref<1x1x64xf32, #tpu.memory_space<vmem>>, vector<1x1x64xf32>
    %47 = vector.shape_cast %46 : vector<1x1x64xf32> to vector<1x64xf32>
    %48 = arith.truncf %43 : vector<15x128xf32> to vector<15x128xbf16>
    %cst_29 = arith.constant dense<0.000000e+00> : vector<15x64xf32>
    %49 = tpu.matmul %48, %45, %cst_29 {dimension_numbers = #tpu.dot_dimension_numbers<[1], [0], [0], [1], [0, 0, 1, 1], [], []>} : vector<15x128xbf16>, vector<128x64xbf16>, vector<15x64xf32> -> vector<15x64xf32>
    %50 = vector.broadcast %47 : vector<1x64xf32> to vector<15x64xf32>
    %51 = arith.addf %49, %50 : vector<15x64xf32>
    %cst_30 = arith.constant 5.000000e-01 : f32
    %52 = vector.broadcast %cst_30 : f32 to vector<15x64xf32>
    %53 = arith.mulf %52, %51 : vector<15x64xf32>
    %54 = arith.addf %3, %53 : vector<15x64xf32>
    %c0_31 = arith.constant 0 : index
    %c0_32 = arith.constant 0 : index
    %c0_33 = arith.constant 0 : index
    %55 = vector.load %arg10[%c0_31, %c0_32, %c0_33] : memref<1x1x64xf32, #tpu.memory_space<vmem>>, vector<1x1x64xf32>
    %56 = vector.shape_cast %55 : vector<1x1x64xf32> to vector<1x64xf32>
    %c0_34 = arith.constant 0 : index
    %c0_35 = arith.constant 0 : index
    %c0_36 = arith.constant 0 : index
    %57 = vector.load %arg11[%c0_34, %c0_35, %c0_36] : memref<1x1x64xf32, #tpu.memory_space<vmem>>, vector<1x1x64xf32>
    %58 = vector.shape_cast %57 : vector<1x1x64xf32> to vector<1x64xf32>
    %cst_37 = arith.constant dense<0.000000e+00> : vector<15xf32>
    %59 = vector.multi_reduction <add>, %54, %cst_37 [1] : vector<15x64xf32> to vector<15xf32>
    %60 = vector.shape_cast %59 : vector<15xf32> to vector<15x1xf32>
    %cst_38 = arith.constant 6.400000e+01 : f32
    %61 = vector.broadcast %cst_38 : f32 to vector<15x1xf32>
    %62 = arith.divf %60, %61 : vector<15x1xf32>
    %63 = vector.broadcast %62 : vector<15x1xf32> to vector<15x64xf32>
    %64 = arith.subf %54, %63 : vector<15x64xf32>
    %65 = arith.mulf %64, %64 : vector<15x64xf32>
    %cst_39 = arith.constant dense<0.000000e+00> : vector<15xf32>
    %66 = vector.multi_reduction <add>, %65, %cst_39 [1] : vector<15x64xf32> to vector<15xf32>
    %67 = vector.shape_cast %66 : vector<15xf32> to vector<15x1xf32>
    %cst_40 = arith.constant 6.400000e+01 : f32
    %68 = vector.broadcast %cst_40 : f32 to vector<15x1xf32>
    %69 = arith.divf %67, %68 : vector<15x1xf32>
    %cst_41 = arith.constant 9.99999974E-6 : f32
    %70 = vector.broadcast %cst_41 : f32 to vector<15x1xf32>
    %71 = arith.addf %69, %70 : vector<15x1xf32>
    %72 = math.rsqrt %71 : vector<15x1xf32>
    %73 = vector.broadcast %72 : vector<15x1xf32> to vector<15x64xf32>
    %74 = arith.mulf %64, %73 : vector<15x64xf32>
    %75 = vector.broadcast %56 : vector<1x64xf32> to vector<15x64xf32>
    %76 = arith.mulf %74, %75 : vector<15x64xf32>
    %77 = vector.broadcast %58 : vector<1x64xf32> to vector<15x64xf32>
    %78 = arith.addf %76, %77 : vector<15x64xf32>
    %c0_42 = arith.constant 0 : index
    %c0_43 = arith.constant 0 : index
    %c0_44 = arith.constant 0 : index
    %79 = vector.load %arg12[%c0_42, %c0_43, %c0_44] : memref<1x64x192xbf16, #tpu.memory_space<vmem>>, vector<1x64x192xbf16>
    %80 = vector.shape_cast %79 : vector<1x64x192xbf16> to vector<64x192xbf16>
    %c0_45 = arith.constant 0 : index
    %c0_46 = arith.constant 0 : index
    %c0_47 = arith.constant 0 : index
    %81 = vector.load %arg13[%c0_45, %c0_46, %c0_47] : memref<1x1x192xf32, #tpu.memory_space<vmem>>, vector<1x1x192xf32>
    %82 = vector.shape_cast %81 : vector<1x1x192xf32> to vector<1x192xf32>
    %83 = arith.truncf %78 : vector<15x64xf32> to vector<15x64xbf16>
    %cst_48 = arith.constant dense<0.000000e+00> : vector<15x192xf32>
    %84 = tpu.matmul %83, %80, %cst_48 {dimension_numbers = #tpu.dot_dimension_numbers<[1], [0], [0], [1], [0, 0, 1, 1], [], []>} : vector<15x64xbf16>, vector<64x192xbf16>, vector<15x192xf32> -> vector<15x192xf32>
    %85 = vector.broadcast %82 : vector<1x192xf32> to vector<15x192xf32>
    %86 = arith.addf %84, %85 : vector<15x192xf32>
    %87 = vector.extract_strided_slice %86 {offsets = [0, 0], sizes = [15, 16], strides = [1, 1]} : vector<15x192xf32> to vector<15x16xf32>
    %88 = vector.extract_strided_slice %86 {offsets = [0, 64], sizes = [15, 16], strides = [1, 1]} : vector<15x192xf32> to vector<15x16xf32>
    %89 = vector.extract_strided_slice %86 {offsets = [0, 128], sizes = [15, 16], strides = [1, 1]} : vector<15x192xf32> to vector<15x16xf32>
    %90 = arith.truncf %87 : vector<15x16xf32> to vector<15x16xbf16>
    %91 = tpu.transpose %88, [1, 0] : vector<15x16xf32> -> vector<16x15xf32>
    %92 = arith.truncf %91 : vector<16x15xf32> to vector<16x15xbf16>
    %cst_49 = arith.constant dense<0.000000e+00> : vector<15x15xf32>
    %93 = tpu.matmul %90, %92, %cst_49 {dimension_numbers = #tpu.dot_dimension_numbers<[1], [0], [0], [1], [0, 0, 1, 1], [], []>} : vector<15x16xbf16>, vector<16x15xbf16>, vector<15x15xf32> -> vector<15x15xf32>
    %cst_50 = arith.constant 2.500000e-01 : f32
    %94 = vector.broadcast %cst_50 : f32 to vector<15x15xf32>
    %95 = arith.mulf %93, %94 : vector<15x15xf32>
    %96 = vector.broadcast %5 : vector<1x15xf32> to vector<15x15xf32>
    %97 = arith.addf %95, %96 : vector<15x15xf32>
    %cst_51 = arith.constant dense<0xFF800000> : vector<15xf32>
    %98 = vector.multi_reduction <maximumf>, %97, %cst_51 [1] : vector<15x15xf32> to vector<15xf32>
    %99 = vector.shape_cast %98 : vector<15xf32> to vector<15x1xf32>
    %100 = vector.broadcast %99 : vector<15x1xf32> to vector<15x15xf32>
    %101 = arith.subf %97, %100 : vector<15x15xf32>
    %102 = math.exp %101 : vector<15x15xf32>
    %103 = arith.truncf %102 : vector<15x15xf32> to vector<15x15xbf16>
    %104 = arith.truncf %89 : vector<15x16xf32> to vector<15x16xbf16>
    %cst_52 = arith.constant dense<0.000000e+00> : vector<15x16xf32>
    %105 = tpu.matmul %103, %104, %cst_52 {dimension_numbers = #tpu.dot_dimension_numbers<[1], [0], [0], [1], [0, 0, 1, 1], [], []>} : vector<15x15xbf16>, vector<15x16xbf16>, vector<15x16xf32> -> vector<15x16xf32>
    %cst_53 = arith.constant dense<0.000000e+00> : vector<15xf32>
    %106 = vector.multi_reduction <add>, %102, %cst_53 [1] : vector<15x15xf32> to vector<15xf32>
    %107 = vector.shape_cast %106 : vector<15xf32> to vector<15x1xf32>
    %108 = tpu.reciprocal %107 {approx = true} : vector<15x1xf32> -> vector<15x1xf32>
    %109 = vector.broadcast %108 : vector<15x1xf32> to vector<15x16xf32>
    %110 = arith.mulf %105, %109 : vector<15x16xf32>
    %111 = vector.extract_strided_slice %86 {offsets = [0, 16], sizes = [15, 16], strides = [1, 1]} : vector<15x192xf32> to vector<15x16xf32>
    %112 = vector.extract_strided_slice %86 {offsets = [0, 80], sizes = [15, 16], strides = [1, 1]} : vector<15x192xf32> to vector<15x16xf32>
    %113 = vector.extract_strided_slice %86 {offsets = [0, 144], sizes = [15, 16], strides = [1, 1]} : vector<15x192xf32> to vector<15x16xf32>
    %114 = arith.truncf %111 : vector<15x16xf32> to vector<15x16xbf16>
    %115 = tpu.transpose %112, [1, 0] : vector<15x16xf32> -> vector<16x15xf32>
    %116 = arith.truncf %115 : vector<16x15xf32> to vector<16x15xbf16>
    %cst_54 = arith.constant dense<0.000000e+00> : vector<15x15xf32>
    %117 = tpu.matmul %114, %116, %cst_54 {dimension_numbers = #tpu.dot_dimension_numbers<[1], [0], [0], [1], [0, 0, 1, 1], [], []>} : vector<15x16xbf16>, vector<16x15xbf16>, vector<15x15xf32> -> vector<15x15xf32>
    %cst_55 = arith.constant 2.500000e-01 : f32
    %118 = vector.broadcast %cst_55 : f32 to vector<15x15xf32>
    %119 = arith.mulf %117, %118 : vector<15x15xf32>
    %120 = vector.broadcast %5 : vector<1x15xf32> to vector<15x15xf32>
    %121 = arith.addf %119, %120 : vector<15x15xf32>
    %cst_56 = arith.constant dense<0xFF800000> : vector<15xf32>
    %122 = vector.multi_reduction <maximumf>, %121, %cst_56 [1] : vector<15x15xf32> to vector<15xf32>
    %123 = vector.shape_cast %122 : vector<15xf32> to vector<15x1xf32>
    %124 = vector.broadcast %123 : vector<15x1xf32> to vector<15x15xf32>
    %125 = arith.subf %121, %124 : vector<15x15xf32>
    %126 = math.exp %125 : vector<15x15xf32>
    %127 = arith.truncf %126 : vector<15x15xf32> to vector<15x15xbf16>
    %128 = arith.truncf %113 : vector<15x16xf32> to vector<15x16xbf16>
    %cst_57 = arith.constant dense<0.000000e+00> : vector<15x16xf32>
    %129 = tpu.matmul %127, %128, %cst_57 {dimension_numbers = #tpu.dot_dimension_numbers<[1], [0], [0], [1], [0, 0, 1, 1], [], []>} : vector<15x15xbf16>, vector<15x16xbf16>, vector<15x16xf32> -> vector<15x16xf32>
    %cst_58 = arith.constant dense<0.000000e+00> : vector<15xf32>
    %130 = vector.multi_reduction <add>, %126, %cst_58 [1] : vector<15x15xf32> to vector<15xf32>
    %131 = vector.shape_cast %130 : vector<15xf32> to vector<15x1xf32>
    %132 = tpu.reciprocal %131 {approx = true} : vector<15x1xf32> -> vector<15x1xf32>
    %133 = vector.broadcast %132 : vector<15x1xf32> to vector<15x16xf32>
    %134 = arith.mulf %129, %133 : vector<15x16xf32>
    %135 = vector.extract_strided_slice %86 {offsets = [0, 32], sizes = [15, 16], strides = [1, 1]} : vector<15x192xf32> to vector<15x16xf32>
    %136 = vector.extract_strided_slice %86 {offsets = [0, 96], sizes = [15, 16], strides = [1, 1]} : vector<15x192xf32> to vector<15x16xf32>
    %137 = vector.extract_strided_slice %86 {offsets = [0, 160], sizes = [15, 16], strides = [1, 1]} : vector<15x192xf32> to vector<15x16xf32>
    %138 = arith.truncf %135 : vector<15x16xf32> to vector<15x16xbf16>
    %139 = tpu.transpose %136, [1, 0] : vector<15x16xf32> -> vector<16x15xf32>
    %140 = arith.truncf %139 : vector<16x15xf32> to vector<16x15xbf16>
    %cst_59 = arith.constant dense<0.000000e+00> : vector<15x15xf32>
    %141 = tpu.matmul %138, %140, %cst_59 {dimension_numbers = #tpu.dot_dimension_numbers<[1], [0], [0], [1], [0, 0, 1, 1], [], []>} : vector<15x16xbf16>, vector<16x15xbf16>, vector<15x15xf32> -> vector<15x15xf32>
    %cst_60 = arith.constant 2.500000e-01 : f32
    %142 = vector.broadcast %cst_60 : f32 to vector<15x15xf32>
    %143 = arith.mulf %141, %142 : vector<15x15xf32>
    %144 = vector.broadcast %5 : vector<1x15xf32> to vector<15x15xf32>
    %145 = arith.addf %143, %144 : vector<15x15xf32>
    %cst_61 = arith.constant dense<0xFF800000> : vector<15xf32>
    %146 = vector.multi_reduction <maximumf>, %145, %cst_61 [1] : vector<15x15xf32> to vector<15xf32>
    %147 = vector.shape_cast %146 : vector<15xf32> to vector<15x1xf32>
    %148 = vector.broadcast %147 : vector<15x1xf32> to vector<15x15xf32>
    %149 = arith.subf %145, %148 : vector<15x15xf32>
    %150 = math.exp %149 : vector<15x15xf32>
    %151 = arith.truncf %150 : vector<15x15xf32> to vector<15x15xbf16>
    %152 = arith.truncf %137 : vector<15x16xf32> to vector<15x16xbf16>
    %cst_62 = arith.constant dense<0.000000e+00> : vector<15x16xf32>
    %153 = tpu.matmul %151, %152, %cst_62 {dimension_numbers = #tpu.dot_dimension_numbers<[1], [0], [0], [1], [0, 0, 1, 1], [], []>} : vector<15x15xbf16>, vector<15x16xbf16>, vector<15x16xf32> -> vector<15x16xf32>
    %cst_63 = arith.constant dense<0.000000e+00> : vector<15xf32>
    %154 = vector.multi_reduction <add>, %150, %cst_63 [1] : vector<15x15xf32> to vector<15xf32>
    %155 = vector.shape_cast %154 : vector<15xf32> to vector<15x1xf32>
    %156 = tpu.reciprocal %155 {approx = true} : vector<15x1xf32> -> vector<15x1xf32>
    %157 = vector.broadcast %156 : vector<15x1xf32> to vector<15x16xf32>
    %158 = arith.mulf %153, %157 : vector<15x16xf32>
    %159 = vector.extract_strided_slice %86 {offsets = [0, 48], sizes = [15, 16], strides = [1, 1]} : vector<15x192xf32> to vector<15x16xf32>
    %160 = vector.extract_strided_slice %86 {offsets = [0, 112], sizes = [15, 16], strides = [1, 1]} : vector<15x192xf32> to vector<15x16xf32>
    %161 = vector.extract_strided_slice %86 {offsets = [0, 176], sizes = [15, 16], strides = [1, 1]} : vector<15x192xf32> to vector<15x16xf32>
    %162 = arith.truncf %159 : vector<15x16xf32> to vector<15x16xbf16>
    %163 = tpu.transpose %160, [1, 0] : vector<15x16xf32> -> vector<16x15xf32>
    %164 = arith.truncf %163 : vector<16x15xf32> to vector<16x15xbf16>
    %cst_64 = arith.constant dense<0.000000e+00> : vector<15x15xf32>
    %165 = tpu.matmul %162, %164, %cst_64 {dimension_numbers = #tpu.dot_dimension_numbers<[1], [0], [0], [1], [0, 0, 1, 1], [], []>} : vector<15x16xbf16>, vector<16x15xbf16>, vector<15x15xf32> -> vector<15x15xf32>
    %cst_65 = arith.constant 2.500000e-01 : f32
    %166 = vector.broadcast %cst_65 : f32 to vector<15x15xf32>
    %167 = arith.mulf %165, %166 : vector<15x15xf32>
    %168 = vector.broadcast %5 : vector<1x15xf32> to vector<15x15xf32>
    %169 = arith.addf %167, %168 : vector<15x15xf32>
    %cst_66 = arith.constant dense<0xFF800000> : vector<15xf32>
    %170 = vector.multi_reduction <maximumf>, %169, %cst_66 [1] : vector<15x15xf32> to vector<15xf32>
    %171 = vector.shape_cast %170 : vector<15xf32> to vector<15x1xf32>
    %172 = vector.broadcast %171 : vector<15x1xf32> to vector<15x15xf32>
    %173 = arith.subf %169, %172 : vector<15x15xf32>
    %174 = math.exp %173 : vector<15x15xf32>
    %175 = arith.truncf %174 : vector<15x15xf32> to vector<15x15xbf16>
    %176 = arith.truncf %161 : vector<15x16xf32> to vector<15x16xbf16>
    %cst_67 = arith.constant dense<0.000000e+00> : vector<15x16xf32>
    %177 = tpu.matmul %175, %176, %cst_67 {dimension_numbers = #tpu.dot_dimension_numbers<[1], [0], [0], [1], [0, 0, 1, 1], [], []>} : vector<15x15xbf16>, vector<15x16xbf16>, vector<15x16xf32> -> vector<15x16xf32>
    %cst_68 = arith.constant dense<0.000000e+00> : vector<15xf32>
    %178 = vector.multi_reduction <add>, %174, %cst_68 [1] : vector<15x15xf32> to vector<15xf32>
    %179 = vector.shape_cast %178 : vector<15xf32> to vector<15x1xf32>
    %180 = tpu.reciprocal %179 {approx = true} : vector<15x1xf32> -> vector<15x1xf32>
    %181 = vector.broadcast %180 : vector<15x1xf32> to vector<15x16xf32>
    %182 = arith.mulf %177, %181 : vector<15x16xf32>
    %183 = tpu.concatenate %110, %134, %158, %182 in 1 : vector<15x16xf32>, vector<15x16xf32>, vector<15x16xf32>, vector<15x16xf32> -> vector<15x64xf32>
    %c0_69 = arith.constant 0 : index
    %c0_70 = arith.constant 0 : index
    %c0_71 = arith.constant 0 : index
    %184 = vector.load %arg14[%c0_69, %c0_70, %c0_71] : memref<1x64x64xbf16, #tpu.memory_space<vmem>>, vector<1x64x64xbf16>
    %185 = vector.shape_cast %184 : vector<1x64x64xbf16> to vector<64x64xbf16>
    %c0_72 = arith.constant 0 : index
    %c0_73 = arith.constant 0 : index
    %c0_74 = arith.constant 0 : index
    %186 = vector.load %arg15[%c0_72, %c0_73, %c0_74] : memref<1x1x64xf32, #tpu.memory_space<vmem>>, vector<1x1x64xf32>
    %187 = vector.shape_cast %186 : vector<1x1x64xf32> to vector<1x64xf32>
    %188 = arith.truncf %183 : vector<15x64xf32> to vector<15x64xbf16>
    %cst_75 = arith.constant dense<0.000000e+00> : vector<15x64xf32>
    %189 = tpu.matmul %188, %185, %cst_75 {dimension_numbers = #tpu.dot_dimension_numbers<[1], [0], [0], [1], [0, 0, 1, 1], [], []>} : vector<15x64xbf16>, vector<64x64xbf16>, vector<15x64xf32> -> vector<15x64xf32>
    %190 = vector.broadcast %187 : vector<1x64xf32> to vector<15x64xf32>
    %191 = arith.addf %189, %190 : vector<15x64xf32>
    %192 = arith.addf %54, %191 : vector<15x64xf32>
    %c0_76 = arith.constant 0 : index
    %c0_77 = arith.constant 0 : index
    %c0_78 = arith.constant 0 : index
    %193 = vector.load %arg16[%c0_76, %c0_77, %c0_78] : memref<1x1x64xf32, #tpu.memory_space<vmem>>, vector<1x1x64xf32>
    %194 = vector.shape_cast %193 : vector<1x1x64xf32> to vector<1x64xf32>
    %c0_79 = arith.constant 0 : index
    %c0_80 = arith.constant 0 : index
    %c0_81 = arith.constant 0 : index
    %195 = vector.load %arg17[%c0_79, %c0_80, %c0_81] : memref<1x1x64xf32, #tpu.memory_space<vmem>>, vector<1x1x64xf32>
    %196 = vector.shape_cast %195 : vector<1x1x64xf32> to vector<1x64xf32>
    %cst_82 = arith.constant dense<0.000000e+00> : vector<15xf32>
    %197 = vector.multi_reduction <add>, %192, %cst_82 [1] : vector<15x64xf32> to vector<15xf32>
    %198 = vector.shape_cast %197 : vector<15xf32> to vector<15x1xf32>
    %cst_83 = arith.constant 6.400000e+01 : f32
    %199 = vector.broadcast %cst_83 : f32 to vector<15x1xf32>
    %200 = arith.divf %198, %199 : vector<15x1xf32>
    %201 = vector.broadcast %200 : vector<15x1xf32> to vector<15x64xf32>
    %202 = arith.subf %192, %201 : vector<15x64xf32>
    %203 = arith.mulf %202, %202 : vector<15x64xf32>
    %cst_84 = arith.constant dense<0.000000e+00> : vector<15xf32>
    %204 = vector.multi_reduction <add>, %203, %cst_84 [1] : vector<15x64xf32> to vector<15xf32>
    %205 = vector.shape_cast %204 : vector<15xf32> to vector<15x1xf32>
    %cst_85 = arith.constant 6.400000e+01 : f32
    %206 = vector.broadcast %cst_85 : f32 to vector<15x1xf32>
    %207 = arith.divf %205, %206 : vector<15x1xf32>
    %cst_86 = arith.constant 9.99999974E-6 : f32
    %208 = vector.broadcast %cst_86 : f32 to vector<15x1xf32>
    %209 = arith.addf %207, %208 : vector<15x1xf32>
    %210 = math.rsqrt %209 : vector<15x1xf32>
    %211 = vector.broadcast %210 : vector<15x1xf32> to vector<15x64xf32>
    %212 = arith.mulf %202, %211 : vector<15x64xf32>
    %213 = vector.broadcast %194 : vector<1x64xf32> to vector<15x64xf32>
    %214 = arith.mulf %212, %213 : vector<15x64xf32>
    %215 = vector.broadcast %196 : vector<1x64xf32> to vector<15x64xf32>
    %216 = arith.addf %214, %215 : vector<15x64xf32>
    %c0_87 = arith.constant 0 : index
    %c0_88 = arith.constant 0 : index
    %c0_89 = arith.constant 0 : index
    %217 = vector.load %arg18[%c0_87, %c0_88, %c0_89] : memref<1x64x128xbf16, #tpu.memory_space<vmem>>, vector<1x64x128xbf16>
    %218 = vector.shape_cast %217 : vector<1x64x128xbf16> to vector<64x128xbf16>
    %c0_90 = arith.constant 0 : index
    %c0_91 = arith.constant 0 : index
    %c0_92 = arith.constant 0 : index
    %219 = vector.load %arg19[%c0_90, %c0_91, %c0_92] : memref<1x1x128xf32, #tpu.memory_space<vmem>>, vector<1x1x128xf32>
    %220 = vector.shape_cast %219 : vector<1x1x128xf32> to vector<1x128xf32>
    %221 = arith.truncf %216 : vector<15x64xf32> to vector<15x64xbf16>
    %cst_93 = arith.constant dense<0.000000e+00> : vector<15x128xf32>
    %222 = tpu.matmul %221, %218, %cst_93 {dimension_numbers = #tpu.dot_dimension_numbers<[1], [0], [0], [1], [0, 0, 1, 1], [], []>} : vector<15x64xbf16>, vector<64x128xbf16>, vector<15x128xf32> -> vector<15x128xf32>
    %223 = vector.broadcast %220 : vector<1x128xf32> to vector<15x128xf32>
    %224 = arith.addf %222, %223 : vector<15x128xf32>
    %225 = vector.extract_strided_slice %224 {offsets = [0, 0], sizes = [15, 64], strides = [1, 1]} : vector<15x128xf32> to vector<15x64xf32>
    %226 = vector.extract_strided_slice %224 {offsets = [0, 64], sizes = [15, 64], strides = [1, 1]} : vector<15x128xf32> to vector<15x64xf32>
    %227 = arith.negf %226 : vector<15x64xf32>
    %228 = math.exp %227 : vector<15x64xf32>
    %cst_94 = arith.constant 1.000000e+00 : f32
    %229 = vector.broadcast %cst_94 : f32 to vector<15x64xf32>
    %230 = arith.addf %229, %228 : vector<15x64xf32>
    %231 = arith.divf %229, %230 : vector<15x64xf32>
    %232 = arith.mulf %225, %231 : vector<15x64xf32>
    %cst_95 = arith.constant 0.000000e+00 : f32
    %233 = vector.broadcast %cst_95 : f32 to vector<21x64xf32>
    %c0_96 = arith.constant 0 : index
    %c0_97 = arith.constant 0 : index
    %234 = vector.load %arg38[%c0_96, %c0_97] : memref<21x64xf32, #tpu.memory_space<vmem>>, vector<21x64xf32>
    tpu.vector_store %arg38[%c0_96, %c0_97], %233 {strides = array<i32>} : memref<21x64xf32, #tpu.memory_space<vmem>>, vector<21x64xf32>,
    %c3 = arith.constant 3 : index
    %c0_98 = arith.constant 0 : index
    %235 = vector.load %arg38[%c3, %c0_98] : memref<21x64xf32, #tpu.memory_space<vmem>>, vector<15x64xf32>
    tpu.vector_store %arg38[%c3, %c0_98], %232 {strides = array<i32>} : memref<21x64xf32, #tpu.memory_space<vmem>>, vector<15x64xf32>,
    %c0_99 = arith.constant 0 : index
    %c0_100 = arith.constant 0 : index
    %c0_101 = arith.constant 0 : index
    %236 = vector.load %arg20[%c0_99, %c0_100, %c0_101] : memref<1x7x64xf32, #tpu.memory_space<vmem>>, vector<1x7x64xf32>
    %237 = vector.shape_cast %236 : vector<1x7x64xf32> to vector<7x64xf32>
    %cst_102 = arith.constant 0.000000e+00 : f32
    %238 = vector.broadcast %cst_102 : f32 to vector<15x64xf32>
    %c0_103 = arith.constant 0 : index
    %c0_104 = arith.constant 0 : index
    %239 = vector.load %arg38[%c0_103, %c0_104] : memref<21x64xf32, #tpu.memory_space<vmem>>, vector<15x64xf32>
    %240 = vector.extract_strided_slice %237 {offsets = [0, 0], sizes = [1, 64], strides = [1, 1]} : vector<7x64xf32> to vector<1x64xf32>
    %241 = vector.broadcast %240 : vector<1x64xf32> to vector<15x64xf32>
    %242 = arith.mulf %239, %241 : vector<15x64xf32>
    %243 = arith.addf %238, %242 : vector<15x64xf32>
    %c1 = arith.constant 1 : index
    %c0_105 = arith.constant 0 : index
    %244 = vector.load %arg38[%c1, %c0_105] : memref<21x64xf32, #tpu.memory_space<vmem>>, vector<15x64xf32>
    %245 = vector.extract_strided_slice %237 {offsets = [1, 0], sizes = [1, 64], strides = [1, 1]} : vector<7x64xf32> to vector<1x64xf32>
    %246 = vector.broadcast %245 : vector<1x64xf32> to vector<15x64xf32>
    %247 = arith.mulf %244, %246 : vector<15x64xf32>
    %248 = arith.addf %243, %247 : vector<15x64xf32>
    %c2 = arith.constant 2 : index
    %c0_106 = arith.constant 0 : index
    %249 = vector.load %arg38[%c2, %c0_106] : memref<21x64xf32, #tpu.memory_space<vmem>>, vector<15x64xf32>
    %250 = vector.extract_strided_slice %237 {offsets = [2, 0], sizes = [1, 64], strides = [1, 1]} : vector<7x64xf32> to vector<1x64xf32>
    %251 = vector.broadcast %250 : vector<1x64xf32> to vector<15x64xf32>
    %252 = arith.mulf %249, %251 : vector<15x64xf32>
    %253 = arith.addf %248, %252 : vector<15x64xf32>
    %c3_107 = arith.constant 3 : index
    %c0_108 = arith.constant 0 : index
    %254 = vector.load %arg38[%c3_107, %c0_108] : memref<21x64xf32, #tpu.memory_space<vmem>>, vector<15x64xf32>
    %255 = vector.extract_strided_slice %237 {offsets = [3, 0], sizes = [1, 64], strides = [1, 1]} : vector<7x64xf32> to vector<1x64xf32>
    %256 = vector.broadcast %255 : vector<1x64xf32> to vector<15x64xf32>
    %257 = arith.mulf %254, %256 : vector<15x64xf32>
    %258 = arith.addf %253, %257 : vector<15x64xf32>
    %c4 = arith.constant 4 : index
    %c0_109 = arith.constant 0 : index
    %259 = vector.load %arg38[%c4, %c0_109] : memref<21x64xf32, #tpu.memory_space<vmem>>, vector<15x64xf32>
    %260 = vector.extract_strided_slice %237 {offsets = [4, 0], sizes = [1, 64], strides = [1, 1]} : vector<7x64xf32> to vector<1x64xf32>
    %261 = vector.broadcast %260 : vector<1x64xf32> to vector<15x64xf32>
    %262 = arith.mulf %259, %261 : vector<15x64xf32>
    %263 = arith.addf %258, %262 : vector<15x64xf32>
    %c5 = arith.constant 5 : index
    %c0_110 = arith.constant 0 : index
    %264 = vector.load %arg38[%c5, %c0_110] : memref<21x64xf32, #tpu.memory_space<vmem>>, vector<15x64xf32>
    %265 = vector.extract_strided_slice %237 {offsets = [5, 0], sizes = [1, 64], strides = [1, 1]} : vector<7x64xf32> to vector<1x64xf32>
    %266 = vector.broadcast %265 : vector<1x64xf32> to vector<15x64xf32>
    %267 = arith.mulf %264, %266 : vector<15x64xf32>
    %268 = arith.addf %263, %267 : vector<15x64xf32>
    %c6 = arith.constant 6 : index
    %c0_111 = arith.constant 0 : index
    %269 = vector.load %arg38[%c6, %c0_111] : memref<21x64xf32, #tpu.memory_space<vmem>>, vector<15x64xf32>
    %270 = vector.extract_strided_slice %237 {offsets = [6, 0], sizes = [1, 64], strides = [1, 1]} : vector<7x64xf32> to vector<1x64xf32>
    %271 = vector.broadcast %270 : vector<1x64xf32> to vector<15x64xf32>
    %272 = arith.mulf %269, %271 : vector<15x64xf32>
    %273 = arith.addf %268, %272 : vector<15x64xf32>
    %c0_112 = arith.constant 0 : index
    %c0_113 = arith.constant 0 : index
    %c0_114 = arith.constant 0 : index
    %274 = vector.load %arg21[%c0_112, %c0_113, %c0_114] : memref<1x1x64xf32, #tpu.memory_space<vmem>>, vector<1x1x64xf32>
    %275 = vector.shape_cast %274 : vector<1x1x64xf32> to vector<1x64xf32>
    %276 = vector.broadcast %275 : vector<1x64xf32> to vector<15x64xf32>
    %277 = arith.addf %273, %276 : vector<15x64xf32>
    %c0_115 = arith.constant 0 : index
    %c0_116 = arith.constant 0 : index
    %c0_117 = arith.constant 0 : index
    %278 = vector.load %arg22[%c0_115, %c0_116, %c0_117] : memref<1x1x64xf32, #tpu.memory_space<vmem>>, vector<1x1x64xf32>
    %279 = vector.shape_cast %278 : vector<1x1x64xf32> to vector<1x64xf32>
    %c0_118 = arith.constant 0 : index
    %c0_119 = arith.constant 0 : index
    %c0_120 = arith.constant 0 : index
    %280 = vector.load %arg23[%c0_118, %c0_119, %c0_120] : memref<1x1x64xf32, #tpu.memory_space<vmem>>, vector<1x1x64xf32>
    %281 = vector.shape_cast %280 : vector<1x1x64xf32> to vector<1x64xf32>
    %cst_121 = arith.constant dense<0.000000e+00> : vector<15xf32>
    %282 = vector.multi_reduction <add>, %277, %cst_121 [1] : vector<15x64xf32> to vector<15xf32>
    %283 = vector.shape_cast %282 : vector<15xf32> to vector<15x1xf32>
    %cst_122 = arith.constant 6.400000e+01 : f32
    %284 = vector.broadcast %cst_122 : f32 to vector<15x1xf32>
    %285 = arith.divf %283, %284 : vector<15x1xf32>
    %286 = vector.broadcast %285 : vector<15x1xf32> to vector<15x64xf32>
    %287 = arith.subf %277, %286 : vector<15x64xf32>
    %288 = arith.mulf %287, %287 : vector<15x64xf32>
    %cst_123 = arith.constant dense<0.000000e+00> : vector<15xf32>
    %289 = vector.multi_reduction <add>, %288, %cst_123 [1] : vector<15x64xf32> to vector<15xf32>
    %290 = vector.shape_cast %289 : vector<15xf32> to vector<15x1xf32>
    %cst_124 = arith.constant 6.400000e+01 : f32
    %291 = vector.broadcast %cst_124 : f32 to vector<15x1xf32>
    %292 = arith.divf %290, %291 : vector<15x1xf32>
    %cst_125 = arith.constant 9.99999974E-6 : f32
    %293 = vector.broadcast %cst_125 : f32 to vector<15x1xf32>
    %294 = arith.addf %292, %293 : vector<15x1xf32>
    %295 = math.rsqrt %294 : vector<15x1xf32>
    %296 = vector.broadcast %295 : vector<15x1xf32> to vector<15x64xf32>
    %297 = arith.mulf %287, %296 : vector<15x64xf32>
    %298 = vector.broadcast %279 : vector<1x64xf32> to vector<15x64xf32>
    %299 = arith.mulf %297, %298 : vector<15x64xf32>
    %300 = vector.broadcast %281 : vector<1x64xf32> to vector<15x64xf32>
    %301 = arith.addf %299, %300 : vector<15x64xf32>
    %302 = arith.negf %301 : vector<15x64xf32>
    %303 = math.exp %302 : vector<15x64xf32>
    %cst_126 = arith.constant 1.000000e+00 : f32
    %304 = vector.broadcast %cst_126 : f32 to vector<15x64xf32>
    %305 = arith.addf %304, %303 : vector<15x64xf32>
    %306 = arith.divf %304, %305 : vector<15x64xf32>
    %307 = arith.mulf %301, %306 : vector<15x64xf32>
    %c0_127 = arith.constant 0 : index
    %c0_128 = arith.constant 0 : index
    %c0_129 = arith.constant 0 : index
    %308 = vector.load %arg24[%c0_127, %c0_128, %c0_129] : memref<1x64x64xbf16, #tpu.memory_space<vmem>>, vector<1x64x64xbf16>
    %309 = vector.shape_cast %308 : vector<1x64x64xbf16> to vector<64x64xbf16>
    %c0_130 = arith.constant 0 : index
    %c0_131 = arith.constant 0 : index
    %c0_132 = arith.constant 0 : index
    %310 = vector.load %arg25[%c0_130, %c0_131, %c0_132] : memref<1x1x64xf32, #tpu.memory_space<vmem>>, vector<1x1x64xf32>
    %311 = vector.shape_cast %310 : vector<1x1x64xf32> to vector<1x64xf32>
    %312 = arith.truncf %307 : vector<15x64xf32> to vector<15x64xbf16>
    %cst_133 = arith.constant dense<0.000000e+00> : vector<15x64xf32>
    %313 = tpu.matmul %312, %309, %cst_133 {dimension_numbers = #tpu.dot_dimension_numbers<[1], [0], [0], [1], [0, 0, 1, 1], [], []>} : vector<15x64xbf16>, vector<64x64xbf16>, vector<15x64xf32> -> vector<15x64xf32>
    %314 = vector.broadcast %311 : vector<1x64xf32> to vector<15x64xf32>
    %315 = arith.addf %313, %314 : vector<15x64xf32>
    %316 = arith.addf %192, %315 : vector<15x64xf32>
    %c0_134 = arith.constant 0 : index
    %c0_135 = arith.constant 0 : index
    %c0_136 = arith.constant 0 : index
    %317 = vector.load %arg26[%c0_134, %c0_135, %c0_136] : memref<1x1x64xf32, #tpu.memory_space<vmem>>, vector<1x1x64xf32>
    %318 = vector.shape_cast %317 : vector<1x1x64xf32> to vector<1x64xf32>
    %c0_137 = arith.constant 0 : index
    %c0_138 = arith.constant 0 : index
    %c0_139 = arith.constant 0 : index
    %319 = vector.load %arg27[%c0_137, %c0_138, %c0_139] : memref<1x1x64xf32, #tpu.memory_space<vmem>>, vector<1x1x64xf32>
    %320 = vector.shape_cast %319 : vector<1x1x64xf32> to vector<1x64xf32>
    %cst_140 = arith.constant dense<0.000000e+00> : vector<15xf32>
    %321 = vector.multi_reduction <add>, %316, %cst_140 [1] : vector<15x64xf32> to vector<15xf32>
    %322 = vector.shape_cast %321 : vector<15xf32> to vector<15x1xf32>
    %cst_141 = arith.constant 6.400000e+01 : f32
    %323 = vector.broadcast %cst_141 : f32 to vector<15x1xf32>
    %324 = arith.divf %322, %323 : vector<15x1xf32>
    %325 = vector.broadcast %324 : vector<15x1xf32> to vector<15x64xf32>
    %326 = arith.subf %316, %325 : vector<15x64xf32>
    %327 = arith.mulf %326, %326 : vector<15x64xf32>
    %cst_142 = arith.constant dense<0.000000e+00> : vector<15xf32>
    %328 = vector.multi_reduction <add>, %327, %cst_142 [1] : vector<15x64xf32> to vector<15xf32>
    %329 = vector.shape_cast %328 : vector<15xf32> to vector<15x1xf32>
    %cst_143 = arith.constant 6.400000e+01 : f32
    %330 = vector.broadcast %cst_143 : f32 to vector<15x1xf32>
    %331 = arith.divf %329, %330 : vector<15x1xf32>
    %cst_144 = arith.constant 9.99999974E-6 : f32
    %332 = vector.broadcast %cst_144 : f32 to vector<15x1xf32>
    %333 = arith.addf %331, %332 : vector<15x1xf32>
    %334 = math.rsqrt %333 : vector<15x1xf32>
    %335 = vector.broadcast %334 : vector<15x1xf32> to vector<15x64xf32>
    %336 = arith.mulf %326, %335 : vector<15x64xf32>
    %337 = vector.broadcast %318 : vector<1x64xf32> to vector<15x64xf32>
    %338 = arith.mulf %336, %337 : vector<15x64xf32>
    %339 = vector.broadcast %320 : vector<1x64xf32> to vector<15x64xf32>
    %340 = arith.addf %338, %339 : vector<15x64xf32>
    %c0_145 = arith.constant 0 : index
    %c0_146 = arith.constant 0 : index
    %c0_147 = arith.constant 0 : index
    %341 = vector.load %arg28[%c0_145, %c0_146, %c0_147] : memref<1x64x128xbf16, #tpu.memory_space<vmem>>, vector<1x64x128xbf16>
    %342 = vector.shape_cast %341 : vector<1x64x128xbf16> to vector<64x128xbf16>
    %c0_148 = arith.constant 0 : index
    %c0_149 = arith.constant 0 : index
    %c0_150 = arith.constant 0 : index
    %343 = vector.load %arg29[%c0_148, %c0_149, %c0_150] : memref<1x1x128xf32, #tpu.memory_space<vmem>>, vector<1x1x128xf32>
    %344 = vector.shape_cast %343 : vector<1x1x128xf32> to vector<1x128xf32>
    %345 = arith.truncf %340 : vector<15x64xf32> to vector<15x64xbf16>
    %cst_151 = arith.constant dense<0.000000e+00> : vector<15x128xf32>
    %346 = tpu.matmul %345, %342, %cst_151 {dimension_numbers = #tpu.dot_dimension_numbers<[1], [0], [0], [1], [0, 0, 1, 1], [], []>} : vector<15x64xbf16>, vector<64x128xbf16>, vector<15x128xf32> -> vector<15x128xf32>
    %347 = vector.broadcast %344 : vector<1x128xf32> to vector<15x128xf32>
    %348 = arith.addf %346, %347 : vector<15x128xf32>
    %349 = arith.negf %348 : vector<15x128xf32>
    %350 = math.exp %349 : vector<15x128xf32>
    %cst_152 = arith.constant 1.000000e+00 : f32
    %351 = vector.broadcast %cst_152 : f32 to vector<15x128xf32>
    %352 = arith.addf %351, %350 : vector<15x128xf32>
    %353 = arith.divf %351, %352 : vector<15x128xf32>
    %354 = arith.mulf %348, %353 : vector<15x128xf32>
    %c0_153 = arith.constant 0 : index
    %c0_154 = arith.constant 0 : index
    %c0_155 = arith.constant 0 : index
    %355 = vector.load %arg30[%c0_153, %c0_154, %c0_155] : memref<1x128x64xbf16, #tpu.memory_space<vmem>>, vector<1x128x64xbf16>
    %356 = vector.shape_cast %355 : vector<1x128x64xbf16> to vector<128x64xbf16>
    %c0_156 = arith.constant 0 : index
    %c0_157 = arith.constant 0 : index
    %c0_158 = arith.constant 0 : index
    %357 = vector.load %arg31[%c0_156, %c0_157, %c0_158] : memref<1x1x64xf32, #tpu.memory_space<vmem>>, vector<1x1x64xf32>
    %358 = vector.shape_cast %357 : vector<1x1x64xf32> to vector<1x64xf32>
    %359 = arith.truncf %354 : vector<15x128xf32> to vector<15x128xbf16>
    %cst_159 = arith.constant dense<0.000000e+00> : vector<15x64xf32>
    %360 = tpu.matmul %359, %356, %cst_159 {dimension_numbers = #tpu.dot_dimension_numbers<[1], [0], [0], [1], [0, 0, 1, 1], [], []>} : vector<15x128xbf16>, vector<128x64xbf16>, vector<15x64xf32> -> vector<15x64xf32>
    %361 = vector.broadcast %358 : vector<1x64xf32> to vector<15x64xf32>
    %362 = arith.addf %360, %361 : vector<15x64xf32>
    %cst_160 = arith.constant 5.000000e-01 : f32
    %363 = vector.broadcast %cst_160 : f32 to vector<15x64xf32>
    %364 = arith.mulf %363, %362 : vector<15x64xf32>
    %365 = arith.addf %316, %364 : vector<15x64xf32>
    %c0_161 = arith.constant 0 : index
    %c0_162 = arith.constant 0 : index
    %c0_163 = arith.constant 0 : index
    %366 = vector.load %arg32[%c0_161, %c0_162, %c0_163] : memref<1x1x64xf32, #tpu.memory_space<vmem>>, vector<1x1x64xf32>
    %367 = vector.shape_cast %366 : vector<1x1x64xf32> to vector<1x64xf32>
    %c0_164 = arith.constant 0 : index
    %c0_165 = arith.constant 0 : index
    %c0_166 = arith.constant 0 : index
    %368 = vector.load %arg33[%c0_164, %c0_165, %c0_166] : memref<1x1x64xf32, #tpu.memory_space<vmem>>, vector<1x1x64xf32>
    %369 = vector.shape_cast %368 : vector<1x1x64xf32> to vector<1x64xf32>
    %cst_167 = arith.constant dense<0.000000e+00> : vector<15xf32>
    %370 = vector.multi_reduction <add>, %365, %cst_167 [1] : vector<15x64xf32> to vector<15xf32>
    %371 = vector.shape_cast %370 : vector<15xf32> to vector<15x1xf32>
    %cst_168 = arith.constant 6.400000e+01 : f32
    %372 = vector.broadcast %cst_168 : f32 to vector<15x1xf32>
    %373 = arith.divf %371, %372 : vector<15x1xf32>
    %374 = vector.broadcast %373 : vector<15x1xf32> to vector<15x64xf32>
    %375 = arith.subf %365, %374 : vector<15x64xf32>
    %376 = arith.mulf %375, %375 : vector<15x64xf32>
    %cst_169 = arith.constant dense<0.000000e+00> : vector<15xf32>
    %377 = vector.multi_reduction <add>, %376, %cst_169 [1] : vector<15x64xf32> to vector<15xf32>
    %378 = vector.shape_cast %377 : vector<15xf32> to vector<15x1xf32>
    %cst_170 = arith.constant 6.400000e+01 : f32
    %379 = vector.broadcast %cst_170 : f32 to vector<15x1xf32>
    %380 = arith.divf %378, %379 : vector<15x1xf32>
    %cst_171 = arith.constant 9.99999974E-6 : f32
    %381 = vector.broadcast %cst_171 : f32 to vector<15x1xf32>
    %382 = arith.addf %380, %381 : vector<15x1xf32>
    %383 = math.rsqrt %382 : vector<15x1xf32>
    %384 = vector.broadcast %383 : vector<15x1xf32> to vector<15x64xf32>
    %385 = arith.mulf %375, %384 : vector<15x64xf32>
    %386 = vector.broadcast %367 : vector<1x64xf32> to vector<15x64xf32>
    %387 = arith.mulf %385, %386 : vector<15x64xf32>
    %388 = vector.broadcast %369 : vector<1x64xf32> to vector<15x64xf32>
    %389 = arith.addf %387, %388 : vector<15x64xf32>
    %c0_172 = arith.constant 0 : index
    %c0_173 = arith.constant 0 : index
    %390 = vector.load %arg37[%c0_172, %c0_173] : memref<15x64xf32, #tpu.memory_space<vmem>>, vector<15x64xf32>
    tpu.vector_store %arg37[%c0_172, %c0_173], %389 {strides = array<i32>} : memref<15x64xf32, #tpu.memory_space<vmem>>, vector<15x64xf32>,
    %c1_i32 = arith.constant 1 : i32
    %391 = arith.cmpi eq, %arg1, %c1_i32 : i32
    %392 = arith.extui %391 : i1 to i32
    %c0_i32_174 = arith.constant 0 : i32
    %393 = arith.cmpi ne, %392, %c0_i32_174 : i32
    scf.if %393 {
      %394 = arith.truncf %389 : vector<15x64xf32> to vector<15x64xbf16>
      %c0_175 = arith.constant 0 : index
      %c0_176 = arith.constant 0 : index
      %395 = vector.load %arg34[%c0_175, %c0_176] : memref<64x41xbf16, #tpu.memory_space<vmem>>, vector<64x41xbf16>
      %cst_177 = arith.constant dense<0.000000e+00> : vector<15x41xf32>
      %396 = tpu.matmul %394, %395, %cst_177 {dimension_numbers = #tpu.dot_dimension_numbers<[1], [0], [0], [1], [0, 0, 1, 1], [], []>} : vector<15x64xbf16>, vector<64x41xbf16>, vector<15x41xf32> -> vector<15x41xf32>
      %c0_178 = arith.constant 0 : index
      %c0_179 = arith.constant 0 : index
      %397 = vector.load %arg35[%c0_178, %c0_179] : memref<1x41xf32, #tpu.memory_space<vmem>>, vector<1x41xf32>
      %398 = vector.broadcast %397 : vector<1x41xf32> to vector<15x41xf32>
      %399 = arith.addf %396, %398 : vector<15x41xf32>
      %cst_180 = arith.constant dense<0xFF800000> : vector<15xf32>
      %400 = vector.multi_reduction <maximumf>, %399, %cst_180 [1] : vector<15x41xf32> to vector<15xf32>
      %401 = vector.shape_cast %400 : vector<15xf32> to vector<15x1xf32>
      %402 = vector.broadcast %401 : vector<15x1xf32> to vector<15x41xf32>
      %403 = arith.subf %399, %402 : vector<15x41xf32>
      %404 = math.exp %403 : vector<15x41xf32>
      %cst_181 = arith.constant dense<0.000000e+00> : vector<15xf32>
      %405 = vector.multi_reduction <add>, %404, %cst_181 [1] : vector<15x41xf32> to vector<15xf32>
      %406 = vector.shape_cast %405 : vector<15xf32> to vector<15x1xf32>
      %407 = math.log %406 : vector<15x1xf32>
      %408 = vector.broadcast %407 : vector<15x1xf32> to vector<15x41xf32>
      %409 = arith.subf %403, %408 : vector<15x41xf32>
      %c0_182 = arith.constant 0 : index
      %c0_183 = arith.constant 0 : index
      %c0_184 = arith.constant 0 : index
      %410 = vector.load %arg36[%c0_182, %c0_183, %c0_184] : memref<1x15x41xf32, #tpu.memory_space<vmem>>, vector<1x15x41xf32>
      %411 = vector.shape_cast %410 : vector<1x15x41xf32> to vector<15x41xf32>
      %412 = vector.shape_cast %409 : vector<15x41xf32> to vector<1x15x41xf32>
      tpu.vector_store %arg36[%c0_182, %c0_183, %c0_184], %412 {strides = array<i32>} : memref<1x15x41xf32, #tpu.memory_space<vmem>>, vector<1x15x41xf32>,
    } else {
    }
    return
  }
  func.func @transform_0(%arg0: i32, %arg1: i32) -> (i32, i32, i32) {
    %c0_i32 = arith.constant 0 : i32
    %c0_i32_0 = arith.constant 0 : i32
    %c0_i32_1 = arith.constant 0 : i32
    return %arg0, %c0_i32, %c0_i32_0 : i32, i32, i32
  }
  func.func @transform_1(%arg0: i32, %arg1: i32) -> (i32, i32, i32) {
    %c0_i32 = arith.constant 0 : i32
    %c0_i32_0 = arith.constant 0 : i32
    %c0_i32_1 = arith.constant 0 : i32
    return %arg0, %c0_i32, %c0_i32_0 : i32, i32, i32
  }
  func.func @transform_2(%arg0: i32, %arg1: i32) -> (i32, i32, i32) {
    %c0_i32 = arith.constant 0 : i32
    %c0_i32_0 = arith.constant 0 : i32
    %c0_i32_1 = arith.constant 0 : i32
    return %arg1, %c0_i32, %c0_i32_0 : i32, i32, i32
  }
  func.func @transform_3(%arg0: i32, %arg1: i32) -> (i32, i32, i32) {
    %c0_i32 = arith.constant 0 : i32
    %c0_i32_0 = arith.constant 0 : i32
    %c0_i32_1 = arith.constant 0 : i32
    return %arg1, %c0_i32, %c0_i32_0 : i32, i32, i32
  }
  func.func @transform_4(%arg0: i32, %arg1: i32) -> (i32, i32, i32) {
    %c0_i32 = arith.constant 0 : i32
    %c0_i32_0 = arith.constant 0 : i32
    %c0_i32_1 = arith.constant 0 : i32
    return %arg1, %c0_i32, %c0_i32_0 : i32, i32, i32
  }
  func.func @transform_5(%arg0: i32, %arg1: i32) -> (i32, i32, i32) {
    %c0_i32 = arith.constant 0 : i32
    %c0_i32_0 = arith.constant 0 : i32
    %c0_i32_1 = arith.constant 0 : i32
    return %arg1, %c0_i32, %c0_i32_0 : i32, i32, i32
  }
  func.func @transform_6(%arg0: i32, %arg1: i32) -> (i32, i32, i32) {
    %c0_i32 = arith.constant 0 : i32
    %c0_i32_0 = arith.constant 0 : i32
    %c0_i32_1 = arith.constant 0 : i32
    return %arg1, %c0_i32, %c0_i32_0 : i32, i32, i32
  }
  func.func @transform_7(%arg0: i32, %arg1: i32) -> (i32, i32, i32) {
    %c0_i32 = arith.constant 0 : i32
    %c0_i32_0 = arith.constant 0 : i32
    %c0_i32_1 = arith.constant 0 : i32
    return %arg1, %c0_i32, %c0_i32_0 : i32, i32, i32
  }
  func.func @transform_8(%arg0: i32, %arg1: i32) -> (i32, i32, i32) {
    %c0_i32 = arith.constant 0 : i32
    %c0_i32_0 = arith.constant 0 : i32
    %c0_i32_1 = arith.constant 0 : i32
    return %arg1, %c0_i32, %c0_i32_0 : i32, i32, i32
  }
  func.func @transform_9(%arg0: i32, %arg1: i32) -> (i32, i32, i32) {
    %c0_i32 = arith.constant 0 : i32
    %c0_i32_0 = arith.constant 0 : i32
    %c0_i32_1 = arith.constant 0 : i32
    return %arg1, %c0_i32, %c0_i32_0 : i32, i32, i32
  }
  func.func @transform_10(%arg0: i32, %arg1: i32) -> (i32, i32, i32) {
    %c0_i32 = arith.constant 0 : i32
    %c0_i32_0 = arith.constant 0 : i32
    %c0_i32_1 = arith.constant 0 : i32
    return %arg1, %c0_i32, %c0_i32_0 : i32, i32, i32
  }
  func.func @transform_11(%arg0: i32, %arg1: i32) -> (i32, i32, i32) {
    %c0_i32 = arith.constant 0 : i32
    %c0_i32_0 = arith.constant 0 : i32
    %c0_i32_1 = arith.constant 0 : i32
    return %arg1, %c0_i32, %c0_i32_0 : i32, i32, i32
  }
  func.func @transform_12(%arg0: i32, %arg1: i32) -> (i32, i32, i32) {
    %c0_i32 = arith.constant 0 : i32
    %c0_i32_0 = arith.constant 0 : i32
    %c0_i32_1 = arith.constant 0 : i32
    return %arg1, %c0_i32, %c0_i32_0 : i32, i32, i32
  }
  func.func @transform_13(%arg0: i32, %arg1: i32) -> (i32, i32, i32) {
    %c0_i32 = arith.constant 0 : i32
    %c0_i32_0 = arith.constant 0 : i32
    %c0_i32_1 = arith.constant 0 : i32
    return %arg1, %c0_i32, %c0_i32_0 : i32, i32, i32
  }
  func.func @transform_14(%arg0: i32, %arg1: i32) -> (i32, i32, i32) {
    %c0_i32 = arith.constant 0 : i32
    %c0_i32_0 = arith.constant 0 : i32
    %c0_i32_1 = arith.constant 0 : i32
    return %arg1, %c0_i32, %c0_i32_0 : i32, i32, i32
  }
  func.func @transform_15(%arg0: i32, %arg1: i32) -> (i32, i32, i32) {
    %c0_i32 = arith.constant 0 : i32
    %c0_i32_0 = arith.constant 0 : i32
    %c0_i32_1 = arith.constant 0 : i32
    return %arg1, %c0_i32, %c0_i32_0 : i32, i32, i32
  }
  func.func @transform_16(%arg0: i32, %arg1: i32) -> (i32, i32, i32) {
    %c0_i32 = arith.constant 0 : i32
    %c0_i32_0 = arith.constant 0 : i32
    %c0_i32_1 = arith.constant 0 : i32
    return %arg1, %c0_i32, %c0_i32_0 : i32, i32, i32
  }
  func.func @transform_17(%arg0: i32, %arg1: i32) -> (i32, i32, i32) {
    %c0_i32 = arith.constant 0 : i32
    %c0_i32_0 = arith.constant 0 : i32
    %c0_i32_1 = arith.constant 0 : i32
    return %arg1, %c0_i32, %c0_i32_0 : i32, i32, i32
  }
  func.func @transform_18(%arg0: i32, %arg1: i32) -> (i32, i32, i32) {
    %c0_i32 = arith.constant 0 : i32
    %c0_i32_0 = arith.constant 0 : i32
    %c0_i32_1 = arith.constant 0 : i32
    return %arg1, %c0_i32, %c0_i32_0 : i32, i32, i32
  }
  func.func @transform_19(%arg0: i32, %arg1: i32) -> (i32, i32, i32) {
    %c0_i32 = arith.constant 0 : i32
    %c0_i32_0 = arith.constant 0 : i32
    %c0_i32_1 = arith.constant 0 : i32
    return %arg1, %c0_i32, %c0_i32_0 : i32, i32, i32
  }
  func.func @transform_20(%arg0: i32, %arg1: i32) -> (i32, i32, i32) {
    %c0_i32 = arith.constant 0 : i32
    %c0_i32_0 = arith.constant 0 : i32
    %c0_i32_1 = arith.constant 0 : i32
    return %arg1, %c0_i32, %c0_i32_0 : i32, i32, i32
  }
  func.func @transform_21(%arg0: i32, %arg1: i32) -> (i32, i32, i32) {
    %c0_i32 = arith.constant 0 : i32
    %c0_i32_0 = arith.constant 0 : i32
    %c0_i32_1 = arith.constant 0 : i32
    return %arg1, %c0_i32, %c0_i32_0 : i32, i32, i32
  }
  func.func @transform_22(%arg0: i32, %arg1: i32) -> (i32, i32, i32) {
    %c0_i32 = arith.constant 0 : i32
    %c0_i32_0 = arith.constant 0 : i32
    %c0_i32_1 = arith.constant 0 : i32
    return %arg1, %c0_i32, %c0_i32_0 : i32, i32, i32
  }
  func.func @transform_23(%arg0: i32, %arg1: i32) -> (i32, i32, i32) {
    %c0_i32 = arith.constant 0 : i32
    %c0_i32_0 = arith.constant 0 : i32
    %c0_i32_1 = arith.constant 0 : i32
    return %arg1, %c0_i32, %c0_i32_0 : i32, i32, i32
  }
  func.func @transform_24(%arg0: i32, %arg1: i32) -> (i32, i32, i32) {
    %c0_i32 = arith.constant 0 : i32
    %c0_i32_0 = arith.constant 0 : i32
    %c0_i32_1 = arith.constant 0 : i32
    return %arg1, %c0_i32, %c0_i32_0 : i32, i32, i32
  }
  func.func @transform_25(%arg0: i32, %arg1: i32) -> (i32, i32, i32) {
    %c0_i32 = arith.constant 0 : i32
    %c0_i32_0 = arith.constant 0 : i32
    %c0_i32_1 = arith.constant 0 : i32
    return %arg1, %c0_i32, %c0_i32_0 : i32, i32, i32
  }
  func.func @transform_26(%arg0: i32, %arg1: i32) -> (i32, i32, i32) {
    %c0_i32 = arith.constant 0 : i32
    %c0_i32_0 = arith.constant 0 : i32
    %c0_i32_1 = arith.constant 0 : i32
    return %arg1, %c0_i32, %c0_i32_0 : i32, i32, i32
  }
  func.func @transform_27(%arg0: i32, %arg1: i32) -> (i32, i32, i32) {
    %c0_i32 = arith.constant 0 : i32
    %c0_i32_0 = arith.constant 0 : i32
    %c0_i32_1 = arith.constant 0 : i32
    return %arg1, %c0_i32, %c0_i32_0 : i32, i32, i32
  }
  func.func @transform_28(%arg0: i32, %arg1: i32) -> (i32, i32, i32) {
    %c0_i32 = arith.constant 0 : i32
    %c0_i32_0 = arith.constant 0 : i32
    %c0_i32_1 = arith.constant 0 : i32
    return %arg1, %c0_i32, %c0_i32_0 : i32, i32, i32
  }
  func.func @transform_29(%arg0: i32, %arg1: i32) -> (i32, i32, i32) {
    %c0_i32 = arith.constant 0 : i32
    %c0_i32_0 = arith.constant 0 : i32
    %c0_i32_1 = arith.constant 0 : i32
    return %arg1, %c0_i32, %c0_i32_0 : i32, i32, i32
  }
  func.func @transform_30(%arg0: i32, %arg1: i32) -> (i32, i32, i32) {
    %c0_i32 = arith.constant 0 : i32
    %c0_i32_0 = arith.constant 0 : i32
    %c0_i32_1 = arith.constant 0 : i32
    return %arg1, %c0_i32, %c0_i32_0 : i32, i32, i32
  }
  func.func @transform_31(%arg0: i32, %arg1: i32) -> (i32, i32, i32) {
    %c0_i32 = arith.constant 0 : i32
    %c0_i32_0 = arith.constant 0 : i32
    %c0_i32_1 = arith.constant 0 : i32
    return %arg1, %c0_i32, %c0_i32_0 : i32, i32, i32
  }
  func.func @transform_32(%arg0: i32, %arg1: i32) -> (i32, i32) {
    %c0_i32 = arith.constant 0 : i32
    %c0_i32_0 = arith.constant 0 : i32
    %c0_i32_1 = arith.constant 0 : i32
    return %c0_i32, %c0_i32_0 : i32, i32
  }
  func.func @transform_33(%arg0: i32, %arg1: i32) -> (i32, i32) {
    %c0_i32 = arith.constant 0 : i32
    %c0_i32_0 = arith.constant 0 : i32
    %c0_i32_1 = arith.constant 0 : i32
    return %c0_i32, %c0_i32_0 : i32, i32
  }
  func.func @transform_34(%arg0: i32, %arg1: i32) -> (i32, i32, i32) {
    %c0_i32 = arith.constant 0 : i32
    %c0_i32_0 = arith.constant 0 : i32
    %c0_i32_1 = arith.constant 0 : i32
    return %arg0, %c0_i32, %c0_i32_0 : i32, i32, i32
  }
}

</mosaic_0001>

<llo_original>
// kernel: model_forward.2
$region0: #{model_forward.2}
  #allocation0 [shape = 'u32[]', space=smem, size = 0x4, offset = 0x4, fixed_abs, tag = 'smem constant byte address 0x4 - core index']
  #allocation1 [shape = 'u32[144,128]{1,0:T(1,128)}', space=vmem, size = 0x12000, scoped, tag = 'internal scratch']
  #allocation2 [shape = 'f32[65,16]{1,0:T(8,128)}', space=vmem, size = 0x9000, scoped, tag = 'scratch operand']
  #allocation3 [shape = 'f32[65,128]{1,0:T(8,128)}', space=vmem, size = 0x9000, scoped, tag = 'scratch operand']
  #allocation4 [shape = 'f32[65,128]{1,0:T(8,128)}', space=vmem, size = 0x9000, scoped, tag = 'scratch operand']
  %s0 = inlined_call_operand.vmem [shape: f32[2,63,64], index: 0, kind: input, shape index: {}]
  %s1 = inlined_call_operand.vmem [shape: f32[1,64], index: 1, kind: input, shape index: {}]
  %s2 = inlined_call_operand.vmem [shape: f32[64,33], index: 2, kind: input, shape index: {}]
  %s3 = inlined_call_operand.vmem [shape: f32[64,33], index: 3, kind: input, shape index: {}]
  %s4 = inlined_call_operand.vmem [shape: f32[33,16], index: 4, kind: input, shape index: {}]
  %s5 = inlined_call_operand.vmem [shape: bf16[3,16,128], index: 5, kind: input, shape index: {}]
  %s6 = inlined_call_operand.vmem [shape: f32[1,128], index: 6, kind: input, shape index: {}]
  %s7 = inlined_call_operand.vmem [shape: bf16[3,128,128], index: 7, kind: input, shape index: {}]
  %s8 = inlined_call_operand.vmem [shape: f32[1,128], index: 8, kind: input, shape index: {}]
  %s9 = inlined_call_operand.vmem [shape: bf16[3,128,128], index: 9, kind: input, shape index: {}]
  %s10 = inlined_call_operand.vmem [shape: f32[1,128], index: 10, kind: input, shape index: {}]
  %s11 = inlined_call_operand.vmem [shape: bf16[3,128,128], index: 11, kind: input, shape index: {}]
  %s12 = inlined_call_operand.vmem [shape: f32[1,128], index: 12, kind: input, shape index: {}]
  %s13 = inlined_call_operand.vmem [shape: f32[31,63], index: 13, kind: input, shape index: {}]
  %s14 = inlined_call_operand.vmem [shape: f32[31,63], index: 14, kind: input, shape index: {}]
  %s15 = inlined_call_operand.vmem [shape: f32[15,31], index: 15, kind: input, shape index: {}]
  %s16 = inlined_call_operand.vmem [shape: f32[15,31], index: 16, kind: input, shape index: {}]
  %s17 = inlined_call_operand.vmem [shape: bf16[128,64], index: 17, kind: input, shape index: {}]
  %s18 = inlined_call_operand.hbm [shape: f32[1,64], index: 18, kind: input, shape index: {}]
  %s19 = inlined_call_operand.vmem [shape: f32[2,15,64], index: 19, kind: output, shape index: {}]
  %s20 = sld [smem:[#allocation0]]
  $region113: #{model_forward.2} parent=0
    _
  %s22 = ssub.s32 1, %s20
  %s23 = scalar_select 0, %s22, %s20
  $region1: #{model_forward.2} parent=0
    #allocation5 [shape = 'u8[512]{0}', space=vmem, size = 0x400, scoped, tag = 'input window, operand 18, single buffered']
    #allocation6 [shape = 's32[2]{0}', space=sflag, size = 0x8, scoped, tag = 'scoped memory for model_forward.2']
    %24 = vsyncpa [#allocation6], 0
    loop: start=0, step=1, limit=4
    $region2: #{model_forward.2} parent=1 // loop_pre_header
      _
    $region3: #{model_forward.2} parent=1 // loop_header
      %s26 = sphi 0, %s30
      %p27 = scmp.ge.s32.totalorder %s26, 4
      %s36 = sphi 0, %s38
      %s39 = sphi 0, %s36
      %s40 = sphi 0, %s39
      %s56 = sphi 0, %s40
      %s60 = sphi 0, %s60
      %s62 = sphi 0, %s60
      %s63 = sphi 0, %s62
      %s77 = sphi 0, %s63
      %s81 = sphi 0, %s81
      %s83 = sphi 0, %s81
      %s84 = sphi 0, %s83
      %s98 = sphi 0, %s84
      %s102 = sphi 0, %s102
      %s104 = sphi 0, %s102
      %s105 = sphi 0, %s104
      %s119 = sphi 0, %s105
      %s123 = sphi 0, %s123
      %s125 = sphi 0, %s123
      %s126 = sphi 0, %s125
      %s140 = sphi 0, %s126
      %s144 = sphi 0, %s144
      %s146 = sphi 0, %s144
      %s147 = sphi 0, %s146
      %s161 = sphi 0, %s147
      %s165 = sphi 0, %s165
      %s167 = sphi 0, %s165
      %s168 = sphi 0, %s167
      %s182 = sphi 0, %s168
      %s186 = sphi 0, %s186
      %s188 = sphi 0, %s186
      %s189 = sphi 0, %s188
      %s203 = sphi 0, %s189
      %s207 = sphi 0, %s207
      %s209 = sphi 0, %s207
      %s210 = sphi 0, %s209
      %s224 = sphi 0, %s210
      %s228 = sphi 0, %s228
      %s230 = sphi 0, %s228
      %s231 = sphi 0, %s230
      %s245 = sphi 0, %s231
      %s249 = sphi 0, %s249
      %s251 = sphi 0, %s249
      %s252 = sphi 0, %s251
      %s266 = sphi 0, %s252
      %s270 = sphi 0, %s270
      %s272 = sphi 0, %s270
      %s273 = sphi 0, %s272
      %s287 = sphi 0, %s273
      %s291 = sphi 0, %s291
      %s293 = sphi 0, %s291
      %s294 = sphi 0, %s293
      %s308 = sphi 0, %s294
      %s312 = sphi 0, %s312
      %s314 = sphi 0, %s312
      %s315 = sphi 0, %s314
      %s329 = sphi 0, %s315
      %s333 = sphi 0, %s333
      %s335 = sphi 0, %s333
      %s336 = sphi 0, %s335
      %s350 = sphi 0, %s336
      %s354 = sphi 0, %s354
      %s356 = sphi 0, %s354
      %s357 = sphi 0, %s356
      %s371 = sphi 0, %s357
      %s375 = sphi 0, %s375
      %s377 = sphi 0, %s375
      %s378 = sphi 0, %s377
      %s392 = sphi 0, %s378
      %s396 = sphi 0, %s396
      %s398 = sphi 0, %s396
      %s399 = sphi 0, %s398
      %s413 = sphi 0, %s399
      %s417 = sphi 0, %s417
      %s419 = sphi 0, %s417
      %s420 = sphi 0, %s419
      %s434 = sphi 0, %s420
      %s440 = sphi 0, %s442
      %s443 = sphi 0, %s440
      %s444 = sphi 0, %s443
      %s460 = sphi 0, %s444
    $region4: #{model_forward.2} parent=1 // loop_header_branch
      %29 = sbr.rel (%p27) target = $region8
    $region5: #{model_forward.2} parent=1 // loop_body
      %s31 = ssub.s32 %s26, 1
      %s32 = ssub.s32 %s26, 2
      %s33 = sadd.s32 %s26, 1
      %s34 = ssub.s32 %s26, %s33
      %p35 = scmp.eq.s32.totalorder %s34, 0
      %s37 = sadd.s32 %s36, 1
      %s38 = scalar_select %p35, %s36, %s37
      %p41 = pneg %p35
      %p42 = scmp.eq.s32.totalorder %s26, 1
      %p43 = por %p41, %p42
      %p44 = scmp.ne.s32.totalorder %s36, %s39
      %p45 = scmp.eq.s32.totalorder %s26, 0
      %p46 = por %p44, %p45
      %p47 = scmp.ne.s32.totalorder %s36, %s39
      %p48 = scmp.eq.s32.totalorder %s31, 1
      %p49 = por %p47, %p48
      %p50 = scmp.ne.s32.totalorder %s39, %s40
      %p51 = scmp.eq.s32.totalorder %s31, 0
      %p52 = por %p50, %p51
      %p53 = scmp.ne.s32.totalorder %s39, %s40
      %p54 = scmp.eq.s32.totalorder %s32, 1
      %p55 = por %p53, %p54
      %p57 = scmp.ne.s32.totalorder %s40, %s56
      %p58 = scmp.eq.s32.totalorder %s32, 0
      %p59 = por %p57, %p58
      %s61 = sadd.s32 %s60, 1
      %p64 = scmp.eq.s32.totalorder %s26, 1
      %p65 = scmp.ne.s32.totalorder %s60, %s62
      %p66 = scmp.eq.s32.totalorder %s26, 0
      %p67 = por %p65, %p66
      %p68 = scmp.ne.s32.totalorder %s60, %s62
      %p69 = scmp.eq.s32.totalorder %s31, 1
      %p70 = por %p68, %p69
      %p71 = scmp.ne.s32.totalorder %s62, %s63
      %p72 = scmp.eq.s32.totalorder %s31, 0
      %p73 = por %p71, %p72
      %p74 = scmp.ne.s32.totalorder %s62, %s63
      %p75 = scmp.eq.s32.totalorder %s32, 1
      %p76 = por %p74, %p75
      %p78 = scmp.ne.s32.totalorder %s63, %s77
      %p79 = scmp.eq.s32.totalorder %s32, 0
      %p80 = por %p78, %p79
      %s82 = sadd.s32 %s81, 1
      %p85 = scmp.eq.s32.totalorder %s26, 1
      %p86 = scmp.ne.s32.totalorder %s81, %s83
      %p87 = scmp.eq.s32.totalorder %s26, 0
      %p88 = por %p86, %p87
      %p89 = scmp.ne.s32.totalorder %s81, %s83
      %p90 = scmp.eq.s32.totalorder %s31, 1
      %p91 = por %p89, %p90
      %p92 = scmp.ne.s32.totalorder %s83, %s84
      %p93 = scmp.eq.s32.totalorder %s31, 0
      %p94 = por %p92, %p93
      %p95 = scmp.ne.s32.totalorder %s83, %s84
      %p96 = scmp.eq.s32.totalorder %s32, 1
      %p97 = por %p95, %p96
      %p99 = scmp.ne.s32.totalorder %s84, %s98
      %p100 = scmp.eq.s32.totalorder %s32, 0
      %p101 = por %p99, %p100
      %s103 = sadd.s32 %s102, 1
      %p106 = scmp.eq.s32.totalorder %s26, 1
      %p107 = scmp.ne.s32.totalorder %s102, %s104
      %p108 = scmp.eq.s32.totalorder %s26, 0
      %p109 = por %p107, %p108
      %p110 = scmp.ne.s32.totalorder %s102, %s104
      %p111 = scmp.eq.s32.totalorder %s31, 1
      %p112 = por %p110, %p111
      %p113 = scmp.ne.s32.totalorder %s104, %s105
      %p114 = scmp.eq.s32.totalorder %s31, 0
      %p115 = por %p113, %p114
      %p116 = scmp.ne.s32.totalorder %s104, %s105
      %p117 = scmp.eq.s32.totalorder %s32, 1
      %p118 = por %p116, %p117
      %p120 = scmp.ne.s32.totalorder %s105, %s119
      %p121 = scmp.eq.s32.totalorder %s32, 0
      %p122 = por %p120, %p121
      %s124 = sadd.s32 %s123, 1
      %p127 = scmp.eq.s32.totalorder %s26, 1
      %p128 = scmp.ne.s32.totalorder %s123, %s125
      %p129 = scmp.eq.s32.totalorder %s26, 0
      %p130 = por %p128, %p129
      %p131 = scmp.ne.s32.totalorder %s123, %s125
      %p132 = scmp.eq.s32.totalorder %s31, 1
      %p133 = por %p131, %p132
      %p134 = scmp.ne.s32.totalorder %s125, %s126
      %p135 = scmp.eq.s32.totalorder %s31, 0
      %p136 = por %p134, %p135
      %p137 = scmp.ne.s32.totalorder %s125, %s126
      %p138 = scmp.eq.s32.totalorder %s32, 1
      %p139 = por %p137, %p138
      %p141 = scmp.ne.s32.totalorder %s126, %s140
      %p142 = scmp.eq.s32.totalorder %s32, 0
      %p143 = por %p141, %p142
      %s145 = sadd.s32 %s144, 1
      %p148 = scmp.eq.s32.totalorder %s26, 1
      %p149 = scmp.ne.s32.totalorder %s144, %s146
      %p150 = scmp.eq.s32.totalorder %s26, 0
      %p151 = por %p149, %p150
      %p152 = scmp.ne.s32.totalorder %s144, %s146
      %p153 = scmp.eq.s32.totalorder %s31, 1
      %p154 = por %p152, %p153
      %p155 = scmp.ne.s32.totalorder %s146, %s147
      %p156 = scmp.eq.s32.totalorder %s31, 0
      %p157 = por %p155, %p156
      %p158 = scmp.ne.s32.totalorder %s146, %s147
      %p159 = scmp.eq.s32.totalorder %s32, 1
      %p160 = por %p158, %p159
      %p162 = scmp.ne.s32.totalorder %s147, %s161
      %p163 = scmp.eq.s32.totalorder %s32, 0
      %p164 = por %p162, %p163
      %s166 = sadd.s32 %s165, 1
      %p169 = scmp.eq.s32.totalorder %s26, 1
      %p170 = scmp.ne.s32.totalorder %s165, %s167
      %p171 = scmp.eq.s32.totalorder %s26, 0
      %p172 = por %p170, %p171
      %p173 = scmp.ne.s32.totalorder %s165, %s167
      %p174 = scmp.eq.s32.totalorder %s31, 1
      %p175 = por %p173, %p174
      %p176 = scmp.ne.s32.totalorder %s167, %s168
      %p177 = scmp.eq.s32.totalorder %s31, 0
      %p178 = por %p176, %p177
      %p179 = scmp.ne.s32.totalorder %s167, %s168
      %p180 = scmp.eq.s32.totalorder %s32, 1
      %p181 = por %p179, %p180
      %p183 = scmp.ne.s32.totalorder %s168, %s182
      %p184 = scmp.eq.s32.totalorder %s32, 0
      %p185 = por %p183, %p184
      %s187 = sadd.s32 %s186, 1
      %p190 = scmp.eq.s32.totalorder %s26, 1
      %p191 = scmp.ne.s32.totalorder %s186, %s188
      %p192 = scmp.eq.s32.totalorder %s26, 0
      %p193 = por %p191, %p192
      %p194 = scmp.ne.s32.totalorder %s186, %s188
      %p195 = scmp.eq.s32.totalorder %s31, 1
      %p196 = por %p194, %p195
      %p197 = scmp.ne.s32.totalorder %s188, %s189
      %p198 = scmp.eq.s32.totalorder %s31, 0
      %p199 = por %p197, %p198
      %p200 = scmp.ne.s32.totalorder %s188, %s189
      %p201 = scmp.eq.s32.totalorder %s32, 1
      %p202 = por %p200, %p201
      %p204 = scmp.ne.s32.totalorder %s189, %s203
      %p205 = scmp.eq.s32.totalorder %s32, 0
      %p206 = por %p204, %p205
      %s208 = sadd.s32 %s207, 1
      %p211 = scmp.eq.s32.totalorder %s26, 1
      %p212 = scmp.ne.s32.totalorder %s207, %s209
      %p213 = scmp.eq.s32.totalorder %s26, 0
      %p214 = por %p212, %p213
      %p215 = scmp.ne.s32.totalorder %s207, %s209
      %p216 = scmp.eq.s32.totalorder %s31, 1
      %p217 = por %p215, %p216
      %p218 = scmp.ne.s32.totalorder %s209, %s210
      %p219 = scmp.eq.s32.totalorder %s31, 0
      %p220 = por %p218, %p219
      %p221 = scmp.ne.s32.totalorder %s209, %s210
      %p222 = scmp.eq.s32.totalorder %s32, 1
      %p223 = por %p221, %p222
      %p225 = scmp.ne.s32.totalorder %s210, %s224
      %p226 = scmp.eq.s32.totalorder %s32, 0
      %p227 = por %p225, %p226
      %s229 = sadd.s32 %s228, 1
      %p232 = scmp.eq.s32.totalorder %s26, 1
      %p233 = scmp.ne.s32.totalorder %s228, %s230
      %p234 = scmp.eq.s32.totalorder %s26, 0
      %p235 = por %p233, %p234
      %p236 = scmp.ne.s32.totalorder %s228, %s230
      %p237 = scmp.eq.s32.totalorder %s31, 1
      %p238 = por %p236, %p237
      %p239 = scmp.ne.s32.totalorder %s230, %s231
      %p240 = scmp.eq.s32.totalorder %s31, 0
      %p241 = por %p239, %p240
      %p242 = scmp.ne.s32.totalorder %s230, %s231
      %p243 = scmp.eq.s32.totalorder %s32, 1
      %p244 = por %p242, %p243
      %p246 = scmp.ne.s32.totalorder %s231, %s245
      %p247 = scmp.eq.s32.totalorder %s32, 0
      %p248 = por %p246, %p247
      %s250 = sadd.s32 %s249, 1
      %p253 = scmp.eq.s32.totalorder %s26, 1
      %p254 = scmp.ne.s32.totalorder %s249, %s251
      %p255 = scmp.eq.s32.totalorder %s26, 0
      %p256 = por %p254, %p255
      %p257 = scmp.ne.s32.totalorder %s249, %s251
      %p258 = scmp.eq.s32.totalorder %s31, 1
      %p259 = por %p257, %p258
      %p260 = scmp.ne.s32.totalorder %s251, %s252
      %p261 = scmp.eq.s32.totalorder %s31, 0
      %p262 = por %p260, %p261
      %p263 = scmp.ne.s32.totalorder %s251, %s252
      %p264 = scmp.eq.s32.totalorder %s32, 1
      %p265 = por %p263, %p264
      %p267 = scmp.ne.s32.totalorder %s252, %s266
      %p268 = scmp.eq.s32.totalorder %s32, 0
      %p269 = por %p267, %p268
      %s271 = sadd.s32 %s270, 1
      %p274 = scmp.eq.s32.totalorder %s26, 1
      %p275 = scmp.ne.s32.totalorder %s270, %s272
      %p276 = scmp.eq.s32.totalorder %s26, 0
      %p277 = por %p275, %p276
      %p278 = scmp.ne.s32.totalorder %s270, %s272
      %p279 = scmp.eq.s32.totalorder %s31, 1
      %p280 = por %p278, %p279
      %p281 = scmp.ne.s32.totalorder %s272, %s273
      %p282 = scmp.eq.s32.totalorder %s31, 0
      %p283 = por %p281, %p282
      %p284 = scmp.ne.s32.totalorder %s272, %s273
      %p285 = scmp.eq.s32.totalorder %s32, 1
      %p286 = por %p284, %p285
      %p288 = scmp.ne.s32.totalorder %s273, %s287
      %p289 = scmp.eq.s32.totalorder %s32, 0
      %p290 = por %p288, %p289
      %s292 = sadd.s32 %s291, 1
      %p295 = scmp.eq.s32.totalorder %s26, 1
      %p296 = scmp.ne.s32.totalorder %s291, %s293
      %p297 = scmp.eq.s32.totalorder %s26, 0
      %p298 = por %p296, %p297
      %p299 = scmp.ne.s32.totalorder %s291, %s293
      %p300 = scmp.eq.s32.totalorder %s31, 1
      %p301 = por %p299, %p300
      %p302 = scmp.ne.s32.totalorder %s293, %s294
      %p303 = scmp.eq.s32.totalorder %s31, 0
      %p304 = por %p302, %p303
      %p305 = scmp.ne.s32.totalorder %s293, %s294
      %p306 = scmp.eq.s32.totalorder %s32, 1
      %p307 = por %p305, %p306
      %p309 = scmp.ne.s32.totalorder %s294, %s308
      %p310 = scmp.eq.s32.totalorder %s32, 0
      %p311 = por %p309, %p310
      %s313 = sadd.s32 %s312, 1
      %p316 = scmp.eq.s32.totalorder %s26, 1
      %p317 = scmp.ne.s32.totalorder %s312, %s314
      %p318 = scmp.eq.s32.totalorder %s26, 0
      %p319 = por %p317, %p318
      %p320 = scmp.ne.s32.totalorder %s312, %s314
      %p321 = scmp.eq.s32.totalorder %s31, 1
      %p322 = por %p320, %p321
      %p323 = scmp.ne.s32.totalorder %s314, %s315
      %p324 = scmp.eq.s32.totalorder %s31, 0
      %p325 = por %p323, %p324
      %p326 = scmp.ne.s32.totalorder %s314, %s315
      %p327 = scmp.eq.s32.totalorder %s32, 1
      %p328 = por %p326, %p327
      %p330 = scmp.ne.s32.totalorder %s315, %s329
      %p331 = scmp.eq.s32.totalorder %s32, 0
      %p332 = por %p330, %p331
      %s334 = sadd.s32 %s333, 1
      %p337 = scmp.eq.s32.totalorder %s26, 1
      %p338 = scmp.ne.s32.totalorder %s333, %s335
      %p339 = scmp.eq.s32.totalorder %s26, 0
      %p340 = por %p338, %p339
      %p341 = scmp.ne.s32.totalorder %s333, %s335
      %p342 = scmp.eq.s32.totalorder %s31, 1
      %p343 = por %p341, %p342
      %p344 = scmp.ne.s32.totalorder %s335, %s336
      %p345 = scmp.eq.s32.totalorder %s31, 0
      %p346 = por %p344, %p345
      %p347 = scmp.ne.s32.totalorder %s335, %s336
      %p348 = scmp.eq.s32.totalorder %s32, 1
      %p349 = por %p347, %p348
      %p351 = scmp.ne.s32.totalorder %s336, %s350
      %p352 = scmp.eq.s32.totalorder %s32, 0
      %p353 = por %p351, %p352
      %s355 = sadd.s32 %s354, 1
      %p358 = scmp.eq.s32.totalorder %s26, 1
      %p359 = scmp.ne.s32.totalorder %s354, %s356
      %p360 = scmp.eq.s32.totalorder %s26, 0
      %p361 = por %p359, %p360
      %p362 = scmp.ne.s32.totalorder %s354, %s356
      %p363 = scmp.eq.s32.totalorder %s31, 1
      %p364 = por %p362, %p363
      %p365 = scmp.ne.s32.totalorder %s356, %s357
      %p366 = scmp.eq.s32.totalorder %s31, 0
      %p367 = por %p365, %p366
      %p368 = scmp.ne.s32.totalorder %s356, %s357
      %p369 = scmp.eq.s32.totalorder %s32, 1
      %p370 = por %p368, %p369
      %p372 = scmp.ne.s32.totalorder %s357, %s371
      %p373 = scmp.eq.s32.totalorder %s32, 0
      %p374 = por %p372, %p373
      %s376 = sadd.s32 %s375, 1
      %p379 = scmp.eq.s32.totalorder %s26, 1
      %p380 = scmp.ne.s32.totalorder %s375, %s377
      %p381 = scmp.eq.s32.totalorder %s26, 0
      %p382 = por %p380, %p381
      %p383 = scmp.ne.s32.totalorder %s375, %s377
      %p384 = scmp.eq.s32.totalorder %s31, 1
      %p385 = por %p383, %p384
      %p386 = scmp.ne.s32.totalorder %s377, %s378
      %p387 = scmp.eq.s32.totalorder %s31, 0
      %p388 = por %p386, %p387
      %p389 = scmp.ne.s32.totalorder %s377, %s378
      %p390 = scmp.eq.s32.totalorder %s32, 1
      %p391 = por %p389, %p390
      %p393 = scmp.ne.s32.totalorder %s378, %s392
      %p394 = scmp.eq.s32.totalorder %s32, 0
      %p395 = por %p393, %p394
      %s397 = sadd.s32 %s396, 1
      %p400 = scmp.eq.s32.totalorder %s26, 1
      %p401 = scmp.ne.s32.totalorder %s396, %s398
      %p402 = scmp.eq.s32.totalorder %s26, 0
      %p403 = por %p401, %p402
      %p404 = scmp.ne.s32.totalorder %s396, %s398
      %p405 = scmp.eq.s32.totalorder %s31, 1
      %p406 = por %p404, %p405
      %p407 = scmp.ne.s32.totalorder %s398, %s399
      %p408 = scmp.eq.s32.totalorder %s31, 0
      %p409 = por %p407, %p408
      %p410 = scmp.ne.s32.totalorder %s398, %s399
      %p411 = scmp.eq.s32.totalorder %s32, 1
      %p412 = por %p410, %p411
      %p414 = scmp.ne.s32.totalorder %s399, %s413
      %p415 = scmp.eq.s32.totalorder %s32, 0
      %p416 = por %p414, %p415
      %s418 = sadd.s32 %s417, 1
      %p421 = scmp.eq.s32.totalorder %s26, 1
      %p422 = scmp.ne.s32.totalorder %s417, %s419
      %p423 = scmp.eq.s32.totalorder %s26, 0
      %p424 = por %p422, %p423
      %p425 = scmp.ne.s32.totalorder %s417, %s419
      %p426 = scmp.eq.s32.totalorder %s31, 1
      %p427 = por %p425, %p426
      %p428 = scmp.ne.s32.totalorder %s419, %s420
      %p429 = scmp.eq.s32.totalorder %s31, 0
      %p430 = por %p428, %p429
      %p431 = scmp.ne.s32.totalorder %s419, %s420
      %p432 = scmp.eq.s32.totalorder %s32, 1
      %p433 = por %p431, %p432
      %p435 = scmp.ne.s32.totalorder %s420, %s434
      %p436 = scmp.eq.s32.totalorder %s32, 0
      %p437 = por %p435, %p436
      %s438 = ssub.s32 %s26, %s33
      %p439 = scmp.eq.s32.totalorder %s438, 0
      %s441 = sadd.s32 %s440, 1
      %s442 = scalar_select %p439, %s440, %s441
      %p445 = pneg %p439
      %p446 = scmp.eq.s32.totalorder %s26, 1
      %p447 = por %p445, %p446
      %p448 = scmp.ne.s32.totalorder %s440, %s443
      %p449 = scmp.eq.s32.totalorder %s26, 0
      %p450 = por %p448, %p449
      %p451 = scmp.ne.s32.totalorder %s440, %s443
      %p452 = scmp.eq.s32.totalorder %s31, 1
      %p453 = por %p451, %p452
      %p454 = scmp.ne.s32.totalorder %s443, %s444
      %p455 = scmp.eq.s32.totalorder %s31, 0
      %p456 = por %p454, %p455
      %p457 = scmp.ne.s32.totalorder %s443, %s444
      %p458 = scmp.eq.s32.totalorder %s32, 1
      %p459 = por %p457, %p458
      %p461 = scmp.ne.s32.totalorder %s444, %s460
      %p462 = scmp.eq.s32.totalorder %s32, 0
      %p463 = por %p461, %p462
      %p464 = scmp.le.s32.totalorder 1, %s26
      %p465 = scmp.lt.s32.totalorder %s26, 3
      %p466 = pnand %p464, %p465
      %p467 = pneg %p466
      // Predicated region
      $region9: #{model_forward.2} parent=5 // pred_check
        _
      $region10: #{model_forward.2} parent=5 // pred_check_branch
        %469 = sbr.rel (%p466) target = $region12
      $region11: #{model_forward.2} parent=5 // pred_region
        %s470 = ssub.s32 %s26, 1
        // Predicated region
        $region13: #{model_forward.2} parent=11 // pred_check
          %p471 = pneg %p73
        $region14: #{model_forward.2} parent=11 // pred_check_branch
          %473 = sbr.rel (%p471) target = $region16
        $region15: #{model_forward.2} parent=11 // pred_region
          _
        $region16: #{model_forward.2} parent=11 // pred_fallthru
          _
        // Predicated region
        $region17: #{model_forward.2} parent=11 // pred_check
          %p474 = pneg %p94
        $region18: #{model_forward.2} parent=11 // pred_check_branch
          %476 = sbr.rel (%p474) target = $region20
        $region19: #{model_forward.2} parent=11 // pred_region
          _
        $region20: #{model_forward.2} parent=11 // pred_fallthru
          _
        // Predicated region
        $region21: #{model_forward.2} parent=11 // pred_check
          %p477 = pneg %p115
        $region22: #{model_forward.2} parent=11 // pred_check_branch
          %479 = sbr.rel (%p477) target = $region24
        $region23: #{model_forward.2} parent=11 // pred_region
          _
        $region24: #{model_forward.2} parent=11 // pred_fallthru
          _
        // Predicated region
        $region25: #{model_forward.2} parent=11 // pred_check
          %p480 = pneg %p136
        $region26: #{model_forward.2} parent=11 // pred_check_branch
          %482 = sbr.rel (%p480) target = $region28
        $region27: #{model_forward.2} parent=11 // pred_region
          _
        $region28: #{model_forward.2} parent=11 // pred_fallthru
          _
        // Predicated region
        $region29: #{model_forward.2} parent=11 // pred_check
          %p483 = pneg %p157
        $region30: #{model_forward.2} parent=11 // pred_check_branch
          %485 = sbr.rel (%p483) target = $region32
        $region31: #{model_forward.2} parent=11 // pred_region
          _
        $region32: #{model_forward.2} parent=11 // pred_fallthru
          _
        // Predicated region
        $region33: #{model_forward.2} parent=11 // pred_check
          %p486 = pneg %p178
        $region34: #{model_forward.2} parent=11 // pred_check_branch
          %488 = sbr.rel (%p486) target = $region36
        $region35: #{model_forward.2} parent=11 // pred_region
          _
        $region36: #{model_forward.2} parent=11 // pred_fallthru
          _
        // Predicated region
        $region37: #{model_forward.2} parent=11 // pred_check
          %p489 = pneg %p199
        $region38: #{model_forward.2} parent=11 // pred_check_branch
          %491 = sbr.rel (%p489) target = $region40
        $region39: #{model_forward.2} parent=11 // pred_region
          _
        $region40: #{model_forward.2} parent=11 // pred_fallthru
          _
        // Predicated region
        $region41: #{model_forward.2} parent=11 // pred_check
          %p492 = pneg %p220
        $region42: #{model_forward.2} parent=11 // pred_check_branch
          %494 = sbr.rel (%p492) target = $region44
        $region43: #{model_forward.2} parent=11 // pred_region
          _
        $region44: #{model_forward.2} parent=11 // pred_fallthru
          _
        // Predicated region
        $region45: #{model_forward.2} parent=11 // pred_check
          %p495 = pneg %p241
        $region46: #{model_forward.2} parent=11 // pred_check_branch
          %497 = sbr.rel (%p495) target = $region48
        $region47: #{model_forward.2} parent=11 // pred_region
          _
        $region48: #{model_forward.2} parent=11 // pred_fallthru
          _
        // Predicated region
        $region49: #{model_forward.2} parent=11 // pred_check
          %p498 = pneg %p262
        $region50: #{model_forward.2} parent=11 // pred_check_branch
          %500 = sbr.rel (%p498) target = $region52
        $region51: #{model_forward.2} parent=11 // pred_region
          _
        $region52: #{model_forward.2} parent=11 // pred_fallthru
          _
        // Predicated region
        $region53: #{model_forward.2} parent=11 // pred_check
          %p501 = pneg %p283
        $region54: #{model_forward.2} parent=11 // pred_check_branch
          %503 = sbr.rel (%p501) target = $region56
        $region55: #{model_forward.2} parent=11 // pred_region
          _
        $region56: #{model_forward.2} parent=11 // pred_fallthru
          _
        // Predicated region
        $region57: #{model_forward.2} parent=11 // pred_check
          %p504 = pneg %p304
        $region58: #{model_forward.2} parent=11 // pred_check_branch
          %506 = sbr.rel (%p504) target = $region60
        $region59: #{model_forward.2} parent=11 // pred_region
          _
        $region60: #{model_forward.2} parent=11 // pred_fallthru
          _
        // Predicated region
        $region61: #{model_forward.2} parent=11 // pred_check
          %p507 = pneg %p325
        $region62: #{model_forward.2} parent=11 // pred_check_branch
          %509 = sbr.rel (%p507) target = $region64
        $region63: #{model_forward.2} parent=11 // pred_region
          _
        $region64: #{model_forward.2} parent=11 // pred_fallthru
          _
        // Predicated region
        $region65: #{model_forward.2} parent=11 // pred_check
          %p510 = pneg %p346
        $region66: #{model_forward.2} parent=11 // pred_check_branch
          %512 = sbr.rel (%p510) target = $region68
        $region67: #{model_forward.2} parent=11 // pred_region
          _
        $region68: #{model_forward.2} parent=11 // pred_fallthru
          _
        // Predicated region
        $region69: #{model_forward.2} parent=11 // pred_check
          %p513 = pneg %p367
        $region70: #{model_forward.2} parent=11 // pred_check_branch
          %515 = sbr.rel (%p513) target = $region72
        $region71: #{model_forward.2} parent=11 // pred_region
          _
        $region72: #{model_forward.2} parent=11 // pred_fallthru
          _
        // Predicated region
        $region73: #{model_forward.2} parent=11 // pred_check
          %p516 = pneg %p388
        $region74: #{model_forward.2} parent=11 // pred_check_branch
          %518 = sbr.rel (%p516) target = $region76
        $region75: #{model_forward.2} parent=11 // pred_region
          _
        $region76: #{model_forward.2} parent=11 // pred_fallthru
          _
        // Predicated region
        $region77: #{model_forward.2} parent=11 // pred_check
          %p519 = pneg %p409
        $region78: #{model_forward.2} parent=11 // pred_check_branch
          %521 = sbr.rel (%p519) target = $region80
        $region79: #{model_forward.2} parent=11 // pred_region
          _
        $region80: #{model_forward.2} parent=11 // pred_fallthru
          _
        // Predicated region
        $region81: #{model_forward.2} parent=11 // pred_check
          %p522 = pneg %p430
        $region82: #{model_forward.2} parent=11 // pred_check_branch
          %524 = sbr.rel (%p522) target = $region84
        $region83: #{model_forward.2} parent=11 // pred_region
          %s526 = ssub.s32 16, 16
          %527 = vsyncadd [#allocation6], %s526
          %s529 = sshll.u32 [#allocation5], 4
          %s530 = int_to_ptr.vmem [resolvable:$true] %s529
          %532 = dma.hbm_to_vmem [thread:$0]  %s18, 16, %s530, [#allocation6]
        $region84: #{model_forward.2} parent=11 // pred_fallthru
          _
      $region12: #{model_forward.2} parent=5 // pred_fallthru
        _
      %p533 = scmp.lt.s32.totalorder %s26, 2
      // Predicated region
      $region85: #{model_forward.2} parent=5 // pred_check
        %p534 = pneg %p533
      $region86: #{model_forward.2} parent=5 // pred_check_branch
        %536 = sbr.rel (%p534) target = $region88
      $region87: #{model_forward.2} parent=5 // pred_region
        // Predicated region
        $region89: #{model_forward.2} parent=87 // pred_check
          %p537 = pneg %p46
        $region90: #{model_forward.2} parent=87 // pred_check_branch
          %539 = sbr.rel (%p537) target = $region92
        $region91: #{model_forward.2} parent=87 // pred_region
          %p540 = scmp.lt.s32.totalorder %s26, 1
          %s541 = scalar_select %p540, %s26, 1
          %s542 = smul.addr %s541, 8
          %s543 = smul.addr %s542, 8
          %s544 = scalar_lea.vmem %s0, %s543
        $region92: #{model_forward.2} parent=87 // pred_fallthru
          _
      $region88: #{model_forward.2} parent=5 // pred_fallthru
        _
      %p545 = scmp.le.s32.totalorder 1, %s26
      %p546 = scmp.lt.s32.totalorder %s26, 3
      %p547 = pnand %p545, %p546
      %p548 = pneg %p547
      // Predicated region
      $region93: #{model_forward.2} parent=5 // pred_check
        _
      $region94: #{model_forward.2} parent=5 // pred_check_branch
        %550 = sbr.rel (%p547) target = $region96
      $region95: #{model_forward.2} parent=5 // pred_region
        %s551 = ssub.s32 %s26, 1
        // Predicated region
        $region97: #{model_forward.2} parent=95 // pred_check
          %p552 = pneg %p430
        $region98: #{model_forward.2} parent=95 // pred_check_branch
          %554 = sbr.rel (%p552) target = $region100
        $region99: #{model_forward.2} parent=95 // pred_region
          %555 = dma.done [#allocation6], 16
        $region100: #{model_forward.2} parent=95 // pred_fallthru
          _
        %p556 = scmp.lt.s32.totalorder %s31, 1
        %s557 = scalar_select %p556, %s31, 1
        %s558 = smul.addr %s557, 8
        %s559 = smul.addr %s558, 8
        %s560 = scalar_lea.vmem %s0, %s559
        %p561 = pneg %p52
        %p562 = pneg %p49
        %p563 = pneg %p73
        %p564 = pneg %p70
        %p565 = pneg %p94
        %p566 = pneg %p91
        %p567 = pneg %p115
        %p568 = pneg %p112
        %p569 = pneg %p136
        %p570 = pneg %p133
        %p571 = pneg %p157
        %p572 = pneg %p154
        %p573 = pneg %p178
        %p574 = pneg %p175
        %p575 = pneg %p199
        %p576 = pneg %p196
        %p577 = pneg %p220
        %p578 = pneg %p217
        %p579 = pneg %p241
        %p580 = pneg %p238
        %p581 = pneg %p262
        %p582 = pneg %p259
        %p583 = pneg %p283
        %p584 = pneg %p280
        %p585 = pneg %p304
        %p586 = pneg %p301
        %p587 = pneg %p325
        %p588 = pneg %p322
        %p589 = pneg %p346
        %p590 = pneg %p343
        %p591 = pneg %p367
        %p592 = pneg %p364
        %p593 = pneg %p388
        %p594 = pneg %p385
        %p595 = pneg %p409
        %p596 = pneg %p406
        %p597 = pneg %p430
        %p598 = pneg %p427
        %p599 = pneg %p456
        %p600 = pneg %p453
        %p601 = scmp.lt.s32.totalorder %s31, 1
        %s602 = scalar_select %p601, %s31, 1
        %s603 = smul.addr %s602, 2
        %s604 = smul.addr %s603, 8
        %s605 = scalar_lea.vmem %s19, %s604
        %p606 = scmp.lt.s32.totalorder %s31, 1
        %s607 = scalar_select %p606, %s31, 1
        %s608 = smul.addr %s607, 8
        %s609 = smul.addr %s608, 8
        %s610 = scalar_lea.vmem %s0, %s609
        %p611 = scmp.lt.s32.totalorder %s31, 1
        %s612 = scalar_select %p611, %s31, 1
        %s613 = smul.addr %s612, 2
        %s614 = smul.addr %s613, 8
        %s615 = scalar_lea.vmem %s19, %s614
        %v617 = vld [vmem:[%s610] sm:$0xff]
        %v618 = vld [vmem:[%s610 + $0x8] sm:$0xff]
        %v619 = vld [vmem:[%s610 + $0x10] sm:$0xff]
        %v620 = vld [vmem:[%s610 + $0x18] sm:$0xff]
        %v621 = vld [vmem:[%s610 + $0x20] sm:$0xff]
        %v622 = vld [vmem:[%s610 + $0x28] sm:$0xff]
        %v623 = vld [vmem:[%s610 + $0x30] sm:$0xff]
        %v624 = vld [vmem:[%s610 + $0x38] sm:$0x7f]
        %v625 = vld [vmem:[%s1] sm:$0x1]
        %v627 = vlaneseq
        %v628 = vshrl.u32 %v627, 7
        %v629 = vsub.s32 0, %v628
        %v630 = vrot.slane %v625, %v629
        %v632 = vmul.f32 %v617, %v630
        %v633 = vmul.f32 %v618, %v630
        %v634 = vmul.f32 %v619, %v630
        %v635 = vmul.f32 %v620, %v630
        %v636 = vmul.f32 %v621, %v630
        %v637 = vmul.f32 %v622, %v630
        %v638 = vmul.f32 %v623, %v630
        %v639 = vmul.f32 %v624, %v630
        %v640 = vld [vmem:[%s2] sm:$0xff]
        %v641 = vld [vmem:[%s2 + $0x8] sm:$0xff]
        %v642 = vld [vmem:[%s2 + $0x10] sm:$0xff]
        %v643 = vld [vmem:[%s2 + $0x18] sm:$0xff]
        %v644 = vld [vmem:[%s2 + $0x20] sm:$0xff]
        %v645 = vld [vmem:[%s2 + $0x28] sm:$0xff]
        %v646 = vld [vmem:[%s2 + $0x30] sm:$0xff]
        %v647 = vld [vmem:[%s2 + $0x38] sm:$0xff]
        %vm648 = vcmask 523264
        %v650 = vsel %vm648, %v632, 0
        %v653 = vsel %vm648, %v633, 0
        %v656 = vsel %vm648, %v634, 0
        %v659 = vsel %vm648, %v635, 0
        %v662 = vsel %vm648, %v636, 0
        %v665 = vsel %vm648, %v637, 0
        %v668 = vsel %vm648, %v638, 0
        %v671 = vsel %vm648, %v639, 0
        %673 = vmatprep.subr.mxu0 0.0
        %674 = vmatpush1.msra.mxu0 %v640
        %675 = vmatprep.subr.mxu0 0.0
        %676 = vmatpush1.msra.mxu0 %v641
        %677 = vmatprep.subr.mxu0 0.0
        %678 = vmatpush1.msra.mxu0 %v642
        %679 = vmatprep.subr.mxu0 0.0
        %680 = vmatpush1.msra.mxu0 %v643
        %681 = vmatprep.subr.mxu0 0.0
        %682 = vmatpush1.msra.mxu0 %v644
        %683 = vmatprep.subr.mxu0 0.0
        %684 = vmatpush1.msra.mxu0 %v645
        %685 = vmatprep.subr.mxu0 0.0
        %686 = vmatpush1.msra.mxu0 %v646
        %687 = vmatprep.subr.mxu0 0.0
        %688 = vmatpush1.msra.mxu0 %v647
        %689 = vmatprep.subr.mxu0 0.0
        %690 = vmatpush1.msra.mxu0 0.0
        %691 = vmatprep.subr.mxu0 0.0
        %692 = vmatpush1.msra.mxu0 0.0
        %693 = vmatprep.subr.mxu0 0.0
        %694 = vmatpush1.msra.mxu0 0.0
        %695 = vmatprep.subr.mxu0 0.0
        %696 = vmatpush1.msra.mxu0 0.0
        %697 = vmatprep.subr.mxu0 0.0
        %698 = vmatpush1.msra.mxu0 0.0
        %699 = vmatprep.subr.mxu0 0.0
        %700 = vmatpush1.msra.mxu0 0.0
        %701 = vmatprep.subr.mxu0 0.0
        %702 = vmatpush1.msra.mxu0 0.0
        %703 = vmatprep.subr.mxu0 0.0
        %704 = vmatpush1.msra.mxu0 0.0
        %705 = vmatprep.subr.mxu0 0.0
        %706 = vmatpush1.msra.mxu0 0.0
        %707 = vmatprep.subr.mxu0 0.0
        %708 = vmatpush1.msra.mxu0 0.0
        %709 = vmatprep.subr.mxu0 0.0
        %710 = vmatpush1.msra.mxu0 0.0
        %711 = vmatprep.subr.mxu0 0.0
        %712 = vmatpush1.msra.mxu0 0.0
        %713 = vmatprep.subr.mxu0 0.0
        %714 = vmatpush1.msra.mxu0 0.0
        %715 = vmatprep.subr.mxu0 0.0
        %716 = vmatpush1.msra.mxu0 0.0
        %717 = vmatprep.subr.mxu0 0.0
        %718 = vmatpush1.msra.mxu0 0.0
        %719 = vmatprep.subr.mxu0 0.0
        %720 = vmatpush1.msra.mxu0 0.0
        %721 = vmatprep.subr.mxu0 0.0
        %722 = vmatpush1.msra.mxu0 0.0
        %723 = vmatprep.subr.mxu0 0.0
        %724 = vmatpush1.msra.mxu0 0.0
        %725 = vmatprep.subr.mxu0 0.0
        %726 = vmatpush1.msra.mxu0 0.0
        %727 = vmatprep.subr.mxu0 0.0
        %728 = vmatpush1.msra.mxu0 0.0
        %729 = vmatprep.subr.mxu0 0.0
        %730 = vmatpush1.msra.mxu0 0.0
        %731 = vmatprep.subr.mxu0 0.0
        %732 = vmatpush1.msra.mxu0 0.0
        %733 = vmatprep.subr.mxu0 0.0
        %734 = vmatpush1.msra.mxu0 0.0
        %735 = vmatprep.subr.mxu0 0.0
        %736 = vmatpush1.msra.mxu0 0.0
        %737 = vmatprep.mubr.f32.mxu0 0.0
        %738 = vmatmul.mubr.f32.gmra.mrb[0].mxu0 %v650
        %v739 = vpop.f32.mrb[0].mxu0
        %v740 = vadd.f32 0.0, %v739
        %v741 = vpop.f32.mrb[0].mxu0
        %742 = vmatprep.mubr.f32.mxu0 0.0
        %743 = vmatmul.mubr.f32.gmra.mrb[0].mxu0 %v653
        %v744 = vpop.f32.mrb[0].mxu0
        %v745 = vadd.f32 0.0, %v744
        %v746 = vpop.f32.mrb[0].mxu0
        %747 = vmatprep.mubr.f32.mxu0 0.0
        %748 = vmatmul.mubr.f32.gmra.mrb[0].mxu0 %v656
        %v749 = vpop.f32.mrb[0].mxu0
        %v750 = vadd.f32 0.0, %v749
        %v751 = vpop.f32.mrb[0].mxu0
        %752 = vmatprep.mubr.f32.mxu0 0.0
        %753 = vmatmul.mubr.f32.gmra.mrb[0].mxu0 %v659
        %v754 = vpop.f32.mrb[0].mxu0
        %v755 = vadd.f32 0.0, %v754
        %v756 = vpop.f32.mrb[0].mxu0
        %757 = vmatprep.mubr.f32.mxu0 0.0
        %758 = vmatmul.mubr.f32.gmra.mrb[0].mxu0 %v662
        %v759 = vpop.f32.mrb[0].mxu0
        %v760 = vadd.f32 0.0, %v759
        %v761 = vpop.f32.mrb[0].mxu0
        %762 = vmatprep.mubr.f32.mxu0 0.0
        %763 = vmatmul.mubr.f32.gmra.mrb[0].mxu0 %v665
        %v764 = vpop.f32.mrb[0].mxu0
        %v765 = vadd.f32 0.0, %v764
        %v766 = vpop.f32.mrb[0].mxu0
        %767 = vmatprep.mubr.f32.mxu0 0.0
        %768 = vmatmul.mubr.f32.gmra.mrb[0].mxu0 %v668
        %v769 = vpop.f32.mrb[0].mxu0
        %v770 = vadd.f32 0.0, %v769
        %v771 = vpop.f32.mrb[0].mxu0
        %772 = vmatprep.mubr.f32.mxu0 0.0
        %773 = vmatmul.mubr.f32.gmra.mrb[0].mxu0 %v671
        %v774 = vpop.f32.mrb[0].mxu0
        %v775 = vadd.f32 0.0, %v774
        %v776 = vpop.f32.mrb[0].mxu0
        %777 = vdwg.mxu0
        %v778 = vld [vmem:[%s3] sm:$0xff]
        %v779 = vld [vmem:[%s3 + $0x8] sm:$0xff]
        %v780 = vld [vmem:[%s3 + $0x10] sm:$0xff]
        %v781 = vld [vmem:[%s3 + $0x18] sm:$0xff]
        %v782 = vld [vmem:[%s3 + $0x20] sm:$0xff]
        %v783 = vld [vmem:[%s3 + $0x28] sm:$0xff]
        %v784 = vld [vmem:[%s3 + $0x30] sm:$0xff]
        %v785 = vld [vmem:[%s3 + $0x38] sm:$0xff]
        %786 = vmatprep.subr.mxu0 0.0
        %787 = vmatpush1.msra.mxu0 %v778
        %788 = vmatprep.subr.mxu0 0.0
        %789 = vmatpush1.msra.mxu0 %v779
        %790 = vmatprep.subr.mxu0 0.0
        %791 = vmatpush1.msra.mxu0 %v780
        %792 = vmatprep.subr.mxu0 0.0
        %793 = vmatpush1.msra.mxu0 %v781
        %794 = vmatprep.subr.mxu0 0.0
        %795 = vmatpush1.msra.mxu0 %v782
        %796 = vmatprep.subr.mxu0 0.0
        %797 = vmatpush1.msra.mxu0 %v783
        %798 = vmatprep.subr.mxu0 0.0
        %799 = vmatpush1.msra.mxu0 %v784
        %800 = vmatprep.subr.mxu0 0.0
        %801 = vmatpush1.msra.mxu0 %v785
        %802 = vmatprep.subr.mxu0 0.0
        %803 = vmatpush1.msra.mxu0 0.0
        %804 = vmatprep.subr.mxu0 0.0
        %805 = vmatpush1.msra.mxu0 0.0
        %806 = vmatprep.subr.mxu0 0.0
        %807 = vmatpush1.msra.mxu0 0.0
        %808 = vmatprep.subr.mxu0 0.0
        %809 = vmatpush1.msra.mxu0 0.0
        %810 = vmatprep.subr.mxu0 0.0
        %811 = vmatpush1.msra.mxu0 0.0
        %812 = vmatprep.subr.mxu0 0.0
        %813 = vmatpush1.msra.mxu0 0.0
        %814 = vmatprep.subr.mxu0 0.0
        %815 = vmatpush1.msra.mxu0 0.0
        %816 = vmatprep.subr.mxu0 0.0
        %817 = vmatpush1.msra.mxu0 0.0
        %818 = vmatprep.subr.mxu0 0.0
        %819 = vmatpush1.msra.mxu0 0.0
        %820 = vmatprep.subr.mxu0 0.0
        %821 = vmatpush1.msra.mxu0 0.0
        %822 = vmatprep.subr.mxu0 0.0
        %823 = vmatpush1.msra.mxu0 0.0
        %824 = vmatprep.subr.mxu0 0.0
        %825 = vmatpush1.msra.mxu0 0.0
        %826 = vmatprep.subr.mxu0 0.0
        %827 = vmatpush1.msra.mxu0 0.0
        %828 = vmatprep.subr.mxu0 0.0
        %829 = vmatpush1.msra.mxu0 0.0
        %830 = vmatprep.subr.mxu0 0.0
        %831 = vmatpush1.msra.mxu0 0.0
        %832 = vmatprep.subr.mxu0 0.0
        %833 = vmatpush1.msra.mxu0 0.0
        %834 = vmatprep.subr.mxu0 0.0
        %835 = vmatpush1.msra.mxu0 0.0
        %836 = vmatprep.subr.mxu0 0.0
        %837 = vmatpush1.msra.mxu0 0.0
        %838 = vmatprep.subr.mxu0 0.0
        %839 = vmatpush1.msra.mxu0 0.0
        %840 = vmatprep.subr.mxu0 0.0
        %841 = vmatpush1.msra.mxu0 0.0
        %842 = vmatprep.subr.mxu0 0.0
        %843 = vmatpush1.msra.mxu0 0.0
        %844 = vmatprep.subr.mxu0 0.0
        %845 = vmatpush1.msra.mxu0 0.0
        %846 = vmatprep.subr.mxu0 0.0
        %847 = vmatpush1.msra.mxu0 0.0
        %848 = vmatprep.subr.mxu0 0.0
        %849 = vmatpush1.msra.mxu0 0.0
        %850 = vmatprep.mubr.f32.mxu0 0.0
        %851 = vmatmul.mubr.f32.gmra.mrb[0].mxu0 %v650
        %v852 = vpop.f32.mrb[0].mxu0
        %v853 = vadd.f32 0.0, %v852
        %v854 = vpop.f32.mrb[0].mxu0
        %855 = vmatprep.mubr.f32.mxu0 0.0
        %856 = vmatmul.mubr.f32.gmra.mrb[0].mxu0 %v653
        %v857 = vpop.f32.mrb[0].mxu0
        %v858 = vadd.f32 0.0, %v857
        %v859 = vpop.f32.mrb[0].mxu0
        %860 = vmatprep.mubr.f32.mxu0 0.0
        %861 = vmatmul.mubr.f32.gmra.mrb[0].mxu0 %v656
        %v862 = vpop.f32.mrb[0].mxu0
        %v863 = vadd.f32 0.0, %v862
        %v864 = vpop.f32.mrb[0].mxu0
        %865 = vmatprep.mubr.f32.mxu0 0.0
        %866 = vmatmul.mubr.f32.gmra.mrb[0].mxu0 %v659
        %v867 = vpop.f32.mrb[0].mxu0
        %v868 = vadd.f32 0.0, %v867
        %v869 = vpop.f32.mrb[0].mxu0
        %870 = vmatprep.mubr.f32.mxu0 0.0
        %871 = vmatmul.mubr.f32.gmra.mrb[0].mxu0 %v662
        %v872 = vpop.f32.mrb[0].mxu0
        %v873 = vadd.f32 0.0, %v872
        %v874 = vpop.f32.mrb[0].mxu0
        %875 = vmatprep.mubr.f32.mxu0 0.0
        %876 = vmatmul.mubr.f32.gmra.mrb[0].mxu0 %v665
        %v877 = vpop.f32.mrb[0].mxu0
        %v878 = vadd.f32 0.0, %v877
        %v879 = vpop.f32.mrb[0].mxu0
        %880 = vmatprep.mubr.f32.mxu0 0.0
        %881 = vmatmul.mubr.f32.gmra.mrb[0].mxu0 %v668
        %v882 = vpop.f32.mrb[0].mxu0
        %v883 = vadd.f32 0.0, %v882
        %v884 = vpop.f32.mrb[0].mxu0
        %885 = vmatprep.mubr.f32.mxu0 0.0
        %886 = vmatmul.mubr.f32.gmra.mrb[0].mxu0 %v671
        %v887 = vpop.f32.mrb[0].mxu0
        %v888 = vadd.f32 0.0, %v887
        %v889 = vpop.f32.mrb[0].mxu0
        %890 = vdwg.mxu0
        %v891 = vmul.f32 %v740, %v740
        %v892 = vmul.f32 %v745, %v745
        %v893 = vmul.f32 %v750, %v750
        %v894 = vmul.f32 %v755, %v755
        %v895 = vmul.f32 %v760, %v760
        %v896 = vmul.f32 %v765, %v765
        %v897 = vmul.f32 %v770, %v770
        %v898 = vmul.f32 %v775, %v775
        %v899 = vmul.f32 %v853, %v853
        %v900 = vmul.f32 %v858, %v858
        %v901 = vmul.f32 %v863, %v863
        %v902 = vmul.f32 %v868, %v868
        %v903 = vmul.f32 %v873, %v873
        %v904 = vmul.f32 %v878, %v878
        %v905 = vmul.f32 %v883, %v883
        %v906 = vmul.f32 %v888, %v888
        %v907 = vadd.f32 %v891, %v899
        %v908 = vadd.f32 %v892, %v900
        %v909 = vadd.f32 %v893, %v901
        %v910 = vadd.f32 %v894, %v902
        %v911 = vadd.f32 %v895, %v903
        %v912 = vadd.f32 %v896, %v904
        %v913 = vadd.f32 %v897, %v905
        %v914 = vadd.f32 %v898, %v906
        %v915 = vld [vmem:[%s4] sm:$0xff]
        %v916 = vld [vmem:[%s4 + $0x8] sm:$0xff]
        %v917 = vld [vmem:[%s4 + $0x10] sm:$0xff]
        %v918 = vld [vmem:[%s4 + $0x18] sm:$0xff]
        %v919 = vld [vmem:[%s4 + $0x20] sm:$0x1]
        %vm920 = vcmask 269312
        %v922 = vsel %vm920, %v907, 0
        %v925 = vsel %vm920, %v908, 0
        %v928 = vsel %vm920, %v909, 0
        %v931 = vsel %vm920, %v910, 0
        %v934 = vsel %vm920, %v911, 0
        %v937 = vsel %vm920, %v912, 0
        %v940 = vsel %vm920, %v913, 0
        %v943 = vsel %vm920, %v914, 0
        %vm945 = vcmask 1040384
        %v947 = vsel %vm945, %v919, 0
        %949 = vmatprep.subr.mxu0 0.0
        %950 = vmatpush1.msra.mxu0 %v915
        %951 = vmatprep.subr.mxu0 0.0
        %952 = vmatpush1.msra.mxu0 %v916
        %953 = vmatprep.subr.mxu0 0.0
        %954 = vmatpush1.msra.mxu0 %v917
        %955 = vmatprep.subr.mxu0 0.0
        %956 = vmatpush1.msra.mxu0 %v918
        %957 = vmatprep.subr.mxu0 0.0
        %958 = vmatpush1.msra.mxu0 %v947
        %959 = vmatprep.subr.mxu0 0.0
        %960 = vmatpush1.msra.mxu0 0.0
        %961 = vmatprep.subr.mxu0 0.0
        %962 = vmatpush1.msra.mxu0 0.0
        %963 = vmatprep.subr.mxu0 0.0
        %964 = vmatpush1.msra.mxu0 0.0
        %965 = vmatprep.subr.mxu0 0.0
        %966 = vmatpush1.msra.mxu0 0.0
        %967 = vmatprep.subr.mxu0 0.0
        %968 = vmatpush1.msra.mxu0 0.0
        %969 = vmatprep.subr.mxu0 0.0
        %970 = vmatpush1.msra.mxu0 0.0
        %971 = vmatprep.subr.mxu0 0.0
        %972 = vmatpush1.msra.mxu0 0.0
        %973 = vmatprep.subr.mxu0 0.0
        %974 = vmatpush1.msra.mxu0 0.0
        %975 = vmatprep.subr.mxu0 0.0
        %976 = vmatpush1.msra.mxu0 0.0
        %977 = vmatprep.subr.mxu0 0.0
        %978 = vmatpush1.msra.mxu0 0.0
        %979 = vmatprep.subr.mxu0 0.0
        %980 = vmatpush1.msra.mxu0 0.0
        %981 = vmatprep.subr.mxu0 0.0
        %982 = vmatpush1.msra.mxu0 0.0
        %983 = vmatprep.subr.mxu0 0.0
        %984 = vmatpush1.msra.mxu0 0.0
        %985 = vmatprep.subr.mxu0 0.0
        %986 = vmatpush1.msra.mxu0 0.0
        %987 = vmatprep.subr.mxu0 0.0
        %988 = vmatpush1.msra.mxu0 0.0
        %989 = vmatprep.subr.mxu0 0.0
        %990 = vmatpush1.msra.mxu0 0.0
        %991 = vmatprep.subr.mxu0 0.0
        %992 = vmatpush1.msra.mxu0 0.0
        %993 = vmatprep.subr.mxu0 0.0
        %994 = vmatpush1.msra.mxu0 0.0
        %995 = vmatprep.subr.mxu0 0.0
        %996 = vmatpush1.msra.mxu0 0.0
        %997 = vmatprep.subr.mxu0 0.0
        %998 = vmatpush1.msra.mxu0 0.0
        %999 = vmatprep.subr.mxu0 0.0
        %1000 = vmatpush1.msra.mxu0 0.0
        %1001 = vmatprep.subr.mxu0 0.0
        %1002 = vmatpush1.msra.mxu0 0.0
        %1003 = vmatprep.subr.mxu0 0.0
        %1004 = vmatpush1.msra.mxu0 0.0
        %1005 = vmatprep.subr.mxu0 0.0
        %1006 = vmatpush1.msra.mxu0 0.0
        %1007 = vmatprep.subr.mxu0 0.0
        %1008 = vmatpush1.msra.mxu0 0.0
        %1009 = vmatprep.subr.mxu0 0.0
        %1010 = vmatpush1.msra.mxu0 0.0
        %1011 = vmatprep.subr.mxu0 0.0
        %1012 = vmatpush1.msra.mxu0 0.0
        %1013 = vmatprep.mubr.f32.mxu0 0.0
        %1014 = vmatmul.mubr.f32.gmra.mrb[0].mxu0 %v922
        %v1015 = vpop.f32.mrb[0].mxu0
        %v1016 = vadd.f32 0.0, %v1015
        %v1017 = vpop.f32.mrb[0].mxu0
        %1018 = vmatprep.mubr.f32.mxu0 0.0
        %1019 = vmatmul.mubr.f32.gmra.mrb[0].mxu0 %v925
        %v1020 = vpop.f32.mrb[0].mxu0
        %v1021 = vadd.f32 0.0, %v1020
        %v1022 = vpop.f32.mrb[0].mxu0
        %1023 = vmatprep.mubr.f32.mxu0 0.0
        %1024 = vmatmul.mubr.f32.gmra.mrb[0].mxu0 %v928
        %v1025 = vpop.f32.mrb[0].mxu0
        %v1026 = vadd.f32 0.0, %v1025
        %v1027 = vpop.f32.mrb[0].mxu0
        %1028 = vmatprep.mubr.f32.mxu0 0.0
        %1029 = vmatmul.mubr.f32.gmra.mrb[0].mxu0 %v931
        %v1030 = vpop.f32.mrb[0].mxu0
        %v1031 = vadd.f32 0.0, %v1030
        %v1032 = vpop.f32.mrb[0].mxu0
        %1033 = vmatprep.mubr.f32.mxu0 0.0
        %1034 = vmatmul.mubr.f32.gmra.mrb[0].mxu0 %v934
        %v1035 = vpop.f32.mrb[0].mxu0
        %v1036 = vadd.f32 0.0, %v1035
        %v1037 = vpop.f32.mrb[0].mxu0
        %1038 = vmatprep.mubr.f32.mxu0 0.0
        %1039 = vmatmul.mubr.f32.gmra.mrb[0].mxu0 %v937
        %v1040 = vpop.f32.mrb[0].mxu0
        %v1041 = vadd.f32 0.0, %v1040
        %v1042 = vpop.f32.mrb[0].mxu0
        %1043 = vmatprep.mubr.f32.mxu0 0.0
        %1044 = vmatmul.mubr.f32.gmra.mrb[0].mxu0 %v940
        %v1045 = vpop.f32.mrb[0].mxu0
        %v1046 = vadd.f32 0.0, %v1045
        %v1047 = vpop.f32.mrb[0].mxu0
        %1048 = vmatprep.mubr.f32.mxu0 0.0
        %1049 = vmatmul.mubr.f32.gmra.mrb[0].mxu0 %v943
        %v1050 = vpop.f32.mrb[0].mxu0
        %v1051 = vadd.f32 0.0, %v1050
        %v1052 = vpop.f32.mrb[0].mxu0
        %1053 = vdwg.mxu0
        %v1054 = vmax.f32 %v1016, 1e-10
        %v1055 = vmax.f32 %v1021, 1e-10
        %v1056 = vmax.f32 %v1026, 1e-10
        %v1057 = vmax.f32 %v1031, 1e-10
        %v1058 = vmax.f32 %v1036, 1e-10
        %v1059 = vmax.f32 %v1041, 1e-10
        %v1060 = vmax.f32 %v1046, 1e-10
        %v1061 = vmax.f32 %v1051, 1e-10
        %v1062 = vlog2.pop %v1054
        %v1063 = vmul.f32 %v1062, 0.6931472
        %v1064 = vlog2.pop %v1055
        %v1065 = vmul.f32 %v1064, 0.6931472
        %v1066 = vlog2.pop %v1056
        %v1067 = vmul.f32 %v1066, 0.6931472
        %v1068 = vlog2.pop %v1057
        %v1069 = vmul.f32 %v1068, 0.6931472
        %v1070 = vlog2.pop %v1058
        %v1071 = vmul.f32 %v1070, 0.6931472
        %v1072 = vlog2.pop %v1059
        %v1073 = vmul.f32 %v1072, 0.6931472
        %v1074 = vlog2.pop %v1060
        %v1075 = vmul.f32 %v1074, 0.6931472
        %v1076 = vlog2.pop %v1061
        %v1077 = vmul.f32 %v1076, 0.6931472
        %v1078 = vmul.f32 %v1063, 0.4342945
        %v1079 = vmul.f32 %v1065, 0.4342945
        %v1080 = vmul.f32 %v1067, 0.4342945
        %v1081 = vmul.f32 %v1069, 0.4342945
        %v1082 = vmul.f32 %v1071, 0.4342945
        %v1083 = vmul.f32 %v1073, 0.4342945
        %v1084 = vmul.f32 %v1075, 0.4342945
        %v1085 = vmul.f32 %v1077, 0.4342945
        %vm1086 = vcmask 130048
        %1087 = vst.msk [vmem:[#allocation2] sm:$0xff] %vm1086, 0.0
        %1088 = vst.msk [vmem:[#allocation2 + $0x8] sm:$0xff] %vm1086, 0.0
        %1089 = vst.msk [vmem:[#allocation2 + $0x10] sm:$0xff] %vm1086, 0.0
        %1090 = vst.msk [vmem:[#allocation2 + $0x18] sm:$0xff] %vm1086, 0.0
        %1091 = vst.msk [vmem:[#allocation2 + $0x20] sm:$0xff] %vm1086, 0.0
        %1092 = vst.msk [vmem:[#allocation2 + $0x28] sm:$0xff] %vm1086, 0.0
        %1093 = vst.msk [vmem:[#allocation2 + $0x30] sm:$0xff] %vm1086, 0.0
        %1094 = vst.msk [vmem:[#allocation2 + $0x38] sm:$0xff] %vm1086, 0.0
        %vm1095 = vcmask 122880
        %1096 = vst.msk [vmem:[#allocation2 + $0x40] sm:$0x1] %vm1095, 0.0
        %1097 = vst.msk [vmem:[#allocation2 + $0x1] sm:$0xff] %vm1086, %v1078
        %1098 = vst.msk [vmem:[#allocation2 + $0x9] sm:$0xff] %vm1086, %v1079
        %1099 = vst.msk [vmem:[#allocation2 + $0x11] sm:$0xff] %vm1086, %v1080
        %1100 = vst.msk [vmem:[#allocation2 + $0x19] sm:$0xff] %vm1086, %v1081
        %1101 = vst.msk [vmem:[#allocation2 + $0x21] sm:$0xff] %vm1086, %v1082
        %1102 = vst.msk [vmem:[#allocation2 + $0x29] sm:$0xff] %vm1086, %v1083
        %1103 = vst.msk [vmem:[#allocation2 + $0x31] sm:$0xff] %vm1086, %v1084
        %vm1104 = vcmask 129024
        %1105 = vst.msk [vmem:[#allocation2 + $0x39] sm:$0x7f] %vm1104, %v1085
        %v1106 = vld [vmem:[%s6] sm:$0x1]
        %v1108 = vlaneseq
        %v1109 = vshrl.u32 %v1108, 7
        %v1110 = vsub.s32 0, %v1109
        %v1111 = vrot.slane %v1106, %v1110
        %v1113 = vadd.f32 %v1111, 0.0
        %v1114 = vld [vmem:[#allocation2] sm:$0xff]
        %v1115 = vld [vmem:[#allocation2 + $0x8] sm:$0xff]
        %v1116 = vld [vmem:[#allocation2 + $0x10] sm:$0xff]
        %v1117 = vld [vmem:[#allocation2 + $0x18] sm:$0xff]
        %v1118 = vld [vmem:[#allocation2 + $0x20] sm:$0xff]
        %v1119 = vld [vmem:[#allocation2 + $0x28] sm:$0xff]
        %v1120 = vld [vmem:[#allocation2 + $0x30] sm:$0xff]
        %v1121 = vld [vmem:[#allocation2 + $0x38] sm:$0x7f]
        %v1122 = vpack.c.bf16 %v1115, %v1114
        %v1123 = vpack.c.bf16 %v1117, %v1116
        %v1124 = vpack.c.bf16 %v1119, %v1118
        %v1125 = vpack.c.bf16 %v1121, %v1120
        %v1126 = vld [vmem:[%s5] sm:$0xf]
        %v1127 = vld [vmem:[%s5 + $0x4] sm:$0xf]
        %v1130 = vunpack.c.l.b16 %v1126
        %v1131 = vunpack.c.l.b16 %v1127
        %v1132 = vpack.c.b16 %v1131, %v1130
        %v1135 = vsel %vm1086, %v1122, 0
        %v1138 = vsel %vm1086, %v1123, 0
        %v1141 = vsel %vm1086, %v1124, 0
        %v1144 = vsel %vm1086, %v1125, 0
        %1146 = vmatprep.subr.bf16.mxu0 0
        %1147 = vmatpush1.bf16.msra.mxu0 %v1132
        %1148 = vmatprep.subr.bf16.mxu0 0
        %1149 = vmatpush1.bf16.msra.mxu0 0
        %1150 = vmatprep.subr.bf16.mxu0 0
        %1151 = vmatpush1.bf16.msra.mxu0 0
        %1152 = vmatprep.subr.bf16.mxu0 0
        %1153 = vmatpush1.bf16.msra.mxu0 0
        %1154 = vmatprep.subr.bf16.mxu0 0
        %1155 = vmatpush1.bf16.msra.mxu0 0
        %1156 = vmatprep.subr.bf16.mxu0 0
        %1157 = vmatpush1.bf16.msra.mxu0 0
        %1158 = vmatprep.subr.bf16.mxu0 0
        %1159 = vmatpush1.bf16.msra.mxu0 0
        %1160 = vmatprep.subr.bf16.mxu0 0
        %1161 = vmatpush1.bf16.msra.mxu0 0
        %1162 = vmatprep.subr.bf16.mxu0 0
        %1163 = vmatpush1.bf16.msra.mxu0 0
        %1164 = vmatprep.subr.bf16.mxu0 0
        %1165 = vmatpush1.bf16.msra.mxu0 0
        %1166 = vmatprep.subr.bf16.mxu0 0
        %1167 = vmatpush1.bf16.msra.mxu0 0
        %1168 = vmatprep.subr.bf16.mxu0 0
        %1169 = vmatpush1.bf16.msra.mxu0 0
        %1170 = vmatprep.subr.bf16.mxu0 0
        %1171 = vmatpush1.bf16.msra.mxu0 0
        %1172 = vmatprep.subr.bf16.mxu0 0
        %1173 = vmatpush1.bf16.msra.mxu0 0
        %1174 = vmatprep.subr.bf16.mxu0 0
        %1175 = vmatpush1.bf16.msra.mxu0 0
        %1176 = vmatprep.subr.bf16.mxu0 0
        %1177 = vmatpush1.bf16.msra.mxu0 0
        %1178 = vmatprep.mubr.bf16.mxu0 0
        %1179 = vmatmul.mubr.bf16.gmra.mrb[0].mxu0 %v1135
        %v1180 = vpop.f32.mrb[0].mxu0
        %v1181 = vadd.f32 0.0, %v1180
        %v1182 = vpop.f32.mrb[0].mxu0
        %v1183 = vpop.f32.mrb[0].mxu0
        %v1184 = vadd.f32 0.0, %v1183
        %v1185 = vpop.f32.mrb[0].mxu0
        %1186 = vmatprep.mubr.bf16.mxu0 0
        %1187 = vmatmul.mubr.bf16.gmra.mrb[0].mxu0 %v1138
        %v1188 = vpop.f32.mrb[0].mxu0
        %v1189 = vadd.f32 0.0, %v1188
        %v1190 = vpop.f32.mrb[0].mxu0
        %v1191 = vpop.f32.mrb[0].mxu0
        %v1192 = vadd.f32 0.0, %v1191
        %v1193 = vpop.f32.mrb[0].mxu0
        %1194 = vmatprep.mubr.bf16.mxu0 0
        %1195 = vmatmul.mubr.bf16.gmra.mrb[0].mxu0 %v1141
        %v1196 = vpop.f32.mrb[0].mxu0
        %v1197 = vadd.f32 0.0, %v1196
        %v1198 = vpop.f32.mrb[0].mxu0
        %v1199 = vpop.f32.mrb[0].mxu0
        %v1200 = vadd.f32 0.0, %v1199
        %v1201 = vpop.f32.mrb[0].mxu0
        %1202 = vmatprep.mubr.bf16.mxu0 0
        %1203 = vmatmul.mubr.bf16.gmra.mrb[0].mxu0 %v1144
        %v1204 = vpop.f32.mrb[0].mxu0
        %v1205 = vadd.f32 0.0, %v1204
        %v1206 = vpop.f32.mrb[0].mxu0
        %v1207 = vpop.f32.mrb[0].mxu0
        %v1208 = vadd.f32 0.0, %v1207
        %v1209 = vpop.f32.mrb[0].mxu0
        %1210 = vdwg.mxu0
        %v1211 = vadd.f32 %v1113, %v1181
        %v1212 = vadd.f32 %v1113, %v1184
        %v1213 = vadd.f32 %v1113, %v1189
        %v1214 = vadd.f32 %v1113, %v1192
        %v1215 = vadd.f32 %v1113, %v1197
        %v1216 = vadd.f32 %v1113, %v1200
        %v1217 = vadd.f32 %v1113, %v1205
        %v1218 = vadd.f32 %v1113, %v1208
        %v1219 = vld [vmem:[#allocation2 + $0x1] sm:$0xff]
        %v1220 = vld [vmem:[#allocation2 + $0x9] sm:$0xff]
        %v1221 = vld [vmem:[#allocation2 + $0x11] sm:$0xff]
        %v1222 = vld [vmem:[#allocation2 + $0x19] sm:$0xff]
        %v1223 = vld [vmem:[#allocation2 + $0x21] sm:$0xff]
        %v1224 = vld [vmem:[#allocation2 + $0x29] sm:$0xff]
        %v1225 = vld [vmem:[#allocation2 + $0x31] sm:$0xff]
        %v1226 = vld [vmem:[#allocation2 + $0x39] sm:$0x7f]
        %v1227 = vpack.c.bf16 %v1220, %v1219
        %v1228 = vpack.c.bf16 %v1222, %v1221
        %v1229 = vpack.c.bf16 %v1224, %v1223
        %v1230 = vpack.c.bf16 %v1226, %v1225
        %s1231 = scalar_lea.vmem %s5, 8
        %v1232 = vld [vmem:[%s1231] sm:$0xf]
        %v1233 = vld [vmem:[%s1231 + $0x4] sm:$0xf]
        %v1236 = vunpack.c.l.b16 %v1232
        %v1237 = vunpack.c.l.b16 %v1233
        %v1238 = vpack.c.b16 %v1237, %v1236
        %v1241 = vsel %vm1086, %v1227, 0
        %v1244 = vsel %vm1086, %v1228, 0
        %v1247 = vsel %vm1086, %v1229, 0
        %v1250 = vsel %vm1086, %v1230, 0
        %1252 = vmatprep.subr.bf16.mxu0 0
        %1253 = vmatpush1.bf16.msra.mxu0 %v1238
        %1254 = vmatprep.subr.bf16.mxu0 0
        %1255 = vmatpush1.bf16.msra.mxu0 0
        %1256 = vmatprep.subr.bf16.mxu0 0
        %1257 = vmatpush1.bf16.msra.mxu0 0
        %1258 = vmatprep.subr.bf16.mxu0 0
        %1259 = vmatpush1.bf16.msra.mxu0 0
        %1260 = vmatprep.subr.bf16.mxu0 0
        %1261 = vmatpush1.bf16.msra.mxu0 0
        %1262 = vmatprep.subr.bf16.mxu0 0
        %1263 = vmatpush1.bf16.msra.mxu0 0
        %1264 = vmatprep.subr.bf16.mxu0 0
        %1265 = vmatpush1.bf16.msra.mxu0 0
        %1266 = vmatprep.subr.bf16.mxu0 0
        %1267 = vmatpush1.bf16.msra.mxu0 0
        %1268 = vmatprep.subr.bf16.mxu0 0
        %1269 = vmatpush1.bf16.msra.mxu0 0
        %1270 = vmatprep.subr.bf16.mxu0 0
        %1271 = vmatpush1.bf16.msra.mxu0 0
        %1272 = vmatprep.subr.bf16.mxu0 0
        %1273 = vmatpush1.bf16.msra.mxu0 0
        %1274 = vmatprep.subr.bf16.mxu0 0
        %1275 = vmatpush1.bf16.msra.mxu0 0
        %1276 = vmatprep.subr.bf16.mxu0 0
        %1277 = vmatpush1.bf16.msra.mxu0 0
        %1278 = vmatprep.subr.bf16.mxu0 0
        %1279 = vmatpush1.bf16.msra.mxu0 0
        %1280 = vmatprep.subr.bf16.mxu0 0
        %1281 = vmatpush1.bf16.msra.mxu0 0
        %1282 = vmatprep.subr.bf16.mxu0 0
        %1283 = vmatpush1.bf16.msra.mxu0 0
        %1284 = vmatprep.mubr.bf16.mxu0 0
        %1285 = vmatmul.mubr.bf16.gmra.mrb[0].mxu0 %v1241
        %v1286 = vpop.f32.mrb[0].mxu0
        %v1287 = vadd.f32 0.0, %v1286
        %v1288 = vpop.f32.mrb[0].mxu0
        %v1289 = vpop.f32.mrb[0].mxu0
        %v1290 = vadd.f32 0.0, %v1289
        %v1291 = vpop.f32.mrb[0].mxu0
        %1292 = vmatprep.mubr.bf16.mxu0 0
        %1293 = vmatmul.mubr.bf16.gmra.mrb[0].mxu0 %v1244
        %v1294 = vpop.f32.mrb[0].mxu0
        %v1295 = vadd.f32 0.0, %v1294
        %v1296 = vpop.f32.mrb[0].mxu0
        %v1297 = vpop.f32.mrb[0].mxu0
        %v1298 = vadd.f32 0.0, %v1297
        %v1299 = vpop.f32.mrb[0].mxu0
        %1300 = vmatprep.mubr.bf16.mxu0 0
        %1301 = vmatmul.mubr.bf16.gmra.mrb[0].mxu0 %v1247
        %v1302 = vpop.f32.mrb[0].mxu0
        %v1303 = vadd.f32 0.0, %v1302
        %v1304 = vpop.f32.mrb[0].mxu0
        %v1305 = vpop.f32.mrb[0].mxu0
        %v1306 = vadd.f32 0.0, %v1305
        %v1307 = vpop.f32.mrb[0].mxu0
        %1308 = vmatprep.mubr.bf16.mxu0 0
        %1309 = vmatmul.mubr.bf16.gmra.mrb[0].mxu0 %v1250
        %v1310 = vpop.f32.mrb[0].mxu0
        %v1311 = vadd.f32 0.0, %v1310
        %v1312 = vpop.f32.mrb[0].mxu0
        %v1313 = vpop.f32.mrb[0].mxu0
        %v1314 = vadd.f32 0.0, %v1313
        %v1315 = vpop.f32.mrb[0].mxu0
        %1316 = vdwg.mxu0
        %v1317 = vadd.f32 %v1211, %v1287
        %v1318 = vadd.f32 %v1212, %v1290
        %v1319 = vadd.f32 %v1213, %v1295
        %v1320 = vadd.f32 %v1214, %v1298
        %v1321 = vadd.f32 %v1215, %v1303
        %v1322 = vadd.f32 %v1216, %v1306
        %v1323 = vadd.f32 %v1217, %v1311
        %v1324 = vadd.f32 %v1218, %v1314
        %v1325 = vld [vmem:[#allocation2 + $0x2] sm:$0xff]
        %v1326 = vld [vmem:[#allocation2 + $0xa] sm:$0xff]
        %v1327 = vld [vmem:[#allocation2 + $0x12] sm:$0xff]
        %v1328 = vld [vmem:[#allocation2 + $0x1a] sm:$0xff]
        %v1329 = vld [vmem:[#allocation2 + $0x22] sm:$0xff]
        %v1330 = vld [vmem:[#allocation2 + $0x2a] sm:$0xff]
        %v1331 = vld [vmem:[#allocation2 + $0x32] sm:$0xff]
        %v1332 = vld [vmem:[#allocation2 + $0x3a] sm:$0x7f]
        %v1333 = vpack.c.bf16 %v1326, %v1325
        %v1334 = vpack.c.bf16 %v1328, %v1327
        %v1335 = vpack.c.bf16 %v1330, %v1329
        %v1336 = vpack.c.bf16 %v1332, %v1331
        %s1337 = scalar_lea.vmem %s5, 16
        %v1338 = vld [vmem:[%s1337] sm:$0xf]
        %v1339 = vld [vmem:[%s1337 + $0x4] sm:$0xf]
        %v1342 = vunpack.c.l.b16 %v1338
        %v1343 = vunpack.c.l.b16 %v1339
        %v1344 = vpack.c.b16 %v1343, %v1342
        %v1347 = vsel %vm1086, %v1333, 0
        %v1350 = vsel %vm1086, %v1334, 0
        %v1353 = vsel %vm1086, %v1335, 0
        %v1356 = vsel %vm1086, %v1336, 0
        %1358 = vmatprep.subr.bf16.mxu0 0
        %1359 = vmatpush1.bf16.msra.mxu0 %v1344
        %1360 = vmatprep.subr.bf16.mxu0 0
        %1361 = vmatpush1.bf16.msra.mxu0 0
        %1362 = vmatprep.subr.bf16.mxu0 0
        %1363 = vmatpush1.bf16.msra.mxu0 0
        %1364 = vmatprep.subr.bf16.mxu0 0
        %1365 = vmatpush1.bf16.msra.mxu0 0
        %1366 = vmatprep.subr.bf16.mxu0 0
        %1367 = vmatpush1.bf16.msra.mxu0 0
        %1368 = vmatprep.subr.bf16.mxu0 0
        %1369 = vmatpush1.bf16.msra.mxu0 0
        %1370 = vmatprep.subr.bf16.mxu0 0
        %1371 = vmatpush1.bf16.msra.mxu0 0
        %1372 = vmatprep.subr.bf16.mxu0 0
        %1373 = vmatpush1.bf16.msra.mxu0 0
        %1374 = vmatprep.subr.bf16.mxu0 0
        %1375 = vmatpush1.bf16.msra.mxu0 0
        %1376 = vmatprep.subr.bf16.mxu0 0
        %1377 = vmatpush1.bf16.msra.mxu0 0
        %1378 = vmatprep.subr.bf16.mxu0 0
        %1379 = vmatpush1.bf16.msra.mxu0 0
        %1380 = vmatprep.subr.bf16.mxu0 0
        %1381 = vmatpush1.bf16.msra.mxu0 0
        %1382 = vmatprep.subr.bf16.mxu0 0
        %1383 = vmatpush1.bf16.msra.mxu0 0
        %1384 = vmatprep.subr.bf16.mxu0 0
        %1385 = vmatpush1.bf16.msra.mxu0 0
        %1386 = vmatprep.subr.bf16.mxu0 0
        %1387 = vmatpush1.bf16.msra.mxu0 0
        %1388 = vmatprep.subr.bf16.mxu0 0
        %1389 = vmatpush1.bf16.msra.mxu0 0
        %1390 = vmatprep.mubr.bf16.mxu0 0
        %1391 = vmatmul.mubr.bf16.gmra.mrb[0].mxu0 %v1347
        %v1392 = vpop.f32.mrb[0].mxu0
        %v1393 = vadd.f32 0.0, %v1392
        %v1394 = vpop.f32.mrb[0].mxu0
        %v1395 = vpop.f32.mrb[0].mxu0
        %v1396 = vadd.f32 0.0, %v1395
        %v1397 = vpop.f32.mrb[0].mxu0
        %1398 = vmatprep.mubr.bf16.mxu0 0
        %1399 = vmatmul.mubr.bf16.gmra.mrb[0].mxu0 %v1350
        %v1400 = vpop.f32.mrb[0].mxu0
        %v1401 = vadd.f32 0.0, %v1400
        %v1402 = vpop.f32.mrb[0].mxu0
        %v1403 = vpop.f32.mrb[0].mxu0
        %v1404 = vadd.f32 0.0, %v1403
        %v1405 = vpop.f32.mrb[0].mxu0
        %1406 = vmatprep.mubr.bf16.mxu0 0
        %1407 = vmatmul.mubr.bf16.gmra.mrb[0].mxu0 %v1353
        %v1408 = vpop.f32.mrb[0].mxu0
        %v1409 = vadd.f32 0.0, %v1408
        %v1410 = vpop.f32.mrb[0].mxu0
        %v1411 = vpop.f32.mrb[0].mxu0
        %v1412 = vadd.f32 0.0, %v1411
        %v1413 = vpop.f32.mrb[0].mxu0
        %1414 = vmatprep.mubr.bf16.mxu0 0
        %1415 = vmatmul.mubr.bf16.gmra.mrb[0].mxu0 %v1356
        %v1416 = vpop.f32.mrb[0].mxu0
        %v1417 = vadd.f32 0.0, %v1416
        %v1418 = vpop.f32.mrb[0].mxu0
        %v1419 = vpop.f32.mrb[0].mxu0
        %v1420 = vadd.f32 0.0, %v1419
        %v1421 = vpop.f32.mrb[0].mxu0
        %1422 = vdwg.mxu0
        %v1423 = vadd.f32 %v1317, %v1393
        %v1424 = vadd.f32 %v1318, %v1396
        %v1425 = vadd.f32 %v1319, %v1401
        %v1426 = vadd.f32 %v1320, %v1404
        %v1427 = vadd.f32 %v1321, %v1409
        %v1428 = vadd.f32 %v1322, %v1412
        %v1429 = vadd.f32 %v1323, %v1417
        %v1430 = vadd.f32 %v1324, %v1420
        %1431 = vst [vmem:[#allocation3] sm:$0xff] 0.0
        %1432 = vst [vmem:[#allocation3 + $0x8] sm:$0xff] 0.0
        %1433 = vst [vmem:[#allocation3 + $0x10] sm:$0xff] 0.0
        %1434 = vst [vmem:[#allocation3 + $0x18] sm:$0xff] 0.0
        %1435 = vst [vmem:[#allocation3 + $0x20] sm:$0xff] 0.0
        %1436 = vst [vmem:[#allocation3 + $0x28] sm:$0xff] 0.0
        %1437 = vst [vmem:[#allocation3 + $0x30] sm:$0xff] 0.0
        %1438 = vst [vmem:[#allocation3 + $0x38] sm:$0xff] 0.0
        %1439 = vst [vmem:[#allocation3 + $0x40] sm:$0x1] 0.0
        %1440 = vst [vmem:[#allocation3 + $0x1] sm:$0xff] %v1423
        %1441 = vst [vmem:[#allocation3 + $0x9] sm:$0xff] %v1424
        %1442 = vst [vmem:[#allocation3 + $0x11] sm:$0xff] %v1425
        %1443 = vst [vmem:[#allocation3 + $0x19] sm:$0xff] %v1426
        %1444 = vst [vmem:[#allocation3 + $0x21] sm:$0xff] %v1427
        %1445 = vst [vmem:[#allocation3 + $0x29] sm:$0xff] %v1428
        %1446 = vst [vmem:[#allocation3 + $0x31] sm:$0xff] %v1429
        %1447 = vst [vmem:[#allocation3 + $0x39] sm:$0x7f] %v1430
        %v1448 = vld [vmem:[%s8] sm:$0x1]
        %v1450 = vlaneseq
        %v1451 = vshrl.u32 %v1450, 7
        %v1452 = vsub.s32 0, %v1451
        %v1453 = vrot.slane %v1448, %v1452
        %v1455 = vadd.f32 %v1453, 0.0
        %v1456 = vld [vmem:[#allocation3] sm:$0xff]
        %v1457 = vld [vmem:[#allocation3 + $0x8] sm:$0xff]
        %v1458 = vld [vmem:[#allocation3 + $0x10] sm:$0xff]
        %v1459 = vld [vmem:[#allocation3 + $0x18] sm:$0xff]
        %v1460 = vld [vmem:[#allocation3 + $0x20] sm:$0xff]
        %v1461 = vld [vmem:[#allocation3 + $0x28] sm:$0xff]
        %v1462 = vld [vmem:[#allocation3 + $0x30] sm:$0xff]
        %v1463 = vld [vmem:[#allocation3 + $0x38] sm:$0x7f]
        %v1464 = vpack.c.bf16 %v1457, %v1456
        %v1465 = vpack.c.bf16 %v1459, %v1458
        %v1466 = vpack.c.bf16 %v1461, %v1460
        %v1467 = vpack.c.bf16 %v1463, %v1462
        %v1468 = vld [vmem:[%s7] sm:$0xf]
        %v1469 = vld [vmem:[%s7 + $0x4] sm:$0xf]
        %v1470 = vld [vmem:[%s7 + $0x8] sm:$0xf]
        %v1471 = vld [vmem:[%s7 + $0xc] sm:$0xf]
        %v1472 = vld [vmem:[%s7 + $0x10] sm:$0xf]
        %v1473 = vld [vmem:[%s7 + $0x14] sm:$0xf]
        %v1474 = vld [vmem:[%s7 + $0x18] sm:$0xf]
        %v1475 = vld [vmem:[%s7 + $0x1c] sm:$0xf]
        %v1476 = vld [vmem:[%s7 + $0x20] sm:$0xf]
        %v1477 = vld [vmem:[%s7 + $0x24] sm:$0xf]
        %v1478 = vld [vmem:[%s7 + $0x28] sm:$0xf]
        %v1479 = vld [vmem:[%s7 + $0x2c] sm:$0xf]
        %v1480 = vld [vmem:[%s7 + $0x30] sm:$0xf]
        %v1481 = vld [vmem:[%s7 + $0x34] sm:$0xf]
        %v1482 = vld [vmem:[%s7 + $0x38] sm:$0xf]
        %v1483 = vld [vmem:[%s7 + $0x3c] sm:$0xf]
        %v1500 = vunpack.c.l.b16 %v1468
        %v1501 = vunpack.c.l.b16 %v1469
        %v1502 = vunpack.c.l.b16 %v1470
        %v1503 = vunpack.c.l.b16 %v1471
        %v1504 = vunpack.c.l.b16 %v1472
        %v1505 = vunpack.c.l.b16 %v1473
        %v1506 = vunpack.c.l.b16 %v1474
        %v1507 = vunpack.c.l.b16 %v1475
        %v1508 = vunpack.c.l.b16 %v1476
        %v1509 = vunpack.c.l.b16 %v1477
        %v1510 = vunpack.c.l.b16 %v1478
        %v1511 = vunpack.c.l.b16 %v1479
        %v1512 = vunpack.c.l.b16 %v1480
        %v1513 = vunpack.c.l.b16 %v1481
        %v1514 = vunpack.c.l.b16 %v1482
        %v1515 = vunpack.c.l.b16 %v1483
        %v1516 = vpack.c.b16 %v1501, %v1500
        %v1517 = vpack.c.b16 %v1503, %v1502
        %v1518 = vpack.c.b16 %v1505, %v1504
        %v1519 = vpack.c.b16 %v1507, %v1506
        %v1520 = vpack.c.b16 %v1509, %v1508
        %v1521 = vpack.c.b16 %v1511, %v1510
        %v1522 = vpack.c.b16 %v1513, %v1512
        %v1523 = vpack.c.b16 %v1515, %v1514
        %1532 = vmatprep.subr.bf16.mxu0 0
        %1533 = vmatpush1.bf16.msra.mxu0 %v1516
        %1534 = vmatprep.subr.bf16.mxu0 0
        %1535 = vmatpush1.bf16.msra.mxu0 %v1517
        %1536 = vmatprep.subr.bf16.mxu0 0
        %1537 = vmatpush1.bf16.msra.mxu0 %v1518
        %1538 = vmatprep.subr.bf16.mxu0 0
        %1539 = vmatpush1.bf16.msra.mxu0 %v1519
        %1540 = vmatprep.subr.bf16.mxu0 0
        %1541 = vmatpush1.bf16.msra.mxu0 %v1520
        %1542 = vmatprep.subr.bf16.mxu0 0
        %1543 = vmatpush1.bf16.msra.mxu0 %v1521
        %1544 = vmatprep.subr.bf16.mxu0 0
        %1545 = vmatpush1.bf16.msra.mxu0 %v1522
        %1546 = vmatprep.subr.bf16.mxu0 0
        %1547 = vmatpush1.bf16.msra.mxu0 %v1523
        %1548 = vmatprep.subr.bf16.mxu0 0
        %1549 = vmatpush1.bf16.msra.mxu0 0
        %1550 = vmatprep.subr.bf16.mxu0 0
        %1551 = vmatpush1.bf16.msra.mxu0 0
        %1552 = vmatprep.subr.bf16.mxu0 0
        %1553 = vmatpush1.bf16.msra.mxu0 0
        %1554 = vmatprep.subr.bf16.mxu0 0
        %1555 = vmatpush1.bf16.msra.mxu0 0
        %1556 = vmatprep.subr.bf16.mxu0 0
        %1557 = vmatpush1.bf16.msra.mxu0 0
        %1558 = vmatprep.subr.bf16.mxu0 0
        %1559 = vmatpush1.bf16.msra.mxu0 0
        %1560 = vmatprep.subr.bf16.mxu0 0
        %1561 = vmatpush1.bf16.msra.mxu0 0
        %1562 = vmatprep.subr.bf16.mxu0 0
        %1563 = vmatpush1.bf16.msra.mxu0 0
        %1564 = vmatprep.mubr.bf16.mxu0 0
        %1565 = vmatmul.mubr.bf16.gmra.mrb[0].mxu0 %v1464
        %v1566 = vpop.f32.mrb[0].mxu0
        %v1567 = vadd.f32 0.0, %v1566
        %v1568 = vpop.f32.mrb[0].mxu0
        %v1569 = vpop.f32.mrb[0].mxu0
        %v1570 = vadd.f32 0.0, %v1569
        %v1571 = vpop.f32.mrb[0].mxu0
        %1572 = vmatprep.mubr.bf16.mxu0 0
        %1573 = vmatmul.mubr.bf16.gmra.mrb[0].mxu0 %v1465
        %v1574 = vpop.f32.mrb[0].mxu0
        %v1575 = vadd.f32 0.0, %v1574
        %v1576 = vpop.f32.mrb[0].mxu0
        %v1577 = vpop.f32.mrb[0].mxu0
        %v1578 = vadd.f32 0.0, %v1577
        %v1579 = vpop.f32.mrb[0].mxu0
        %1580 = vmatprep.mubr.bf16.mxu0 0
        %1581 = vmatmul.mubr.bf16.gmra.mrb[0].mxu0 %v1466
        %v1582 = vpop.f32.mrb[0].mxu0
        %v1583 = vadd.f32 0.0, %v1582
        %v1584 = vpop.f32.mrb[0].mxu0
        %v1585 = vpop.f32.mrb[0].mxu0
        %v1586 = vadd.f32 0.0, %v1585
        %v1587 = vpop.f32.mrb[0].mxu0
        %1588 = vmatprep.mubr.bf16.mxu0 0
        %1589 = vmatmul.mubr.bf16.gmra.mrb[0].mxu0 %v1467
        %v1590 = vpop.f32.mrb[0].mxu0
        %v1591 = vadd.f32 0.0, %v1590
        %v1592 = vpop.f32.mrb[0].mxu0
        %v1593 = vpop.f32.mrb[0].mxu0
        %v1594 = vadd.f32 0.0, %v1593
        %v1595 = vpop.f32.mrb[0].mxu0
        %1596 = vdwg.mxu0
        %v1597 = vadd.f32 %v1455, %v1567
        %v1598 = vadd.f32 %v1455, %v1570
        %v1599 = vadd.f32 %v1455, %v1575
        %v1600 = vadd.f32 %v1455, %v1578
        %v1601 = vadd.f32 %v1455, %v1583
        %v1602 = vadd.f32 %v1455, %v1586
        %v1603 = vadd.f32 %v1455, %v1591
        %v1604 = vadd.f32 %v1455, %v1594
        %v1605 = vld [vmem:[#allocation3 + $0x1] sm:$0xff]
        %v1606 = vld [vmem:[#allocation3 + $0x9] sm:$0xff]
        %v1607 = vld [vmem:[#allocation3 + $0x11] sm:$0xff]
        %v1608 = vld [vmem:[#allocation3 + $0x19] sm:$0xff]
        %v1609 = vld [vmem:[#allocation3 + $0x21] sm:$0xff]
        %v1610 = vld [vmem:[#allocation3 + $0x29] sm:$0xff]
        %v1611 = vld [vmem:[#allocation3 + $0x31] sm:$0xff]
        %v1612 = vld [vmem:[#allocation3 + $0x39] sm:$0x7f]
        %v1613 = vpack.c.bf16 %v1606, %v1605
        %v1614 = vpack.c.bf16 %v1608, %v1607
        %v1615 = vpack.c.bf16 %v1610, %v1609
        %v1616 = vpack.c.bf16 %v1612, %v1611
        %s1617 = scalar_lea.vmem %s7, 64
        %v1618 = vld [vmem:[%s1617] sm:$0xf]
        %v1619 = vld [vmem:[%s1617 + $0x4] sm:$0xf]
        %v1620 = vld [vmem:[%s1617 + $0x8] sm:$0xf]
        %v1621 = vld [vmem:[%s1617 + $0xc] sm:$0xf]
        %v1622 = vld [vmem:[%s1617 + $0x10] sm:$0xf]
        %v1623 = vld [vmem:[%s1617 + $0x14] sm:$0xf]
        %v1624 = vld [vmem:[%s1617 + $0x18] sm:$0xf]
        %v1625 = vld [vmem:[%s1617 + $0x1c] sm:$0xf]
        %v1626 = vld [vmem:[%s1617 + $0x20] sm:$0xf]
        %v1627 = vld [vmem:[%s1617 + $0x24] sm:$0xf]
        %v1628 = vld [vmem:[%s1617 + $0x28] sm:$0xf]
        %v1629 = vld [vmem:[%s1617 + $0x2c] sm:$0xf]
        %v1630 = vld [vmem:[%s1617 + $0x30] sm:$0xf]
        %v1631 = vld [vmem:[%s1617 + $0x34] sm:$0xf]
        %v1632 = vld [vmem:[%s1617 + $0x38] sm:$0xf]
        %v1633 = vld [vmem:[%s1617 + $0x3c] sm:$0xf]
        %v1650 = vunpack.c.l.b16 %v1618
        %v1651 = vunpack.c.l.b16 %v1619
        %v1652 = vunpack.c.l.b16 %v1620
        %v1653 = vunpack.c.l.b16 %v1621
        %v1654 = vunpack.c.l.b16 %v1622
        %v1655 = vunpack.c.l.b16 %v1623
        %v1656 = vunpack.c.l.b16 %v1624
        %v1657 = vunpack.c.l.b16 %v1625
        %v1658 = vunpack.c.l.b16 %v1626
        %v1659 = vunpack.c.l.b16 %v1627
        %v1660 = vunpack.c.l.b16 %v1628
        %v1661 = vunpack.c.l.b16 %v1629
        %v1662 = vunpack.c.l.b16 %v1630
        %v1663 = vunpack.c.l.b16 %v1631
        %v1664 = vunpack.c.l.b16 %v1632
        %v1665 = vunpack.c.l.b16 %v1633
        %v1666 = vpack.c.b16 %v1651, %v1650
        %v1667 = vpack.c.b16 %v1653, %v1652
        %v1668 = vpack.c.b16 %v1655, %v1654
        %v1669 = vpack.c.b16 %v1657, %v1656
        %v1670 = vpack.c.b16 %v1659, %v1658
        %v1671 = vpack.c.b16 %v1661, %v1660
        %v1672 = vpack.c.b16 %v1663, %v1662
        %v1673 = vpack.c.b16 %v1665, %v1664
        %1682 = vmatprep.subr.bf16.mxu0 0
        %1683 = vmatpush1.bf16.msra.mxu0 %v1666
        %1684 = vmatprep.subr.bf16.mxu0 0
        %1685 = vmatpush1.bf16.msra.mxu0 %v1667
        %1686 = vmatprep.subr.bf16.mxu0 0
        %1687 = vmatpush1.bf16.msra.mxu0 %v1668
        %1688 = vmatprep.subr.bf16.mxu0 0
        %1689 = vmatpush1.bf16.msra.mxu0 %v1669
        %1690 = vmatprep.subr.bf16.mxu0 0
        %1691 = vmatpush1.bf16.msra.mxu0 %v1670
        %1692 = vmatprep.subr.bf16.mxu0 0
        %1693 = vmatpush1.bf16.msra.mxu0 %v1671
        %1694 = vmatprep.subr.bf16.mxu0 0
        %1695 = vmatpush1.bf16.msra.mxu0 %v1672
        %1696 = vmatprep.subr.bf16.mxu0 0
        %1697 = vmatpush1.bf16.msra.mxu0 %v1673
        %1698 = vmatprep.subr.bf16.mxu0 0
        %1699 = vmatpush1.bf16.msra.mxu0 0
        %1700 = vmatprep.subr.bf16.mxu0 0
        %1701 = vmatpush1.bf16.msra.mxu0 0
        %1702 = vmatprep.subr.bf16.mxu0 0
        %1703 = vmatpush1.bf16.msra.mxu0 0
        %1704 = vmatprep.subr.bf16.mxu0 0
        %1705 = vmatpush1.bf16.msra.mxu0 0
        %1706 = vmatprep.subr.bf16.mxu0 0
        %1707 = vmatpush1.bf16.msra.mxu0 0
        %1708 = vmatprep.subr.bf16.mxu0 0
        %1709 = vmatpush1.bf16.msra.mxu0 0
        %1710 = vmatprep.subr.bf16.mxu0 0
        %1711 = vmatpush1.bf16.msra.mxu0 0
        %1712 = vmatprep.subr.bf16.mxu0 0
        %1713 = vmatpush1.bf16.msra.mxu0 0
        %1714 = vmatprep.mubr.bf16.mxu0 0
        %1715 = vmatmul.mubr.bf16.gmra.mrb[0].mxu0 %v1613
        %v1716 = vpop.f32.mrb[0].mxu0
        %v1717 = vadd.f32 0.0, %v1716
        %v1718 = vpop.f32.mrb[0].mxu0
        %v1719 = vpop.f32.mrb[0].mxu0
        %v1720 = vadd.f32 0.0, %v1719
        %v1721 = vpop.f32.mrb[0].mxu0
        %1722 = vmatprep.mubr.bf16.mxu0 0
        %1723 = vmatmul.mubr.bf16.gmra.mrb[0].mxu0 %v1614
        %v1724 = vpop.f32.mrb[0].mxu0
        %v1725 = vadd.f32 0.0, %v1724
        %v1726 = vpop.f32.mrb[0].mxu0
        %v1727 = vpop.f32.mrb[0].mxu0
        %v1728 = vadd.f32 0.0, %v1727
        %v1729 = vpop.f32.mrb[0].mxu0
        %1730 = vmatprep.mubr.bf16.mxu0 0
        %1731 = vmatmul.mubr.bf16.gmra.mrb[0].mxu0 %v1615
        %v1732 = vpop.f32.mrb[0].mxu0
        %v1733 = vadd.f32 0.0, %v1732
        %v1734 = vpop.f32.mrb[0].mxu0
        %v1735 = vpop.f32.mrb[0].mxu0
        %v1736 = vadd.f32 0.0, %v1735
        %v1737 = vpop.f32.mrb[0].mxu0
        %1738 = vmatprep.mubr.bf16.mxu0 0
        %1739 = vmatmul.mubr.bf16.gmra.mrb[0].mxu0 %v1616
        %v1740 = vpop.f32.mrb[0].mxu0
        %v1741 = vadd.f32 0.0, %v1740
        %v1742 = vpop.f32.mrb[0].mxu0
        %v1743 = vpop.f32.mrb[0].mxu0
        %v1744 = vadd.f32 0.0, %v1743
        %v1745 = vpop.f32.mrb[0].mxu0
        %1746 = vdwg.mxu0
        %v1747 = vadd.f32 %v1597, %v1717
        %v1748 = vadd.f32 %v1598, %v1720
        %v1749 = vadd.f32 %v1599, %v1725
        %v1750 = vadd.f32 %v1600, %v1728
        %v1751 = vadd.f32 %v1601, %v1733
        %v1752 = vadd.f32 %v1602, %v1736
        %v1753 = vadd.f32 %v1603, %v1741
        %v1754 = vadd.f32 %v1604, %v1744
        %v1755 = vld [vmem:[#allocation3 + $0x2] sm:$0xff]
        %v1756 = vld [vmem:[#allocation3 + $0xa] sm:$0xff]
        %v1757 = vld [vmem:[#allocation3 + $0x12] sm:$0xff]
        %v1758 = vld [vmem:[#allocation3 + $0x1a] sm:$0xff]
        %v1759 = vld [vmem:[#allocation3 + $0x22] sm:$0xff]
        %v1760 = vld [vmem:[#allocation3 + $0x2a] sm:$0xff]
        %v1761 = vld [vmem:[#allocation3 + $0x32] sm:$0xff]
        %v1762 = vld [vmem:[#allocation3 + $0x3a] sm:$0x7f]
        %v1763 = vpack.c.bf16 %v1756, %v1755
        %v1764 = vpack.c.bf16 %v1758, %v1757
        %v1765 = vpack.c.bf16 %v1760, %v1759
        %v1766 = vpack.c.bf16 %v1762, %v1761
        %s1767 = scalar_lea.vmem %s7, 128
        %v1768 = vld [vmem:[%s1767] sm:$0xf]
        %v1769 = vld [vmem:[%s1767 + $0x4] sm:$0xf]
        %v1770 = vld [vmem:[%s1767 + $0x8] sm:$0xf]
        %v1771 = vld [vmem:[%s1767 + $0xc] sm:$0xf]
        %v1772 = vld [vmem:[%s1767 + $0x10] sm:$0xf]
        %v1773 = vld [vmem:[%s1767 + $0x14] sm:$0xf]
        %v1774 = vld [vmem:[%s1767 + $0x18] sm:$0xf]
        %v1775 = vld [vmem:[%s1767 + $0x1c] sm:$0xf]
        %v1776 = vld [vmem:[%s1767 + $0x20] sm:$0xf]
        %v1777 = vld [vmem:[%s1767 + $0x24] sm:$0xf]
        %v1778 = vld [vmem:[%s1767 + $0x28] sm:$0xf]
        %v1779 = vld [vmem:[%s1767 + $0x2c] sm:$0xf]
        %v1780 = vld [vmem:[%s1767 + $0x30] sm:$0xf]
        %v1781 = vld [vmem:[%s1767 + $0x34] sm:$0xf]
        %v1782 = vld [vmem:[%s1767 + $0x38] sm:$0xf]
        %v1783 = vld [vmem:[%s1767 + $0x3c] sm:$0xf]
        %v1800 = vunpack.c.l.b16 %v1768
        %v1801 = vunpack.c.l.b16 %v1769
        %v1802 = vunpack.c.l.b16 %v1770
        %v1803 = vunpack.c.l.b16 %v1771
        %v1804 = vunpack.c.l.b16 %v1772
        %v1805 = vunpack.c.l.b16 %v1773
        %v1806 = vunpack.c.l.b16 %v1774
        %v1807 = vunpack.c.l.b16 %v1775
        %v1808 = vunpack.c.l.b16 %v1776
        %v1809 = vunpack.c.l.b16 %v1777
        %v1810 = vunpack.c.l.b16 %v1778
        %v1811 = vunpack.c.l.b16 %v1779
        %v1812 = vunpack.c.l.b16 %v1780
        %v1813 = vunpack.c.l.b16 %v1781
        %v1814 = vunpack.c.l.b16 %v1782
        %v1815 = vunpack.c.l.b16 %v1783
        %v1816 = vpack.c.b16 %v1801, %v1800
        %v1817 = vpack.c.b16 %v1803, %v1802
        %v1818 = vpack.c.b16 %v1805, %v1804
        %v1819 = vpack.c.b16 %v1807, %v1806
        %v1820 = vpack.c.b16 %v1809, %v1808
        %v1821 = vpack.c.b16 %v1811, %v1810
        %v1822 = vpack.c.b16 %v1813, %v1812
        %v1823 = vpack.c.b16 %v1815, %v1814
        %1832 = vmatprep.subr.bf16.mxu0 0
        %1833 = vmatpush1.bf16.msra.mxu0 %v1816
        %1834 = vmatprep.subr.bf16.mxu0 0
        %1835 = vmatpush1.bf16.msra.mxu0 %v1817
        %1836 = vmatprep.subr.bf16.mxu0 0
        %1837 = vmatpush1.bf16.msra.mxu0 %v1818
        %1838 = vmatprep.subr.bf16.mxu0 0
        %1839 = vmatpush1.bf16.msra.mxu0 %v1819
        %1840 = vmatprep.subr.bf16.mxu0 0
        %1841 = vmatpush1.bf16.msra.mxu0 %v1820
        %1842 = vmatprep.subr.bf16.mxu0 0
        %1843 = vmatpush1.bf16.msra.mxu0 %v1821
        %1844 = vmatprep.subr.bf16.mxu0 0
        %1845 = vmatpush1.bf16.msra.mxu0 %v1822
        %1846 = vmatprep.subr.bf16.mxu0 0
        %1847 = vmatpush1.bf16.msra.mxu0 %v1823
        %1848 = vmatprep.subr.bf16.mxu0 0
        %1849 = vmatpush1.bf16.msra.mxu0 0
        %1850 = vmatprep.subr.bf16.mxu0 0
        %1851 = vmatpush1.bf16.msra.mxu0 0
        %1852 = vmatprep.subr.bf16.mxu0 0
        %1853 = vmatpush1.bf16.msra.mxu0 0
        %1854 = vmatprep.subr.bf16.mxu0 0
        %1855 = vmatpush1.bf16.msra.mxu0 0
        %1856 = vmatprep.subr.bf16.mxu0 0
        %1857 = vmatpush1.bf16.msra.mxu0 0
        %1858 = vmatprep.subr.bf16.mxu0 0
        %1859 = vmatpush1.bf16.msra.mxu0 0
        %1860 = vmatprep.subr.bf16.mxu0 0
        %1861 = vmatpush1.bf16.msra.mxu0 0
        %1862 = vmatprep.subr.bf16.mxu0 0
        %1863 = vmatpush1.bf16.msra.mxu0 0
        %1864 = vmatprep.mubr.bf16.mxu0 0
        %1865 = vmatmul.mubr.bf16.gmra.mrb[0].mxu0 %v1763
        %v1866 = vpop.f32.mrb[0].mxu0
        %v1867 = vadd.f32 0.0, %v1866
        %v1868 = vpop.f32.mrb[0].mxu0
        %v1869 = vpop.f32.mrb[0].mxu0
        %v1870 = vadd.f32 0.0, %v1869
        %v1871 = vpop.f32.mrb[0].mxu0
        %1872 = vmatprep.mubr.bf16.mxu0 0
        %1873 = vmatmul.mubr.bf16.gmra.mrb[0].mxu0 %v1764
        %v1874 = vpop.f32.mrb[0].mxu0
        %v1875 = vadd.f32 0.0, %v1874
        %v1876 = vpop.f32.mrb[0].mxu0
        %v1877 = vpop.f32.mrb[0].mxu0
        %v1878 = vadd.f32 0.0, %v1877
        %v1879 = vpop.f32.mrb[0].mxu0
        %1880 = vmatprep.mubr.bf16.mxu0 0
        %1881 = vmatmul.mubr.bf16.gmra.mrb[0].mxu0 %v1765
        %v1882 = vpop.f32.mrb[0].mxu0
        %v1883 = vadd.f32 0.0, %v1882
        %v1884 = vpop.f32.mrb[0].mxu0
        %v1885 = vpop.f32.mrb[0].mxu0
        %v1886 = vadd.f32 0.0, %v1885
        %v1887 = vpop.f32.mrb[0].mxu0
        %1888 = vmatprep.mubr.bf16.mxu0 0
        %1889 = vmatmul.mubr.bf16.gmra.mrb[0].mxu0 %v1766
        %v1890 = vpop.f32.mrb[0].mxu0
        %v1891 = vadd.f32 0.0, %v1890
        %v1892 = vpop.f32.mrb[0].mxu0
        %v1893 = vpop.f32.mrb[0].mxu0
        %v1894 = vadd.f32 0.0, %v1893
        %v1895 = vpop.f32.mrb[0].mxu0
        %1896 = vdwg.mxu0
        %v1897 = vadd.f32 %v1747, %v1867
        %v1898 = vadd.f32 %v1748, %v1870
        %v1899 = vadd.f32 %v1749, %v1875
        %v1900 = vadd.f32 %v1750, %v1878
        %v1901 = vadd.f32 %v1751, %v1883
        %v1902 = vadd.f32 %v1752, %v1886
        %v1903 = vadd.f32 %v1753, %v1891
        %v1904 = vadd.f32 %v1754, %v1894
        %v1905 = vmax.f32 %v1897, 0.0
        %v1906 = vmax.f32 %v1898, 0.0
        %v1907 = vmax.f32 %v1899, 0.0
        %v1908 = vmax.f32 %v1900, 0.0
        %v1909 = vmax.f32 %v1901, 0.0
        %v1910 = vmax.f32 %v1902, 0.0
        %v1911 = vmax.f32 %v1903, 0.0
        %v1912 = vmax.f32 %v1904, 0.0
        %v1913 = vld [vmem:[%s13] sm:$0xff]
        %v1914 = vld [vmem:[%s13 + $0x8] sm:$0xff]
        %v1915 = vld [vmem:[%s13 + $0x10] sm:$0xff]
        %v1916 = vld [vmem:[%s13 + $0x18] sm:$0x7f]
        %vm1917 = vcmask 515072
        %v1919 = vsel %vm1917, %v1913, 0
        %v1922 = vsel %vm1917, %v1914, 0
        %v1925 = vsel %vm1917, %v1915, 0
        %v1928 = vsel %vm1917, %v1916, 0
        %vm1930 = vcmask 1046528
        %v1932 = vsel %vm1930, %v1912, 0
        %1934 = vmatprep.subr.mxu0 0.0
        %1935 = vmatpush1.msra.mxu0 %v1905
        %1936 = vmatprep.subr.mxu0 0.0
        %1937 = vmatpush1.msra.mxu0 %v1906
        %1938 = vmatprep.subr.mxu0 0.0
        %1939 = vmatpush1.msra.mxu0 %v1907
        %1940 = vmatprep.subr.mxu0 0.0
        %1941 = vmatpush1.msra.mxu0 %v1908
        %1942 = vmatprep.subr.mxu0 0.0
        %1943 = vmatpush1.msra.mxu0 %v1909
        %1944 = vmatprep.subr.mxu0 0.0
        %1945 = vmatpush1.msra.mxu0 %v1910
        %1946 = vmatprep.subr.mxu0 0.0
        %1947 = vmatpush1.msra.mxu0 %v1911
        %1948 = vmatprep.subr.mxu0 0.0
        %1949 = vmatpush1.msra.mxu0 %v1932
        %1950 = vmatprep.subr.mxu0 0.0
        %1951 = vmatpush1.msra.mxu0 0.0
        %1952 = vmatprep.subr.mxu0 0.0
        %1953 = vmatpush1.msra.mxu0 0.0
        %1954 = vmatprep.subr.mxu0 0.0
        %1955 = vmatpush1.msra.mxu0 0.0
        %1956 = vmatprep.subr.mxu0 0.0
        %1957 = vmatpush1.msra.mxu0 0.0
        %1958 = vmatprep.subr.mxu0 0.0
        %1959 = vmatpush1.msra.mxu0 0.0
        %1960 = vmatprep.subr.mxu0 0.0
        %1961 = vmatpush1.msra.mxu0 0.0
        %1962 = vmatprep.subr.mxu0 0.0
        %1963 = vmatpush1.msra.mxu0 0.0
        %1964 = vmatprep.subr.mxu0 0.0
        %1965 = vmatpush1.msra.mxu0 0.0
        %1966 = vmatprep.subr.mxu0 0.0
        %1967 = vmatpush1.msra.mxu0 0.0
        %1968 = vmatprep.subr.mxu0 0.0
        %1969 = vmatpush1.msra.mxu0 0.0
        %1970 = vmatprep.subr.mxu0 0.0
        %1971 = vmatpush1.msra.mxu0 0.0
        %1972 = vmatprep.subr.mxu0 0.0
        %1973 = vmatpush1.msra.mxu0 0.0
        %1974 = vmatprep.subr.mxu0 0.0
        %1975 = vmatpush1.msra.mxu0 0.0
        %1976 = vmatprep.subr.mxu0 0.0
        %1977 = vmatpush1.msra.mxu0 0.0
        %1978 = vmatprep.subr.mxu0 0.0
        %1979 = vmatpush1.msra.mxu0 0.0
        %1980 = vmatprep.subr.mxu0 0.0
        %1981 = vmatpush1.msra.mxu0 0.0
        %1982 = vmatprep.subr.mxu0 0.0
        %1983 = vmatpush1.msra.mxu0 0.0
        %1984 = vmatprep.subr.mxu0 0.0
        %1985 = vmatpush1.msra.mxu0 0.0
        %1986 = vmatprep.subr.mxu0 0.0
        %1987 = vmatpush1.msra.mxu0 0.0
        %1988 = vmatprep.subr.mxu0 0.0
        %1989 = vmatpush1.msra.mxu0 0.0
        %1990 = vmatprep.subr.mxu0 0.0
        %1991 = vmatpush1.msra.mxu0 0.0
        %1992 = vmatprep.subr.mxu0 0.0
        %1993 = vmatpush1.msra.mxu0 0.0
        %1994 = vmatprep.subr.mxu0 0.0
        %1995 = vmatpush1.msra.mxu0 0.0
        %1996 = vmatprep.subr.mxu0 0.0
        %1997 = vmatpush1.msra.mxu0 0.0
        %1998 = vmatprep.mubr.f32.mxu0 0.0
        %1999 = vmatmul.mubr.f32.gmra.mrb[0].mxu0 %v1919
        %v2000 = vpop.f32.mrb[0].mxu0
        %v2001 = vadd.f32 0.0, %v2000
        %v2002 = vpop.f32.mrb[0].mxu0
        %2003 = vmatprep.mubr.f32.mxu0 0.0
        %2004 = vmatmul.mubr.f32.gmra.mrb[0].mxu0 %v1922
        %v2005 = vpop.f32.mrb[0].mxu0
        %v2006 = vadd.f32 0.0, %v2005
        %v2007 = vpop.f32.mrb[0].mxu0
        %2008 = vmatprep.mubr.f32.mxu0 0.0
        %2009 = vmatmul.mubr.f32.gmra.mrb[0].mxu0 %v1925
        %v2010 = vpop.f32.mrb[0].mxu0
        %v2011 = vadd.f32 0.0, %v2010
        %v2012 = vpop.f32.mrb[0].mxu0
        %2013 = vmatprep.mubr.f32.mxu0 0.0
        %2014 = vmatmul.mubr.f32.gmra.mrb[0].mxu0 %v1928
        %v2015 = vpop.f32.mrb[0].mxu0
        %v2016 = vadd.f32 0.0, %v2015
        %v2017 = vpop.f32.mrb[0].mxu0
        %2018 = vdwg.mxu0
        %v2019 = vld [vmem:[%s14] sm:$0xff]
        %v2020 = vld [vmem:[%s14 + $0x8] sm:$0xff]
        %v2021 = vld [vmem:[%s14 + $0x10] sm:$0xff]
        %v2022 = vld [vmem:[%s14 + $0x18] sm:$0x7f]
        %v2024 = vsel %vm1917, %v2019, 0
        %v2027 = vsel %vm1917, %v2020, 0
        %v2030 = vsel %vm1917, %v2021, 0
        %v2033 = vsel %vm1917, %v2022, 0
        %2035 = vmatprep.subr.mxu0 0.0
        %2036 = vmatpush1.msra.mxu0 %v1905
        %2037 = vmatprep.subr.mxu0 0.0
        %2038 = vmatpush1.msra.mxu0 %v1906
        %2039 = vmatprep.subr.mxu0 0.0
        %2040 = vmatpush1.msra.mxu0 %v1907
        %2041 = vmatprep.subr.mxu0 0.0
        %2042 = vmatpush1.msra.mxu0 %v1908
        %2043 = vmatprep.subr.mxu0 0.0
        %2044 = vmatpush1.msra.mxu0 %v1909
        %2045 = vmatprep.subr.mxu0 0.0
        %2046 = vmatpush1.msra.mxu0 %v1910
        %2047 = vmatprep.subr.mxu0 0.0
        %2048 = vmatpush1.msra.mxu0 %v1911
        %2049 = vmatprep.subr.mxu0 0.0
        %2050 = vmatpush1.msra.mxu0 %v1932
        %2051 = vmatprep.subr.mxu0 0.0
        %2052 = vmatpush1.msra.mxu0 0.0
        %2053 = vmatprep.subr.mxu0 0.0
        %2054 = vmatpush1.msra.mxu0 0.0
        %2055 = vmatprep.subr.mxu0 0.0
        %2056 = vmatpush1.msra.mxu0 0.0
        %2057 = vmatprep.subr.mxu0 0.0
        %2058 = vmatpush1.msra.mxu0 0.0
        %2059 = vmatprep.subr.mxu0 0.0
        %2060 = vmatpush1.msra.mxu0 0.0
        %2061 = vmatprep.subr.mxu0 0.0
        %2062 = vmatpush1.msra.mxu0 0.0
        %2063 = vmatprep.subr.mxu0 0.0
        %2064 = vmatpush1.msra.mxu0 0.0
        %2065 = vmatprep.subr.mxu0 0.0
        %2066 = vmatpush1.msra.mxu0 0.0
        %2067 = vmatprep.subr.mxu0 0.0
        %2068 = vmatpush1.msra.mxu0 0.0
        %2069 = vmatprep.subr.mxu0 0.0
        %2070 = vmatpush1.msra.mxu0 0.0
        %2071 = vmatprep.subr.mxu0 0.0
        %2072 = vmatpush1.msra.mxu0 0.0
        %2073 = vmatprep.subr.mxu0 0.0
        %2074 = vmatpush1.msra.mxu0 0.0
        %2075 = vmatprep.subr.mxu0 0.0
        %2076 = vmatpush1.msra.mxu0 0.0
        %2077 = vmatprep.subr.mxu0 0.0
        %2078 = vmatpush1.msra.mxu0 0.0
        %2079 = vmatprep.subr.mxu0 0.0
        %2080 = vmatpush1.msra.mxu0 0.0
        %2081 = vmatprep.subr.mxu0 0.0
        %2082 = vmatpush1.msra.mxu0 0.0
        %2083 = vmatprep.subr.mxu0 0.0
        %2084 = vmatpush1.msra.mxu0 0.0
        %2085 = vmatprep.subr.mxu0 0.0
        %2086 = vmatpush1.msra.mxu0 0.0
        %2087 = vmatprep.subr.mxu0 0.0
        %2088 = vmatpush1.msra.mxu0 0.0
        %2089 = vmatprep.subr.mxu0 0.0
        %2090 = vmatpush1.msra.mxu0 0.0
        %2091 = vmatprep.subr.mxu0 0.0
        %2092 = vmatpush1.msra.mxu0 0.0
        %2093 = vmatprep.subr.mxu0 0.0
        %2094 = vmatpush1.msra.mxu0 0.0
        %2095 = vmatprep.subr.mxu0 0.0
        %2096 = vmatpush1.msra.mxu0 0.0
        %2097 = vmatprep.subr.mxu0 0.0
        %2098 = vmatpush1.msra.mxu0 0.0
        %2099 = vmatprep.mubr.f32.mxu0 0.0
        %2100 = vmatmul.mubr.f32.gmra.mrb[0].mxu0 %v2024
        %v2101 = vpop.f32.mrb[0].mxu0
        %v2102 = vadd.f32 0.0, %v2101
        %v2103 = vpop.f32.mrb[0].mxu0
        %2104 = vmatprep.mubr.f32.mxu0 0.0
        %2105 = vmatmul.mubr.f32.gmra.mrb[0].mxu0 %v2027
        %v2106 = vpop.f32.mrb[0].mxu0
        %v2107 = vadd.f32 0.0, %v2106
        %v2108 = vpop.f32.mrb[0].mxu0
        %2109 = vmatprep.mubr.f32.mxu0 0.0
        %2110 = vmatmul.mubr.f32.gmra.mrb[0].mxu0 %v2030
        %v2111 = vpop.f32.mrb[0].mxu0
        %v2112 = vadd.f32 0.0, %v2111
        %v2113 = vpop.f32.mrb[0].mxu0
        %2114 = vmatprep.mubr.f32.mxu0 0.0
        %2115 = vmatmul.mubr.f32.gmra.mrb[0].mxu0 %v2033
        %v2116 = vpop.f32.mrb[0].mxu0
        %v2117 = vadd.f32 0.0, %v2116
        %v2118 = vpop.f32.mrb[0].mxu0
        %2119 = vdwg.mxu0
        %v2120 = vmax.f32 %v2001, %v2102
        %v2121 = vmax.f32 %v2006, %v2107
        %v2122 = vmax.f32 %v2011, %v2112
        %v2123 = vmax.f32 %v2016, %v2117
        %2124 = vst [vmem:[#allocation4] sm:$0xff] 0.0
        %2125 = vst [vmem:[#allocation4 + $0x8] sm:$0xff] 0.0
        %2126 = vst [vmem:[#allocation4 + $0x10] sm:$0xff] 0.0
        %2127 = vst [vmem:[#allocation4 + $0x18] sm:$0xff] 0.0
        %2128 = vst [vmem:[#allocation4 + $0x20] sm:$0xff] 0.0
        %2129 = vst [vmem:[#allocation4 + $0x28] sm:$0xff] 0.0
        %2130 = vst [vmem:[#allocation4 + $0x30] sm:$0xff] 0.0
        %2131 = vst [vmem:[#allocation4 + $0x38] sm:$0xff] 0.0
        %2132 = vst [vmem:[#allocation4 + $0x40] sm:$0x1] 0.0
        %2133 = vst [vmem:[#allocation4 + $0x1] sm:$0xff] %v2120
        %2134 = vst [vmem:[#allocation4 + $0x9] sm:$0xff] %v2121
        %2135 = vst [vmem:[#allocation4 + $0x11] sm:$0xff] %v2122
        %2136 = vst [vmem:[#allocation4 + $0x19] sm:$0x7f] %v2123
        %v2137 = vld [vmem:[%s10] sm:$0x1]
        %v2139 = vlaneseq
        %v2140 = vshrl.u32 %v2139, 7
        %v2141 = vsub.s32 0, %v2140
        %v2142 = vrot.slane %v2137, %v2141
        %v2144 = vadd.f32 %v2142, 0.0
        %v2145 = vld [vmem:[#allocation4] sm:$0xff]
        %v2146 = vld [vmem:[#allocation4 + $0x8] sm:$0xff]
        %v2147 = vld [vmem:[#allocation4 + $0x10] sm:$0xff]
        %v2148 = vld [vmem:[#allocation4 + $0x18] sm:$0x7f]
        %v2149 = vpack.c.bf16 %v2146, %v2145
        %v2150 = vpack.c.bf16 %v2148, %v2147
        %v2151 = vld [vmem:[%s9] sm:$0xf]
        %v2152 = vld [vmem:[%s9 + $0x4] sm:$0xf]
        %v2153 = vld [vmem:[%s9 + $0x8] sm:$0xf]
        %v2154 = vld [vmem:[%s9 + $0xc] sm:$0xf]
        %v2155 = vld [vmem:[%s9 + $0x10] sm:$0xf]
        %v2156 = vld [vmem:[%s9 + $0x14] sm:$0xf]
        %v2157 = vld [vmem:[%s9 + $0x18] sm:$0xf]
        %v2158 = vld [vmem:[%s9 + $0x1c] sm:$0xf]
        %v2159 = vld [vmem:[%s9 + $0x20] sm:$0xf]
        %v2160 = vld [vmem:[%s9 + $0x24] sm:$0xf]
        %v2161 = vld [vmem:[%s9 + $0x28] sm:$0xf]
        %v2162 = vld [vmem:[%s9 + $0x2c] sm:$0xf]
        %v2163 = vld [vmem:[%s9 + $0x30] sm:$0xf]
        %v2164 = vld [vmem:[%s9 + $0x34] sm:$0xf]
        %v2165 = vld [vmem:[%s9 + $0x38] sm:$0xf]
        %v2166 = vld [vmem:[%s9 + $0x3c] sm:$0xf]
        %v2183 = vunpack.c.l.b16 %v2151
        %v2184 = vunpack.c.l.b16 %v2152
        %v2185 = vunpack.c.l.b16 %v2153
        %v2186 = vunpack.c.l.b16 %v2154
        %v2187 = vunpack.c.l.b16 %v2155
        %v2188 = vunpack.c.l.b16 %v2156
        %v2189 = vunpack.c.l.b16 %v2157
        %v2190 = vunpack.c.l.b16 %v2158
        %v2191 = vunpack.c.l.b16 %v2159
        %v2192 = vunpack.c.l.b16 %v2160
        %v2193 = vunpack.c.l.b16 %v2161
        %v2194 = vunpack.c.l.b16 %v2162
        %v2195 = vunpack.c.l.b16 %v2163
        %v2196 = vunpack.c.l.b16 %v2164
        %v2197 = vunpack.c.l.b16 %v2165
        %v2198 = vunpack.c.l.b16 %v2166
        %v2199 = vpack.c.b16 %v2184, %v2183
        %v2200 = vpack.c.b16 %v2186, %v2185
        %v2201 = vpack.c.b16 %v2188, %v2187
        %v2202 = vpack.c.b16 %v2190, %v2189
        %v2203 = vpack.c.b16 %v2192, %v2191
        %v2204 = vpack.c.b16 %v2194, %v2193
        %v2205 = vpack.c.b16 %v2196, %v2195
        %v2206 = vpack.c.b16 %v2198, %v2197
        %2215 = vmatprep.subr.bf16.mxu0 0
        %2216 = vmatpush1.bf16.msra.mxu0 %v2199
        %2217 = vmatprep.subr.bf16.mxu0 0
        %2218 = vmatpush1.bf16.msra.mxu0 %v2200
        %2219 = vmatprep.subr.bf16.mxu0 0
        %2220 = vmatpush1.bf16.msra.mxu0 %v2201
        %2221 = vmatprep.subr.bf16.mxu0 0
        %2222 = vmatpush1.bf16.msra.mxu0 %v2202
        %2223 = vmatprep.subr.bf16.mxu0 0
        %2224 = vmatpush1.bf16.msra.mxu0 %v2203
        %2225 = vmatprep.subr.bf16.mxu0 0
        %2226 = vmatpush1.bf16.msra.mxu0 %v2204
        %2227 = vmatprep.subr.bf16.mxu0 0
        %2228 = vmatpush1.bf16.msra.mxu0 %v2205
        %2229 = vmatprep.subr.bf16.mxu0 0
        %2230 = vmatpush1.bf16.msra.mxu0 %v2206
        %2231 = vmatprep.subr.bf16.mxu0 0
        %2232 = vmatpush1.bf16.msra.mxu0 0
        %2233 = vmatprep.subr.bf16.mxu0 0
        %2234 = vmatpush1.bf16.msra.mxu0 0
        %2235 = vmatprep.subr.bf16.mxu0 0
        %2236 = vmatpush1.bf16.msra.mxu0 0
        %2237 = vmatprep.subr.bf16.mxu0 0
        %2238 = vmatpush1.bf16.msra.mxu0 0
        %2239 = vmatprep.subr.bf16.mxu0 0
        %2240 = vmatpush1.bf16.msra.mxu0 0
        %2241 = vmatprep.subr.bf16.mxu0 0
        %2242 = vmatpush1.bf16.msra.mxu0 0
        %2243 = vmatprep.subr.bf16.mxu0 0
        %2244 = vmatpush1.bf16.msra.mxu0 0
        %2245 = vmatprep.subr.bf16.mxu0 0
        %2246 = vmatpush1.bf16.msra.mxu0 0
        %2247 = vmatprep.mubr.bf16.mxu0 0
        %2248 = vmatmul.mubr.bf16.gmra.mrb[0].mxu0 %v2149
        %v2249 = vpop.f32.mrb[0].mxu0
        %v2250 = vadd.f32 0.0, %v2249
        %v2251 = vpop.f32.mrb[0].mxu0
        %v2252 = vpop.f32.mrb[0].mxu0
        %v2253 = vadd.f32 0.0, %v2252
        %v2254 = vpop.f32.mrb[0].mxu0
        %2255 = vmatprep.mubr.bf16.mxu0 0
        %2256 = vmatmul.mubr.bf16.gmra.mrb[0].mxu0 %v2150
        %v2257 = vpop.f32.mrb[0].mxu0
        %v2258 = vadd.f32 0.0, %v2257
        %v2259 = vpop.f32.mrb[0].mxu0
        %v2260 = vpop.f32.mrb[0].mxu0
        %v2261 = vadd.f32 0.0, %v2260
        %v2262 = vpop.f32.mrb[0].mxu0
        %2263 = vdwg.mxu0
        %v2264 = vadd.f32 %v2144, %v2250
        %v2265 = vadd.f32 %v2144, %v2253
        %v2266 = vadd.f32 %v2144, %v2258
        %v2267 = vadd.f32 %v2144, %v2261
        %v2268 = vld [vmem:[#allocation4 + $0x1] sm:$0xff]
        %v2269 = vld [vmem:[#allocation4 + $0x9] sm:$0xff]
        %v2270 = vld [vmem:[#allocation4 + $0x11] sm:$0xff]
        %v2271 = vld [vmem:[#allocation4 + $0x19] sm:$0x7f]
        %v2272 = vpack.c.bf16 %v2269, %v2268
        %v2273 = vpack.c.bf16 %v2271, %v2270
        %s2274 = scalar_lea.vmem %s9, 64
        %v2275 = vld [vmem:[%s2274] sm:$0xf]
        %v2276 = vld [vmem:[%s2274 + $0x4] sm:$0xf]
        %v2277 = vld [vmem:[%s2274 + $0x8] sm:$0xf]
        %v2278 = vld [vmem:[%s2274 + $0xc] sm:$0xf]
        %v2279 = vld [vmem:[%s2274 + $0x10] sm:$0xf]
        %v2280 = vld [vmem:[%s2274 + $0x14] sm:$0xf]
        %v2281 = vld [vmem:[%s2274 + $0x18] sm:$0xf]
        %v2282 = vld [vmem:[%s2274 + $0x1c] sm:$0xf]
        %v2283 = vld [vmem:[%s2274 + $0x20] sm:$0xf]
        %v2284 = vld [vmem:[%s2274 + $0x24] sm:$0xf]
        %v2285 = vld [vmem:[%s2274 + $0x28] sm:$0xf]
        %v2286 = vld [vmem:[%s2274 + $0x2c] sm:$0xf]
        %v2287 = vld [vmem:[%s2274 + $0x30] sm:$0xf]
        %v2288 = vld [vmem:[%s2274 + $0x34] sm:$0xf]
        %v2289 = vld [vmem:[%s2274 + $0x38] sm:$0xf]
        %v2290 = vld [vmem:[%s2274 + $0x3c] sm:$0xf]
        %v2307 = vunpack.c.l.b16 %v2275
        %v2308 = vunpack.c.l.b16 %v2276
        %v2309 = vunpack.c.l.b16 %v2277
        %v2310 = vunpack.c.l.b16 %v2278
        %v2311 = vunpack.c.l.b16 %v2279
        %v2312 = vunpack.c.l.b16 %v2280
        %v2313 = vunpack.c.l.b16 %v2281
        %v2314 = vunpack.c.l.b16 %v2282
        %v2315 = vunpack.c.l.b16 %v2283
        %v2316 = vunpack.c.l.b16 %v2284
        %v2317 = vunpack.c.l.b16 %v2285
        %v2318 = vunpack.c.l.b16 %v2286
        %v2319 = vunpack.c.l.b16 %v2287
        %v2320 = vunpack.c.l.b16 %v2288
        %v2321 = vunpack.c.l.b16 %v2289
        %v2322 = vunpack.c.l.b16 %v2290
        %v2323 = vpack.c.b16 %v2308, %v2307
        %v2324 = vpack.c.b16 %v2310, %v2309
        %v2325 = vpack.c.b16 %v2312, %v2311
        %v2326 = vpack.c.b16 %v2314, %v2313
        %v2327 = vpack.c.b16 %v2316, %v2315
        %v2328 = vpack.c.b16 %v2318, %v2317
        %v2329 = vpack.c.b16 %v2320, %v2319
        %v2330 = vpack.c.b16 %v2322, %v2321
        %2339 = vmatprep.subr.bf16.mxu0 0
        %2340 = vmatpush1.bf16.msra.mxu0 %v2323
        %2341 = vmatprep.subr.bf16.mxu0 0
        %2342 = vmatpush1.bf16.msra.mxu0 %v2324
        %2343 = vmatprep.subr.bf16.mxu0 0
        %2344 = vmatpush1.bf16.msra.mxu0 %v2325
        %2345 = vmatprep.subr.bf16.mxu0 0
        %2346 = vmatpush1.bf16.msra.mxu0 %v2326
        %2347 = vmatprep.subr.bf16.mxu0 0
        %2348 = vmatpush1.bf16.msra.mxu0 %v2327
        %2349 = vmatprep.subr.bf16.mxu0 0
        %2350 = vmatpush1.bf16.msra.mxu0 %v2328
        %2351 = vmatprep.subr.bf16.mxu0 0
        %2352 = vmatpush1.bf16.msra.mxu0 %v2329
        %2353 = vmatprep.subr.bf16.mxu0 0
        %2354 = vmatpush1.bf16.msra.mxu0 %v2330
        %2355 = vmatprep.subr.bf16.mxu0 0
        %2356 = vmatpush1.bf16.msra.mxu0 0
        %2357 = vmatprep.subr.bf16.mxu0 0
        %2358 = vmatpush1.bf16.msra.mxu0 0
        %2359 = vmatprep.subr.bf16.mxu0 0
        %2360 = vmatpush1.bf16.msra.mxu0 0
        %2361 = vmatprep.subr.bf16.mxu0 0
        %2362 = vmatpush1.bf16.msra.mxu0 0
        %2363 = vmatprep.subr.bf16.mxu0 0
        %2364 = vmatpush1.bf16.msra.mxu0 0
        %2365 = vmatprep.subr.bf16.mxu0 0
        %2366 = vmatpush1.bf16.msra.mxu0 0
        %2367 = vmatprep.subr.bf16.mxu0 0
        %2368 = vmatpush1.bf16.msra.mxu0 0
        %2369 = vmatprep.subr.bf16.mxu0 0
        %2370 = vmatpush1.bf16.msra.mxu0 0
        %2371 = vmatprep.mubr.bf16.mxu0 0
        %2372 = vmatmul.mubr.bf16.gmra.mrb[0].mxu0 %v2272
        %v2373 = vpop.f32.mrb[0].mxu0
        %v2374 = vadd.f32 0.0, %v2373
        %v2375 = vpop.f32.mrb[0].mxu0
        %v2376 = vpop.f32.mrb[0].mxu0
        %v2377 = vadd.f32 0.0, %v2376
        %v2378 = vpop.f32.mrb[0].mxu0
        %2379 = vmatprep.mubr.bf16.mxu0 0
        %2380 = vmatmul.mubr.bf16.gmra.mrb[0].mxu0 %v2273
        %v2381 = vpop.f32.mrb[0].mxu0
        %v2382 = vadd.f32 0.0, %v2381
        %v2383 = vpop.f32.mrb[0].mxu0
        %v2384 = vpop.f32.mrb[0].mxu0
        %v2385 = vadd.f32 0.0, %v2384
        %v2386 = vpop.f32.mrb[0].mxu0
        %2387 = vdwg.mxu0
        %v2388 = vadd.f32 %v2264, %v2374
        %v2389 = vadd.f32 %v2265, %v2377
        %v2390 = vadd.f32 %v2266, %v2382
        %v2391 = vadd.f32 %v2267, %v2385
        %v2392 = vld [vmem:[#allocation4 + $0x2] sm:$0xff]
        %v2393 = vld [vmem:[#allocation4 + $0xa] sm:$0xff]
        %v2394 = vld [vmem:[#allocation4 + $0x12] sm:$0xff]
        %v2395 = vld [vmem:[#allocation4 + $0x1a] sm:$0x7f]
        %v2396 = vpack.c.bf16 %v2393, %v2392
        %v2397 = vpack.c.bf16 %v2395, %v2394
        %s2398 = scalar_lea.vmem %s9, 128
        %v2399 = vld [vmem:[%s2398] sm:$0xf]
        %v2400 = vld [vmem:[%s2398 + $0x4] sm:$0xf]
        %v2401 = vld [vmem:[%s2398 + $0x8] sm:$0xf]
        %v2402 = vld [vmem:[%s2398 + $0xc] sm:$0xf]
        %v2403 = vld [vmem:[%s2398 + $0x10] sm:$0xf]
        %v2404 = vld [vmem:[%s2398 + $0x14] sm:$0xf]
        %v2405 = vld [vmem:[%s2398 + $0x18] sm:$0xf]
        %v2406 = vld [vmem:[%s2398 + $0x1c] sm:$0xf]
        %v2407 = vld [vmem:[%s2398 + $0x20] sm:$0xf]
        %v2408 = vld [vmem:[%s2398 + $0x24] sm:$0xf]
        %v2409 = vld [vmem:[%s2398 + $0x28] sm:$0xf]
        %v2410 = vld [vmem:[%s2398 + $0x2c] sm:$0xf]
        %v2411 = vld [vmem:[%s2398 + $0x30] sm:$0xf]
        %v2412 = vld [vmem:[%s2398 + $0x34] sm:$0xf]
        %v2413 = vld [vmem:[%s2398 + $0x38] sm:$0xf]
        %v2414 = vld [vmem:[%s2398 + $0x3c] sm:$0xf]
        %v2431 = vunpack.c.l.b16 %v2399
        %v2432 = vunpack.c.l.b16 %v2400
        %v2433 = vunpack.c.l.b16 %v2401
        %v2434 = vunpack.c.l.b16 %v2402
        %v2435 = vunpack.c.l.b16 %v2403
        %v2436 = vunpack.c.l.b16 %v2404
        %v2437 = vunpack.c.l.b16 %v2405
        %v2438 = vunpack.c.l.b16 %v2406
        %v2439 = vunpack.c.l.b16 %v2407
        %v2440 = vunpack.c.l.b16 %v2408
        %v2441 = vunpack.c.l.b16 %v2409
        %v2442 = vunpack.c.l.b16 %v2410
        %v2443 = vunpack.c.l.b16 %v2411
        %v2444 = vunpack.c.l.b16 %v2412
        %v2445 = vunpack.c.l.b16 %v2413
        %v2446 = vunpack.c.l.b16 %v2414
        %v2447 = vpack.c.b16 %v2432, %v2431
        %v2448 = vpack.c.b16 %v2434, %v2433
        %v2449 = vpack.c.b16 %v2436, %v2435
        %v2450 = vpack.c.b16 %v2438, %v2437
        %v2451 = vpack.c.b16 %v2440, %v2439
        %v2452 = vpack.c.b16 %v2442, %v2441
        %v2453 = vpack.c.b16 %v2444, %v2443
        %v2454 = vpack.c.b16 %v2446, %v2445
        %2463 = vmatprep.subr.bf16.mxu0 0
        %2464 = vmatpush1.bf16.msra.mxu0 %v2447
        %2465 = vmatprep.subr.bf16.mxu0 0
        %2466 = vmatpush1.bf16.msra.mxu0 %v2448
        %2467 = vmatprep.subr.bf16.mxu0 0
        %2468 = vmatpush1.bf16.msra.mxu0 %v2449
        %2469 = vmatprep.subr.bf16.mxu0 0
        %2470 = vmatpush1.bf16.msra.mxu0 %v2450
        %2471 = vmatprep.subr.bf16.mxu0 0
        %2472 = vmatpush1.bf16.msra.mxu0 %v2451
        %2473 = vmatprep.subr.bf16.mxu0 0
        %2474 = vmatpush1.bf16.msra.mxu0 %v2452
        %2475 = vmatprep.subr.bf16.mxu0 0
        %2476 = vmatpush1.bf16.msra.mxu0 %v2453
        %2477 = vmatprep.subr.bf16.mxu0 0
        %2478 = vmatpush1.bf16.msra.mxu0 %v2454
        %2479 = vmatprep.subr.bf16.mxu0 0
        %2480 = vmatpush1.bf16.msra.mxu0 0
        %2481 = vmatprep.subr.bf16.mxu0 0
        %2482 = vmatpush1.bf16.msra.mxu0 0
        %2483 = vmatprep.subr.bf16.mxu0 0
        %2484 = vmatpush1.bf16.msra.mxu0 0
        %2485 = vmatprep.subr.bf16.mxu0 0
        %2486 = vmatpush1.bf16.msra.mxu0 0
        %2487 = vmatprep.subr.bf16.mxu0 0
        %2488 = vmatpush1.bf16.msra.mxu0 0
        %2489 = vmatprep.subr.bf16.mxu0 0
        %2490 = vmatpush1.bf16.msra.mxu0 0
        %2491 = vmatprep.subr.bf16.mxu0 0
        %2492 = vmatpush1.bf16.msra.mxu0 0
        %2493 = vmatprep.subr.bf16.mxu0 0
        %2494 = vmatpush1.bf16.msra.mxu0 0
        %2495 = vmatprep.mubr.bf16.mxu0 0
        %2496 = vmatmul.mubr.bf16.gmra.mrb[0].mxu0 %v2396
        %v2497 = vpop.f32.mrb[0].mxu0
        %v2498 = vadd.f32 0.0, %v2497
        %v2499 = vpop.f32.mrb[0].mxu0
        %v2500 = vpop.f32.mrb[0].mxu0
        %v2501 = vadd.f32 0.0, %v2500
        %v2502 = vpop.f32.mrb[0].mxu0
        %2503 = vmatprep.mubr.bf16.mxu0 0
        %2504 = vmatmul.mubr.bf16.gmra.mrb[0].mxu0 %v2397
        %v2505 = vpop.f32.mrb[0].mxu0
        %v2506 = vadd.f32 0.0, %v2505
        %v2507 = vpop.f32.mrb[0].mxu0
        %v2508 = vpop.f32.mrb[0].mxu0
        %v2509 = vadd.f32 0.0, %v2508
        %v2510 = vpop.f32.mrb[0].mxu0
        %2511 = vdwg.mxu0
        %v2512 = vadd.f32 %v2388, %v2498
        %v2513 = vadd.f32 %v2389, %v2501
        %v2514 = vadd.f32 %v2390, %v2506
        %v2515 = vadd.f32 %v2391, %v2509
        %2516 = vst [vmem:[#allocation3] sm:$0xff] 0.0
        %2517 = vst [vmem:[#allocation3 + $0x8] sm:$0xff] 0.0
        %2518 = vst [vmem:[#allocation3 + $0x10] sm:$0xff] 0.0
        %2519 = vst [vmem:[#allocation3 + $0x18] sm:$0xff] 0.0
        %2520 = vst [vmem:[#allocation3 + $0x20] sm:$0xff] 0.0
        %2521 = vst [vmem:[#allocation3 + $0x28] sm:$0xff] 0.0
        %2522 = vst [vmem:[#allocation3 + $0x30] sm:$0xff] 0.0
        %2523 = vst [vmem:[#allocation3 + $0x38] sm:$0xff] 0.0
        %2524 = vst [vmem:[#allocation3 + $0x40] sm:$0x1] 0.0
        %2525 = vst [vmem:[#allocation3 + $0x1] sm:$0xff] %v2512
        %2526 = vst [vmem:[#allocation3 + $0x9] sm:$0xff] %v2513
        %2527 = vst [vmem:[#allocation3 + $0x11] sm:$0xff] %v2514
        %2528 = vst [vmem:[#allocation3 + $0x19] sm:$0x7f] %v2515
        %v2529 = vld [vmem:[%s12] sm:$0x1]
        %v2531 = vlaneseq
        %v2532 = vshrl.u32 %v2531, 7
        %v2533 = vsub.s32 0, %v2532
        %v2534 = vrot.slane %v2529, %v2533
        %v2536 = vadd.f32 %v2534, 0.0
        %v2537 = vld [vmem:[#allocation3] sm:$0xff]
        %v2538 = vld [vmem:[#allocation3 + $0x8] sm:$0xff]
        %v2539 = vld [vmem:[#allocation3 + $0x10] sm:$0xff]
        %v2540 = vld [vmem:[#allocation3 + $0x18] sm:$0x7f]
        %v2541 = vpack.c.bf16 %v2538, %v2537
        %v2542 = vpack.c.bf16 %v2540, %v2539
        %v2543 = vld [vmem:[%s11] sm:$0xf]
        %v2544 = vld [vmem:[%s11 + $0x4] sm:$0xf]
        %v2545 = vld [vmem:[%s11 + $0x8] sm:$0xf]
        %v2546 = vld [vmem:[%s11 + $0xc] sm:$0xf]
        %v2547 = vld [vmem:[%s11 + $0x10] sm:$0xf]
        %v2548 = vld [vmem:[%s11 + $0x14] sm:$0xf]
        %v2549 = vld [vmem:[%s11 + $0x18] sm:$0xf]
        %v2550 = vld [vmem:[%s11 + $0x1c] sm:$0xf]
        %v2551 = vld [vmem:[%s11 + $0x20] sm:$0xf]
        %v2552 = vld [vmem:[%s11 + $0x24] sm:$0xf]
        %v2553 = vld [vmem:[%s11 + $0x28] sm:$0xf]
        %v2554 = vld [vmem:[%s11 + $0x2c] sm:$0xf]
        %v2555 = vld [vmem:[%s11 + $0x30] sm:$0xf]
        %v2556 = vld [vmem:[%s11 + $0x34] sm:$0xf]
        %v2557 = vld [vmem:[%s11 + $0x38] sm:$0xf]
        %v2558 = vld [vmem:[%s11 + $0x3c] sm:$0xf]
        %v2575 = vunpack.c.l.b16 %v2543
        %v2576 = vunpack.c.l.b16 %v2544
        %v2577 = vunpack.c.l.b16 %v2545
        %v2578 = vunpack.c.l.b16 %v2546
        %v2579 = vunpack.c.l.b16 %v2547
        %v2580 = vunpack.c.l.b16 %v2548
        %v2581 = vunpack.c.l.b16 %v2549
        %v2582 = vunpack.c.l.b16 %v2550
        %v2583 = vunpack.c.l.b16 %v2551
        %v2584 = vunpack.c.l.b16 %v2552
        %v2585 = vunpack.c.l.b16 %v2553
        %v2586 = vunpack.c.l.b16 %v2554
        %v2587 = vunpack.c.l.b16 %v2555
        %v2588 = vunpack.c.l.b16 %v2556
        %v2589 = vunpack.c.l.b16 %v2557
        %v2590 = vunpack.c.l.b16 %v2558
        %v2591 = vpack.c.b16 %v2576, %v2575
        %v2592 = vpack.c.b16 %v2578, %v2577
        %v2593 = vpack.c.b16 %v2580, %v2579
        %v2594 = vpack.c.b16 %v2582, %v2581
        %v2595 = vpack.c.b16 %v2584, %v2583
        %v2596 = vpack.c.b16 %v2586, %v2585
        %v2597 = vpack.c.b16 %v2588, %v2587
        %v2598 = vpack.c.b16 %v2590, %v2589
        %2607 = vmatprep.subr.bf16.mxu0 0
        %2608 = vmatpush1.bf16.msra.mxu0 %v2591
        %2609 = vmatprep.subr.bf16.mxu0 0
        %2610 = vmatpush1.bf16.msra.mxu0 %v2592
        %2611 = vmatprep.subr.bf16.mxu0 0
        %2612 = vmatpush1.bf16.msra.mxu0 %v2593
        %2613 = vmatprep.subr.bf16.mxu0 0
        %2614 = vmatpush1.bf16.msra.mxu0 %v2594
        %2615 = vmatprep.subr.bf16.mxu0 0
        %2616 = vmatpush1.bf16.msra.mxu0 %v2595
        %2617 = vmatprep.subr.bf16.mxu0 0
        %2618 = vmatpush1.bf16.msra.mxu0 %v2596
        %2619 = vmatprep.subr.bf16.mxu0 0
        %2620 = vmatpush1.bf16.msra.mxu0 %v2597
        %2621 = vmatprep.subr.bf16.mxu0 0
        %2622 = vmatpush1.bf16.msra.mxu0 %v2598
        %2623 = vmatprep.subr.bf16.mxu0 0
        %2624 = vmatpush1.bf16.msra.mxu0 0
        %2625 = vmatprep.subr.bf16.mxu0 0
        %2626 = vmatpush1.bf16.msra.mxu0 0
        %2627 = vmatprep.subr.bf16.mxu0 0
        %2628 = vmatpush1.bf16.msra.mxu0 0
        %2629 = vmatprep.subr.bf16.mxu0 0
        %2630 = vmatpush1.bf16.msra.mxu0 0
        %2631 = vmatprep.subr.bf16.mxu0 0
        %2632 = vmatpush1.bf16.msra.mxu0 0
        %2633 = vmatprep.subr.bf16.mxu0 0
        %2634 = vmatpush1.bf16.msra.mxu0 0
        %2635 = vmatprep.subr.bf16.mxu0 0
        %2636 = vmatpush1.bf16.msra.mxu0 0
        %2637 = vmatprep.subr.bf16.mxu0 0
        %2638 = vmatpush1.bf16.msra.mxu0 0
        %2639 = vmatprep.mubr.bf16.mxu0 0
        %2640 = vmatmul.mubr.bf16.gmra.mrb[0].mxu0 %v2541
        %v2641 = vpop.f32.mrb[0].mxu0
        %v2642 = vadd.f32 0.0, %v2641
        %v2643 = vpop.f32.mrb[0].mxu0
        %v2644 = vpop.f32.mrb[0].mxu0
        %v2645 = vadd.f32 0.0, %v2644
        %v2646 = vpop.f32.mrb[0].mxu0
        %2647 = vmatprep.mubr.bf16.mxu0 0
        %2648 = vmatmul.mubr.bf16.gmra.mrb[0].mxu0 %v2542
        %v2649 = vpop.f32.mrb[0].mxu0
        %v2650 = vadd.f32 0.0, %v2649
        %v2651 = vpop.f32.mrb[0].mxu0
        %v2652 = vpop.f32.mrb[0].mxu0
        %v2653 = vadd.f32 0.0, %v2652
        %v2654 = vpop.f32.mrb[0].mxu0
        %2655 = vdwg.mxu0
        %v2656 = vadd.f32 %v2536, %v2642
        %v2657 = vadd.f32 %v2536, %v2645
        %v2658 = vadd.f32 %v2536, %v2650
        %v2659 = vadd.f32 %v2536, %v2653
        %v2660 = vld [vmem:[#allocation3 + $0x1] sm:$0xff]
        %v2661 = vld [vmem:[#allocation3 + $0x9] sm:$0xff]
        %v2662 = vld [vmem:[#allocation3 + $0x11] sm:$0xff]
        %v2663 = vld [vmem:[#allocation3 + $0x19] sm:$0x7f]
        %v2664 = vpack.c.bf16 %v2661, %v2660
        %v2665 = vpack.c.bf16 %v2663, %v2662
        %s2666 = scalar_lea.vmem %s11, 64
        %v2667 = vld [vmem:[%s2666] sm:$0xf]
        %v2668 = vld [vmem:[%s2666 + $0x4] sm:$0xf]
        %v2669 = vld [vmem:[%s2666 + $0x8] sm:$0xf]
        %v2670 = vld [vmem:[%s2666 + $0xc] sm:$0xf]
        %v2671 = vld [vmem:[%s2666 + $0x10] sm:$0xf]
        %v2672 = vld [vmem:[%s2666 + $0x14] sm:$0xf]
        %v2673 = vld [vmem:[%s2666 + $0x18] sm:$0xf]
        %v2674 = vld [vmem:[%s2666 + $0x1c] sm:$0xf]
        %v2675 = vld [vmem:[%s2666 + $0x20] sm:$0xf]
        %v2676 = vld [vmem:[%s2666 + $0x24] sm:$0xf]
        %v2677 = vld [vmem:[%s2666 + $0x28] sm:$0xf]
        %v2678 = vld [vmem:[%s2666 + $0x2c] sm:$0xf]
        %v2679 = vld [vmem:[%s2666 + $0x30] sm:$0xf]
        %v2680 = vld [vmem:[%s2666 + $0x34] sm:$0xf]
        %v2681 = vld [vmem:[%s2666 + $0x38] sm:$0xf]
        %v2682 = vld [vmem:[%s2666 + $0x3c] sm:$0xf]
        %v2699 = vunpack.c.l.b16 %v2667
        %v2700 = vunpack.c.l.b16 %v2668
        %v2701 = vunpack.c.l.b16 %v2669
        %v2702 = vunpack.c.l.b16 %v2670
        %v2703 = vunpack.c.l.b16 %v2671
        %v2704 = vunpack.c.l.b16 %v2672
        %v2705 = vunpack.c.l.b16 %v2673
        %v2706 = vunpack.c.l.b16 %v2674
        %v2707 = vunpack.c.l.b16 %v2675
        %v2708 = vunpack.c.l.b16 %v2676
        %v2709 = vunpack.c.l.b16 %v2677
        %v2710 = vunpack.c.l.b16 %v2678
        %v2711 = vunpack.c.l.b16 %v2679
        %v2712 = vunpack.c.l.b16 %v2680
        %v2713 = vunpack.c.l.b16 %v2681
        %v2714 = vunpack.c.l.b16 %v2682
        %v2715 = vpack.c.b16 %v2700, %v2699
        %v2716 = vpack.c.b16 %v2702, %v2701
        %v2717 = vpack.c.b16 %v2704, %v2703
        %v2718 = vpack.c.b16 %v2706, %v2705
        %v2719 = vpack.c.b16 %v2708, %v2707
        %v2720 = vpack.c.b16 %v2710, %v2709
        %v2721 = vpack.c.b16 %v2712, %v2711
        %v2722 = vpack.c.b16 %v2714, %v2713
        %2731 = vmatprep.subr.bf16.mxu0 0
        %2732 = vmatpush1.bf16.msra.mxu0 %v2715
        %2733 = vmatprep.subr.bf16.mxu0 0
        %2734 = vmatpush1.bf16.msra.mxu0 %v2716
        %2735 = vmatprep.subr.bf16.mxu0 0
        %2736 = vmatpush1.bf16.msra.mxu0 %v2717
        %2737 = vmatprep.subr.bf16.mxu0 0
        %2738 = vmatpush1.bf16.msra.mxu0 %v2718
        %2739 = vmatprep.subr.bf16.mxu0 0
        %2740 = vmatpush1.bf16.msra.mxu0 %v2719
        %2741 = vmatprep.subr.bf16.mxu0 0
        %2742 = vmatpush1.bf16.msra.mxu0 %v2720
        %2743 = vmatprep.subr.bf16.mxu0 0
        %2744 = vmatpush1.bf16.msra.mxu0 %v2721
        %2745 = vmatprep.subr.bf16.mxu0 0
        %2746 = vmatpush1.bf16.msra.mxu0 %v2722
        %2747 = vmatprep.subr.bf16.mxu0 0
        %2748 = vmatpush1.bf16.msra.mxu0 0
        %2749 = vmatprep.subr.bf16.mxu0 0
        %2750 = vmatpush1.bf16.msra.mxu0 0
        %2751 = vmatprep.subr.bf16.mxu0 0
        %2752 = vmatpush1.bf16.msra.mxu0 0
        %2753 = vmatprep.subr.bf16.mxu0 0
        %2754 = vmatpush1.bf16.msra.mxu0 0
        %2755 = vmatprep.subr.bf16.mxu0 0
        %2756 = vmatpush1.bf16.msra.mxu0 0
        %2757 = vmatprep.subr.bf16.mxu0 0
        %2758 = vmatpush1.bf16.msra.mxu0 0
        %2759 = vmatprep.subr.bf16.mxu0 0
        %2760 = vmatpush1.bf16.msra.mxu0 0
        %2761 = vmatprep.subr.bf16.mxu0 0
        %2762 = vmatpush1.bf16.msra.mxu0 0
        %2763 = vmatprep.mubr.bf16.mxu0 0
        %2764 = vmatmul.mubr.bf16.gmra.mrb[0].mxu0 %v2664
        %v2765 = vpop.f32.mrb[0].mxu0
        %v2766 = vadd.f32 0.0, %v2765
        %v2767 = vpop.f32.mrb[0].mxu0
        %v2768 = vpop.f32.mrb[0].mxu0
        %v2769 = vadd.f32 0.0, %v2768
        %v2770 = vpop.f32.mrb[0].mxu0
        %2771 = vmatprep.mubr.bf16.mxu0 0
        %2772 = vmatmul.mubr.bf16.gmra.mrb[0].mxu0 %v2665
        %v2773 = vpop.f32.mrb[0].mxu0
        %v2774 = vadd.f32 0.0, %v2773
        %v2775 = vpop.f32.mrb[0].mxu0
        %v2776 = vpop.f32.mrb[0].mxu0
        %v2777 = vadd.f32 0.0, %v2776
        %v2778 = vpop.f32.mrb[0].mxu0
        %2779 = vdwg.mxu0
        %v2780 = vadd.f32 %v2656, %v2766
        %v2781 = vadd.f32 %v2657, %v2769
        %v2782 = vadd.f32 %v2658, %v2774
        %v2783 = vadd.f32 %v2659, %v2777
        %v2784 = vld [vmem:[#allocation3 + $0x2] sm:$0xff]
        %v2785 = vld [vmem:[#allocation3 + $0xa] sm:$0xff]
        %v2786 = vld [vmem:[#allocation3 + $0x12] sm:$0xff]
        %v2787 = vld [vmem:[#allocation3 + $0x1a] sm:$0x7f]
        %v2788 = vpack.c.bf16 %v2785, %v2784
        %v2789 = vpack.c.bf16 %v2787, %v2786
        %s2790 = scalar_lea.vmem %s11, 128
        %v2791 = vld [vmem:[%s2790] sm:$0xf]
        %v2792 = vld [vmem:[%s2790 + $0x4] sm:$0xf]
        %v2793 = vld [vmem:[%s2790 + $0x8] sm:$0xf]
        %v2794 = vld [vmem:[%s2790 + $0xc] sm:$0xf]
        %v2795 = vld [vmem:[%s2790 + $0x10] sm:$0xf]
        %v2796 = vld [vmem:[%s2790 + $0x14] sm:$0xf]
        %v2797 = vld [vmem:[%s2790 + $0x18] sm:$0xf]
        %v2798 = vld [vmem:[%s2790 + $0x1c] sm:$0xf]
        %v2799 = vld [vmem:[%s2790 + $0x20] sm:$0xf]
        %v2800 = vld [vmem:[%s2790 + $0x24] sm:$0xf]
        %v2801 = vld [vmem:[%s2790 + $0x28] sm:$0xf]
        %v2802 = vld [vmem:[%s2790 + $0x2c] sm:$0xf]
        %v2803 = vld [vmem:[%s2790 + $0x30] sm:$0xf]
        %v2804 = vld [vmem:[%s2790 + $0x34] sm:$0xf]
        %v2805 = vld [vmem:[%s2790 + $0x38] sm:$0xf]
        %v2806 = vld [vmem:[%s2790 + $0x3c] sm:$0xf]
        %v2823 = vunpack.c.l.b16 %v2791
        %v2824 = vunpack.c.l.b16 %v2792
        %v2825 = vunpack.c.l.b16 %v2793
        %v2826 = vunpack.c.l.b16 %v2794
        %v2827 = vunpack.c.l.b16 %v2795
        %v2828 = vunpack.c.l.b16 %v2796
        %v2829 = vunpack.c.l.b16 %v2797
        %v2830 = vunpack.c.l.b16 %v2798
        %v2831 = vunpack.c.l.b16 %v2799
        %v2832 = vunpack.c.l.b16 %v2800
        %v2833 = vunpack.c.l.b16 %v2801
        %v2834 = vunpack.c.l.b16 %v2802
        %v2835 = vunpack.c.l.b16 %v2803
        %v2836 = vunpack.c.l.b16 %v2804
        %v2837 = vunpack.c.l.b16 %v2805
        %v2838 = vunpack.c.l.b16 %v2806
        %v2839 = vpack.c.b16 %v2824, %v2823
        %v2840 = vpack.c.b16 %v2826, %v2825
        %v2841 = vpack.c.b16 %v2828, %v2827
        %v2842 = vpack.c.b16 %v2830, %v2829
        %v2843 = vpack.c.b16 %v2832, %v2831
        %v2844 = vpack.c.b16 %v2834, %v2833
        %v2845 = vpack.c.b16 %v2836, %v2835
        %v2846 = vpack.c.b16 %v2838, %v2837
        %2855 = vmatprep.subr.bf16.mxu0 0
        %2856 = vmatpush1.bf16.msra.mxu0 %v2839
        %2857 = vmatprep.subr.bf16.mxu0 0
        %2858 = vmatpush1.bf16.msra.mxu0 %v2840
        %2859 = vmatprep.subr.bf16.mxu0 0
        %2860 = vmatpush1.bf16.msra.mxu0 %v2841
        %2861 = vmatprep.subr.bf16.mxu0 0
        %2862 = vmatpush1.bf16.msra.mxu0 %v2842
        %2863 = vmatprep.subr.bf16.mxu0 0
        %2864 = vmatpush1.bf16.msra.mxu0 %v2843
        %2865 = vmatprep.subr.bf16.mxu0 0
        %2866 = vmatpush1.bf16.msra.mxu0 %v2844
        %2867 = vmatprep.subr.bf16.mxu0 0
        %2868 = vmatpush1.bf16.msra.mxu0 %v2845
        %2869 = vmatprep.subr.bf16.mxu0 0
        %2870 = vmatpush1.bf16.msra.mxu0 %v2846
        %2871 = vmatprep.subr.bf16.mxu0 0
        %2872 = vmatpush1.bf16.msra.mxu0 0
        %2873 = vmatprep.subr.bf16.mxu0 0
        %2874 = vmatpush1.bf16.msra.mxu0 0
        %2875 = vmatprep.subr.bf16.mxu0 0
        %2876 = vmatpush1.bf16.msra.mxu0 0
        %2877 = vmatprep.subr.bf16.mxu0 0
        %2878 = vmatpush1.bf16.msra.mxu0 0
        %2879 = vmatprep.subr.bf16.mxu0 0
        %2880 = vmatpush1.bf16.msra.mxu0 0
        %2881 = vmatprep.subr.bf16.mxu0 0
        %2882 = vmatpush1.bf16.msra.mxu0 0
        %2883 = vmatprep.subr.bf16.mxu0 0
        %2884 = vmatpush1.bf16.msra.mxu0 0
        %2885 = vmatprep.subr.bf16.mxu0 0
        %2886 = vmatpush1.bf16.msra.mxu0 0
        %2887 = vmatprep.mubr.bf16.mxu0 0
        %2888 = vmatmul.mubr.bf16.gmra.mrb[0].mxu0 %v2788
        %v2889 = vpop.f32.mrb[0].mxu0
        %v2890 = vadd.f32 0.0, %v2889
        %v2891 = vpop.f32.mrb[0].mxu0
        %v2892 = vpop.f32.mrb[0].mxu0
        %v2893 = vadd.f32 0.0, %v2892
        %v2894 = vpop.f32.mrb[0].mxu0
        %2895 = vmatprep.mubr.bf16.mxu0 0
        %2896 = vmatmul.mubr.bf16.gmra.mrb[0].mxu0 %v2789
        %v2897 = vpop.f32.mrb[0].mxu0
        %v2898 = vadd.f32 0.0, %v2897
        %v2899 = vpop.f32.mrb[0].mxu0
        %v2900 = vpop.f32.mrb[0].mxu0
        %v2901 = vadd.f32 0.0, %v2900
        %v2902 = vpop.f32.mrb[0].mxu0
        %2903 = vdwg.mxu0
        %v2904 = vadd.f32 %v2780, %v2890
        %v2905 = vadd.f32 %v2781, %v2893
        %v2906 = vadd.f32 %v2782, %v2898
        %v2907 = vadd.f32 %v2783, %v2901
        %v2908 = vmax.f32 %v2904, 0.0
        %v2909 = vmax.f32 %v2905, 0.0
        %v2910 = vmax.f32 %v2906, 0.0
        %v2911 = vmax.f32 %v2907, 0.0
        %v2912 = vld [vmem:[%s15] sm:$0xff]
        %v2913 = vld [vmem:[%s15 + $0x8] sm:$0x7f]
        %vm2914 = vcmask 252928
        %v2916 = vsel %vm2914, %v2912, 0
        %v2919 = vsel %vm2914, %v2913, 0
        %v2922 = vsel %vm1930, %v2911, 0
        %2924 = vmatprep.subr.mxu0 0.0
        %2925 = vmatpush1.msra.mxu0 %v2908
        %2926 = vmatprep.subr.mxu0 0.0
        %2927 = vmatpush1.msra.mxu0 %v2909
        %2928 = vmatprep.subr.mxu0 0.0
        %2929 = vmatpush1.msra.mxu0 %v2910
        %2930 = vmatprep.subr.mxu0 0.0
        %2931 = vmatpush1.msra.mxu0 %v2922
        %2932 = vmatprep.subr.mxu0 0.0
        %2933 = vmatpush1.msra.mxu0 0.0
        %2934 = vmatprep.subr.mxu0 0.0
        %2935 = vmatpush1.msra.mxu0 0.0
        %2936 = vmatprep.subr.mxu0 0.0
        %2937 = vmatpush1.msra.mxu0 0.0
        %2938 = vmatprep.subr.mxu0 0.0
        %2939 = vmatpush1.msra.mxu0 0.0
        %2940 = vmatprep.subr.mxu0 0.0
        %2941 = vmatpush1.msra.mxu0 0.0
        %2942 = vmatprep.subr.mxu0 0.0
        %2943 = vmatpush1.msra.mxu0 0.0
        %2944 = vmatprep.subr.mxu0 0.0
        %2945 = vmatpush1.msra.mxu0 0.0
        %2946 = vmatprep.subr.mxu0 0.0
        %2947 = vmatpush1.msra.mxu0 0.0
        %2948 = vmatprep.subr.mxu0 0.0
        %2949 = vmatpush1.msra.mxu0 0.0
        %2950 = vmatprep.subr.mxu0 0.0
        %2951 = vmatpush1.msra.mxu0 0.0
        %2952 = vmatprep.subr.mxu0 0.0
        %2953 = vmatpush1.msra.mxu0 0.0
        %2954 = vmatprep.subr.mxu0 0.0
        %2955 = vmatpush1.msra.mxu0 0.0
        %2956 = vmatprep.subr.mxu0 0.0
        %2957 = vmatpush1.msra.mxu0 0.0
        %2958 = vmatprep.subr.mxu0 0.0
        %2959 = vmatpush1.msra.mxu0 0.0
        %2960 = vmatprep.subr.mxu0 0.0
        %2961 = vmatpush1.msra.mxu0 0.0
        %2962 = vmatprep.subr.mxu0 0.0
        %2963 = vmatpush1.msra.mxu0 0.0
        %2964 = vmatprep.subr.mxu0 0.0
        %2965 = vmatpush1.msra.mxu0 0.0
        %2966 = vmatprep.subr.mxu0 0.0
        %2967 = vmatpush1.msra.mxu0 0.0
        %2968 = vmatprep.subr.mxu0 0.0
        %2969 = vmatpush1.msra.mxu0 0.0
        %2970 = vmatprep.subr.mxu0 0.0
        %2971 = vmatpush1.msra.mxu0 0.0
        %2972 = vmatprep.subr.mxu0 0.0
        %2973 = vmatpush1.msra.mxu0 0.0
        %2974 = vmatprep.subr.mxu0 0.0
        %2975 = vmatpush1.msra.mxu0 0.0
        %2976 = vmatprep.subr.mxu0 0.0
        %2977 = vmatpush1.msra.mxu0 0.0
        %2978 = vmatprep.subr.mxu0 0.0
        %2979 = vmatpush1.msra.mxu0 0.0
        %2980 = vmatprep.subr.mxu0 0.0
        %2981 = vmatpush1.msra.mxu0 0.0
        %2982 = vmatprep.subr.mxu0 0.0
        %2983 = vmatpush1.msra.mxu0 0.0
        %2984 = vmatprep.subr.mxu0 0.0
        %2985 = vmatpush1.msra.mxu0 0.0
        %2986 = vmatprep.subr.mxu0 0.0
        %2987 = vmatpush1.msra.mxu0 0.0
        %2988 = vmatprep.mubr.f32.mxu0 0.0
        %2989 = vmatmul.mubr.f32.gmra.mrb[0].mxu0 %v2916
        %v2990 = vpop.f32.mrb[0].mxu0
        %v2991 = vadd.f32 0.0, %v2990
        %v2992 = vpop.f32.mrb[0].mxu0
        %2993 = vmatprep.mubr.f32.mxu0 0.0
        %2994 = vmatmul.mubr.f32.gmra.mrb[0].mxu0 %v2919
        %v2995 = vpop.f32.mrb[0].mxu0
        %v2996 = vadd.f32 0.0, %v2995
        %v2997 = vpop.f32.mrb[0].mxu0
        %2998 = vdwg.mxu0
        %v2999 = vld [vmem:[%s16] sm:$0xff]
        %v3000 = vld [vmem:[%s16 + $0x8] sm:$0x7f]
        %v3002 = vsel %vm2914, %v2999, 0
        %v3005 = vsel %vm2914, %v3000, 0
        %3007 = vmatprep.subr.mxu0 0.0
        %3008 = vmatpush1.msra.mxu0 %v2908
        %3009 = vmatprep.subr.mxu0 0.0
        %3010 = vmatpush1.msra.mxu0 %v2909
        %3011 = vmatprep.subr.mxu0 0.0
        %3012 = vmatpush1.msra.mxu0 %v2910
        %3013 = vmatprep.subr.mxu0 0.0
        %3014 = vmatpush1.msra.mxu0 %v2922
        %3015 = vmatprep.subr.mxu0 0.0
        %3016 = vmatpush1.msra.mxu0 0.0
        %3017 = vmatprep.subr.mxu0 0.0
        %3018 = vmatpush1.msra.mxu0 0.0
        %3019 = vmatprep.subr.mxu0 0.0
        %3020 = vmatpush1.msra.mxu0 0.0
        %3021 = vmatprep.subr.mxu0 0.0
        %3022 = vmatpush1.msra.mxu0 0.0
        %3023 = vmatprep.subr.mxu0 0.0
        %3024 = vmatpush1.msra.mxu0 0.0
        %3025 = vmatprep.subr.mxu0 0.0
        %3026 = vmatpush1.msra.mxu0 0.0
        %3027 = vmatprep.subr.mxu0 0.0
        %3028 = vmatpush1.msra.mxu0 0.0
        %3029 = vmatprep.subr.mxu0 0.0
        %3030 = vmatpush1.msra.mxu0 0.0
        %3031 = vmatprep.subr.mxu0 0.0
        %3032 = vmatpush1.msra.mxu0 0.0
        %3033 = vmatprep.subr.mxu0 0.0
        %3034 = vmatpush1.msra.mxu0 0.0
        %3035 = vmatprep.subr.mxu0 0.0
        %3036 = vmatpush1.msra.mxu0 0.0
        %3037 = vmatprep.subr.mxu0 0.0
        %3038 = vmatpush1.msra.mxu0 0.0
        %3039 = vmatprep.subr.mxu0 0.0
        %3040 = vmatpush1.msra.mxu0 0.0
        %3041 = vmatprep.subr.mxu0 0.0
        %3042 = vmatpush1.msra.mxu0 0.0
        %3043 = vmatprep.subr.mxu0 0.0
        %3044 = vmatpush1.msra.mxu0 0.0
        %3045 = vmatprep.subr.mxu0 0.0
        %3046 = vmatpush1.msra.mxu0 0.0
        %3047 = vmatprep.subr.mxu0 0.0
        %3048 = vmatpush1.msra.mxu0 0.0
        %3049 = vmatprep.subr.mxu0 0.0
        %3050 = vmatpush1.msra.mxu0 0.0
        %3051 = vmatprep.subr.mxu0 0.0
        %3052 = vmatpush1.msra.mxu0 0.0
        %3053 = vmatprep.subr.mxu0 0.0
        %3054 = vmatpush1.msra.mxu0 0.0
        %3055 = vmatprep.subr.mxu0 0.0
        %3056 = vmatpush1.msra.mxu0 0.0
        %3057 = vmatprep.subr.mxu0 0.0
        %3058 = vmatpush1.msra.mxu0 0.0
        %3059 = vmatprep.subr.mxu0 0.0
        %3060 = vmatpush1.msra.mxu0 0.0
        %3061 = vmatprep.subr.mxu0 0.0
        %3062 = vmatpush1.msra.mxu0 0.0
        %3063 = vmatprep.subr.mxu0 0.0
        %3064 = vmatpush1.msra.mxu0 0.0
        %3065 = vmatprep.subr.mxu0 0.0
        %3066 = vmatpush1.msra.mxu0 0.0
        %3067 = vmatprep.subr.mxu0 0.0
        %3068 = vmatpush1.msra.mxu0 0.0
        %3069 = vmatprep.subr.mxu0 0.0
        %3070 = vmatpush1.msra.mxu0 0.0
        %3071 = vmatprep.mubr.f32.mxu0 0.0
        %3072 = vmatmul.mubr.f32.gmra.mrb[0].mxu0 %v3002
        %v3073 = vpop.f32.mrb[0].mxu0
        %v3074 = vadd.f32 0.0, %v3073
        %v3075 = vpop.f32.mrb[0].mxu0
        %3076 = vmatprep.mubr.f32.mxu0 0.0
        %3077 = vmatmul.mubr.f32.gmra.mrb[0].mxu0 %v3005
        %v3078 = vpop.f32.mrb[0].mxu0
        %v3079 = vadd.f32 0.0, %v3078
        %v3080 = vpop.f32.mrb[0].mxu0
        %3081 = vdwg.mxu0
        %v3082 = vmax.f32 %v2991, %v3074
        %v3083 = vmax.f32 %v2996, %v3079
        %v3084 = vpack.c.bf16 %v3083, %v3082
        %v3085 = vld [vmem:[%s17] sm:$0xf]
        %v3086 = vld [vmem:[%s17 + $0x4] sm:$0xf]
        %v3087 = vld [vmem:[%s17 + $0x8] sm:$0xf]
        %v3088 = vld [vmem:[%s17 + $0xc] sm:$0xf]
        %v3089 = vld [vmem:[%s17 + $0x10] sm:$0xf]
        %v3090 = vld [vmem:[%s17 + $0x14] sm:$0xf]
        %v3091 = vld [vmem:[%s17 + $0x18] sm:$0xf]
        %v3092 = vld [vmem:[%s17 + $0x1c] sm:$0xf]
        %v3093 = vld [vmem:[%s17 + $0x20] sm:$0xf]
        %v3094 = vld [vmem:[%s17 + $0x24] sm:$0xf]
        %v3095 = vld [vmem:[%s17 + $0x28] sm:$0xf]
        %v3096 = vld [vmem:[%s17 + $0x2c] sm:$0xf]
        %v3097 = vld [vmem:[%s17 + $0x30] sm:$0xf]
        %v3098 = vld [vmem:[%s17 + $0x34] sm:$0xf]
        %v3099 = vld [vmem:[%s17 + $0x38] sm:$0xf]
        %v3100 = vld [vmem:[%s17 + $0x3c] sm:$0xf]
        %v3101 = vld [vmem:[#allocation5] sm:$0x1]
        %v3103 = vlaneseq
        %v3104 = vshrl.u32 %v3103, 7
        %v3105 = vsub.s32 0, %v3104
        %v3106 = vrot.slane %v3101, %v3105
        %v3124 = vunpack.c.l.b16 %v3085
        %v3125 = vunpack.c.l.b16 %v3086
        %v3126 = vunpack.c.l.b16 %v3087
        %v3127 = vunpack.c.l.b16 %v3088
        %v3128 = vunpack.c.l.b16 %v3089
        %v3129 = vunpack.c.l.b16 %v3090
        %v3130 = vunpack.c.l.b16 %v3091
        %v3131 = vunpack.c.l.b16 %v3092
        %v3132 = vunpack.c.l.b16 %v3093
        %v3133 = vunpack.c.l.b16 %v3094
        %v3134 = vunpack.c.l.b16 %v3095
        %v3135 = vunpack.c.l.b16 %v3096
        %v3136 = vunpack.c.l.b16 %v3097
        %v3137 = vunpack.c.l.b16 %v3098
        %v3138 = vunpack.c.l.b16 %v3099
        %v3139 = vunpack.c.l.b16 %v3100
        %v3140 = vpack.c.b16 %v3125, %v3124
        %v3141 = vpack.c.b16 %v3127, %v3126
        %v3142 = vpack.c.b16 %v3129, %v3128
        %v3143 = vpack.c.b16 %v3131, %v3130
        %v3144 = vpack.c.b16 %v3133, %v3132
        %v3145 = vpack.c.b16 %v3135, %v3134
        %v3146 = vpack.c.b16 %v3137, %v3136
        %v3147 = vpack.c.b16 %v3139, %v3138
        %3156 = vmatprep.subr.bf16.mxu0 0
        %3157 = vmatpush1.bf16.msra.mxu0 %v3140
        %3158 = vmatprep.subr.bf16.mxu0 0
        %3159 = vmatpush1.bf16.msra.mxu0 %v3141
        %3160 = vmatprep.subr.bf16.mxu0 0
        %3161 = vmatpush1.bf16.msra.mxu0 %v3142
        %3162 = vmatprep.subr.bf16.mxu0 0
        %3163 = vmatpush1.bf16.msra.mxu0 %v3143
        %3164 = vmatprep.subr.bf16.mxu0 0
        %3165 = vmatpush1.bf16.msra.mxu0 %v3144
        %3166 = vmatprep.subr.bf16.mxu0 0
        %3167 = vmatpush1.bf16.msra.mxu0 %v3145
        %3168 = vmatprep.subr.bf16.mxu0 0
        %3169 = vmatpush1.bf16.msra.mxu0 %v3146
        %3170 = vmatprep.subr.bf16.mxu0 0
        %3171 = vmatpush1.bf16.msra.mxu0 %v3147
        %3172 = vmatprep.subr.bf16.mxu0 0
        %3173 = vmatpush1.bf16.msra.mxu0 0
        %3174 = vmatprep.subr.bf16.mxu0 0
        %3175 = vmatpush1.bf16.msra.mxu0 0
        %3176 = vmatprep.subr.bf16.mxu0 0
        %3177 = vmatpush1.bf16.msra.mxu0 0
        %3178 = vmatprep.subr.bf16.mxu0 0
        %3179 = vmatpush1.bf16.msra.mxu0 0
        %3180 = vmatprep.subr.bf16.mxu0 0
        %3181 = vmatpush1.bf16.msra.mxu0 0
        %3182 = vmatprep.subr.bf16.mxu0 0
        %3183 = vmatpush1.bf16.msra.mxu0 0
        %3184 = vmatprep.subr.bf16.mxu0 0
        %3185 = vmatpush1.bf16.msra.mxu0 0
        %3186 = vmatprep.subr.bf16.mxu0 0
        %3187 = vmatpush1.bf16.msra.mxu0 0
        %3188 = vmatprep.mubr.bf16.mxu0 0
        %3189 = vmatmul.mubr.bf16.gmra.mrb[0].mxu0 %v3084
        %v3190 = vpop.f32.mrb[0].mxu0
        %v3191 = vadd.f32 %v3106, %v3190
        %v3192 = vpop.f32.mrb[0].mxu0
        %v3193 = vpop.f32.mrb[0].mxu0
        %v3194 = vadd.f32 %v3106, %v3193
        %v3195 = vpop.f32.mrb[0].mxu0
        %3196 = vdwg.mxu0
        %3197 = vst.msk [vmem:[%s615] sm:$0xff] %vm648, %v3191
        %vm3198 = vcmask 522240
        %3199 = vst.msk [vmem:[%s615 + $0x8] sm:$0x7f] %vm3198, %v3194
        %p3200 = scmp.lt.s32.totalorder %s31, 1
        %s3201 = scalar_select %p3200, %s31, 1
        %s3202 = smul.addr %s3201, 2
        %s3203 = smul.addr %s3202, 8
        %s3204 = scalar_lea.vmem %s19, %s3203
        // Predicated region
        $region101: #{model_forward.2} parent=95 // pred_check
          %p3205 = pneg %p453
        $region102: #{model_forward.2} parent=95 // pred_check_branch
          %3207 = sbr.rel (%p3205) target = $region104
        $region103: #{model_forward.2} parent=95 // pred_region
          _
        $region104: #{model_forward.2} parent=95 // pred_fallthru
          _
      $region96: #{model_forward.2} parent=5 // pred_fallthru
        _
      %p3208 = scmp.le.s32.totalorder 2, %s26
      // Predicated region
      $region105: #{model_forward.2} parent=5 // pred_check
        %p3209 = pneg %p3208
      $region106: #{model_forward.2} parent=5 // pred_check_branch
        %3211 = sbr.rel (%p3209) target = $region108
      $region107: #{model_forward.2} parent=5 // pred_region
        %s3212 = ssub.s32 %s26, 2
        // Predicated region
        $region109: #{model_forward.2} parent=107 // pred_check
          %p3213 = pneg %p459
        $region110: #{model_forward.2} parent=107 // pred_check_branch
          %3215 = sbr.rel (%p3213) target = $region112
        $region111: #{model_forward.2} parent=107 // pred_region
          %p3216 = scmp.lt.s32.totalorder %s32, 1
          %s3217 = scalar_select %p3216, %s32, 1
          %s3218 = smul.addr %s3217, 2
          %s3219 = smul.addr %s3218, 8
          %s3220 = scalar_lea.vmem %s19, %s3219
        $region112: #{model_forward.2} parent=107 // pred_fallthru
          _
      $region108: #{model_forward.2} parent=5 // pred_fallthru
        _
    $region6: #{model_forward.2} parent=1 // loop_footer
      %s30 = sadd.s32 1, %s26
    $region7: #{model_forward.2} parent=1 // loop_footer_branch
      %25 = sbr.rel target = $region3
    $region8: #{model_forward.2} parent=1 // loop_exit
      _
    %3221 = vsyncpa [#allocation6], 1
    %s3222 = scalar_lea.sflag [#allocation6], 1
    %3223 = vsyncpa %s3222, 1

// kernel: model_forward.3
$region0: #{model_forward.3}
  #allocation0 [shape = 'u32[]', space=smem, size = 0x4, offset = 0x4, fixed_abs, tag = 'smem constant byte address 0x4 - core index']
  #allocation1 [shape = 'u32[144,128]{1,0:T(1,128)}', space=vmem, size = 0x12000, scoped, tag = 'internal scratch']
  #allocation2 [shape = 'f32[15,64]{1,0:T(8,128)}', space=vmem, size = 0x2000, scoped, tag = 'scratch operand']
  #allocation3 [shape = 'f32[21,64]{1,0:T(8,128)}', space=vmem, size = 0x3000, scoped, tag = 'scratch operand']
  %s0 = inlined_call_operand.smem [shape: u32[35], index: -1, kind: input, shape index: {}]
  %s1 = sld [smem:[%s0]]
  %s2 = scalar_lea.smem %s0, 1
  %s3 = sld [smem:[%s2]]
  %s4 = scalar_lea.smem %s0, 2
  %s5 = sld [smem:[%s4]]
  %s6 = scalar_lea.smem %s0, 3
  %s7 = sld [smem:[%s6]]
  %s8 = scalar_lea.smem %s0, 4
  %s9 = sld [smem:[%s8]]
  %s10 = scalar_lea.smem %s0, 5
  %s11 = sld [smem:[%s10]]
  %s12 = scalar_lea.smem %s0, 6
  %s13 = sld [smem:[%s12]]
  %s14 = scalar_lea.smem %s0, 7
  %s15 = sld [smem:[%s14]]
  %s16 = scalar_lea.smem %s0, 8
  %s17 = sld [smem:[%s16]]
  %s18 = scalar_lea.smem %s0, 9
  %s19 = sld [smem:[%s18]]
  %s20 = scalar_lea.smem %s0, 10
  %s21 = sld [smem:[%s20]]
  %s22 = scalar_lea.smem %s0, 11
  %s23 = sld [smem:[%s22]]
  %s24 = scalar_lea.smem %s0, 12
  %s25 = sld [smem:[%s24]]
  %s26 = scalar_lea.smem %s0, 13
  %s27 = sld [smem:[%s26]]
  %s28 = scalar_lea.smem %s0, 14
  %s29 = sld [smem:[%s28]]
  %s30 = scalar_lea.smem %s0, 15
  %s31 = sld [smem:[%s30]]
  %s32 = scalar_lea.smem %s0, 16
  %s33 = sld [smem:[%s32]]
  %s34 = scalar_lea.smem %s0, 17
  %s35 = sld [smem:[%s34]]
  %s36 = scalar_lea.smem %s0, 18
  %s37 = sld [smem:[%s36]]
  %s38 = scalar_lea.smem %s0, 19
  %s39 = sld [smem:[%s38]]
  %s40 = scalar_lea.smem %s0, 20
  %s41 = sld [smem:[%s40]]
  %s42 = scalar_lea.smem %s0, 21
  %s43 = sld [smem:[%s42]]
  %s44 = scalar_lea.smem %s0, 22
  %s45 = sld [smem:[%s44]]
  %s46 = scalar_lea.smem %s0, 23
  %s47 = sld [smem:[%s46]]
  %s48 = scalar_lea.smem %s0, 24
  %s49 = sld [smem:[%s48]]
  %s50 = scalar_lea.smem %s0, 25
  %s51 = sld [smem:[%s50]]
  %s52 = scalar_lea.smem %s0, 26
  %s53 = sld [smem:[%s52]]
  %s54 = scalar_lea.smem %s0, 27
  %s55 = sld [smem:[%s54]]
  %s56 = scalar_lea.smem %s0, 28
  %s57 = sld [smem:[%s56]]
  %s58 = scalar_lea.smem %s0, 29
  %s59 = sld [smem:[%s58]]
  %s60 = scalar_lea.smem %s0, 30
  %s61 = sld [smem:[%s60]]
  %s62 = scalar_lea.smem %s0, 31
  %s63 = sld [smem:[%s62]]
  %s64 = scalar_lea.smem %s0, 32
  %s65 = sld [smem:[%s64]]
  %s66 = scalar_lea.smem %s0, 33
  %s67 = sld [smem:[%s66]]
  %s68 = scalar_lea.smem %s0, 34
  %s69 = sld [smem:[%s68]]
  %s70 = sld [smem:[#allocation0]]
  $region181: #{model_forward.3} parent=0
    _
  %s72 = ssub.s32 1, %s70
  %s73 = scalar_select 0, %s72, %s70
  $region1: #{model_forward.3} parent=0
    #allocation4 [shape = 'u8[512]{0}', space=vmem, size = 0x400, scoped, tag = 'input window, operand 33, single buffered']
    #allocation5 [shape = 's32[2]{0}', space=sflag, size = 0x8, scoped, tag = 'scoped memory for model_forward.3']
    %74 = vsyncpa [#allocation5], 0
    loop: start=0, step=1, limit=6
    $region2: #{model_forward.3} parent=1 // loop_pre_header
      _
    $region3: #{model_forward.3} parent=1 // loop_header
      %s76 = sphi 0, %s80
      %p77 = scmp.ge.s32.totalorder %s76, 6
      %s83 = sphi 0, %s95
      %s84 = sphi 0, %s91
      %s85 = sphi 0, %s83
      %s86 = sphi 0, %s84
      %s87 = sphi 0, %s85
      %s88 = sphi 0, %s86
      %s98 = sphi 0, %s100
      %s101 = sphi 0, %s98
      %s102 = sphi 0, %s101
      %s118 = sphi 0, %s102
      %s124 = sphi 0, %s126
      %s127 = sphi 0, %s124
      %s128 = sphi 0, %s127
      %s144 = sphi 0, %s128
      %s150 = sphi 0, %s152
      %s153 = sphi 0, %s150
      %s154 = sphi 0, %s153
      %s170 = sphi 0, %s154
      %s176 = sphi 0, %s178
      %s179 = sphi 0, %s176
      %s180 = sphi 0, %s179
      %s196 = sphi 0, %s180
      %s202 = sphi 0, %s204
      %s205 = sphi 0, %s202
      %s206 = sphi 0, %s205
      %s222 = sphi 0, %s206
      %s228 = sphi 0, %s230
      %s231 = sphi 0, %s228
      %s232 = sphi 0, %s231
      %s248 = sphi 0, %s232
      %s254 = sphi 0, %s256
      %s257 = sphi 0, %s254
      %s258 = sphi 0, %s257
      %s274 = sphi 0, %s258
      %s280 = sphi 0, %s282
      %s283 = sphi 0, %s280
      %s284 = sphi 0, %s283
      %s300 = sphi 0, %s284
      %s306 = sphi 0, %s308
      %s309 = sphi 0, %s306
      %s310 = sphi 0, %s309
      %s326 = sphi 0, %s310
      %s332 = sphi 0, %s334
      %s335 = sphi 0, %s332
      %s336 = sphi 0, %s335
      %s352 = sphi 0, %s336
      %s358 = sphi 0, %s360
      %s361 = sphi 0, %s358
      %s362 = sphi 0, %s361
      %s378 = sphi 0, %s362
      %s384 = sphi 0, %s386
      %s387 = sphi 0, %s384
      %s388 = sphi 0, %s387
      %s404 = sphi 0, %s388
      %s410 = sphi 0, %s412
      %s413 = sphi 0, %s410
      %s414 = sphi 0, %s413
      %s430 = sphi 0, %s414
      %s436 = sphi 0, %s438
      %s439 = sphi 0, %s436
      %s440 = sphi 0, %s439
      %s456 = sphi 0, %s440
      %s462 = sphi 0, %s464
      %s465 = sphi 0, %s462
      %s466 = sphi 0, %s465
      %s482 = sphi 0, %s466
      %s488 = sphi 0, %s490
      %s491 = sphi 0, %s488
      %s492 = sphi 0, %s491
      %s508 = sphi 0, %s492
      %s514 = sphi 0, %s516
      %s517 = sphi 0, %s514
      %s518 = sphi 0, %s517
      %s534 = sphi 0, %s518
      %s540 = sphi 0, %s542
      %s543 = sphi 0, %s540
      %s544 = sphi 0, %s543
      %s560 = sphi 0, %s544
      %s566 = sphi 0, %s568
      %s569 = sphi 0, %s566
      %s570 = sphi 0, %s569
      %s586 = sphi 0, %s570
      %s592 = sphi 0, %s594
      %s595 = sphi 0, %s592
      %s596 = sphi 0, %s595
      %s612 = sphi 0, %s596
      %s618 = sphi 0, %s620
      %s621 = sphi 0, %s618
      %s622 = sphi 0, %s621
      %s638 = sphi 0, %s622
      %s644 = sphi 0, %s646
      %s647 = sphi 0, %s644
      %s648 = sphi 0, %s647
      %s664 = sphi 0, %s648
      %s670 = sphi 0, %s672
      %s673 = sphi 0, %s670
      %s674 = sphi 0, %s673
      %s690 = sphi 0, %s674
      %s696 = sphi 0, %s698
      %s699 = sphi 0, %s696
      %s700 = sphi 0, %s699
      %s716 = sphi 0, %s700
      %s722 = sphi 0, %s724
      %s725 = sphi 0, %s722
      %s726 = sphi 0, %s725
      %s742 = sphi 0, %s726
      %s748 = sphi 0, %s750
      %s751 = sphi 0, %s748
      %s752 = sphi 0, %s751
      %s768 = sphi 0, %s752
      %s774 = sphi 0, %s776
      %s777 = sphi 0, %s774
      %s778 = sphi 0, %s777
      %s794 = sphi 0, %s778
      %s800 = sphi 0, %s802
      %s803 = sphi 0, %s800
      %s804 = sphi 0, %s803
      %s820 = sphi 0, %s804
      %s826 = sphi 0, %s828
      %s829 = sphi 0, %s826
      %s830 = sphi 0, %s829
      %s846 = sphi 0, %s830
      %s852 = sphi 0, %s854
      %s855 = sphi 0, %s852
      %s856 = sphi 0, %s855
      %s872 = sphi 0, %s856
      %s878 = sphi 0, %s880
      %s881 = sphi 0, %s878
      %s882 = sphi 0, %s881
      %s898 = sphi 0, %s882
      %s904 = sphi 0, %s906
      %s907 = sphi 0, %s904
      %s908 = sphi 0, %s907
      %s924 = sphi 0, %s908
      %s928 = sphi 0, %s928
      %s930 = sphi 0, %s928
      %s931 = sphi 0, %s930
      %s945 = sphi 0, %s931
      %s949 = sphi 0, %s949
      %s951 = sphi 0, %s949
      %s952 = sphi 0, %s951
      %s966 = sphi 0, %s952
      %s972 = sphi 0, %s974
      %s975 = sphi 0, %s972
      %s976 = sphi 0, %s975
      %s992 = sphi 0, %s976
    $region4: #{model_forward.3} parent=1 // loop_header_branch
      %79 = sbr.rel (%p77) target = $region8
    $region5: #{model_forward.3} parent=1 // loop_body
      %s81 = ssub.s32 %s76, 1
      %s82 = ssub.s32 %s76, 2
      %s89 = sadd.s32 1, %s84
      %p90 = scmp.ge.s32.totalorder %s89, 2
      %s91 = scalar_select %p90, 0, %s89
      %s92 = sadd.s32 1, %s83
      %s93 = scalar_select %p90, %s92, %s83
      %p94 = scmp.ge.s32.totalorder %s93, 2
      %s95 = scalar_select %p94, 0, %s93
      %s96 = ssub.s32 %s83, %s95
      %p97 = scmp.eq.s32.totalorder %s96, 0
      %s99 = sadd.s32 %s98, 1
      %s100 = scalar_select %p97, %s98, %s99
      %p103 = pneg %p97
      %p104 = scmp.eq.s32.totalorder %s76, 3
      %p105 = por %p103, %p104
      %p106 = scmp.ne.s32.totalorder %s98, %s101
      %p107 = scmp.eq.s32.totalorder %s76, 0
      %p108 = por %p106, %p107
      %p109 = scmp.ne.s32.totalorder %s98, %s101
      %p110 = scmp.eq.s32.totalorder %s81, 3
      %p111 = por %p109, %p110
      %p112 = scmp.ne.s32.totalorder %s101, %s102
      %p113 = scmp.eq.s32.totalorder %s81, 0
      %p114 = por %p112, %p113
      %p115 = scmp.ne.s32.totalorder %s101, %s102
      %p116 = scmp.eq.s32.totalorder %s82, 3
      %p117 = por %p115, %p116
      %p119 = scmp.ne.s32.totalorder %s102, %s118
      %p120 = scmp.eq.s32.totalorder %s82, 0
      %p121 = por %p119, %p120
      %s122 = ssub.s32 %s83, %s95
      %p123 = scmp.eq.s32.totalorder %s122, 0
      %s125 = sadd.s32 %s124, 1
      %s126 = scalar_select %p123, %s124, %s125
      %p129 = pneg %p123
      %p130 = scmp.eq.s32.totalorder %s76, 3
      %p131 = por %p129, %p130
      %p132 = scmp.ne.s32.totalorder %s124, %s127
      %p133 = scmp.eq.s32.totalorder %s76, 0
      %p134 = por %p132, %p133
      %p135 = scmp.ne.s32.totalorder %s124, %s127
      %p136 = scmp.eq.s32.totalorder %s81, 3
      %p137 = por %p135, %p136
      %p138 = scmp.ne.s32.totalorder %s127, %s128
      %p139 = scmp.eq.s32.totalorder %s81, 0
      %p140 = por %p138, %p139
      %p141 = scmp.ne.s32.totalorder %s127, %s128
      %p142 = scmp.eq.s32.totalorder %s82, 3
      %p143 = por %p141, %p142
      %p145 = scmp.ne.s32.totalorder %s128, %s144
      %p146 = scmp.eq.s32.totalorder %s82, 0
      %p147 = por %p145, %p146
      %s148 = ssub.s32 %s84, %s91
      %p149 = scmp.eq.s32.totalorder %s148, 0
      %s151 = sadd.s32 %s150, 1
      %s152 = scalar_select %p149, %s150, %s151
      %p155 = pneg %p149
      %p156 = scmp.eq.s32.totalorder %s76, 3
      %p157 = por %p155, %p156
      %p158 = scmp.ne.s32.totalorder %s150, %s153
      %p159 = scmp.eq.s32.totalorder %s76, 0
      %p160 = por %p158, %p159
      %p161 = scmp.ne.s32.totalorder %s150, %s153
      %p162 = scmp.eq.s32.totalorder %s81, 3
      %p163 = por %p161, %p162
      %p164 = scmp.ne.s32.totalorder %s153, %s154
      %p165 = scmp.eq.s32.totalorder %s81, 0
      %p166 = por %p164, %p165
      %p167 = scmp.ne.s32.totalorder %s153, %s154
      %p168 = scmp.eq.s32.totalorder %s82, 3
      %p169 = por %p167, %p168
      %p171 = scmp.ne.s32.totalorder %s154, %s170
      %p172 = scmp.eq.s32.totalorder %s82, 0
      %p173 = por %p171, %p172
      %s174 = ssub.s32 %s84, %s91
      %p175 = scmp.eq.s32.totalorder %s174, 0
      %s177 = sadd.s32 %s176, 1
      %s178 = scalar_select %p175, %s176, %s177
      %p181 = pneg %p175
      %p182 = scmp.eq.s32.totalorder %s76, 3
      %p183 = por %p181, %p182
      %p184 = scmp.ne.s32.totalorder %s176, %s179
      %p185 = scmp.eq.s32.totalorder %s76, 0
      %p186 = por %p184, %p185
      %p187 = scmp.ne.s32.totalorder %s176, %s179
      %p188 = scmp.eq.s32.totalorder %s81, 3
      %p189 = por %p187, %p188
      %p190 = scmp.ne.s32.totalorder %s179, %s180
      %p191 = scmp.eq.s32.totalorder %s81, 0
      %p192 = por %p190, %p191
      %p193 = scmp.ne.s32.totalorder %s179, %s180
      %p194 = scmp.eq.s32.totalorder %s82, 3
      %p195 = por %p193, %p194
      %p197 = scmp.ne.s32.totalorder %s180, %s196
      %p198 = scmp.eq.s32.totalorder %s82, 0
      %p199 = por %p197, %p198
      %s200 = ssub.s32 %s84, %s91
      %p201 = scmp.eq.s32.totalorder %s200, 0
      %s203 = sadd.s32 %s202, 1
      %s204 = scalar_select %p201, %s202, %s203
      %p207 = pneg %p201
      %p208 = scmp.eq.s32.totalorder %s76, 3
      %p209 = por %p207, %p208
      %p210 = scmp.ne.s32.totalorder %s202, %s205
      %p211 = scmp.eq.s32.totalorder %s76, 0
      %p212 = por %p210, %p211
      %p213 = scmp.ne.s32.totalorder %s202, %s205
      %p214 = scmp.eq.s32.totalorder %s81, 3
      %p215 = por %p213, %p214
      %p216 = scmp.ne.s32.totalorder %s205, %s206
      %p217 = scmp.eq.s32.totalorder %s81, 0
      %p218 = por %p216, %p217
      %p219 = scmp.ne.s32.totalorder %s205, %s206
      %p220 = scmp.eq.s32.totalorder %s82, 3
      %p221 = por %p219, %p220
      %p223 = scmp.ne.s32.totalorder %s206, %s222
      %p224 = scmp.eq.s32.totalorder %s82, 0
      %p225 = por %p223, %p224
      %s226 = ssub.s32 %s84, %s91
      %p227 = scmp.eq.s32.totalorder %s226, 0
      %s229 = sadd.s32 %s228, 1
      %s230 = scalar_select %p227, %s228, %s229
      %p233 = pneg %p227
      %p234 = scmp.eq.s32.totalorder %s76, 3
      %p235 = por %p233, %p234
      %p236 = scmp.ne.s32.totalorder %s228, %s231
      %p237 = scmp.eq.s32.totalorder %s76, 0
      %p238 = por %p236, %p237
      %p239 = scmp.ne.s32.totalorder %s228, %s231
      %p240 = scmp.eq.s32.totalorder %s81, 3
      %p241 = por %p239, %p240
      %p242 = scmp.ne.s32.totalorder %s231, %s232
      %p243 = scmp.eq.s32.totalorder %s81, 0
      %p244 = por %p242, %p243
      %p245 = scmp.ne.s32.totalorder %s231, %s232
      %p246 = scmp.eq.s32.totalorder %s82, 3
      %p247 = por %p245, %p246
      %p249 = scmp.ne.s32.totalorder %s232, %s248
      %p250 = scmp.eq.s32.totalorder %s82, 0
      %p251 = por %p249, %p250
      %s252 = ssub.s32 %s84, %s91
      %p253 = scmp.eq.s32.totalorder %s252, 0
      %s255 = sadd.s32 %s254, 1
      %s256 = scalar_select %p253, %s254, %s255
      %p259 = pneg %p253
      %p260 = scmp.eq.s32.totalorder %s76, 3
      %p261 = por %p259, %p260
      %p262 = scmp.ne.s32.totalorder %s254, %s257
      %p263 = scmp.eq.s32.totalorder %s76, 0
      %p264 = por %p262, %p263
      %p265 = scmp.ne.s32.totalorder %s254, %s257
      %p266 = scmp.eq.s32.totalorder %s81, 3
      %p267 = por %p265, %p266
      %p268 = scmp.ne.s32.totalorder %s257, %s258
      %p269 = scmp.eq.s32.totalorder %s81, 0
      %p270 = por %p268, %p269
      %p271 = scmp.ne.s32.totalorder %s257, %s258
      %p272 = scmp.eq.s32.totalorder %s82, 3
      %p273 = por %p271, %p272
      %p275 = scmp.ne.s32.totalorder %s258, %s274
      %p276 = scmp.eq.s32.totalorder %s82, 0
      %p277 = por %p275, %p276
      %s278 = ssub.s32 %s84, %s91
      %p279 = scmp.eq.s32.totalorder %s278, 0
      %s281 = sadd.s32 %s280, 1
      %s282 = scalar_select %p279, %s280, %s281
      %p285 = pneg %p279
      %p286 = scmp.eq.s32.totalorder %s76, 3
      %p287 = por %p285, %p286
      %p288 = scmp.ne.s32.totalorder %s280, %s283
      %p289 = scmp.eq.s32.totalorder %s76, 0
      %p290 = por %p288, %p289
      %p291 = scmp.ne.s32.totalorder %s280, %s283
      %p292 = scmp.eq.s32.totalorder %s81, 3
      %p293 = por %p291, %p292
      %p294 = scmp.ne.s32.totalorder %s283, %s284
      %p295 = scmp.eq.s32.totalorder %s81, 0
      %p296 = por %p294, %p295
      %p297 = scmp.ne.s32.totalorder %s283, %s284
      %p298 = scmp.eq.s32.totalorder %s82, 3
      %p299 = por %p297, %p298
      %p301 = scmp.ne.s32.totalorder %s284, %s300
      %p302 = scmp.eq.s32.totalorder %s82, 0
      %p303 = por %p301, %p302
      %s304 = ssub.s32 %s84, %s91
      %p305 = scmp.eq.s32.totalorder %s304, 0
      %s307 = sadd.s32 %s306, 1
      %s308 = scalar_select %p305, %s306, %s307
      %p311 = pneg %p305
      %p312 = scmp.eq.s32.totalorder %s76, 3
      %p313 = por %p311, %p312
      %p314 = scmp.ne.s32.totalorder %s306, %s309
      %p315 = scmp.eq.s32.totalorder %s76, 0
      %p316 = por %p314, %p315
      %p317 = scmp.ne.s32.totalorder %s306, %s309
      %p318 = scmp.eq.s32.totalorder %s81, 3
      %p319 = por %p317, %p318
      %p320 = scmp.ne.s32.totalorder %s309, %s310
      %p321 = scmp.eq.s32.totalorder %s81, 0
      %p322 = por %p320, %p321
      %p323 = scmp.ne.s32.totalorder %s309, %s310
      %p324 = scmp.eq.s32.totalorder %s82, 3
      %p325 = por %p323, %p324
      %p327 = scmp.ne.s32.totalorder %s310, %s326
      %p328 = scmp.eq.s32.totalorder %s82, 0
      %p329 = por %p327, %p328
      %s330 = ssub.s32 %s84, %s91
      %p331 = scmp.eq.s32.totalorder %s330, 0
      %s333 = sadd.s32 %s332, 1
      %s334 = scalar_select %p331, %s332, %s333
      %p337 = pneg %p331
      %p338 = scmp.eq.s32.totalorder %s76, 3
      %p339 = por %p337, %p338
      %p340 = scmp.ne.s32.totalorder %s332, %s335
      %p341 = scmp.eq.s32.totalorder %s76, 0
      %p342 = por %p340, %p341
      %p343 = scmp.ne.s32.totalorder %s332, %s335
      %p344 = scmp.eq.s32.totalorder %s81, 3
      %p345 = por %p343, %p344
      %p346 = scmp.ne.s32.totalorder %s335, %s336
      %p347 = scmp.eq.s32.totalorder %s81, 0
      %p348 = por %p346, %p347
      %p349 = scmp.ne.s32.totalorder %s335, %s336
      %p350 = scmp.eq.s32.totalorder %s82, 3
      %p351 = por %p349, %p350
      %p353 = scmp.ne.s32.totalorder %s336, %s352
      %p354 = scmp.eq.s32.totalorder %s82, 0
      %p355 = por %p353, %p354
      %s356 = ssub.s32 %s84, %s91
      %p357 = scmp.eq.s32.totalorder %s356, 0
      %s359 = sadd.s32 %s358, 1
      %s360 = scalar_select %p357, %s358, %s359
      %p363 = pneg %p357
      %p364 = scmp.eq.s32.totalorder %s76, 3
      %p365 = por %p363, %p364
      %p366 = scmp.ne.s32.totalorder %s358, %s361
      %p367 = scmp.eq.s32.totalorder %s76, 0
      %p368 = por %p366, %p367
      %p369 = scmp.ne.s32.totalorder %s358, %s361
      %p370 = scmp.eq.s32.totalorder %s81, 3
      %p371 = por %p369, %p370
      %p372 = scmp.ne.s32.totalorder %s361, %s362
      %p373 = scmp.eq.s32.totalorder %s81, 0
      %p374 = por %p372, %p373
      %p375 = scmp.ne.s32.totalorder %s361, %s362
      %p376 = scmp.eq.s32.totalorder %s82, 3
      %p377 = por %p375, %p376
      %p379 = scmp.ne.s32.totalorder %s362, %s378
      %p380 = scmp.eq.s32.totalorder %s82, 0
      %p381 = por %p379, %p380
      %s382 = ssub.s32 %s84, %s91
      %p383 = scmp.eq.s32.totalorder %s382, 0
      %s385 = sadd.s32 %s384, 1
      %s386 = scalar_select %p383, %s384, %s385
      %p389 = pneg %p383
      %p390 = scmp.eq.s32.totalorder %s76, 3
      %p391 = por %p389, %p390
      %p392 = scmp.ne.s32.totalorder %s384, %s387
      %p393 = scmp.eq.s32.totalorder %s76, 0
      %p394 = por %p392, %p393
      %p395 = scmp.ne.s32.totalorder %s384, %s387
      %p396 = scmp.eq.s32.totalorder %s81, 3
      %p397 = por %p395, %p396
      %p398 = scmp.ne.s32.totalorder %s387, %s388
      %p399 = scmp.eq.s32.totalorder %s81, 0
      %p400 = por %p398, %p399
      %p401 = scmp.ne.s32.totalorder %s387, %s388
      %p402 = scmp.eq.s32.totalorder %s82, 3
      %p403 = por %p401, %p402
      %p405 = scmp.ne.s32.totalorder %s388, %s404
      %p406 = scmp.eq.s32.totalorder %s82, 0
      %p407 = por %p405, %p406
      %s408 = ssub.s32 %s84, %s91
      %p409 = scmp.eq.s32.totalorder %s408, 0
      %s411 = sadd.s32 %s410, 1
      %s412 = scalar_select %p409, %s410, %s411
      %p415 = pneg %p409
      %p416 = scmp.eq.s32.totalorder %s76, 3
      %p417 = por %p415, %p416
      %p418 = scmp.ne.s32.totalorder %s410, %s413
      %p419 = scmp.eq.s32.totalorder %s76, 0
      %p420 = por %p418, %p419
      %p421 = scmp.ne.s32.totalorder %s410, %s413
      %p422 = scmp.eq.s32.totalorder %s81, 3
      %p423 = por %p421, %p422
      %p424 = scmp.ne.s32.totalorder %s413, %s414
      %p425 = scmp.eq.s32.totalorder %s81, 0
      %p426 = por %p424, %p425
      %p427 = scmp.ne.s32.totalorder %s413, %s414
      %p428 = scmp.eq.s32.totalorder %s82, 3
      %p429 = por %p427, %p428
      %p431 = scmp.ne.s32.totalorder %s414, %s430
      %p432 = scmp.eq.s32.totalorder %s82, 0
      %p433 = por %p431, %p432
      %s434 = ssub.s32 %s84, %s91
      %p435 = scmp.eq.s32.totalorder %s434, 0
      %s437 = sadd.s32 %s436, 1
      %s438 = scalar_select %p435, %s436, %s437
      %p441 = pneg %p435
      %p442 = scmp.eq.s32.totalorder %s76, 3
      %p443 = por %p441, %p442
      %p444 = scmp.ne.s32.totalorder %s436, %s439
      %p445 = scmp.eq.s32.totalorder %s76, 0
      %p446 = por %p444, %p445
      %p447 = scmp.ne.s32.totalorder %s436, %s439
      %p448 = scmp.eq.s32.totalorder %s81, 3
      %p449 = por %p447, %p448
      %p450 = scmp.ne.s32.totalorder %s439, %s440
      %p451 = scmp.eq.s32.totalorder %s81, 0
      %p452 = por %p450, %p451
      %p453 = scmp.ne.s32.totalorder %s439, %s440
      %p454 = scmp.eq.s32.totalorder %s82, 3
      %p455 = por %p453, %p454
      %p457 = scmp.ne.s32.totalorder %s440, %s456
      %p458 = scmp.eq.s32.totalorder %s82, 0
      %p459 = por %p457, %p458
      %s460 = ssub.s32 %s84, %s91
      %p461 = scmp.eq.s32.totalorder %s460, 0
      %s463 = sadd.s32 %s462, 1
      %s464 = scalar_select %p461, %s462, %s463
      %p467 = pneg %p461
      %p468 = scmp.eq.s32.totalorder %s76, 3
      %p469 = por %p467, %p468
      %p470 = scmp.ne.s32.totalorder %s462, %s465
      %p471 = scmp.eq.s32.totalorder %s76, 0
      %p472 = por %p470, %p471
      %p473 = scmp.ne.s32.totalorder %s462, %s465
      %p474 = scmp.eq.s32.totalorder %s81, 3
      %p475 = por %p473, %p474
      %p476 = scmp.ne.s32.totalorder %s465, %s466
      %p477 = scmp.eq.s32.totalorder %s81, 0
      %p478 = por %p476, %p477
      %p479 = scmp.ne.s32.totalorder %s465, %s466
      %p480 = scmp.eq.s32.totalorder %s82, 3
      %p481 = por %p479, %p480
      %p483 = scmp.ne.s32.totalorder %s466, %s482
      %p484 = scmp.eq.s32.totalorder %s82, 0
      %p485 = por %p483, %p484
      %s486 = ssub.s32 %s84, %s91
      %p487 = scmp.eq.s32.totalorder %s486, 0
      %s489 = sadd.s32 %s488, 1
      %s490 = scalar_select %p487, %s488, %s489
      %p493 = pneg %p487
      %p494 = scmp.eq.s32.totalorder %s76, 3
      %p495 = por %p493, %p494
      %p496 = scmp.ne.s32.totalorder %s488, %s491
      %p497 = scmp.eq.s32.totalorder %s76, 0
      %p498 = por %p496, %p497
      %p499 = scmp.ne.s32.totalorder %s488, %s491
      %p500 = scmp.eq.s32.totalorder %s81, 3
      %p501 = por %p499, %p500
      %p502 = scmp.ne.s32.totalorder %s491, %s492
      %p503 = scmp.eq.s32.totalorder %s81, 0
      %p504 = por %p502, %p503
      %p505 = scmp.ne.s32.totalorder %s491, %s492
      %p506 = scmp.eq.s32.totalorder %s82, 3
      %p507 = por %p505, %p506
      %p509 = scmp.ne.s32.totalorder %s492, %s508
      %p510 = scmp.eq.s32.totalorder %s82, 0
      %p511 = por %p509, %p510
      %s512 = ssub.s32 %s84, %s91
      %p513 = scmp.eq.s32.totalorder %s512, 0
      %s515 = sadd.s32 %s514, 1
      %s516 = scalar_select %p513, %s514, %s515
      %p519 = pneg %p513
      %p520 = scmp.eq.s32.totalorder %s76, 3
      %p521 = por %p519, %p520
      %p522 = scmp.ne.s32.totalorder %s514, %s517
      %p523 = scmp.eq.s32.totalorder %s76, 0
      %p524 = por %p522, %p523
      %p525 = scmp.ne.s32.totalorder %s514, %s517
      %p526 = scmp.eq.s32.totalorder %s81, 3
      %p527 = por %p525, %p526
      %p528 = scmp.ne.s32.totalorder %s517, %s518
      %p529 = scmp.eq.s32.totalorder %s81, 0
      %p530 = por %p528, %p529
      %p531 = scmp.ne.s32.totalorder %s517, %s518
      %p532 = scmp.eq.s32.totalorder %s82, 3
      %p533 = por %p531, %p532
      %p535 = scmp.ne.s32.totalorder %s518, %s534
      %p536 = scmp.eq.s32.totalorder %s82, 0
      %p537 = por %p535, %p536
      %s538 = ssub.s32 %s84, %s91
      %p539 = scmp.eq.s32.totalorder %s538, 0
      %s541 = sadd.s32 %s540, 1
      %s542 = scalar_select %p539, %s540, %s541
      %p545 = pneg %p539
      %p546 = scmp.eq.s32.totalorder %s76, 3
      %p547 = por %p545, %p546
      %p548 = scmp.ne.s32.totalorder %s540, %s543
      %p549 = scmp.eq.s32.totalorder %s76, 0
      %p550 = por %p548, %p549
      %p551 = scmp.ne.s32.totalorder %s540, %s543
      %p552 = scmp.eq.s32.totalorder %s81, 3
      %p553 = por %p551, %p552
      %p554 = scmp.ne.s32.totalorder %s543, %s544
      %p555 = scmp.eq.s32.totalorder %s81, 0
      %p556 = por %p554, %p555
      %p557 = scmp.ne.s32.totalorder %s543, %s544
      %p558 = scmp.eq.s32.totalorder %s82, 3
      %p559 = por %p557, %p558
      %p561 = scmp.ne.s32.totalorder %s544, %s560
      %p562 = scmp.eq.s32.totalorder %s82, 0
      %p563 = por %p561, %p562
      %s564 = ssub.s32 %s84, %s91
      %p565 = scmp.eq.s32.totalorder %s564, 0
      %s567 = sadd.s32 %s566, 1
      %s568 = scalar_select %p565, %s566, %s567
      %p571 = pneg %p565
      %p572 = scmp.eq.s32.totalorder %s76, 3
      %p573 = por %p571, %p572
      %p574 = scmp.ne.s32.totalorder %s566, %s569
      %p575 = scmp.eq.s32.totalorder %s76, 0
      %p576 = por %p574, %p575
      %p577 = scmp.ne.s32.totalorder %s566, %s569
      %p578 = scmp.eq.s32.totalorder %s81, 3
      %p579 = por %p577, %p578
      %p580 = scmp.ne.s32.totalorder %s569, %s570
      %p581 = scmp.eq.s32.totalorder %s81, 0
      %p582 = por %p580, %p581
      %p583 = scmp.ne.s32.totalorder %s569, %s570
      %p584 = scmp.eq.s32.totalorder %s82, 3
      %p585 = por %p583, %p584
      %p587 = scmp.ne.s32.totalorder %s570, %s586
      %p588 = scmp.eq.s32.totalorder %s82, 0
      %p589 = por %p587, %p588
      %s590 = ssub.s32 %s84, %s91
      %p591 = scmp.eq.s32.totalorder %s590, 0
      %s593 = sadd.s32 %s592, 1
      %s594 = scalar_select %p591, %s592, %s593
      %p597 = pneg %p591
      %p598 = scmp.eq.s32.totalorder %s76, 3
      %p599 = por %p597, %p598
      %p600 = scmp.ne.s32.totalorder %s592, %s595
      %p601 = scmp.eq.s32.totalorder %s76, 0
      %p602 = por %p600, %p601
      %p603 = scmp.ne.s32.totalorder %s592, %s595
      %p604 = scmp.eq.s32.totalorder %s81, 3
      %p605 = por %p603, %p604
      %p606 = scmp.ne.s32.totalorder %s595, %s596
      %p607 = scmp.eq.s32.totalorder %s81, 0
      %p608 = por %p606, %p607
      %p609 = scmp.ne.s32.totalorder %s595, %s596
      %p610 = scmp.eq.s32.totalorder %s82, 3
      %p611 = por %p609, %p610
      %p613 = scmp.ne.s32.totalorder %s596, %s612
      %p614 = scmp.eq.s32.totalorder %s82, 0
      %p615 = por %p613, %p614
      %s616 = ssub.s32 %s84, %s91
      %p617 = scmp.eq.s32.totalorder %s616, 0
      %s619 = sadd.s32 %s618, 1
      %s620 = scalar_select %p617, %s618, %s619
      %p623 = pneg %p617
      %p624 = scmp.eq.s32.totalorder %s76, 3
      %p625 = por %p623, %p624
      %p626 = scmp.ne.s32.totalorder %s618, %s621
      %p627 = scmp.eq.s32.totalorder %s76, 0
      %p628 = por %p626, %p627
      %p629 = scmp.ne.s32.totalorder %s618, %s621
      %p630 = scmp.eq.s32.totalorder %s81, 3
      %p631 = por %p629, %p630
      %p632 = scmp.ne.s32.totalorder %s621, %s622
      %p633 = scmp.eq.s32.totalorder %s81, 0
      %p634 = por %p632, %p633
      %p635 = scmp.ne.s32.totalorder %s621, %s622
      %p636 = scmp.eq.s32.totalorder %s82, 3
      %p637 = por %p635, %p636
      %p639 = scmp.ne.s32.totalorder %s622, %s638
      %p640 = scmp.eq.s32.totalorder %s82, 0
      %p641 = por %p639, %p640
      %s642 = ssub.s32 %s84, %s91
      %p643 = scmp.eq.s32.totalorder %s642, 0
      %s645 = sadd.s32 %s644, 1
      %s646 = scalar_select %p643, %s644, %s645
      %p649 = pneg %p643
      %p650 = scmp.eq.s32.totalorder %s76, 3
      %p651 = por %p649, %p650
      %p652 = scmp.ne.s32.totalorder %s644, %s647
      %p653 = scmp.eq.s32.totalorder %s76, 0
      %p654 = por %p652, %p653
      %p655 = scmp.ne.s32.totalorder %s644, %s647
      %p656 = scmp.eq.s32.totalorder %s81, 3
      %p657 = por %p655, %p656
      %p658 = scmp.ne.s32.totalorder %s647, %s648
      %p659 = scmp.eq.s32.totalorder %s81, 0
      %p660 = por %p658, %p659
      %p661 = scmp.ne.s32.totalorder %s647, %s648
      %p662 = scmp.eq.s32.totalorder %s82, 3
      %p663 = por %p661, %p662
      %p665 = scmp.ne.s32.totalorder %s648, %s664
      %p666 = scmp.eq.s32.totalorder %s82, 0
      %p667 = por %p665, %p666
      %s668 = ssub.s32 %s84, %s91
      %p669 = scmp.eq.s32.totalorder %s668, 0
      %s671 = sadd.s32 %s670, 1
      %s672 = scalar_select %p669, %s670, %s671
      %p675 = pneg %p669
      %p676 = scmp.eq.s32.totalorder %s76, 3
      %p677 = por %p675, %p676
      %p678 = scmp.ne.s32.totalorder %s670, %s673
      %p679 = scmp.eq.s32.totalorder %s76, 0
      %p680 = por %p678, %p679
      %p681 = scmp.ne.s32.totalorder %s670, %s673
      %p682 = scmp.eq.s32.totalorder %s81, 3
      %p683 = por %p681, %p682
      %p684 = scmp.ne.s32.totalorder %s673, %s674
      %p685 = scmp.eq.s32.totalorder %s81, 0
      %p686 = por %p684, %p685
      %p687 = scmp.ne.s32.totalorder %s673, %s674
      %p688 = scmp.eq.s32.totalorder %s82, 3
      %p689 = por %p687, %p688
      %p691 = scmp.ne.s32.totalorder %s674, %s690
      %p692 = scmp.eq.s32.totalorder %s82, 0
      %p693 = por %p691, %p692
      %s694 = ssub.s32 %s84, %s91
      %p695 = scmp.eq.s32.totalorder %s694, 0
      %s697 = sadd.s32 %s696, 1
      %s698 = scalar_select %p695, %s696, %s697
      %p701 = pneg %p695
      %p702 = scmp.eq.s32.totalorder %s76, 3
      %p703 = por %p701, %p702
      %p704 = scmp.ne.s32.totalorder %s696, %s699
      %p705 = scmp.eq.s32.totalorder %s76, 0
      %p706 = por %p704, %p705
      %p707 = scmp.ne.s32.totalorder %s696, %s699
      %p708 = scmp.eq.s32.totalorder %s81, 3
      %p709 = por %p707, %p708
      %p710 = scmp.ne.s32.totalorder %s699, %s700
      %p711 = scmp.eq.s32.totalorder %s81, 0
      %p712 = por %p710, %p711
      %p713 = scmp.ne.s32.totalorder %s699, %s700
      %p714 = scmp.eq.s32.totalorder %s82, 3
      %p715 = por %p713, %p714
      %p717 = scmp.ne.s32.totalorder %s700, %s716
      %p718 = scmp.eq.s32.totalorder %s82, 0
      %p719 = por %p717, %p718
      %s720 = ssub.s32 %s84, %s91
      %p721 = scmp.eq.s32.totalorder %s720, 0
      %s723 = sadd.s32 %s722, 1
      %s724 = scalar_select %p721, %s722, %s723
      %p727 = pneg %p721
      %p728 = scmp.eq.s32.totalorder %s76, 3
      %p729 = por %p727, %p728
      %p730 = scmp.ne.s32.totalorder %s722, %s725
      %p731 = scmp.eq.s32.totalorder %s76, 0
      %p732 = por %p730, %p731
      %p733 = scmp.ne.s32.totalorder %s722, %s725
      %p734 = scmp.eq.s32.totalorder %s81, 3
      %p735 = por %p733, %p734
      %p736 = scmp.ne.s32.totalorder %s725, %s726
      %p737 = scmp.eq.s32.totalorder %s81, 0
      %p738 = por %p736, %p737
      %p739 = scmp.ne.s32.totalorder %s725, %s726
      %p740 = scmp.eq.s32.totalorder %s82, 3
      %p741 = por %p739, %p740
      %p743 = scmp.ne.s32.totalorder %s726, %s742
      %p744 = scmp.eq.s32.totalorder %s82, 0
      %p745 = por %p743, %p744
      %s746 = ssub.s32 %s84, %s91
      %p747 = scmp.eq.s32.totalorder %s746, 0
      %s749 = sadd.s32 %s748, 1
      %s750 = scalar_select %p747, %s748, %s749
      %p753 = pneg %p747
      %p754 = scmp.eq.s32.totalorder %s76, 3
      %p755 = por %p753, %p754
      %p756 = scmp.ne.s32.totalorder %s748, %s751
      %p757 = scmp.eq.s32.totalorder %s76, 0
      %p758 = por %p756, %p757
      %p759 = scmp.ne.s32.totalorder %s748, %s751
      %p760 = scmp.eq.s32.totalorder %s81, 3
      %p761 = por %p759, %p760
      %p762 = scmp.ne.s32.totalorder %s751, %s752
      %p763 = scmp.eq.s32.totalorder %s81, 0
      %p764 = por %p762, %p763
      %p765 = scmp.ne.s32.totalorder %s751, %s752
      %p766 = scmp.eq.s32.totalorder %s82, 3
      %p767 = por %p765, %p766
      %p769 = scmp.ne.s32.totalorder %s752, %s768
      %p770 = scmp.eq.s32.totalorder %s82, 0
      %p771 = por %p769, %p770
      %s772 = ssub.s32 %s84, %s91
      %p773 = scmp.eq.s32.totalorder %s772, 0
      %s775 = sadd.s32 %s774, 1
      %s776 = scalar_select %p773, %s774, %s775
      %p779 = pneg %p773
      %p780 = scmp.eq.s32.totalorder %s76, 3
      %p781 = por %p779, %p780
      %p782 = scmp.ne.s32.totalorder %s774, %s777
      %p783 = scmp.eq.s32.totalorder %s76, 0
      %p784 = por %p782, %p783
      %p785 = scmp.ne.s32.totalorder %s774, %s777
      %p786 = scmp.eq.s32.totalorder %s81, 3
      %p787 = por %p785, %p786
      %p788 = scmp.ne.s32.totalorder %s777, %s778
      %p789 = scmp.eq.s32.totalorder %s81, 0
      %p790 = por %p788, %p789
      %p791 = scmp.ne.s32.totalorder %s777, %s778
      %p792 = scmp.eq.s32.totalorder %s82, 3
      %p793 = por %p791, %p792
      %p795 = scmp.ne.s32.totalorder %s778, %s794
      %p796 = scmp.eq.s32.totalorder %s82, 0
      %p797 = por %p795, %p796
      %s798 = ssub.s32 %s84, %s91
      %p799 = scmp.eq.s32.totalorder %s798, 0
      %s801 = sadd.s32 %s800, 1
      %s802 = scalar_select %p799, %s800, %s801
      %p805 = pneg %p799
      %p806 = scmp.eq.s32.totalorder %s76, 3
      %p807 = por %p805, %p806
      %p808 = scmp.ne.s32.totalorder %s800, %s803
      %p809 = scmp.eq.s32.totalorder %s76, 0
      %p810 = por %p808, %p809
      %p811 = scmp.ne.s32.totalorder %s800, %s803
      %p812 = scmp.eq.s32.totalorder %s81, 3
      %p813 = por %p811, %p812
      %p814 = scmp.ne.s32.totalorder %s803, %s804
      %p815 = scmp.eq.s32.totalorder %s81, 0
      %p816 = por %p814, %p815
      %p817 = scmp.ne.s32.totalorder %s803, %s804
      %p818 = scmp.eq.s32.totalorder %s82, 3
      %p819 = por %p817, %p818
      %p821 = scmp.ne.s32.totalorder %s804, %s820
      %p822 = scmp.eq.s32.totalorder %s82, 0
      %p823 = por %p821, %p822
      %s824 = ssub.s32 %s84, %s91
      %p825 = scmp.eq.s32.totalorder %s824, 0
      %s827 = sadd.s32 %s826, 1
      %s828 = scalar_select %p825, %s826, %s827
      %p831 = pneg %p825
      %p832 = scmp.eq.s32.totalorder %s76, 3
      %p833 = por %p831, %p832
      %p834 = scmp.ne.s32.totalorder %s826, %s829
      %p835 = scmp.eq.s32.totalorder %s76, 0
      %p836 = por %p834, %p835
      %p837 = scmp.ne.s32.totalorder %s826, %s829
      %p838 = scmp.eq.s32.totalorder %s81, 3
      %p839 = por %p837, %p838
      %p840 = scmp.ne.s32.totalorder %s829, %s830
      %p841 = scmp.eq.s32.totalorder %s81, 0
      %p842 = por %p840, %p841
      %p843 = scmp.ne.s32.totalorder %s829, %s830
      %p844 = scmp.eq.s32.totalorder %s82, 3
      %p845 = por %p843, %p844
      %p847 = scmp.ne.s32.totalorder %s830, %s846
      %p848 = scmp.eq.s32.totalorder %s82, 0
      %p849 = por %p847, %p848
      %s850 = ssub.s32 %s84, %s91
      %p851 = scmp.eq.s32.totalorder %s850, 0
      %s853 = sadd.s32 %s852, 1
      %s854 = scalar_select %p851, %s852, %s853
      %p857 = pneg %p851
      %p858 = scmp.eq.s32.totalorder %s76, 3
      %p859 = por %p857, %p858
      %p860 = scmp.ne.s32.totalorder %s852, %s855
      %p861 = scmp.eq.s32.totalorder %s76, 0
      %p862 = por %p860, %p861
      %p863 = scmp.ne.s32.totalorder %s852, %s855
      %p864 = scmp.eq.s32.totalorder %s81, 3
      %p865 = por %p863, %p864
      %p866 = scmp.ne.s32.totalorder %s855, %s856
      %p867 = scmp.eq.s32.totalorder %s81, 0
      %p868 = por %p866, %p867
      %p869 = scmp.ne.s32.totalorder %s855, %s856
      %p870 = scmp.eq.s32.totalorder %s82, 3
      %p871 = por %p869, %p870
      %p873 = scmp.ne.s32.totalorder %s856, %s872
      %p874 = scmp.eq.s32.totalorder %s82, 0
      %p875 = por %p873, %p874
      %s876 = ssub.s32 %s84, %s91
      %p877 = scmp.eq.s32.totalorder %s876, 0
      %s879 = sadd.s32 %s878, 1
      %s880 = scalar_select %p877, %s878, %s879
      %p883 = pneg %p877
      %p884 = scmp.eq.s32.totalorder %s76, 3
      %p885 = por %p883, %p884
      %p886 = scmp.ne.s32.totalorder %s878, %s881
      %p887 = scmp.eq.s32.totalorder %s76, 0
      %p888 = por %p886, %p887
      %p889 = scmp.ne.s32.totalorder %s878, %s881
      %p890 = scmp.eq.s32.totalorder %s81, 3
      %p891 = por %p889, %p890
      %p892 = scmp.ne.s32.totalorder %s881, %s882
      %p893 = scmp.eq.s32.totalorder %s81, 0
      %p894 = por %p892, %p893
      %p895 = scmp.ne.s32.totalorder %s881, %s882
      %p896 = scmp.eq.s32.totalorder %s82, 3
      %p897 = por %p895, %p896
      %p899 = scmp.ne.s32.totalorder %s882, %s898
      %p900 = scmp.eq.s32.totalorder %s82, 0
      %p901 = por %p899, %p900
      %s902 = ssub.s32 %s84, %s91
      %p903 = scmp.eq.s32.totalorder %s902, 0
      %s905 = sadd.s32 %s904, 1
      %s906 = scalar_select %p903, %s904, %s905
      %p909 = pneg %p903
      %p910 = scmp.eq.s32.totalorder %s76, 3
      %p911 = por %p909, %p910
      %p912 = scmp.ne.s32.totalorder %s904, %s907
      %p913 = scmp.eq.s32.totalorder %s76, 0
      %p914 = por %p912, %p913
      %p915 = scmp.ne.s32.totalorder %s904, %s907
      %p916 = scmp.eq.s32.totalorder %s81, 3
      %p917 = por %p915, %p916
      %p918 = scmp.ne.s32.totalorder %s907, %s908
      %p919 = scmp.eq.s32.totalorder %s81, 0
      %p920 = por %p918, %p919
      %p921 = scmp.ne.s32.totalorder %s907, %s908
      %p922 = scmp.eq.s32.totalorder %s82, 3
      %p923 = por %p921, %p922
      %p925 = scmp.ne.s32.totalorder %s908, %s924
      %p926 = scmp.eq.s32.totalorder %s82, 0
      %p927 = por %p925, %p926
      %s929 = sadd.s32 %s928, 1
      %p932 = scmp.eq.s32.totalorder %s76, 3
      %p933 = scmp.ne.s32.totalorder %s928, %s930
      %p934 = scmp.eq.s32.totalorder %s76, 0
      %p935 = por %p933, %p934
      %p936 = scmp.ne.s32.totalorder %s928, %s930
      %p937 = scmp.eq.s32.totalorder %s81, 3
      %p938 = por %p936, %p937
      %p939 = scmp.ne.s32.totalorder %s930, %s931
      %p940 = scmp.eq.s32.totalorder %s81, 0
      %p941 = por %p939, %p940
      %p942 = scmp.ne.s32.totalorder %s930, %s931
      %p943 = scmp.eq.s32.totalorder %s82, 3
      %p944 = por %p942, %p943
      %p946 = scmp.ne.s32.totalorder %s931, %s945
      %p947 = scmp.eq.s32.totalorder %s82, 0
      %p948 = por %p946, %p947
      %s950 = sadd.s32 %s949, 1
      %p953 = scmp.eq.s32.totalorder %s76, 3
      %p954 = scmp.ne.s32.totalorder %s949, %s951
      %p955 = scmp.eq.s32.totalorder %s76, 0
      %p956 = por %p954, %p955
      %p957 = scmp.ne.s32.totalorder %s949, %s951
      %p958 = scmp.eq.s32.totalorder %s81, 3
      %p959 = por %p957, %p958
      %p960 = scmp.ne.s32.totalorder %s951, %s952
      %p961 = scmp.eq.s32.totalorder %s81, 0
      %p962 = por %p960, %p961
      %p963 = scmp.ne.s32.totalorder %s951, %s952
      %p964 = scmp.eq.s32.totalorder %s82, 3
      %p965 = por %p963, %p964
      %p967 = scmp.ne.s32.totalorder %s952, %s966
      %p968 = scmp.eq.s32.totalorder %s82, 0
      %p969 = por %p967, %p968
      %s970 = ssub.s32 %s83, %s95
      %p971 = scmp.eq.s32.totalorder %s970, 0
      %s973 = sadd.s32 %s972, 1
      %s974 = scalar_select %p971, %s972, %s973
      %p977 = pneg %p971
      %p978 = scmp.eq.s32.totalorder %s76, 3
      %p979 = por %p977, %p978
      %p980 = scmp.ne.s32.totalorder %s972, %s975
      %p981 = scmp.eq.s32.totalorder %s76, 0
      %p982 = por %p980, %p981
      %p983 = scmp.ne.s32.totalorder %s972, %s975
      %p984 = scmp.eq.s32.totalorder %s81, 3
      %p985 = por %p983, %p984
      %p986 = scmp.ne.s32.totalorder %s975, %s976
      %p987 = scmp.eq.s32.totalorder %s81, 0
      %p988 = por %p986, %p987
      %p989 = scmp.ne.s32.totalorder %s975, %s976
      %p990 = scmp.eq.s32.totalorder %s82, 3
      %p991 = por %p989, %p990
      %p993 = scmp.ne.s32.totalorder %s976, %s992
      %p994 = scmp.eq.s32.totalorder %s82, 0
      %p995 = por %p993, %p994
      %p996 = scmp.le.s32.totalorder 1, %s76
      %p997 = scmp.lt.s32.totalorder %s76, 5
      %p998 = pnand %p996, %p997
      %p999 = pneg %p998
      // Predicated region
      $region9: #{model_forward.3} parent=5 // pred_check
        _
      $region10: #{model_forward.3} parent=5 // pred_check_branch
        %1001 = sbr.rel (%p998) target = $region12
      $region11: #{model_forward.3} parent=5 // pred_region
        %s1002 = ssub.s32 %s76, 1
        // Predicated region
        $region13: #{model_forward.3} parent=11 // pred_check
          %p1003 = pneg %p941
        $region14: #{model_forward.3} parent=11 // pred_check_branch
          %1005 = sbr.rel (%p1003) target = $region16
        $region15: #{model_forward.3} parent=11 // pred_region
          _
        $region16: #{model_forward.3} parent=11 // pred_fallthru
          _
        // Predicated region
        $region17: #{model_forward.3} parent=11 // pred_check
          %p1006 = pneg %p962
        $region18: #{model_forward.3} parent=11 // pred_check_branch
          %1008 = sbr.rel (%p1006) target = $region20
        $region19: #{model_forward.3} parent=11 // pred_region
          %s1010 = ssub.s32 16, 16
          %1011 = vsyncadd [#allocation5], %s1010
          %s1013 = sshll.u32 [#allocation4], 4
          %s1014 = int_to_ptr.vmem [resolvable:$true] %s1013
          %1016 = dma.hbm_to_vmem [thread:$0]  %s67, 16, %s1014, [#allocation5]
        $region20: #{model_forward.3} parent=11 // pred_fallthru
          _
      $region12: #{model_forward.3} parent=5 // pred_fallthru
        _
      %p1017 = scmp.lt.s32.totalorder %s76, 4
      // Predicated region
      $region21: #{model_forward.3} parent=5 // pred_check
        %p1018 = pneg %p1017
      $region22: #{model_forward.3} parent=5 // pred_check_branch
        %1020 = sbr.rel (%p1018) target = $region24
      $region23: #{model_forward.3} parent=5 // pred_region
        // Predicated region
        $region25: #{model_forward.3} parent=23 // pred_check
          %p1021 = pneg %p108
        $region26: #{model_forward.3} parent=23 // pred_check_branch
          %1023 = sbr.rel (%p1021) target = $region28
        $region27: #{model_forward.3} parent=23 // pred_region
          %p1024 = scmp.lt.s32.totalorder %s83, 1
          %s1025 = scalar_select %p1024, %s83, 1
          %s1026 = smul.addr %s1025, 2
          %s1027 = smul.addr %s1026, 8
          %s1028 = scalar_lea.vmem %s1, %s1027
        $region28: #{model_forward.3} parent=23 // pred_fallthru
          _
        // Predicated region
        $region29: #{model_forward.3} parent=23 // pred_check
          %p1029 = pneg %p134
        $region30: #{model_forward.3} parent=23 // pred_check_branch
          %1031 = sbr.rel (%p1029) target = $region32
        $region31: #{model_forward.3} parent=23 // pred_region
          %p1032 = scmp.lt.s32.totalorder %s83, 1
          %s1033 = scalar_select %p1032, %s83, 1
          %s1034 = scalar_lea.vmem %s3, %s1033
        $region32: #{model_forward.3} parent=23 // pred_fallthru
          _
        // Predicated region
        $region33: #{model_forward.3} parent=23 // pred_check
          %p1035 = pneg %p160
        $region34: #{model_forward.3} parent=23 // pred_check_branch
          %1037 = sbr.rel (%p1035) target = $region36
        $region35: #{model_forward.3} parent=23 // pred_region
          %p1038 = scmp.lt.s32.totalorder %s84, 1
          %s1039 = scalar_select %p1038, %s84, 1
          %s1040 = scalar_lea.vmem %s5, %s1039
        $region36: #{model_forward.3} parent=23 // pred_fallthru
          _
        // Predicated region
        $region37: #{model_forward.3} parent=23 // pred_check
          %p1041 = pneg %p186
        $region38: #{model_forward.3} parent=23 // pred_check_branch
          %1043 = sbr.rel (%p1041) target = $region40
        $region39: #{model_forward.3} parent=23 // pred_region
          %p1044 = scmp.lt.s32.totalorder %s84, 1
          %s1045 = scalar_select %p1044, %s84, 1
          %s1046 = scalar_lea.vmem %s7, %s1045
        $region40: #{model_forward.3} parent=23 // pred_fallthru
          _
        // Predicated region
        $region41: #{model_forward.3} parent=23 // pred_check
          %p1047 = pneg %p212
        $region42: #{model_forward.3} parent=23 // pred_check_branch
          %1049 = sbr.rel (%p1047) target = $region44
        $region43: #{model_forward.3} parent=23 // pred_region
          %p1050 = scmp.lt.s32.totalorder %s84, 1
          %s1051 = scalar_select %p1050, %s84, 1
          %s1052 = smul.addr %s1051, 8
          %s1053 = smul.addr %s1052, 4
          %s1054 = scalar_lea.vmem %s9, %s1053
        $region44: #{model_forward.3} parent=23 // pred_fallthru
          _
        // Predicated region
        $region45: #{model_forward.3} parent=23 // pred_check
          %p1055 = pneg %p238
        $region46: #{model_forward.3} parent=23 // pred_check_branch
          %1057 = sbr.rel (%p1055) target = $region48
        $region47: #{model_forward.3} parent=23 // pred_region
          %p1058 = scmp.lt.s32.totalorder %s84, 1
          %s1059 = scalar_select %p1058, %s84, 1
          %s1060 = scalar_lea.vmem %s11, %s1059
        $region48: #{model_forward.3} parent=23 // pred_fallthru
          _
        // Predicated region
        $region49: #{model_forward.3} parent=23 // pred_check
          %p1061 = pneg %p264
        $region50: #{model_forward.3} parent=23 // pred_check_branch
          %1063 = sbr.rel (%p1061) target = $region52
        $region51: #{model_forward.3} parent=23 // pred_region
          %p1064 = scmp.lt.s32.totalorder %s84, 1
          %s1065 = scalar_select %p1064, %s84, 1
          %s1066 = smul.addr %s1065, 16
          %s1067 = smul.addr %s1066, 4
          %s1068 = scalar_lea.vmem %s13, %s1067
        $region52: #{model_forward.3} parent=23 // pred_fallthru
          _
        // Predicated region
        $region53: #{model_forward.3} parent=23 // pred_check
          %p1069 = pneg %p290
        $region54: #{model_forward.3} parent=23 // pred_check_branch
          %1071 = sbr.rel (%p1069) target = $region56
        $region55: #{model_forward.3} parent=23 // pred_region
          %p1072 = scmp.lt.s32.totalorder %s84, 1
          %s1073 = scalar_select %p1072, %s84, 1
          %s1074 = scalar_lea.vmem %s15, %s1073
        $region56: #{model_forward.3} parent=23 // pred_fallthru
          _
        // Predicated region
        $region57: #{model_forward.3} parent=23 // pred_check
          %p1075 = pneg %p316
        $region58: #{model_forward.3} parent=23 // pred_check_branch
          %1077 = sbr.rel (%p1075) target = $region60
        $region59: #{model_forward.3} parent=23 // pred_region
          %p1078 = scmp.lt.s32.totalorder %s84, 1
          %s1079 = scalar_select %p1078, %s84, 1
          %s1080 = scalar_lea.vmem %s17, %s1079
        $region60: #{model_forward.3} parent=23 // pred_fallthru
          _
        // Predicated region
        $region61: #{model_forward.3} parent=23 // pred_check
          %p1081 = pneg %p342
        $region62: #{model_forward.3} parent=23 // pred_check_branch
          %1083 = sbr.rel (%p1081) target = $region64
        $region63: #{model_forward.3} parent=23 // pred_region
          %p1084 = scmp.lt.s32.totalorder %s84, 1
          %s1085 = scalar_select %p1084, %s84, 1
          %s1086 = scalar_lea.vmem %s19, %s1085
        $region64: #{model_forward.3} parent=23 // pred_fallthru
          _
        // Predicated region
        $region65: #{model_forward.3} parent=23 // pred_check
          %p1087 = pneg %p368
        $region66: #{model_forward.3} parent=23 // pred_check_branch
          %1089 = sbr.rel (%p1087) target = $region68
        $region67: #{model_forward.3} parent=23 // pred_region
          %p1090 = scmp.lt.s32.totalorder %s84, 1
          %s1091 = scalar_select %p1090, %s84, 1
          %s1092 = smul.addr %s1091, 16
          %s1093 = smul.addr %s1092, 4
          %s1094 = scalar_lea.vmem %s21, %s1093
        $region68: #{model_forward.3} parent=23 // pred_fallthru
          _
        // Predicated region
        $region69: #{model_forward.3} parent=23 // pred_check
          %p1095 = pneg %p394
        $region70: #{model_forward.3} parent=23 // pred_check_branch
          %1097 = sbr.rel (%p1095) target = $region72
        $region71: #{model_forward.3} parent=23 // pred_region
          %p1098 = scmp.lt.s32.totalorder %s84, 1
          %s1099 = scalar_select %p1098, %s84, 1
          %s1100 = smul.addr %s1099, 2
          %s1101 = scalar_lea.vmem %s23, %s1100
        $region72: #{model_forward.3} parent=23 // pred_fallthru
          _
        // Predicated region
        $region73: #{model_forward.3} parent=23 // pred_check
          %p1102 = pneg %p420
        $region74: #{model_forward.3} parent=23 // pred_check_branch
          %1104 = sbr.rel (%p1102) target = $region76
        $region75: #{model_forward.3} parent=23 // pred_region
          %p1105 = scmp.lt.s32.totalorder %s84, 1
          %s1106 = scalar_select %p1105, %s84, 1
          %s1107 = smul.addr %s1106, 8
          %s1108 = smul.addr %s1107, 4
          %s1109 = scalar_lea.vmem %s25, %s1108
        $region76: #{model_forward.3} parent=23 // pred_fallthru
          _
        // Predicated region
        $region77: #{model_forward.3} parent=23 // pred_check
          %p1110 = pneg %p446
        $region78: #{model_forward.3} parent=23 // pred_check_branch
          %1112 = sbr.rel (%p1110) target = $region80
        $region79: #{model_forward.3} parent=23 // pred_region
          %p1113 = scmp.lt.s32.totalorder %s84, 1
          %s1114 = scalar_select %p1113, %s84, 1
          %s1115 = scalar_lea.vmem %s27, %s1114
        $region80: #{model_forward.3} parent=23 // pred_fallthru
          _
        // Predicated region
        $region81: #{model_forward.3} parent=23 // pred_check
          %p1116 = pneg %p472
        $region82: #{model_forward.3} parent=23 // pred_check_branch
          %1118 = sbr.rel (%p1116) target = $region84
        $region83: #{model_forward.3} parent=23 // pred_region
          %p1119 = scmp.lt.s32.totalorder %s84, 1
          %s1120 = scalar_select %p1119, %s84, 1
          %s1121 = scalar_lea.vmem %s29, %s1120
        $region84: #{model_forward.3} parent=23 // pred_fallthru
          _
        // Predicated region
        $region85: #{model_forward.3} parent=23 // pred_check
          %p1122 = pneg %p498
        $region86: #{model_forward.3} parent=23 // pred_check_branch
          %1124 = sbr.rel (%p1122) target = $region88
        $region87: #{model_forward.3} parent=23 // pred_region
          %p1125 = scmp.lt.s32.totalorder %s84, 1
          %s1126 = scalar_select %p1125, %s84, 1
          %s1127 = scalar_lea.vmem %s31, %s1126
        $region88: #{model_forward.3} parent=23 // pred_fallthru
          _
        // Predicated region
        $region89: #{model_forward.3} parent=23 // pred_check
          %p1128 = pneg %p524
        $region90: #{model_forward.3} parent=23 // pred_check_branch
          %1130 = sbr.rel (%p1128) target = $region92
        $region91: #{model_forward.3} parent=23 // pred_region
          %p1131 = scmp.lt.s32.totalorder %s84, 1
          %s1132 = scalar_select %p1131, %s84, 1
          %s1133 = smul.addr %s1132, 8
          %s1134 = smul.addr %s1133, 4
          %s1135 = scalar_lea.vmem %s33, %s1134
        $region92: #{model_forward.3} parent=23 // pred_fallthru
          _
        // Predicated region
        $region93: #{model_forward.3} parent=23 // pred_check
          %p1136 = pneg %p550
        $region94: #{model_forward.3} parent=23 // pred_check_branch
          %1138 = sbr.rel (%p1136) target = $region96
        $region95: #{model_forward.3} parent=23 // pred_region
          %p1139 = scmp.lt.s32.totalorder %s84, 1
          %s1140 = scalar_select %p1139, %s84, 1
          %s1141 = scalar_lea.vmem %s35, %s1140
        $region96: #{model_forward.3} parent=23 // pred_fallthru
          _
        // Predicated region
        $region97: #{model_forward.3} parent=23 // pred_check
          %p1142 = pneg %p576
        $region98: #{model_forward.3} parent=23 // pred_check_branch
          %1144 = sbr.rel (%p1142) target = $region100
        $region99: #{model_forward.3} parent=23 // pred_region
          %p1145 = scmp.lt.s32.totalorder %s84, 1
          %s1146 = scalar_select %p1145, %s84, 1
          %s1147 = smul.addr %s1146, 8
          %s1148 = scalar_lea.vmem %s37, %s1147
        $region100: #{model_forward.3} parent=23 // pred_fallthru
          _
        // Predicated region
        $region101: #{model_forward.3} parent=23 // pred_check
          %p1149 = pneg %p602
        $region102: #{model_forward.3} parent=23 // pred_check_branch
          %1151 = sbr.rel (%p1149) target = $region104
        $region103: #{model_forward.3} parent=23 // pred_region
          %p1152 = scmp.lt.s32.totalorder %s84, 1
          %s1153 = scalar_select %p1152, %s84, 1
          %s1154 = scalar_lea.vmem %s39, %s1153
        $region104: #{model_forward.3} parent=23 // pred_fallthru
          _
        // Predicated region
        $region105: #{model_forward.3} parent=23 // pred_check
          %p1155 = pneg %p628
        $region106: #{model_forward.3} parent=23 // pred_check_branch
          %1157 = sbr.rel (%p1155) target = $region108
        $region107: #{model_forward.3} parent=23 // pred_region
          %p1158 = scmp.lt.s32.totalorder %s84, 1
          %s1159 = scalar_select %p1158, %s84, 1
          %s1160 = scalar_lea.vmem %s41, %s1159
        $region108: #{model_forward.3} parent=23 // pred_fallthru
          _
        // Predicated region
        $region109: #{model_forward.3} parent=23 // pred_check
          %p1161 = pneg %p654
        $region110: #{model_forward.3} parent=23 // pred_check_branch
          %1163 = sbr.rel (%p1161) target = $region112
        $region111: #{model_forward.3} parent=23 // pred_region
          %p1164 = scmp.lt.s32.totalorder %s84, 1
          %s1165 = scalar_select %p1164, %s84, 1
          %s1166 = scalar_lea.vmem %s43, %s1165
        $region112: #{model_forward.3} parent=23 // pred_fallthru
          _
        // Predicated region
        $region113: #{model_forward.3} parent=23 // pred_check
          %p1167 = pneg %p680
        $region114: #{model_forward.3} parent=23 // pred_check_branch
          %1169 = sbr.rel (%p1167) target = $region116
        $region115: #{model_forward.3} parent=23 // pred_region
          %p1170 = scmp.lt.s32.totalorder %s84, 1
          %s1171 = scalar_select %p1170, %s84, 1
          %s1172 = smul.addr %s1171, 8
          %s1173 = smul.addr %s1172, 4
          %s1174 = scalar_lea.vmem %s45, %s1173
        $region116: #{model_forward.3} parent=23 // pred_fallthru
          _
        // Predicated region
        $region117: #{model_forward.3} parent=23 // pred_check
          %p1175 = pneg %p706
        $region118: #{model_forward.3} parent=23 // pred_check_branch
          %1177 = sbr.rel (%p1175) target = $region120
        $region119: #{model_forward.3} parent=23 // pred_region
          %p1178 = scmp.lt.s32.totalorder %s84, 1
          %s1179 = scalar_select %p1178, %s84, 1
          %s1180 = scalar_lea.vmem %s47, %s1179
        $region120: #{model_forward.3} parent=23 // pred_fallthru
          _
        // Predicated region
        $region121: #{model_forward.3} parent=23 // pred_check
          %p1181 = pneg %p732
        $region122: #{model_forward.3} parent=23 // pred_check_branch
          %1183 = sbr.rel (%p1181) target = $region124
        $region123: #{model_forward.3} parent=23 // pred_region
          %p1184 = scmp.lt.s32.totalorder %s84, 1
          %s1185 = scalar_select %p1184, %s84, 1
          %s1186 = scalar_lea.vmem %s49, %s1185
        $region124: #{model_forward.3} parent=23 // pred_fallthru
          _
        // Predicated region
        $region125: #{model_forward.3} parent=23 // pred_check
          %p1187 = pneg %p758
        $region126: #{model_forward.3} parent=23 // pred_check_branch
          %1189 = sbr.rel (%p1187) target = $region128
        $region127: #{model_forward.3} parent=23 // pred_region
          %p1190 = scmp.lt.s32.totalorder %s84, 1
          %s1191 = scalar_select %p1190, %s84, 1
          %s1192 = scalar_lea.vmem %s51, %s1191
        $region128: #{model_forward.3} parent=23 // pred_fallthru
          _
        // Predicated region
        $region129: #{model_forward.3} parent=23 // pred_check
          %p1193 = pneg %p784
        $region130: #{model_forward.3} parent=23 // pred_check_branch
          %1195 = sbr.rel (%p1193) target = $region132
        $region131: #{model_forward.3} parent=23 // pred_region
          %p1196 = scmp.lt.s32.totalorder %s84, 1
          %s1197 = scalar_select %p1196, %s84, 1
          %s1198 = smul.addr %s1197, 8
          %s1199 = smul.addr %s1198, 4
          %s1200 = scalar_lea.vmem %s53, %s1199
        $region132: #{model_forward.3} parent=23 // pred_fallthru
          _
        // Predicated region
        $region133: #{model_forward.3} parent=23 // pred_check
          %p1201 = pneg %p810
        $region134: #{model_forward.3} parent=23 // pred_check_branch
          %1203 = sbr.rel (%p1201) target = $region136
        $region135: #{model_forward.3} parent=23 // pred_region
          %p1204 = scmp.lt.s32.totalorder %s84, 1
          %s1205 = scalar_select %p1204, %s84, 1
          %s1206 = scalar_lea.vmem %s55, %s1205
        $region136: #{model_forward.3} parent=23 // pred_fallthru
          _
        // Predicated region
        $region137: #{model_forward.3} parent=23 // pred_check
          %p1207 = pneg %p836
        $region138: #{model_forward.3} parent=23 // pred_check_branch
          %1209 = sbr.rel (%p1207) target = $region140
        $region139: #{model_forward.3} parent=23 // pred_region
          %p1210 = scmp.lt.s32.totalorder %s84, 1
          %s1211 = scalar_select %p1210, %s84, 1
          %s1212 = smul.addr %s1211, 16
          %s1213 = smul.addr %s1212, 4
          %s1214 = scalar_lea.vmem %s57, %s1213
        $region140: #{model_forward.3} parent=23 // pred_fallthru
          _
        // Predicated region
        $region141: #{model_forward.3} parent=23 // pred_check
          %p1215 = pneg %p862
        $region142: #{model_forward.3} parent=23 // pred_check_branch
          %1217 = sbr.rel (%p1215) target = $region144
        $region143: #{model_forward.3} parent=23 // pred_region
          %p1218 = scmp.lt.s32.totalorder %s84, 1
          %s1219 = scalar_select %p1218, %s84, 1
          %s1220 = scalar_lea.vmem %s59, %s1219
        $region144: #{model_forward.3} parent=23 // pred_fallthru
          _
        // Predicated region
        $region145: #{model_forward.3} parent=23 // pred_check
          %p1221 = pneg %p888
        $region146: #{model_forward.3} parent=23 // pred_check_branch
          %1223 = sbr.rel (%p1221) target = $region148
        $region147: #{model_forward.3} parent=23 // pred_region
          %p1224 = scmp.lt.s32.totalorder %s84, 1
          %s1225 = scalar_select %p1224, %s84, 1
          %s1226 = scalar_lea.vmem %s61, %s1225
        $region148: #{model_forward.3} parent=23 // pred_fallthru
          _
        // Predicated region
        $region149: #{model_forward.3} parent=23 // pred_check
          %p1227 = pneg %p914
        $region150: #{model_forward.3} parent=23 // pred_check_branch
          %1229 = sbr.rel (%p1227) target = $region152
        $region151: #{model_forward.3} parent=23 // pred_region
          %p1230 = scmp.lt.s32.totalorder %s84, 1
          %s1231 = scalar_select %p1230, %s84, 1
          %s1232 = scalar_lea.vmem %s63, %s1231
        $region152: #{model_forward.3} parent=23 // pred_fallthru
          _
      $region24: #{model_forward.3} parent=5 // pred_fallthru
        _
      %p1233 = scmp.le.s32.totalorder 1, %s76
      %p1234 = scmp.lt.s32.totalorder %s76, 5
      %p1235 = pnand %p1233, %p1234
      %p1236 = pneg %p1235
      // Predicated region
      $region153: #{model_forward.3} parent=5 // pred_check
        _
      $region154: #{model_forward.3} parent=5 // pred_check_branch
        %1238 = sbr.rel (%p1235) target = $region156
      $region155: #{model_forward.3} parent=5 // pred_region
        %s1239 = ssub.s32 %s76, 1
        // Predicated region
        $region157: #{model_forward.3} parent=155 // pred_check
          %p1240 = pneg %p962
        $region158: #{model_forward.3} parent=155 // pred_check_branch
          %1242 = sbr.rel (%p1240) target = $region160
        $region159: #{model_forward.3} parent=155 // pred_region
          %1243 = dma.done [#allocation5], 16
        $region160: #{model_forward.3} parent=155 // pred_fallthru
          _
        %p1244 = scmp.lt.s32.totalorder %s85, 1
        %s1245 = scalar_select %p1244, %s85, 1
        %s1246 = smul.addr %s1245, 2
        %s1247 = smul.addr %s1246, 8
        %s1248 = scalar_lea.vmem %s1, %s1247
        %p1249 = pneg %p114
        %p1250 = pneg %p111
        %p1251 = scmp.lt.s32.totalorder %s85, 1
        %s1252 = scalar_select %p1251, %s85, 1
        %s1253 = scalar_lea.vmem %s3, %s1252
        %p1254 = pneg %p140
        %p1255 = pneg %p137
        %p1256 = scmp.lt.s32.totalorder %s86, 1
        %s1257 = scalar_select %p1256, %s86, 1
        %s1258 = scalar_lea.vmem %s5, %s1257
        %p1259 = pneg %p166
        %p1260 = pneg %p163
        %p1261 = scmp.lt.s32.totalorder %s86, 1
        %s1262 = scalar_select %p1261, %s86, 1
        %s1263 = scalar_lea.vmem %s7, %s1262
        %p1264 = pneg %p192
        %p1265 = pneg %p189
        %p1266 = scmp.lt.s32.totalorder %s86, 1
        %s1267 = scalar_select %p1266, %s86, 1
        %s1268 = smul.addr %s1267, 8
        %s1269 = smul.addr %s1268, 4
        %s1270 = scalar_lea.vmem %s9, %s1269
        %p1271 = pneg %p218
        %p1272 = pneg %p215
        %p1273 = scmp.lt.s32.totalorder %s86, 1
        %s1274 = scalar_select %p1273, %s86, 1
        %s1275 = scalar_lea.vmem %s11, %s1274
        %p1276 = pneg %p244
        %p1277 = pneg %p241
        %p1278 = scmp.lt.s32.totalorder %s86, 1
        %s1279 = scalar_select %p1278, %s86, 1
        %s1280 = smul.addr %s1279, 16
        %s1281 = smul.addr %s1280, 4
        %s1282 = scalar_lea.vmem %s13, %s1281
        %p1283 = pneg %p270
        %p1284 = pneg %p267
        %p1285 = scmp.lt.s32.totalorder %s86, 1
        %s1286 = scalar_select %p1285, %s86, 1
        %s1287 = scalar_lea.vmem %s15, %s1286
        %p1288 = pneg %p296
        %p1289 = pneg %p293
        %p1290 = scmp.lt.s32.totalorder %s86, 1
        %s1291 = scalar_select %p1290, %s86, 1
        %s1292 = scalar_lea.vmem %s17, %s1291
        %p1293 = pneg %p322
        %p1294 = pneg %p319
        %p1295 = scmp.lt.s32.totalorder %s86, 1
        %s1296 = scalar_select %p1295, %s86, 1
        %s1297 = scalar_lea.vmem %s19, %s1296
        %p1298 = pneg %p348
        %p1299 = pneg %p345
        %p1300 = scmp.lt.s32.totalorder %s86, 1
        %s1301 = scalar_select %p1300, %s86, 1
        %s1302 = smul.addr %s1301, 16
        %s1303 = smul.addr %s1302, 4
        %s1304 = scalar_lea.vmem %s21, %s1303
        %p1305 = pneg %p374
        %p1306 = pneg %p371
        %p1307 = scmp.lt.s32.totalorder %s86, 1
        %s1308 = scalar_select %p1307, %s86, 1
        %s1309 = smul.addr %s1308, 2
        %s1310 = scalar_lea.vmem %s23, %s1309
        %p1311 = pneg %p400
        %p1312 = pneg %p397
        %p1313 = scmp.lt.s32.totalorder %s86, 1
        %s1314 = scalar_select %p1313, %s86, 1
        %s1315 = smul.addr %s1314, 8
        %s1316 = smul.addr %s1315, 4
        %s1317 = scalar_lea.vmem %s25, %s1316
        %p1318 = pneg %p426
        %p1319 = pneg %p423
        %p1320 = scmp.lt.s32.totalorder %s86, 1
        %s1321 = scalar_select %p1320, %s86, 1
        %s1322 = scalar_lea.vmem %s27, %s1321
        %p1323 = pneg %p452
        %p1324 = pneg %p449
        %p1325 = scmp.lt.s32.totalorder %s86, 1
        %s1326 = scalar_select %p1325, %s86, 1
        %s1327 = scalar_lea.vmem %s29, %s1326
        %p1328 = pneg %p478
        %p1329 = pneg %p475
        %p1330 = scmp.lt.s32.totalorder %s86, 1
        %s1331 = scalar_select %p1330, %s86, 1
        %s1332 = scalar_lea.vmem %s31, %s1331
        %p1333 = pneg %p504
        %p1334 = pneg %p501
        %p1335 = scmp.lt.s32.totalorder %s86, 1
        %s1336 = scalar_select %p1335, %s86, 1
        %s1337 = smul.addr %s1336, 8
        %s1338 = smul.addr %s1337, 4
        %s1339 = scalar_lea.vmem %s33, %s1338
        %p1340 = pneg %p530
        %p1341 = pneg %p527
        %p1342 = scmp.lt.s32.totalorder %s86, 1
        %s1343 = scalar_select %p1342, %s86, 1
        %s1344 = scalar_lea.vmem %s35, %s1343
        %p1345 = pneg %p556
        %p1346 = pneg %p553
        %p1347 = scmp.lt.s32.totalorder %s86, 1
        %s1348 = scalar_select %p1347, %s86, 1
        %s1349 = smul.addr %s1348, 8
        %s1350 = scalar_lea.vmem %s37, %s1349
        %p1351 = pneg %p582
        %p1352 = pneg %p579
        %p1353 = scmp.lt.s32.totalorder %s86, 1
        %s1354 = scalar_select %p1353, %s86, 1
        %s1355 = scalar_lea.vmem %s39, %s1354
        %p1356 = pneg %p608
        %p1357 = pneg %p605
        %p1358 = scmp.lt.s32.totalorder %s86, 1
        %s1359 = scalar_select %p1358, %s86, 1
        %s1360 = scalar_lea.vmem %s41, %s1359
        %p1361 = pneg %p634
        %p1362 = pneg %p631
        %p1363 = scmp.lt.s32.totalorder %s86, 1
        %s1364 = scalar_select %p1363, %s86, 1
        %s1365 = scalar_lea.vmem %s43, %s1364
        %p1366 = pneg %p660
        %p1367 = pneg %p657
        %p1368 = scmp.lt.s32.totalorder %s86, 1
        %s1369 = scalar_select %p1368, %s86, 1
        %s1370 = smul.addr %s1369, 8
        %s1371 = smul.addr %s1370, 4
        %s1372 = scalar_lea.vmem %s45, %s1371
        %p1373 = pneg %p686
        %p1374 = pneg %p683
        %p1375 = scmp.lt.s32.totalorder %s86, 1
        %s1376 = scalar_select %p1375, %s86, 1
        %s1377 = scalar_lea.vmem %s47, %s1376
        %p1378 = pneg %p712
        %p1379 = pneg %p709
        %p1380 = scmp.lt.s32.totalorder %s86, 1
        %s1381 = scalar_select %p1380, %s86, 1
        %s1382 = scalar_lea.vmem %s49, %s1381
        %p1383 = pneg %p738
        %p1384 = pneg %p735
        %p1385 = scmp.lt.s32.totalorder %s86, 1
        %s1386 = scalar_select %p1385, %s86, 1
        %s1387 = scalar_lea.vmem %s51, %s1386
        %p1388 = pneg %p764
        %p1389 = pneg %p761
        %p1390 = scmp.lt.s32.totalorder %s86, 1
        %s1391 = scalar_select %p1390, %s86, 1
        %s1392 = smul.addr %s1391, 8
        %s1393 = smul.addr %s1392, 4
        %s1394 = scalar_lea.vmem %s53, %s1393
        %p1395 = pneg %p790
        %p1396 = pneg %p787
        %p1397 = scmp.lt.s32.totalorder %s86, 1
        %s1398 = scalar_select %p1397, %s86, 1
        %s1399 = scalar_lea.vmem %s55, %s1398
        %p1400 = pneg %p816
        %p1401 = pneg %p813
        %p1402 = scmp.lt.s32.totalorder %s86, 1
        %s1403 = scalar_select %p1402, %s86, 1
        %s1404 = smul.addr %s1403, 16
        %s1405 = smul.addr %s1404, 4
        %s1406 = scalar_lea.vmem %s57, %s1405
        %p1407 = pneg %p842
        %p1408 = pneg %p839
        %p1409 = scmp.lt.s32.totalorder %s86, 1
        %s1410 = scalar_select %p1409, %s86, 1
        %s1411 = scalar_lea.vmem %s59, %s1410
        %p1412 = pneg %p868
        %p1413 = pneg %p865
        %p1414 = scmp.lt.s32.totalorder %s86, 1
        %s1415 = scalar_select %p1414, %s86, 1
        %s1416 = scalar_lea.vmem %s61, %s1415
        %p1417 = pneg %p894
        %p1418 = pneg %p891
        %p1419 = scmp.lt.s32.totalorder %s86, 1
        %s1420 = scalar_select %p1419, %s86, 1
        %s1421 = scalar_lea.vmem %s63, %s1420
        %p1422 = pneg %p920
        %p1423 = pneg %p917
        %p1424 = pneg %p941
        %p1425 = pneg %p938
        %p1426 = pneg %p962
        %p1427 = pneg %p959
        %p1428 = pneg %p988
        %p1429 = pneg %p985
        %p1430 = scmp.lt.s32.totalorder %s85, 1
        %s1431 = scalar_select %p1430, %s85, 1
        %s1432 = smul.addr %s1431, 2
        %s1433 = smul.addr %s1432, 8
        %s1434 = scalar_lea.vmem %s69, %s1433
        %p1435 = scmp.lt.s32.totalorder %s85, 1
        %s1436 = scalar_select %p1435, %s85, 1
        %s1437 = smul.addr %s1436, 2
        %s1438 = smul.addr %s1437, 8
        %s1439 = scalar_lea.vmem %s1, %s1438
        %p1440 = scmp.lt.s32.totalorder %s85, 1
        %s1441 = scalar_select %p1440, %s85, 1
        %s1442 = scalar_lea.vmem %s3, %s1441
        %p1443 = scmp.lt.s32.totalorder %s86, 1
        %s1444 = scalar_select %p1443, %s86, 1
        %s1445 = scalar_lea.vmem %s5, %s1444
        %p1446 = scmp.lt.s32.totalorder %s86, 1
        %s1447 = scalar_select %p1446, %s86, 1
        %s1448 = scalar_lea.vmem %s7, %s1447
        %p1449 = scmp.lt.s32.totalorder %s86, 1
        %s1450 = scalar_select %p1449, %s86, 1
        %s1451 = smul.addr %s1450, 8
        %s1452 = smul.addr %s1451, 4
        %s1453 = scalar_lea.vmem %s9, %s1452
        %p1454 = scmp.lt.s32.totalorder %s86, 1
        %s1455 = scalar_select %p1454, %s86, 1
        %s1456 = scalar_lea.vmem %s11, %s1455
        %p1457 = scmp.lt.s32.totalorder %s86, 1
        %s1458 = scalar_select %p1457, %s86, 1
        %s1459 = smul.addr %s1458, 16
        %s1460 = smul.addr %s1459, 4
        %s1461 = scalar_lea.vmem %s13, %s1460
        %p1462 = scmp.lt.s32.totalorder %s86, 1
        %s1463 = scalar_select %p1462, %s86, 1
        %s1464 = scalar_lea.vmem %s15, %s1463
        %p1465 = scmp.lt.s32.totalorder %s86, 1
        %s1466 = scalar_select %p1465, %s86, 1
        %s1467 = scalar_lea.vmem %s17, %s1466
        %p1468 = scmp.lt.s32.totalorder %s86, 1
        %s1469 = scalar_select %p1468, %s86, 1
        %s1470 = scalar_lea.vmem %s19, %s1469
        %p1471 = scmp.lt.s32.totalorder %s86, 1
        %s1472 = scalar_select %p1471, %s86, 1
        %s1473 = smul.addr %s1472, 16
        %s1474 = smul.addr %s1473, 4
        %s1475 = scalar_lea.vmem %s21, %s1474
        %p1476 = scmp.lt.s32.totalorder %s86, 1
        %s1477 = scalar_select %p1476, %s86, 1
        %s1478 = smul.addr %s1477, 2
        %s1479 = scalar_lea.vmem %s23, %s1478
        %p1480 = scmp.lt.s32.totalorder %s86, 1
        %s1481 = scalar_select %p1480, %s86, 1
        %s1482 = smul.addr %s1481, 8
        %s1483 = smul.addr %s1482, 4
        %s1484 = scalar_lea.vmem %s25, %s1483
        %p1485 = scmp.lt.s32.totalorder %s86, 1
        %s1486 = scalar_select %p1485, %s86, 1
        %s1487 = scalar_lea.vmem %s27, %s1486
        %p1488 = scmp.lt.s32.totalorder %s86, 1
        %s1489 = scalar_select %p1488, %s86, 1
        %s1490 = scalar_lea.vmem %s29, %s1489
        %p1491 = scmp.lt.s32.totalorder %s86, 1
        %s1492 = scalar_select %p1491, %s86, 1
        %s1493 = scalar_lea.vmem %s31, %s1492
        %p1494 = scmp.lt.s32.totalorder %s86, 1
        %s1495 = scalar_select %p1494, %s86, 1
        %s1496 = smul.addr %s1495, 8
        %s1497 = smul.addr %s1496, 4
        %s1498 = scalar_lea.vmem %s33, %s1497
        %p1499 = scmp.lt.s32.totalorder %s86, 1
        %s1500 = scalar_select %p1499, %s86, 1
        %s1501 = scalar_lea.vmem %s35, %s1500
        %p1502 = scmp.lt.s32.totalorder %s86, 1
        %s1503 = scalar_select %p1502, %s86, 1
        %s1504 = smul.addr %s1503, 8
        %s1505 = scalar_lea.vmem %s37, %s1504
        %p1506 = scmp.lt.s32.totalorder %s86, 1
        %s1507 = scalar_select %p1506, %s86, 1
        %s1508 = scalar_lea.vmem %s39, %s1507
        %p1509 = scmp.lt.s32.totalorder %s86, 1
        %s1510 = scalar_select %p1509, %s86, 1
        %s1511 = scalar_lea.vmem %s41, %s1510
        %p1512 = scmp.lt.s32.totalorder %s86, 1
        %s1513 = scalar_select %p1512, %s86, 1
        %s1514 = scalar_lea.vmem %s43, %s1513
        %p1515 = scmp.lt.s32.totalorder %s86, 1
        %s1516 = scalar_select %p1515, %s86, 1
        %s1517 = smul.addr %s1516, 8
        %s1518 = smul.addr %s1517, 4
        %s1519 = scalar_lea.vmem %s45, %s1518
        %p1520 = scmp.lt.s32.totalorder %s86, 1
        %s1521 = scalar_select %p1520, %s86, 1
        %s1522 = scalar_lea.vmem %s47, %s1521
        %p1523 = scmp.lt.s32.totalorder %s86, 1
        %s1524 = scalar_select %p1523, %s86, 1
        %s1525 = scalar_lea.vmem %s49, %s1524
        %p1526 = scmp.lt.s32.totalorder %s86, 1
        %s1527 = scalar_select %p1526, %s86, 1
        %s1528 = scalar_lea.vmem %s51, %s1527
        %p1529 = scmp.lt.s32.totalorder %s86, 1
        %s1530 = scalar_select %p1529, %s86, 1
        %s1531 = smul.addr %s1530, 8
        %s1532 = smul.addr %s1531, 4
        %s1533 = scalar_lea.vmem %s53, %s1532
        %p1534 = scmp.lt.s32.totalorder %s86, 1
        %s1535 = scalar_select %p1534, %s86, 1
        %s1536 = scalar_lea.vmem %s55, %s1535
        %p1537 = scmp.lt.s32.totalorder %s86, 1
        %s1538 = scalar_select %p1537, %s86, 1
        %s1539 = smul.addr %s1538, 16
        %s1540 = smul.addr %s1539, 4
        %s1541 = scalar_lea.vmem %s57, %s1540
        %p1542 = scmp.lt.s32.totalorder %s86, 1
        %s1543 = scalar_select %p1542, %s86, 1
        %s1544 = scalar_lea.vmem %s59, %s1543
        %p1545 = scmp.lt.s32.totalorder %s86, 1
        %s1546 = scalar_select %p1545, %s86, 1
        %s1547 = scalar_lea.vmem %s61, %s1546
        %p1548 = scmp.lt.s32.totalorder %s86, 1
        %s1549 = scalar_select %p1548, %s86, 1
        %s1550 = scalar_lea.vmem %s63, %s1549
        %p1551 = scmp.lt.s32.totalorder %s85, 1
        %s1552 = scalar_select %p1551, %s85, 1
        %s1553 = smul.addr %s1552, 2
        %s1554 = smul.addr %s1553, 8
        %s1555 = scalar_lea.vmem %s69, %s1554
        %p1557 = scmp.eq.s32.totalorder %s86, 0
        // Predicated region
        $region161: #{model_forward.3} parent=155 // pred_check
          %p1558 = pneg %p1557
        $region162: #{model_forward.3} parent=155 // pred_check_branch
          %1560 = sbr.rel (%p1558) target = $region164
        $region163: #{model_forward.3} parent=155 // pred_region
          %v1561 = vld [vmem:[%s1439] sm:$0xff]
          %v1562 = vld [vmem:[%s1439 + $0x8] sm:$0x7f]
          %vm1563 = vcmask 523264
          %1564 = vst.msk [vmem:[#allocation2] sm:$0xff] %vm1563, %v1561
          %vm1565 = vcmask 522240
          %1566 = vst.msk [vmem:[#allocation2 + $0x8] sm:$0x7f] %vm1565, %v1562
        $region164: #{model_forward.3} parent=155 // pred_fallthru
          _
        %v1567 = vld [vmem:[#allocation2] sm:$0xff]
        %v1568 = vld [vmem:[#allocation2 + $0x8] sm:$0x7f]
        %v1569 = vld [vmem:[%s1442] sm:$0x1]
        %v1570 = vld [vmem:[%s1445] sm:$0x1]
        %v1571 = vld [vmem:[%s1448] sm:$0x1]
        %vm1572 = vcmask 523264
        %v1573 = vsel %vm1572, %v1567, 0.0
        %1574 = vadd.xlane.f32.xlu0 %v1573
        %v1575 = vpop.xlane.xlu0 %1574
        %vm1576 = vcmask 522240
        %v1577 = vsel %vm1576, %v1568, 0.0
        %1578 = vadd.xlane.f32.xlu0 %v1577
        %v1579 = vpop.xlane.xlu0 %1578
        %v1580 = vrcp.pop 64.0
        %v1581 = vmul.f32 %v1575, %v1580
        %v1582 = vmul.f32 %v1579, %v1580
        %v1583 = vsub.f32 %v1567, %v1581
        %v1584 = vsub.f32 %v1568, %v1582
        %v1585 = vmul.f32 %v1583, %v1583
        %v1586 = vmul.f32 %v1584, %v1584
        %v1587 = vsel %vm1572, %v1585, 0.0
        %1588 = vadd.xlane.f32.xlu0 %v1587
        %v1589 = vpop.xlane.xlu0 %1588
        %v1590 = vsel %vm1576, %v1586, 0.0
        %1591 = vadd.xlane.f32.xlu0 %v1590
        %v1592 = vpop.xlane.xlu0 %1591
        %v1593 = vmul.f32 %v1589, %v1580
        %v1594 = vmul.f32 %v1592, %v1580
        %v1595 = vadd.f32 %v1593, 1e-05
        %v1596 = vadd.f32 %v1594, 1e-05
        %v1597 = vrsqrt.pop %v1595
        %v1598 = vrsqrt.pop %v1596
        %v1599 = vmul.f32 %v1583, %v1597
        %v1600 = vmul.f32 %v1584, %v1598
        %v1602 = vlaneseq
        %v1603 = vshrl.u32 %v1602, 7
        %v1604 = vsub.s32 0, %v1603
        %v1605 = vrot.slane %v1570, %v1604
        %v1607 = vmul.f32 %v1599, %v1605
        %v1608 = vmul.f32 %v1600, %v1605
        %v1610 = vlaneseq
        %v1611 = vshrl.u32 %v1610, 7
        %v1612 = vsub.s32 0, %v1611
        %v1613 = vrot.slane %v1571, %v1612
        %v1615 = vadd.f32 %v1607, %v1613
        %v1616 = vadd.f32 %v1608, %v1613
        %v1617 = vld [vmem:[%s1453] sm:$0xf]
        %v1618 = vld [vmem:[%s1453 + $0x4] sm:$0xf]
        %v1619 = vld [vmem:[%s1453 + $0x8] sm:$0xf]
        %v1620 = vld [vmem:[%s1453 + $0xc] sm:$0xf]
        %v1621 = vld [vmem:[%s1453 + $0x10] sm:$0xf]
        %v1622 = vld [vmem:[%s1453 + $0x14] sm:$0xf]
        %v1623 = vld [vmem:[%s1453 + $0x18] sm:$0xf]
        %v1624 = vld [vmem:[%s1453 + $0x1c] sm:$0xf]
        %v1625 = vld [vmem:[%s1456] sm:$0x1]
        %v1626 = vpack.c.bf16 %v1616, %v1615
        %v1628 = vlaneseq
        %v1629 = vshrl.u32 %v1628, 7
        %v1630 = vsub.s32 0, %v1629
        %v1631 = vrot.slane %v1625, %v1630
        %v1641 = vunpack.c.l.b16 %v1617
        %v1642 = vunpack.c.l.b16 %v1618
        %v1643 = vunpack.c.l.b16 %v1619
        %v1644 = vunpack.c.l.b16 %v1620
        %v1645 = vunpack.c.l.b16 %v1621
        %v1646 = vunpack.c.l.b16 %v1622
        %v1647 = vunpack.c.l.b16 %v1623
        %v1648 = vunpack.c.l.b16 %v1624
        %v1649 = vpack.c.b16 %v1642, %v1641
        %v1650 = vpack.c.b16 %v1644, %v1643
        %v1651 = vpack.c.b16 %v1646, %v1645
        %v1652 = vpack.c.b16 %v1648, %v1647
        %v1658 = vsel %vm1572, %v1626, 0
        %1660 = vmatprep.subr.bf16.mxu0 0
        %1661 = vmatpush1.bf16.msra.mxu0 %v1649
        %1662 = vmatprep.subr.bf16.mxu0 0
        %1663 = vmatpush1.bf16.msra.mxu0 %v1650
        %1664 = vmatprep.subr.bf16.mxu0 0
        %1665 = vmatpush1.bf16.msra.mxu0 %v1651
        %1666 = vmatprep.subr.bf16.mxu0 0
        %1667 = vmatpush1.bf16.msra.mxu0 %v1652
        %1668 = vmatprep.subr.bf16.mxu0 0
        %1669 = vmatpush1.bf16.msra.mxu0 0
        %1670 = vmatprep.subr.bf16.mxu0 0
        %1671 = vmatpush1.bf16.msra.mxu0 0
        %1672 = vmatprep.subr.bf16.mxu0 0
        %1673 = vmatpush1.bf16.msra.mxu0 0
        %1674 = vmatprep.subr.bf16.mxu0 0
        %1675 = vmatpush1.bf16.msra.mxu0 0
        %1676 = vmatprep.subr.bf16.mxu0 0
        %1677 = vmatpush1.bf16.msra.mxu0 0
        %1678 = vmatprep.subr.bf16.mxu0 0
        %1679 = vmatpush1.bf16.msra.mxu0 0
        %1680 = vmatprep.subr.bf16.mxu0 0
        %1681 = vmatpush1.bf16.msra.mxu0 0
        %1682 = vmatprep.subr.bf16.mxu0 0
        %1683 = vmatpush1.bf16.msra.mxu0 0
        %1684 = vmatprep.subr.bf16.mxu0 0
        %1685 = vmatpush1.bf16.msra.mxu0 0
        %1686 = vmatprep.subr.bf16.mxu0 0
        %1687 = vmatpush1.bf16.msra.mxu0 0
        %1688 = vmatprep.subr.bf16.mxu0 0
        %1689 = vmatpush1.bf16.msra.mxu0 0
        %1690 = vmatprep.subr.bf16.mxu0 0
        %1691 = vmatpush1.bf16.msra.mxu0 0
        %1692 = vmatprep.mubr.bf16.mxu0 0
        %1693 = vmatmul.mubr.bf16.gmra.mrb[0].mxu0 %v1658
        %v1694 = vpop.f32.mrb[0].mxu0
        %v1695 = vadd.f32 %v1631, %v1694
        %v1696 = vpop.f32.mrb[0].mxu0
        %v1697 = vpop.f32.mrb[0].mxu0
        %v1698 = vadd.f32 %v1631, %v1697
        %v1699 = vpop.f32.mrb[0].mxu0
        %1700 = vdwg.mxu0
        %v1701 = vxor.u32 %v1695, 2147483648
        %v1702 = vxor.u32 %v1698, 2147483648
        %v1703 = vmul.f32 %v1701, 1.442695
        %v1704 = vpow.pop %v1703
        %v1705 = vmul.f32 %v1702, 1.442695
        %v1706 = vpow.pop %v1705
        %v1707 = vadd.f32 %v1704, 1.0
        %v1708 = vadd.f32 %v1706, 1.0
        %v1709 = vrcp.pop %v1707
        %v1710 = vmul.f32 1.0, %v1709
        %v1711 = vrcp.pop %v1708
        %v1712 = vmul.f32 1.0, %v1711
        %v1713 = vmul.f32 %v1695, %v1710
        %v1714 = vmul.f32 %v1698, %v1712
        %v1715 = vld [vmem:[%s1461] sm:$0xf]
        %v1716 = vld [vmem:[%s1461 + $0x4] sm:$0xf]
        %v1717 = vld [vmem:[%s1461 + $0x8] sm:$0xf]
        %v1718 = vld [vmem:[%s1461 + $0xc] sm:$0xf]
        %v1719 = vld [vmem:[%s1461 + $0x10] sm:$0xf]
        %v1720 = vld [vmem:[%s1461 + $0x14] sm:$0xf]
        %v1721 = vld [vmem:[%s1461 + $0x18] sm:$0xf]
        %v1722 = vld [vmem:[%s1461 + $0x1c] sm:$0xf]
        %v1723 = vld [vmem:[%s1461 + $0x20] sm:$0xf]
        %v1724 = vld [vmem:[%s1461 + $0x24] sm:$0xf]
        %v1725 = vld [vmem:[%s1461 + $0x28] sm:$0xf]
        %v1726 = vld [vmem:[%s1461 + $0x2c] sm:$0xf]
        %v1727 = vld [vmem:[%s1461 + $0x30] sm:$0xf]
        %v1728 = vld [vmem:[%s1461 + $0x34] sm:$0xf]
        %v1729 = vld [vmem:[%s1461 + $0x38] sm:$0xf]
        %v1730 = vld [vmem:[%s1461 + $0x3c] sm:$0xf]
        %v1731 = vld [vmem:[%s1464] sm:$0x1]
        %v1732 = vpack.c.bf16 %v1714, %v1713
        %v1734 = vlaneseq
        %v1735 = vshrl.u32 %v1734, 7
        %v1736 = vsub.s32 0, %v1735
        %v1737 = vrot.slane %v1731, %v1736
        %v1755 = vunpack.c.l.b16 %v1715
        %v1756 = vunpack.c.l.b16 %v1716
        %v1757 = vunpack.c.l.b16 %v1717
        %v1758 = vunpack.c.l.b16 %v1718
        %v1759 = vunpack.c.l.b16 %v1719
        %v1760 = vunpack.c.l.b16 %v1720
        %v1761 = vunpack.c.l.b16 %v1721
        %v1762 = vunpack.c.l.b16 %v1722
        %v1763 = vunpack.c.l.b16 %v1723
        %v1764 = vunpack.c.l.b16 %v1724
        %v1765 = vunpack.c.l.b16 %v1725
        %v1766 = vunpack.c.l.b16 %v1726
        %v1767 = vunpack.c.l.b16 %v1727
        %v1768 = vunpack.c.l.b16 %v1728
        %v1769 = vunpack.c.l.b16 %v1729
        %v1770 = vunpack.c.l.b16 %v1730
        %v1771 = vpack.c.b16 %v1756, %v1755
        %v1772 = vpack.c.b16 %v1758, %v1757
        %v1773 = vpack.c.b16 %v1760, %v1759
        %v1774 = vpack.c.b16 %v1762, %v1761
        %v1775 = vpack.c.b16 %v1764, %v1763
        %v1776 = vpack.c.b16 %v1766, %v1765
        %v1777 = vpack.c.b16 %v1768, %v1767
        %v1778 = vpack.c.b16 %v1770, %v1769
        %1787 = vmatprep.subr.bf16.mxu0 0
        %1788 = vmatpush1.bf16.msra.mxu0 %v1771
        %1789 = vmatprep.subr.bf16.mxu0 0
        %1790 = vmatpush1.bf16.msra.mxu0 %v1772
        %1791 = vmatprep.subr.bf16.mxu0 0
        %1792 = vmatpush1.bf16.msra.mxu0 %v1773
        %1793 = vmatprep.subr.bf16.mxu0 0
        %1794 = vmatpush1.bf16.msra.mxu0 %v1774
        %1795 = vmatprep.subr.bf16.mxu0 0
        %1796 = vmatpush1.bf16.msra.mxu0 %v1775
        %1797 = vmatprep.subr.bf16.mxu0 0
        %1798 = vmatpush1.bf16.msra.mxu0 %v1776
        %1799 = vmatprep.subr.bf16.mxu0 0
        %1800 = vmatpush1.bf16.msra.mxu0 %v1777
        %1801 = vmatprep.subr.bf16.mxu0 0
        %1802 = vmatpush1.bf16.msra.mxu0 %v1778
        %1803 = vmatprep.subr.bf16.mxu0 0
        %1804 = vmatpush1.bf16.msra.mxu0 0
        %1805 = vmatprep.subr.bf16.mxu0 0
        %1806 = vmatpush1.bf16.msra.mxu0 0
        %1807 = vmatprep.subr.bf16.mxu0 0
        %1808 = vmatpush1.bf16.msra.mxu0 0
        %1809 = vmatprep.subr.bf16.mxu0 0
        %1810 = vmatpush1.bf16.msra.mxu0 0
        %1811 = vmatprep.subr.bf16.mxu0 0
        %1812 = vmatpush1.bf16.msra.mxu0 0
        %1813 = vmatprep.subr.bf16.mxu0 0
        %1814 = vmatpush1.bf16.msra.mxu0 0
        %1815 = vmatprep.subr.bf16.mxu0 0
        %1816 = vmatpush1.bf16.msra.mxu0 0
        %1817 = vmatprep.subr.bf16.mxu0 0
        %1818 = vmatpush1.bf16.msra.mxu0 0
        %1819 = vmatprep.mubr.bf16.mxu0 0
        %1820 = vmatmul.mubr.bf16.gmra.mrb[0].mxu0 %v1732
        %v1821 = vpop.f32.mrb[0].mxu0
        %v1822 = vadd.f32 %v1737, %v1821
        %v1823 = vpop.f32.mrb[0].mxu0
        %v1824 = vpop.f32.mrb[0].mxu0
        %v1825 = vadd.f32 %v1737, %v1824
        %v1826 = vpop.f32.mrb[0].mxu0
        %1827 = vdwg.mxu0
        %v1828 = vmul.f32 %v1822, 0.5
        %v1829 = vmul.f32 %v1825, 0.5
        %v1830 = vadd.f32 %v1567, %v1828
        %v1831 = vadd.f32 %v1568, %v1829
        %v1832 = vld [vmem:[%s1467] sm:$0x1]
        %v1833 = vld [vmem:[%s1470] sm:$0x1]
        %v1834 = vsel %vm1572, %v1830, 0.0
        %1835 = vadd.xlane.f32.xlu0 %v1834
        %v1836 = vpop.xlane.xlu0 %1835
        %v1837 = vsel %vm1576, %v1831, 0.0
        %1838 = vadd.xlane.f32.xlu0 %v1837
        %v1839 = vpop.xlane.xlu0 %1838
        %v1840 = vmul.f32 %v1836, %v1580
        %v1841 = vmul.f32 %v1839, %v1580
        %v1842 = vsub.f32 %v1830, %v1840
        %v1843 = vsub.f32 %v1831, %v1841
        %v1844 = vmul.f32 %v1842, %v1842
        %v1845 = vmul.f32 %v1843, %v1843
        %v1846 = vsel %vm1572, %v1844, 0.0
        %1847 = vadd.xlane.f32.xlu0 %v1846
        %v1848 = vpop.xlane.xlu0 %1847
        %v1849 = vsel %vm1576, %v1845, 0.0
        %1850 = vadd.xlane.f32.xlu0 %v1849
        %v1851 = vpop.xlane.xlu0 %1850
        %v1852 = vmul.f32 %v1848, %v1580
        %v1853 = vmul.f32 %v1851, %v1580
        %v1854 = vadd.f32 %v1852, 1e-05
        %v1855 = vadd.f32 %v1853, 1e-05
        %v1856 = vrsqrt.pop %v1854
        %v1857 = vrsqrt.pop %v1855
        %v1858 = vmul.f32 %v1842, %v1856
        %v1859 = vmul.f32 %v1843, %v1857
        %v1861 = vlaneseq
        %v1862 = vshrl.u32 %v1861, 7
        %v1863 = vsub.s32 0, %v1862
        %v1864 = vrot.slane %v1832, %v1863
        %v1866 = vmul.f32 %v1858, %v1864
        %v1867 = vmul.f32 %v1859, %v1864
        %v1869 = vlaneseq
        %v1870 = vshrl.u32 %v1869, 7
        %v1871 = vsub.s32 0, %v1870
        %v1872 = vrot.slane %v1833, %v1871
        %v1874 = vadd.f32 %v1866, %v1872
        %v1875 = vadd.f32 %v1867, %v1872
        %v1876 = vld [vmem:[%s1475] sm:$0xff]
        %v1877 = vld [vmem:[%s1475 + $0x8] sm:$0xff]
        %v1878 = vld [vmem:[%s1475 + $0x10] sm:$0xff]
        %v1879 = vld [vmem:[%s1475 + $0x18] sm:$0xff]
        %v1880 = vld [vmem:[%s1475 + $0x20] sm:$0xff]
        %v1881 = vld [vmem:[%s1475 + $0x28] sm:$0xff]
        %v1882 = vld [vmem:[%s1475 + $0x30] sm:$0xff]
        %v1883 = vld [vmem:[%s1475 + $0x38] sm:$0xff]
        %v1884 = vld [vmem:[%s1479] sm:$0x3]
        %v1885 = vpack.c.bf16 %v1875, %v1874
        %v1887 = vlaneseq
        %v1888 = vshrl.u32 %v1887, 7
        %v1889 = vsub.s32 0, %v1888
        %v1890 = vrot.slane %v1884, %v1889
        %v1891 = vlaneseq
        %v1892 = vshrl.u32 %v1891, 7
        %v1893 = vsub.s32 1, %v1892
        %v1894 = vrot.slane %v1884, %v1893
        %v1905 = vunpack.c.l.b16 %v1876
        %v1906 = vunpack.c.h.b16 %v1876
        %v1907 = vunpack.c.l.b16 %v1877
        %v1908 = vunpack.c.h.b16 %v1877
        %v1909 = vunpack.c.l.b16 %v1878
        %v1910 = vunpack.c.h.b16 %v1878
        %v1911 = vunpack.c.l.b16 %v1879
        %v1912 = vunpack.c.h.b16 %v1879
        %v1913 = vunpack.c.l.b16 %v1880
        %v1914 = vunpack.c.h.b16 %v1880
        %v1915 = vunpack.c.l.b16 %v1881
        %v1916 = vunpack.c.h.b16 %v1881
        %v1917 = vunpack.c.l.b16 %v1882
        %v1918 = vunpack.c.h.b16 %v1882
        %v1919 = vunpack.c.l.b16 %v1883
        %v1920 = vunpack.c.h.b16 %v1883
        %v1921 = vpack.c.b16 %v1907, %v1905
        %v1922 = vpack.c.b16 %v1908, %v1906
        %v1923 = vpack.c.b16 %v1911, %v1909
        %v1924 = vpack.c.b16 %v1912, %v1910
        %v1925 = vpack.c.b16 %v1915, %v1913
        %v1926 = vpack.c.b16 %v1916, %v1914
        %v1927 = vpack.c.b16 %v1919, %v1917
        %v1928 = vpack.c.b16 %v1920, %v1918
        %v1938 = vsel %vm1572, %v1885, 0
        %1940 = vmatprep.subr.bf16.mxu0 %v1922
        %1941 = vmatpush1.bf16.msra.mxu0 %v1921
        %1942 = vmatprep.subr.bf16.mxu0 %v1924
        %1943 = vmatpush1.bf16.msra.mxu0 %v1923
        %1944 = vmatprep.subr.bf16.mxu0 %v1926
        %1945 = vmatpush1.bf16.msra.mxu0 %v1925
        %1946 = vmatprep.subr.bf16.mxu0 %v1928
        %1947 = vmatpush1.bf16.msra.mxu0 %v1927
        %1948 = vmatprep.subr.bf16.mxu0 0
        %1949 = vmatpush1.bf16.msra.mxu0 0
        %1950 = vmatprep.subr.bf16.mxu0 0
        %1951 = vmatpush1.bf16.msra.mxu0 0
        %1952 = vmatprep.subr.bf16.mxu0 0
        %1953 = vmatpush1.bf16.msra.mxu0 0
        %1954 = vmatprep.subr.bf16.mxu0 0
        %1955 = vmatpush1.bf16.msra.mxu0 0
        %1956 = vmatprep.subr.bf16.mxu0 0
        %1957 = vmatpush1.bf16.msra.mxu0 0
        %1958 = vmatprep.subr.bf16.mxu0 0
        %1959 = vmatpush1.bf16.msra.mxu0 0
        %1960 = vmatprep.subr.bf16.mxu0 0
        %1961 = vmatpush1.bf16.msra.mxu0 0
        %1962 = vmatprep.subr.bf16.mxu0 0
        %1963 = vmatpush1.bf16.msra.mxu0 0
        %1964 = vmatprep.subr.bf16.mxu0 0
        %1965 = vmatpush1.bf16.msra.mxu0 0
        %1966 = vmatprep.subr.bf16.mxu0 0
        %1967 = vmatpush1.bf16.msra.mxu0 0
        %1968 = vmatprep.subr.bf16.mxu0 0
        %1969 = vmatpush1.bf16.msra.mxu0 0
        %1970 = vmatprep.subr.bf16.mxu0 0
        %1971 = vmatpush1.bf16.msra.mxu0 0
        %1972 = vmatprep.mubr.bf16.mxu0 0
        %1973 = vmatmul.mubr.bf16.gmra.mrb[0].mxu0 %v1938
        %v1974 = vpop.f32.mrb[0].mxu0
        %v1975 = vadd.f32 %v1890, %v1974
        %v1976 = vpop.f32.mrb[0].mxu0
        %v1977 = vadd.f32 %v1894, %v1976
        %v1978 = vpop.f32.mrb[0].mxu0
        %v1979 = vadd.f32 %v1890, %v1978
        %v1980 = vpop.f32.mrb[0].mxu0
        %v1981 = vadd.f32 %v1894, %v1980
        %1982 = vdwg.mxu0
        %v1983 = vpack.c.bf16 %v1979, %v1975
        %1986 = vrot.lane.b32.xlu0 %v1975, 64
        %v1987 = vpop.permute.xlu0 %1986
        %1988 = vrot.lane.b32.xlu0 %v1979, 64
        %v1989 = vpop.permute.xlu0 %1988
        %1992 = vxpose.xlu0.b32.start [1/16] %v1987, 128
        %1993 = vxpose.xlu0.b32.cont [2/16] %v1989, 128
        %1994 = vxpose.xlu0.b32.cont [3/16] 0.0, 128
        %1995 = vxpose.xlu0.b32.cont [4/16] 0.0, 128
        %1996 = vxpose.xlu0.b32.cont [5/16] 0.0, 128
        %1997 = vxpose.xlu0.b32.cont [6/16] 0.0, 128
        %1998 = vxpose.xlu0.b32.cont [7/16] 0.0, 128
        %1999 = vxpose.xlu0.b32.cont [8/16] 0.0, 128
        %2000 = vxpose.xlu0.b32.cont [9/16] 0.0, 128
        %2001 = vxpose.xlu0.b32.cont [10/16] 0.0, 128
        %2002 = vxpose.xlu0.b32.cont [11/16] 0.0, 128
        %2003 = vxpose.xlu0.b32.cont [12/16] 0.0, 128
        %2004 = vxpose.xlu0.b32.cont [13/16] 0.0, 128
        %2005 = vxpose.xlu0.b32.cont [14/16] 0.0, 128
        %2006 = vxpose.xlu0.b32.cont [15/16] 0.0, 128
        %2007 = vxpose.xlu0.b32.end [16/16] 0.0, 128
        %v2008 = vpop.trf.xlu0
        %v2009 = vpop.trf.xlu0
        %v2010 = vpop.trf.xlu0
        %v2011 = vpop.trf.xlu0
        %v2012 = vpop.trf.xlu0
        %v2013 = vpop.trf.xlu0
        %v2014 = vpop.trf.xlu0
        %v2015 = vpop.trf.xlu0
        %v2016 = vpop.trf.xlu0
        %v2017 = vpop.trf.xlu0
        %v2018 = vpop.trf.xlu0
        %v2019 = vpop.trf.xlu0
        %v2020 = vpop.trf.xlu0
        %v2021 = vpop.trf.xlu0
        %v2022 = vpop.trf.xlu0
        %v2023 = vpop.trf.xlu0
        %v2024 = vpack.c.bf16 %v2009, %v2008
        %vm2025 = vcmask 130048
        %v2027 = vsel %vm2025, %v1983, 0
        %2029 = vmatprep.subr.bf16.mxu0 0
        %2030 = vmatpush1.bf16.msra.mxu0 %v2024
        %2031 = vmatprep.subr.bf16.mxu0 0
        %2032 = vmatpush1.bf16.msra.mxu0 0
        %2033 = vmatprep.subr.bf16.mxu0 0
        %2034 = vmatpush1.bf16.msra.mxu0 0
        %2035 = vmatprep.subr.bf16.mxu0 0
        %2036 = vmatpush1.bf16.msra.mxu0 0
        %2037 = vmatprep.subr.bf16.mxu0 0
        %2038 = vmatpush1.bf16.msra.mxu0 0
        %2039 = vmatprep.subr.bf16.mxu0 0
        %2040 = vmatpush1.bf16.msra.mxu0 0
        %2041 = vmatprep.subr.bf16.mxu0 0
        %2042 = vmatpush1.bf16.msra.mxu0 0
        %2043 = vmatprep.subr.bf16.mxu0 0
        %2044 = vmatpush1.bf16.msra.mxu0 0
        %2045 = vmatprep.subr.bf16.mxu0 0
        %2046 = vmatpush1.bf16.msra.mxu0 0
        %2047 = vmatprep.subr.bf16.mxu0 0
        %2048 = vmatpush1.bf16.msra.mxu0 0
        %2049 = vmatprep.subr.bf16.mxu0 0
        %2050 = vmatpush1.bf16.msra.mxu0 0
        %2051 = vmatprep.subr.bf16.mxu0 0
        %2052 = vmatpush1.bf16.msra.mxu0 0
        %2053 = vmatprep.subr.bf16.mxu0 0
        %2054 = vmatpush1.bf16.msra.mxu0 0
        %2055 = vmatprep.subr.bf16.mxu0 0
        %2056 = vmatpush1.bf16.msra.mxu0 0
        %2057 = vmatprep.subr.bf16.mxu0 0
        %2058 = vmatpush1.bf16.msra.mxu0 0
        %2059 = vmatprep.subr.bf16.mxu0 0
        %2060 = vmatpush1.bf16.msra.mxu0 0
        %2061 = vmatprep.mubr.bf16.mxu0 0
        %2062 = vmatmul.mubr.bf16.gmra.mrb[0].mxu0 %v2027
        %v2063 = vpop.f32.mrb[0].mxu0
        %v2064 = vadd.f32 0.0, %v2063
        %v2065 = vpop.f32.mrb[0].mxu0
        %v2066 = vpop.f32.mrb[0].mxu0
        %v2067 = vadd.f32 0.0, %v2066
        %v2068 = vpop.f32.mrb[0].mxu0
        %2069 = vdwg.mxu0
        %v2070 = vmul.f32 %v2064, 0.25
        %v2071 = vmul.f32 %v2067, 0.25
        %v2073 = vlaneseq
        %v2074 = vshrl.u32 %v2073, 7
        %v2075 = vsub.s32 0, %v2074
        %v2076 = vrot.slane %v1569, %v2075
        %v2078 = vadd.f32 %v2070, %v2076
        %v2079 = vadd.f32 %v2071, %v2076
        %vm2080 = vcmask 121856
        %v2081 = vsel %vm2080, %v2078, -inf
        %2082 = vmax.xlane.f32.xlu0 %v2081
        %v2083 = vpop.xlane.xlu0 %2082
        %vm2084 = vcmask 120832
        %v2085 = vsel %vm2084, %v2079, -inf
        %2086 = vmax.xlane.f32.xlu0 %v2085
        %v2087 = vpop.xlane.xlu0 %2086
        %v2088 = vsub.f32 %v2078, %v2083
        %v2089 = vsub.f32 %v2079, %v2087
        %v2090 = vmul.f32 %v2088, 1.442695
        %v2091 = vpow.pop %v2090
        %v2092 = vmul.f32 %v2089, 1.442695
        %v2093 = vpow.pop %v2092
        %v2094 = vpack.c.bf16 %v2093, %v2091
        %v2095 = vpack.c.bf16 %v1981, %v1977
        %v2097 = vsel %vm2080, %v2094, 0
        %vm2099 = vcmask 1046528
        %vm2100 = vcmask 1047552
        %v2101 = vsel %vm2099, 4294967295, 65535
        %v2102 = vsel %vm2100, %v2101, 0
        %v2104 = vand.u32 %v2095, %v2102
        %2106 = vmatprep.subr.bf16.mxu0 0
        %2107 = vmatpush1.bf16.msra.mxu0 %v2104
        %2108 = vmatprep.subr.bf16.mxu0 0
        %2109 = vmatpush1.bf16.msra.mxu0 0
        %2110 = vmatprep.subr.bf16.mxu0 0
        %2111 = vmatpush1.bf16.msra.mxu0 0
        %2112 = vmatprep.subr.bf16.mxu0 0
        %2113 = vmatpush1.bf16.msra.mxu0 0
        %2114 = vmatprep.subr.bf16.mxu0 0
        %2115 = vmatpush1.bf16.msra.mxu0 0
        %2116 = vmatprep.subr.bf16.mxu0 0
        %2117 = vmatpush1.bf16.msra.mxu0 0
        %2118 = vmatprep.subr.bf16.mxu0 0
        %2119 = vmatpush1.bf16.msra.mxu0 0
        %2120 = vmatprep.subr.bf16.mxu0 0
        %2121 = vmatpush1.bf16.msra.mxu0 0
        %2122 = vmatprep.subr.bf16.mxu0 0
        %2123 = vmatpush1.bf16.msra.mxu0 0
        %2124 = vmatprep.subr.bf16.mxu0 0
        %2125 = vmatpush1.bf16.msra.mxu0 0
        %2126 = vmatprep.subr.bf16.mxu0 0
        %2127 = vmatpush1.bf16.msra.mxu0 0
        %2128 = vmatprep.subr.bf16.mxu0 0
        %2129 = vmatpush1.bf16.msra.mxu0 0
        %2130 = vmatprep.subr.bf16.mxu0 0
        %2131 = vmatpush1.bf16.msra.mxu0 0
        %2132 = vmatprep.subr.bf16.mxu0 0
        %2133 = vmatpush1.bf16.msra.mxu0 0
        %2134 = vmatprep.subr.bf16.mxu0 0
        %2135 = vmatpush1.bf16.msra.mxu0 0
        %2136 = vmatprep.subr.bf16.mxu0 0
        %2137 = vmatpush1.bf16.msra.mxu0 0
        %2138 = vmatprep.mubr.bf16.mxu0 0
        %2139 = vmatmul.mubr.bf16.gmra.mrb[0].mxu0 %v2097
        %v2140 = vpop.f32.mrb[0].mxu0
        %v2141 = vadd.f32 0.0, %v2140
        %v2142 = vpop.f32.mrb[0].mxu0
        %v2143 = vpop.f32.mrb[0].mxu0
        %v2144 = vadd.f32 0.0, %v2143
        %v2145 = vpop.f32.mrb[0].mxu0
        %2146 = vdwg.mxu0
        %v2147 = vsel %vm2080, %v2091, 0.0
        %2148 = vadd.xlane.f32.xlu0 %v2147
        %v2149 = vpop.xlane.xlu0 %2148
        %v2150 = vsel %vm2084, %v2093, 0.0
        %2151 = vadd.xlane.f32.xlu0 %v2150
        %v2152 = vpop.xlane.xlu0 %2151
        %v2153 = vrcp.pop %v2149
        %v2154 = vrcp.pop %v2152
        %v2155 = vmul.f32 %v2141, %v2153
        %v2156 = vmul.f32 %v2144, %v2154
        %2157 = vrot.lane.b32.xlu0 %v1975, 48
        %v2158 = vpop.permute.xlu0 %2157
        %2159 = vrot.lane.b32.xlu0 %v1979, 48
        %v2160 = vpop.permute.xlu0 %2159
        %2163 = vxpose.xlu0.b32.start [1/16] %v2158, 128
        %2164 = vxpose.xlu0.b32.cont [2/16] %v2160, 128
        %2165 = vxpose.xlu0.b32.cont [3/16] 0.0, 128
        %2166 = vxpose.xlu0.b32.cont [4/16] 0.0, 128
        %2167 = vxpose.xlu0.b32.cont [5/16] 0.0, 128
        %2168 = vxpose.xlu0.b32.cont [6/16] 0.0, 128
        %2169 = vxpose.xlu0.b32.cont [7/16] 0.0, 128
        %2170 = vxpose.xlu0.b32.cont [8/16] 0.0, 128
        %2171 = vxpose.xlu0.b32.cont [9/16] 0.0, 128
        %2172 = vxpose.xlu0.b32.cont [10/16] 0.0, 128
        %2173 = vxpose.xlu0.b32.cont [11/16] 0.0, 128
        %2174 = vxpose.xlu0.b32.cont [12/16] 0.0, 128
        %2175 = vxpose.xlu0.b32.cont [13/16] 0.0, 128
        %2176 = vxpose.xlu0.b32.cont [14/16] 0.0, 128
        %2177 = vxpose.xlu0.b32.cont [15/16] 0.0, 128
        %2178 = vxpose.xlu0.b32.end [16/16] 0.0, 128
        %v2179 = vpop.trf.xlu0
        %v2180 = vpop.trf.xlu0
        %v2181 = vpop.trf.xlu0
        %v2182 = vpop.trf.xlu0
        %v2183 = vpop.trf.xlu0
        %v2184 = vpop.trf.xlu0
        %v2185 = vpop.trf.xlu0
        %v2186 = vpop.trf.xlu0
        %v2187 = vpop.trf.xlu0
        %v2188 = vpop.trf.xlu0
        %v2189 = vpop.trf.xlu0
        %v2190 = vpop.trf.xlu0
        %v2191 = vpop.trf.xlu0
        %v2192 = vpop.trf.xlu0
        %v2193 = vpop.trf.xlu0
        %v2194 = vpop.trf.xlu0
        %v2195 = vpack.c.bf16 %v2180, %v2179
        %2197 = vrot.lane.b32.xlu0 %v1983, 112
        %v2198 = vpop.permute.xlu0 %2197
        %v2200 = vsel %vm2025, %v2198, 0
        %2202 = vmatprep.subr.bf16.mxu0 0
        %2203 = vmatpush1.bf16.msra.mxu0 %v2195
        %2204 = vmatprep.subr.bf16.mxu0 0
        %2205 = vmatpush1.bf16.msra.mxu0 0
        %2206 = vmatprep.subr.bf16.mxu0 0
        %2207 = vmatpush1.bf16.msra.mxu0 0
        %2208 = vmatprep.subr.bf16.mxu0 0
        %2209 = vmatpush1.bf16.msra.mxu0 0
        %2210 = vmatprep.subr.bf16.mxu0 0
        %2211 = vmatpush1.bf16.msra.mxu0 0
        %2212 = vmatprep.subr.bf16.mxu0 0
        %2213 = vmatpush1.bf16.msra.mxu0 0
        %2214 = vmatprep.subr.bf16.mxu0 0
        %2215 = vmatpush1.bf16.msra.mxu0 0
        %2216 = vmatprep.subr.bf16.mxu0 0
        %2217 = vmatpush1.bf16.msra.mxu0 0
        %2218 = vmatprep.subr.bf16.mxu0 0
        %2219 = vmatpush1.bf16.msra.mxu0 0
        %2220 = vmatprep.subr.bf16.mxu0 0
        %2221 = vmatpush1.bf16.msra.mxu0 0
        %2222 = vmatprep.subr.bf16.mxu0 0
        %2223 = vmatpush1.bf16.msra.mxu0 0
        %2224 = vmatprep.subr.bf16.mxu0 0
        %2225 = vmatpush1.bf16.msra.mxu0 0
        %2226 = vmatprep.subr.bf16.mxu0 0
        %2227 = vmatpush1.bf16.msra.mxu0 0
        %2228 = vmatprep.subr.bf16.mxu0 0
        %2229 = vmatpush1.bf16.msra.mxu0 0
        %2230 = vmatprep.subr.bf16.mxu0 0
        %2231 = vmatpush1.bf16.msra.mxu0 0
        %2232 = vmatprep.subr.bf16.mxu0 0
        %2233 = vmatpush1.bf16.msra.mxu0 0
        %2234 = vmatprep.mubr.bf16.mxu0 0
        %2235 = vmatmul.mubr.bf16.gmra.mrb[0].mxu0 %v2200
        %v2236 = vpop.f32.mrb[0].mxu0
        %v2237 = vadd.f32 0.0, %v2236
        %v2238 = vpop.f32.mrb[0].mxu0
        %v2239 = vpop.f32.mrb[0].mxu0
        %v2240 = vadd.f32 0.0, %v2239
        %v2241 = vpop.f32.mrb[0].mxu0
        %2242 = vdwg.mxu0
        %v2243 = vmul.f32 %v2237, 0.25
        %v2244 = vmul.f32 %v2240, 0.25
        %v2245 = vadd.f32 %v2243, %v2076
        %v2246 = vadd.f32 %v2244, %v2076
        %v2247 = vsel %vm2080, %v2245, -inf
        %2248 = vmax.xlane.f32.xlu0 %v2247
        %v2249 = vpop.xlane.xlu0 %2248
        %v2250 = vsel %vm2084, %v2246, -inf
        %2251 = vmax.xlane.f32.xlu0 %v2250
        %v2252 = vpop.xlane.xlu0 %2251
        %v2253 = vsub.f32 %v2245, %v2249
        %v2254 = vsub.f32 %v2246, %v2252
        %v2255 = vmul.f32 %v2253, 1.442695
        %v2256 = vpow.pop %v2255
        %v2257 = vmul.f32 %v2254, 1.442695
        %v2258 = vpow.pop %v2257
        %v2259 = vpack.c.bf16 %v2258, %v2256
        %2261 = vrot.lane.b32.xlu0 %v2095, 112
        %v2262 = vpop.permute.xlu0 %2261
        %v2264 = vsel %vm2080, %v2259, 0
        %v2267 = vand.u32 %v2262, %v2102
        %2269 = vmatprep.subr.bf16.mxu0 0
        %2270 = vmatpush1.bf16.msra.mxu0 %v2267
        %2271 = vmatprep.subr.bf16.mxu0 0
        %2272 = vmatpush1.bf16.msra.mxu0 0
        %2273 = vmatprep.subr.bf16.mxu0 0
        %2274 = vmatpush1.bf16.msra.mxu0 0
        %2275 = vmatprep.subr.bf16.mxu0 0
        %2276 = vmatpush1.bf16.msra.mxu0 0
        %2277 = vmatprep.subr.bf16.mxu0 0
        %2278 = vmatpush1.bf16.msra.mxu0 0
        %2279 = vmatprep.subr.bf16.mxu0 0
        %2280 = vmatpush1.bf16.msra.mxu0 0
        %2281 = vmatprep.subr.bf16.mxu0 0
        %2282 = vmatpush1.bf16.msra.mxu0 0
        %2283 = vmatprep.subr.bf16.mxu0 0
        %2284 = vmatpush1.bf16.msra.mxu0 0
        %2285 = vmatprep.subr.bf16.mxu0 0
        %2286 = vmatpush1.bf16.msra.mxu0 0
        %2287 = vmatprep.subr.bf16.mxu0 0
        %2288 = vmatpush1.bf16.msra.mxu0 0
        %2289 = vmatprep.subr.bf16.mxu0 0
        %2290 = vmatpush1.bf16.msra.mxu0 0
        %2291 = vmatprep.subr.bf16.mxu0 0
        %2292 = vmatpush1.bf16.msra.mxu0 0
        %2293 = vmatprep.subr.bf16.mxu0 0
        %2294 = vmatpush1.bf16.msra.mxu0 0
        %2295 = vmatprep.subr.bf16.mxu0 0
        %2296 = vmatpush1.bf16.msra.mxu0 0
        %2297 = vmatprep.subr.bf16.mxu0 0
        %2298 = vmatpush1.bf16.msra.mxu0 0
        %2299 = vmatprep.subr.bf16.mxu0 0
        %2300 = vmatpush1.bf16.msra.mxu0 0
        %2301 = vmatprep.mubr.bf16.mxu0 0
        %2302 = vmatmul.mubr.bf16.gmra.mrb[0].mxu0 %v2264
        %v2303 = vpop.f32.mrb[0].mxu0
        %v2304 = vadd.f32 0.0, %v2303
        %v2305 = vpop.f32.mrb[0].mxu0
        %v2306 = vpop.f32.mrb[0].mxu0
        %v2307 = vadd.f32 0.0, %v2306
        %v2308 = vpop.f32.mrb[0].mxu0
        %2309 = vdwg.mxu0
        %v2310 = vsel %vm2080, %v2256, 0.0
        %2311 = vadd.xlane.f32.xlu0 %v2310
        %v2312 = vpop.xlane.xlu0 %2311
        %v2313 = vsel %vm2084, %v2258, 0.0
        %2314 = vadd.xlane.f32.xlu0 %v2313
        %v2315 = vpop.xlane.xlu0 %2314
        %v2316 = vrcp.pop %v2312
        %v2317 = vrcp.pop %v2315
        %v2318 = vmul.f32 %v2304, %v2316
        %v2319 = vmul.f32 %v2307, %v2317
        %2320 = vrot.lane.b32.xlu0 %v1975, 32
        %v2321 = vpop.permute.xlu0 %2320
        %2322 = vrot.lane.b32.xlu0 %v1979, 32
        %v2323 = vpop.permute.xlu0 %2322
        %2326 = vxpose.xlu0.b32.start [1/16] %v2321, 128
        %2327 = vxpose.xlu0.b32.cont [2/16] %v2323, 128
        %2328 = vxpose.xlu0.b32.cont [3/16] 0.0, 128
        %2329 = vxpose.xlu0.b32.cont [4/16] 0.0, 128
        %2330 = vxpose.xlu0.b32.cont [5/16] 0.0, 128
        %2331 = vxpose.xlu0.b32.cont [6/16] 0.0, 128
        %2332 = vxpose.xlu0.b32.cont [7/16] 0.0, 128
        %2333 = vxpose.xlu0.b32.cont [8/16] 0.0, 128
        %2334 = vxpose.xlu0.b32.cont [9/16] 0.0, 128
        %2335 = vxpose.xlu0.b32.cont [10/16] 0.0, 128
        %2336 = vxpose.xlu0.b32.cont [11/16] 0.0, 128
        %2337 = vxpose.xlu0.b32.cont [12/16] 0.0, 128
        %2338 = vxpose.xlu0.b32.cont [13/16] 0.0, 128
        %2339 = vxpose.xlu0.b32.cont [14/16] 0.0, 128
        %2340 = vxpose.xlu0.b32.cont [15/16] 0.0, 128
        %2341 = vxpose.xlu0.b32.end [16/16] 0.0, 128
        %v2342 = vpop.trf.xlu0
        %v2343 = vpop.trf.xlu0
        %v2344 = vpop.trf.xlu0
        %v2345 = vpop.trf.xlu0
        %v2346 = vpop.trf.xlu0
        %v2347 = vpop.trf.xlu0
        %v2348 = vpop.trf.xlu0
        %v2349 = vpop.trf.xlu0
        %v2350 = vpop.trf.xlu0
        %v2351 = vpop.trf.xlu0
        %v2352 = vpop.trf.xlu0
        %v2353 = vpop.trf.xlu0
        %v2354 = vpop.trf.xlu0
        %v2355 = vpop.trf.xlu0
        %v2356 = vpop.trf.xlu0
        %v2357 = vpop.trf.xlu0
        %v2358 = vpack.c.bf16 %v2343, %v2342
        %2359 = vrot.lane.b32.xlu0 %v1983, 96
        %v2360 = vpop.permute.xlu0 %2359
        %v2362 = vsel %vm2025, %v2360, 0
        %2364 = vmatprep.subr.bf16.mxu0 0
        %2365 = vmatpush1.bf16.msra.mxu0 %v2358
        %2366 = vmatprep.subr.bf16.mxu0 0
        %2367 = vmatpush1.bf16.msra.mxu0 0
        %2368 = vmatprep.subr.bf16.mxu0 0
        %2369 = vmatpush1.bf16.msra.mxu0 0
        %2370 = vmatprep.subr.bf16.mxu0 0
        %2371 = vmatpush1.bf16.msra.mxu0 0
        %2372 = vmatprep.subr.bf16.mxu0 0
        %2373 = vmatpush1.bf16.msra.mxu0 0
        %2374 = vmatprep.subr.bf16.mxu0 0
        %2375 = vmatpush1.bf16.msra.mxu0 0
        %2376 = vmatprep.subr.bf16.mxu0 0
        %2377 = vmatpush1.bf16.msra.mxu0 0
        %2378 = vmatprep.subr.bf16.mxu0 0
        %2379 = vmatpush1.bf16.msra.mxu0 0
        %2380 = vmatprep.subr.bf16.mxu0 0
        %2381 = vmatpush1.bf16.msra.mxu0 0
        %2382 = vmatprep.subr.bf16.mxu0 0
        %2383 = vmatpush1.bf16.msra.mxu0 0
        %2384 = vmatprep.subr.bf16.mxu0 0
        %2385 = vmatpush1.bf16.msra.mxu0 0
        %2386 = vmatprep.subr.bf16.mxu0 0
        %2387 = vmatpush1.bf16.msra.mxu0 0
        %2388 = vmatprep.subr.bf16.mxu0 0
        %2389 = vmatpush1.bf16.msra.mxu0 0
        %2390 = vmatprep.subr.bf16.mxu0 0
        %2391 = vmatpush1.bf16.msra.mxu0 0
        %2392 = vmatprep.subr.bf16.mxu0 0
        %2393 = vmatpush1.bf16.msra.mxu0 0
        %2394 = vmatprep.subr.bf16.mxu0 0
        %2395 = vmatpush1.bf16.msra.mxu0 0
        %2396 = vmatprep.mubr.bf16.mxu0 0
        %2397 = vmatmul.mubr.bf16.gmra.mrb[0].mxu0 %v2362
        %v2398 = vpop.f32.mrb[0].mxu0
        %v2399 = vadd.f32 0.0, %v2398
        %v2400 = vpop.f32.mrb[0].mxu0
        %v2401 = vpop.f32.mrb[0].mxu0
        %v2402 = vadd.f32 0.0, %v2401
        %v2403 = vpop.f32.mrb[0].mxu0
        %2404 = vdwg.mxu0
        %v2405 = vmul.f32 %v2399, 0.25
        %v2406 = vmul.f32 %v2402, 0.25
        %v2407 = vadd.f32 %v2405, %v2076
        %v2408 = vadd.f32 %v2406, %v2076
        %v2409 = vsel %vm2080, %v2407, -inf
        %2410 = vmax.xlane.f32.xlu0 %v2409
        %v2411 = vpop.xlane.xlu0 %2410
        %v2412 = vsel %vm2084, %v2408, -inf
        %2413 = vmax.xlane.f32.xlu0 %v2412
        %v2414 = vpop.xlane.xlu0 %2413
        %v2415 = vsub.f32 %v2407, %v2411
        %v2416 = vsub.f32 %v2408, %v2414
        %v2417 = vmul.f32 %v2415, 1.442695
        %v2418 = vpow.pop %v2417
        %v2419 = vmul.f32 %v2416, 1.442695
        %v2420 = vpow.pop %v2419
        %v2421 = vpack.c.bf16 %v2420, %v2418
        %2422 = vrot.lane.b32.xlu0 %v2095, 96
        %v2423 = vpop.permute.xlu0 %2422
        %v2425 = vsel %vm2080, %v2421, 0
        %v2428 = vand.u32 %v2423, %v2102
        %2430 = vmatprep.subr.bf16.mxu0 0
        %2431 = vmatpush1.bf16.msra.mxu0 %v2428
        %2432 = vmatprep.subr.bf16.mxu0 0
        %2433 = vmatpush1.bf16.msra.mxu0 0
        %2434 = vmatprep.subr.bf16.mxu0 0
        %2435 = vmatpush1.bf16.msra.mxu0 0
        %2436 = vmatprep.subr.bf16.mxu0 0
        %2437 = vmatpush1.bf16.msra.mxu0 0
        %2438 = vmatprep.subr.bf16.mxu0 0
        %2439 = vmatpush1.bf16.msra.mxu0 0
        %2440 = vmatprep.subr.bf16.mxu0 0
        %2441 = vmatpush1.bf16.msra.mxu0 0
        %2442 = vmatprep.subr.bf16.mxu0 0
        %2443 = vmatpush1.bf16.msra.mxu0 0
        %2444 = vmatprep.subr.bf16.mxu0 0
        %2445 = vmatpush1.bf16.msra.mxu0 0
        %2446 = vmatprep.subr.bf16.mxu0 0
        %2447 = vmatpush1.bf16.msra.mxu0 0
        %2448 = vmatprep.subr.bf16.mxu0 0
        %2449 = vmatpush1.bf16.msra.mxu0 0
        %2450 = vmatprep.subr.bf16.mxu0 0
        %2451 = vmatpush1.bf16.msra.mxu0 0
        %2452 = vmatprep.subr.bf16.mxu0 0
        %2453 = vmatpush1.bf16.msra.mxu0 0
        %2454 = vmatprep.subr.bf16.mxu0 0
        %2455 = vmatpush1.bf16.msra.mxu0 0
        %2456 = vmatprep.subr.bf16.mxu0 0
        %2457 = vmatpush1.bf16.msra.mxu0 0
        %2458 = vmatprep.subr.bf16.mxu0 0
        %2459 = vmatpush1.bf16.msra.mxu0 0
        %2460 = vmatprep.subr.bf16.mxu0 0
        %2461 = vmatpush1.bf16.msra.mxu0 0
        %2462 = vmatprep.mubr.bf16.mxu0 0
        %2463 = vmatmul.mubr.bf16.gmra.mrb[0].mxu0 %v2425
        %v2464 = vpop.f32.mrb[0].mxu0
        %v2465 = vadd.f32 0.0, %v2464
        %v2466 = vpop.f32.mrb[0].mxu0
        %v2467 = vpop.f32.mrb[0].mxu0
        %v2468 = vadd.f32 0.0, %v2467
        %v2469 = vpop.f32.mrb[0].mxu0
        %2470 = vdwg.mxu0
        %v2471 = vsel %vm2080, %v2418, 0.0
        %2472 = vadd.xlane.f32.xlu0 %v2471
        %v2473 = vpop.xlane.xlu0 %2472
        %v2474 = vsel %vm2084, %v2420, 0.0
        %2475 = vadd.xlane.f32.xlu0 %v2474
        %v2476 = vpop.xlane.xlu0 %2475
        %v2477 = vrcp.pop %v2473
        %v2478 = vrcp.pop %v2476
        %v2479 = vmul.f32 %v2465, %v2477
        %v2480 = vmul.f32 %v2468, %v2478
        %2481 = vrot.lane.b32.xlu0 %v1975, 16
        %v2482 = vpop.permute.xlu0 %2481
        %2483 = vrot.lane.b32.xlu0 %v1979, 16
        %v2484 = vpop.permute.xlu0 %2483
        %2487 = vxpose.xlu0.b32.start [1/16] %v2482, 128
        %2488 = vxpose.xlu0.b32.cont [2/16] %v2484, 128
        %2489 = vxpose.xlu0.b32.cont [3/16] 0.0, 128
        %2490 = vxpose.xlu0.b32.cont [4/16] 0.0, 128
        %2491 = vxpose.xlu0.b32.cont [5/16] 0.0, 128
        %2492 = vxpose.xlu0.b32.cont [6/16] 0.0, 128
        %2493 = vxpose.xlu0.b32.cont [7/16] 0.0, 128
        %2494 = vxpose.xlu0.b32.cont [8/16] 0.0, 128
        %2495 = vxpose.xlu0.b32.cont [9/16] 0.0, 128
        %2496 = vxpose.xlu0.b32.cont [10/16] 0.0, 128
        %2497 = vxpose.xlu0.b32.cont [11/16] 0.0, 128
        %2498 = vxpose.xlu0.b32.cont [12/16] 0.0, 128
        %2499 = vxpose.xlu0.b32.cont [13/16] 0.0, 128
        %2500 = vxpose.xlu0.b32.cont [14/16] 0.0, 128
        %2501 = vxpose.xlu0.b32.cont [15/16] 0.0, 128
        %2502 = vxpose.xlu0.b32.end [16/16] 0.0, 128
        %v2503 = vpop.trf.xlu0
        %v2504 = vpop.trf.xlu0
        %v2505 = vpop.trf.xlu0
        %v2506 = vpop.trf.xlu0
        %v2507 = vpop.trf.xlu0
        %v2508 = vpop.trf.xlu0
        %v2509 = vpop.trf.xlu0
        %v2510 = vpop.trf.xlu0
        %v2511 = vpop.trf.xlu0
        %v2512 = vpop.trf.xlu0
        %v2513 = vpop.trf.xlu0
        %v2514 = vpop.trf.xlu0
        %v2515 = vpop.trf.xlu0
        %v2516 = vpop.trf.xlu0
        %v2517 = vpop.trf.xlu0
        %v2518 = vpop.trf.xlu0
        %v2519 = vpack.c.bf16 %v2504, %v2503
        %2520 = vrot.lane.b32.xlu0 %v1983, 80
        %v2521 = vpop.permute.xlu0 %2520
        %v2523 = vsel %vm2025, %v2521, 0
        %2525 = vmatprep.subr.bf16.mxu0 0
        %2526 = vmatpush1.bf16.msra.mxu0 %v2519
        %2527 = vmatprep.subr.bf16.mxu0 0
        %2528 = vmatpush1.bf16.msra.mxu0 0
        %2529 = vmatprep.subr.bf16.mxu0 0
        %2530 = vmatpush1.bf16.msra.mxu0 0
        %2531 = vmatprep.subr.bf16.mxu0 0
        %2532 = vmatpush1.bf16.msra.mxu0 0
        %2533 = vmatprep.subr.bf16.mxu0 0
        %2534 = vmatpush1.bf16.msra.mxu0 0
        %2535 = vmatprep.subr.bf16.mxu0 0
        %2536 = vmatpush1.bf16.msra.mxu0 0
        %2537 = vmatprep.subr.bf16.mxu0 0
        %2538 = vmatpush1.bf16.msra.mxu0 0
        %2539 = vmatprep.subr.bf16.mxu0 0
        %2540 = vmatpush1.bf16.msra.mxu0 0
        %2541 = vmatprep.subr.bf16.mxu0 0
        %2542 = vmatpush1.bf16.msra.mxu0 0
        %2543 = vmatprep.subr.bf16.mxu0 0
        %2544 = vmatpush1.bf16.msra.mxu0 0
        %2545 = vmatprep.subr.bf16.mxu0 0
        %2546 = vmatpush1.bf16.msra.mxu0 0
        %2547 = vmatprep.subr.bf16.mxu0 0
        %2548 = vmatpush1.bf16.msra.mxu0 0
        %2549 = vmatprep.subr.bf16.mxu0 0
        %2550 = vmatpush1.bf16.msra.mxu0 0
        %2551 = vmatprep.subr.bf16.mxu0 0
        %2552 = vmatpush1.bf16.msra.mxu0 0
        %2553 = vmatprep.subr.bf16.mxu0 0
        %2554 = vmatpush1.bf16.msra.mxu0 0
        %2555 = vmatprep.subr.bf16.mxu0 0
        %2556 = vmatpush1.bf16.msra.mxu0 0
        %2557 = vmatprep.mubr.bf16.mxu0 0
        %2558 = vmatmul.mubr.bf16.gmra.mrb[0].mxu0 %v2523
        %v2559 = vpop.f32.mrb[0].mxu0
        %v2560 = vadd.f32 0.0, %v2559
        %v2561 = vpop.f32.mrb[0].mxu0
        %v2562 = vpop.f32.mrb[0].mxu0
        %v2563 = vadd.f32 0.0, %v2562
        %v2564 = vpop.f32.mrb[0].mxu0
        %2565 = vdwg.mxu0
        %v2566 = vmul.f32 %v2560, 0.25
        %v2567 = vmul.f32 %v2563, 0.25
        %v2568 = vadd.f32 %v2566, %v2076
        %v2569 = vadd.f32 %v2567, %v2076
        %v2570 = vsel %vm2080, %v2568, -inf
        %2571 = vmax.xlane.f32.xlu0 %v2570
        %v2572 = vpop.xlane.xlu0 %2571
        %v2573 = vsel %vm2084, %v2569, -inf
        %2574 = vmax.xlane.f32.xlu0 %v2573
        %v2575 = vpop.xlane.xlu0 %2574
        %v2576 = vsub.f32 %v2568, %v2572
        %v2577 = vsub.f32 %v2569, %v2575
        %v2578 = vmul.f32 %v2576, 1.442695
        %v2579 = vpow.pop %v2578
        %v2580 = vmul.f32 %v2577, 1.442695
        %v2581 = vpow.pop %v2580
        %v2582 = vpack.c.bf16 %v2581, %v2579
        %2583 = vrot.lane.b32.xlu0 %v2095, 80
        %v2584 = vpop.permute.xlu0 %2583
        %v2586 = vsel %vm2080, %v2582, 0
        %v2589 = vand.u32 %v2584, %v2102
        %2591 = vmatprep.subr.bf16.mxu0 0
        %2592 = vmatpush1.bf16.msra.mxu0 %v2589
        %2593 = vmatprep.subr.bf16.mxu0 0
        %2594 = vmatpush1.bf16.msra.mxu0 0
        %2595 = vmatprep.subr.bf16.mxu0 0
        %2596 = vmatpush1.bf16.msra.mxu0 0
        %2597 = vmatprep.subr.bf16.mxu0 0
        %2598 = vmatpush1.bf16.msra.mxu0 0
        %2599 = vmatprep.subr.bf16.mxu0 0
        %2600 = vmatpush1.bf16.msra.mxu0 0
        %2601 = vmatprep.subr.bf16.mxu0 0
        %2602 = vmatpush1.bf16.msra.mxu0 0
        %2603 = vmatprep.subr.bf16.mxu0 0
        %2604 = vmatpush1.bf16.msra.mxu0 0
        %2605 = vmatprep.subr.bf16.mxu0 0
        %2606 = vmatpush1.bf16.msra.mxu0 0
        %2607 = vmatprep.subr.bf16.mxu0 0
        %2608 = vmatpush1.bf16.msra.mxu0 0
        %2609 = vmatprep.subr.bf16.mxu0 0
        %2610 = vmatpush1.bf16.msra.mxu0 0
        %2611 = vmatprep.subr.bf16.mxu0 0
        %2612 = vmatpush1.bf16.msra.mxu0 0
        %2613 = vmatprep.subr.bf16.mxu0 0
        %2614 = vmatpush1.bf16.msra.mxu0 0
        %2615 = vmatprep.subr.bf16.mxu0 0
        %2616 = vmatpush1.bf16.msra.mxu0 0
        %2617 = vmatprep.subr.bf16.mxu0 0
        %2618 = vmatpush1.bf16.msra.mxu0 0
        %2619 = vmatprep.subr.bf16.mxu0 0
        %2620 = vmatpush1.bf16.msra.mxu0 0
        %2621 = vmatprep.subr.bf16.mxu0 0
        %2622 = vmatpush1.bf16.msra.mxu0 0
        %2623 = vmatprep.mubr.bf16.mxu0 0
        %2624 = vmatmul.mubr.bf16.gmra.mrb[0].mxu0 %v2586
        %v2625 = vpop.f32.mrb[0].mxu0
        %v2626 = vadd.f32 0.0, %v2625
        %v2627 = vpop.f32.mrb[0].mxu0
        %v2628 = vpop.f32.mrb[0].mxu0
        %v2629 = vadd.f32 0.0, %v2628
        %v2630 = vpop.f32.mrb[0].mxu0
        %2631 = vdwg.mxu0
        %v2632 = vsel %vm2080, %v2579, 0.0
        %2633 = vadd.xlane.f32.xlu0 %v2632
        %v2634 = vpop.xlane.xlu0 %2633
        %v2635 = vsel %vm2084, %v2581, 0.0
        %2636 = vadd.xlane.f32.xlu0 %v2635
        %v2637 = vpop.xlane.xlu0 %2636
        %v2638 = vrcp.pop %v2634
        %v2639 = vrcp.pop %v2637
        %v2640 = vmul.f32 %v2626, %v2638
        %v2641 = vmul.f32 %v2629, %v2639
        %2644 = vrot.lane.b32.xlu0 %v2318, 16
        %v2645 = vpop.permute.xlu0 %2644
        %2646 = vrot.lane.b32.xlu0 %v2319, 16
        %v2647 = vpop.permute.xlu0 %2646
        %2652 = vrot.lane.b32.xlu0 %v2479, 32
        %v2653 = vpop.permute.xlu0 %2652
        %2654 = vrot.lane.b32.xlu0 %v2480, 32
        %v2655 = vpop.permute.xlu0 %2654
        %2660 = vrot.lane.b32.xlu0 %v2640, 48
        %v2661 = vpop.permute.xlu0 %2660
        %2662 = vrot.lane.b32.xlu0 %v2641, 48
        %v2663 = vpop.permute.xlu0 %2662
        %v2666 = vsel %vm2025, %v2155, %v2645
        %v2667 = vsel %vm2025, %v2156, %v2647
        %vm2668 = vcmask 261120
        %v2669 = vsel %vm2668, %v2666, %v2653
        %v2670 = vsel %vm2668, %v2667, %v2655
        %vm2671 = vcmask 392192
        %v2672 = vsel %vm2671, %v2669, %v2661
        %v2673 = vsel %vm2671, %v2670, %v2663
        %v2674 = vld [vmem:[%s1484] sm:$0xf]
        %v2675 = vld [vmem:[%s1484 + $0x4] sm:$0xf]
        %v2676 = vld [vmem:[%s1484 + $0x8] sm:$0xf]
        %v2677 = vld [vmem:[%s1484 + $0xc] sm:$0xf]
        %v2678 = vld [vmem:[%s1484 + $0x10] sm:$0xf]
        %v2679 = vld [vmem:[%s1484 + $0x14] sm:$0xf]
        %v2680 = vld [vmem:[%s1484 + $0x18] sm:$0xf]
        %v2681 = vld [vmem:[%s1484 + $0x1c] sm:$0xf]
        %v2682 = vld [vmem:[%s1487] sm:$0x1]
        %v2683 = vpack.c.bf16 %v2673, %v2672
        %v2685 = vlaneseq
        %v2686 = vshrl.u32 %v2685, 7
        %v2687 = vsub.s32 0, %v2686
        %v2688 = vrot.slane %v2682, %v2687
        %v2698 = vunpack.c.l.b16 %v2674
        %v2699 = vunpack.c.l.b16 %v2675
        %v2700 = vunpack.c.l.b16 %v2676
        %v2701 = vunpack.c.l.b16 %v2677
        %v2702 = vunpack.c.l.b16 %v2678
        %v2703 = vunpack.c.l.b16 %v2679
        %v2704 = vunpack.c.l.b16 %v2680
        %v2705 = vunpack.c.l.b16 %v2681
        %v2706 = vpack.c.b16 %v2699, %v2698
        %v2707 = vpack.c.b16 %v2701, %v2700
        %v2708 = vpack.c.b16 %v2703, %v2702
        %v2709 = vpack.c.b16 %v2705, %v2704
        %v2715 = vsel %vm1572, %v2683, 0
        %2717 = vmatprep.subr.bf16.mxu0 0
        %2718 = vmatpush1.bf16.msra.mxu0 %v2706
        %2719 = vmatprep.subr.bf16.mxu0 0
        %2720 = vmatpush1.bf16.msra.mxu0 %v2707
        %2721 = vmatprep.subr.bf16.mxu0 0
        %2722 = vmatpush1.bf16.msra.mxu0 %v2708
        %2723 = vmatprep.subr.bf16.mxu0 0
        %2724 = vmatpush1.bf16.msra.mxu0 %v2709
        %2725 = vmatprep.subr.bf16.mxu0 0
        %2726 = vmatpush1.bf16.msra.mxu0 0
        %2727 = vmatprep.subr.bf16.mxu0 0
        %2728 = vmatpush1.bf16.msra.mxu0 0
        %2729 = vmatprep.subr.bf16.mxu0 0
        %2730 = vmatpush1.bf16.msra.mxu0 0
        %2731 = vmatprep.subr.bf16.mxu0 0
        %2732 = vmatpush1.bf16.msra.mxu0 0
        %2733 = vmatprep.subr.bf16.mxu0 0
        %2734 = vmatpush1.bf16.msra.mxu0 0
        %2735 = vmatprep.subr.bf16.mxu0 0
        %2736 = vmatpush1.bf16.msra.mxu0 0
        %2737 = vmatprep.subr.bf16.mxu0 0
        %2738 = vmatpush1.bf16.msra.mxu0 0
        %2739 = vmatprep.subr.bf16.mxu0 0
        %2740 = vmatpush1.bf16.msra.mxu0 0
        %2741 = vmatprep.subr.bf16.mxu0 0
        %2742 = vmatpush1.bf16.msra.mxu0 0
        %2743 = vmatprep.subr.bf16.mxu0 0
        %2744 = vmatpush1.bf16.msra.mxu0 0
        %2745 = vmatprep.subr.bf16.mxu0 0
        %2746 = vmatpush1.bf16.msra.mxu0 0
        %2747 = vmatprep.subr.bf16.mxu0 0
        %2748 = vmatpush1.bf16.msra.mxu0 0
        %2749 = vmatprep.mubr.bf16.mxu0 0
        %2750 = vmatmul.mubr.bf16.gmra.mrb[0].mxu0 %v2715
        %v2751 = vpop.f32.mrb[0].mxu0
        %v2752 = vadd.f32 %v2688, %v2751
        %v2753 = vpop.f32.mrb[0].mxu0
        %v2754 = vpop.f32.mrb[0].mxu0
        %v2755 = vadd.f32 %v2688, %v2754
        %v2756 = vpop.f32.mrb[0].mxu0
        %2757 = vdwg.mxu0
        %v2758 = vadd.f32 %v1830, %v2752
        %v2759 = vadd.f32 %v1831, %v2755
        %v2760 = vld [vmem:[%s1490] sm:$0x1]
        %v2761 = vld [vmem:[%s1493] sm:$0x1]
        %v2762 = vsel %vm1572, %v2758, 0.0
        %2763 = vadd.xlane.f32.xlu0 %v2762
        %v2764 = vpop.xlane.xlu0 %2763
        %v2765 = vsel %vm1576, %v2759, 0.0
        %2766 = vadd.xlane.f32.xlu0 %v2765
        %v2767 = vpop.xlane.xlu0 %2766
        %v2768 = vmul.f32 %v2764, %v1580
        %v2769 = vmul.f32 %v2767, %v1580
        %v2770 = vsub.f32 %v2758, %v2768
        %v2771 = vsub.f32 %v2759, %v2769
        %v2772 = vmul.f32 %v2770, %v2770
        %v2773 = vmul.f32 %v2771, %v2771
        %v2774 = vsel %vm1572, %v2772, 0.0
        %2775 = vadd.xlane.f32.xlu0 %v2774
        %v2776 = vpop.xlane.xlu0 %2775
        %v2777 = vsel %vm1576, %v2773, 0.0
        %2778 = vadd.xlane.f32.xlu0 %v2777
        %v2779 = vpop.xlane.xlu0 %2778
        %v2780 = vmul.f32 %v2776, %v1580
        %v2781 = vmul.f32 %v2779, %v1580
        %v2782 = vadd.f32 %v2780, 1e-05
        %v2783 = vadd.f32 %v2781, 1e-05
        %v2784 = vrsqrt.pop %v2782
        %v2785 = vrsqrt.pop %v2783
        %v2786 = vmul.f32 %v2770, %v2784
        %v2787 = vmul.f32 %v2771, %v2785
        %v2789 = vlaneseq
        %v2790 = vshrl.u32 %v2789, 7
        %v2791 = vsub.s32 0, %v2790
        %v2792 = vrot.slane %v2760, %v2791
        %v2794 = vmul.f32 %v2786, %v2792
        %v2795 = vmul.f32 %v2787, %v2792
        %v2797 = vlaneseq
        %v2798 = vshrl.u32 %v2797, 7
        %v2799 = vsub.s32 0, %v2798
        %v2800 = vrot.slane %v2761, %v2799
        %v2802 = vadd.f32 %v2794, %v2800
        %v2803 = vadd.f32 %v2795, %v2800
        %v2804 = vld [vmem:[%s1498] sm:$0xf]
        %v2805 = vld [vmem:[%s1498 + $0x4] sm:$0xf]
        %v2806 = vld [vmem:[%s1498 + $0x8] sm:$0xf]
        %v2807 = vld [vmem:[%s1498 + $0xc] sm:$0xf]
        %v2808 = vld [vmem:[%s1498 + $0x10] sm:$0xf]
        %v2809 = vld [vmem:[%s1498 + $0x14] sm:$0xf]
        %v2810 = vld [vmem:[%s1498 + $0x18] sm:$0xf]
        %v2811 = vld [vmem:[%s1498 + $0x1c] sm:$0xf]
        %v2812 = vld [vmem:[%s1501] sm:$0x1]
        %v2813 = vpack.c.bf16 %v2803, %v2802
        %v2815 = vlaneseq
        %v2816 = vshrl.u32 %v2815, 7
        %v2817 = vsub.s32 0, %v2816
        %v2818 = vrot.slane %v2812, %v2817
        %v2828 = vunpack.c.l.b16 %v2804
        %v2829 = vunpack.c.l.b16 %v2805
        %v2830 = vunpack.c.l.b16 %v2806
        %v2831 = vunpack.c.l.b16 %v2807
        %v2832 = vunpack.c.l.b16 %v2808
        %v2833 = vunpack.c.l.b16 %v2809
        %v2834 = vunpack.c.l.b16 %v2810
        %v2835 = vunpack.c.l.b16 %v2811
        %v2836 = vpack.c.b16 %v2829, %v2828
        %v2837 = vpack.c.b16 %v2831, %v2830
        %v2838 = vpack.c.b16 %v2833, %v2832
        %v2839 = vpack.c.b16 %v2835, %v2834
        %v2845 = vsel %vm1572, %v2813, 0
        %2847 = vmatprep.subr.bf16.mxu0 0
        %2848 = vmatpush1.bf16.msra.mxu0 %v2836
        %2849 = vmatprep.subr.bf16.mxu0 0
        %2850 = vmatpush1.bf16.msra.mxu0 %v2837
        %2851 = vmatprep.subr.bf16.mxu0 0
        %2852 = vmatpush1.bf16.msra.mxu0 %v2838
        %2853 = vmatprep.subr.bf16.mxu0 0
        %2854 = vmatpush1.bf16.msra.mxu0 %v2839
        %2855 = vmatprep.subr.bf16.mxu0 0
        %2856 = vmatpush1.bf16.msra.mxu0 0
        %2857 = vmatprep.subr.bf16.mxu0 0
        %2858 = vmatpush1.bf16.msra.mxu0 0
        %2859 = vmatprep.subr.bf16.mxu0 0
        %2860 = vmatpush1.bf16.msra.mxu0 0
        %2861 = vmatprep.subr.bf16.mxu0 0
        %2862 = vmatpush1.bf16.msra.mxu0 0
        %2863 = vmatprep.subr.bf16.mxu0 0
        %2864 = vmatpush1.bf16.msra.mxu0 0
        %2865 = vmatprep.subr.bf16.mxu0 0
        %2866 = vmatpush1.bf16.msra.mxu0 0
        %2867 = vmatprep.subr.bf16.mxu0 0
        %2868 = vmatpush1.bf16.msra.mxu0 0
        %2869 = vmatprep.subr.bf16.mxu0 0
        %2870 = vmatpush1.bf16.msra.mxu0 0
        %2871 = vmatprep.subr.bf16.mxu0 0
        %2872 = vmatpush1.bf16.msra.mxu0 0
        %2873 = vmatprep.subr.bf16.mxu0 0
        %2874 = vmatpush1.bf16.msra.mxu0 0
        %2875 = vmatprep.subr.bf16.mxu0 0
        %2876 = vmatpush1.bf16.msra.mxu0 0
        %2877 = vmatprep.subr.bf16.mxu0 0
        %2878 = vmatpush1.bf16.msra.mxu0 0
        %2879 = vmatprep.mubr.bf16.mxu0 0
        %2880 = vmatmul.mubr.bf16.gmra.mrb[0].mxu0 %v2845
        %v2881 = vpop.f32.mrb[0].mxu0
        %v2882 = vadd.f32 %v2818, %v2881
        %v2883 = vpop.f32.mrb[0].mxu0
        %v2884 = vpop.f32.mrb[0].mxu0
        %v2885 = vadd.f32 %v2818, %v2884
        %v2886 = vpop.f32.mrb[0].mxu0
        %2887 = vdwg.mxu0
        %v2888 = vxor.u32 %v2882, 2147483648
        %v2889 = vxor.u32 %v2885, 2147483648
        %v2890 = vmul.f32 %v2888, 1.442695
        %v2891 = vpow.pop %v2890
        %v2892 = vmul.f32 %v2889, 1.442695
        %v2893 = vpow.pop %v2892
        %v2894 = vadd.f32 %v2891, 1.0
        %v2895 = vadd.f32 %v2893, 1.0
        %v2896 = vrcp.pop %v2894
        %v2897 = vmul.f32 1.0, %v2896
        %v2898 = vrcp.pop %v2895
        %v2899 = vmul.f32 1.0, %v2898
        %2902 = vrot.lane.b32.xlu0 %v2897, 64
        %v2903 = vpop.permute.xlu0 %2902
        %2904 = vrot.lane.b32.xlu0 %v2899, 64
        %v2905 = vpop.permute.xlu0 %2904
        %v2908 = vmul.f32 %v2882, %v2903
        %v2909 = vmul.f32 %v2885, %v2905
        %2910 = vst.msk [vmem:[#allocation3] sm:$0xff] %vm1572, 0.0
        %2911 = vst.msk [vmem:[#allocation3 + $0x8] sm:$0xff] %vm1572, 0.0
        %vm2912 = vcmask 520192
        %2913 = vst.msk [vmem:[#allocation3 + $0x10] sm:$0x1f] %vm2912, 0.0
        %2914 = vst.msk [vmem:[#allocation3 + $0x3] sm:$0xff] %vm1572, %v2908
        %2915 = vst.msk [vmem:[#allocation3 + $0xb] sm:$0x7f] %vm1576, %v2909
        %v2916 = vld [vmem:[%s1505] sm:$0x7f]
        %v2917 = vld [vmem:[#allocation3] sm:$0xff]
        %v2918 = vld [vmem:[#allocation3 + $0x8] sm:$0x7f]
        %v2919 = vlaneseq
        %v2920 = vshrl.u32 %v2919, 7
        %v2921 = vsub.s32 0, %v2920
        %v2922 = vrot.slane %v2916, %v2921
        %v2923 = vmul.f32 %v2917, %v2922
        %v2924 = vmul.f32 %v2918, %v2922
        %v2925 = vadd.f32 %v2923, 0.0
        %v2926 = vadd.f32 %v2924, 0.0
        %v2927 = vld [vmem:[#allocation3 + $0x1] sm:$0xff]
        %v2928 = vld [vmem:[#allocation3 + $0x9] sm:$0x7f]
        %v2929 = vlaneseq
        %v2930 = vshrl.u32 %v2929, 7
        %v2931 = vsub.s32 1, %v2930
        %v2932 = vrot.slane %v2916, %v2931
        %v2933 = vmul.f32 %v2927, %v2932
        %v2934 = vmul.f32 %v2928, %v2932
        %v2935 = vadd.f32 %v2925, %v2933
        %v2936 = vadd.f32 %v2926, %v2934
        %v2937 = vld [vmem:[#allocation3 + $0x2] sm:$0xff]
        %v2938 = vld [vmem:[#allocation3 + $0xa] sm:$0x7f]
        %v2939 = vlaneseq
        %v2940 = vshrl.u32 %v2939, 7
        %v2941 = vsub.s32 2, %v2940
        %v2942 = vrot.slane %v2916, %v2941
        %v2943 = vmul.f32 %v2937, %v2942
        %v2944 = vmul.f32 %v2938, %v2942
        %v2945 = vadd.f32 %v2935, %v2943
        %v2946 = vadd.f32 %v2936, %v2944
        %v2947 = vld [vmem:[#allocation3 + $0x3] sm:$0xff]
        %v2948 = vld [vmem:[#allocation3 + $0xb] sm:$0x7f]
        %v2949 = vlaneseq
        %v2950 = vshrl.u32 %v2949, 7
        %v2951 = vsub.s32 3, %v2950
        %v2952 = vrot.slane %v2916, %v2951
        %v2953 = vmul.f32 %v2947, %v2952
        %v2954 = vmul.f32 %v2948, %v2952
        %v2955 = vadd.f32 %v2945, %v2953
        %v2956 = vadd.f32 %v2946, %v2954
        %v2957 = vld [vmem:[#allocation3 + $0x4] sm:$0xff]
        %v2958 = vld [vmem:[#allocation3 + $0xc] sm:$0x7f]
        %v2959 = vlaneseq
        %v2960 = vshrl.u32 %v2959, 7
        %v2961 = vsub.s32 4, %v2960
        %v2962 = vrot.slane %v2916, %v2961
        %v2963 = vmul.f32 %v2957, %v2962
        %v2964 = vmul.f32 %v2958, %v2962
        %v2965 = vadd.f32 %v2955, %v2963
        %v2966 = vadd.f32 %v2956, %v2964
        %v2967 = vld [vmem:[#allocation3 + $0x5] sm:$0xff]
        %v2968 = vld [vmem:[#allocation3 + $0xd] sm:$0x7f]
        %v2969 = vlaneseq
        %v2970 = vshrl.u32 %v2969, 7
        %v2971 = vsub.s32 5, %v2970
        %v2972 = vrot.slane %v2916, %v2971
        %v2973 = vmul.f32 %v2967, %v2972
        %v2974 = vmul.f32 %v2968, %v2972
        %v2975 = vadd.f32 %v2965, %v2973
        %v2976 = vadd.f32 %v2966, %v2974
        %v2977 = vld [vmem:[#allocation3 + $0x6] sm:$0xff]
        %v2978 = vld [vmem:[#allocation3 + $0xe] sm:$0x7f]
        %v2979 = vlaneseq
        %v2980 = vshrl.u32 %v2979, 7
        %v2981 = vsub.s32 6, %v2980
        %v2982 = vrot.slane %v2916, %v2981
        %v2983 = vmul.f32 %v2977, %v2982
        %v2984 = vmul.f32 %v2978, %v2982
        %v2985 = vadd.f32 %v2975, %v2983
        %v2986 = vadd.f32 %v2976, %v2984
        %v2987 = vld [vmem:[%s1508] sm:$0x1]
        %v2989 = vlaneseq
        %v2990 = vshrl.u32 %v2989, 7
        %v2991 = vsub.s32 0, %v2990
        %v2992 = vrot.slane %v2987, %v2991
        %v2994 = vadd.f32 %v2985, %v2992
        %v2995 = vadd.f32 %v2986, %v2992
        %v2996 = vld [vmem:[%s1511] sm:$0x1]
        %v2997 = vld [vmem:[%s1514] sm:$0x1]
        %v2998 = vsel %vm1572, %v2994, 0.0
        %2999 = vadd.xlane.f32.xlu0 %v2998
        %v3000 = vpop.xlane.xlu0 %2999
        %v3001 = vsel %vm1576, %v2995, 0.0
        %3002 = vadd.xlane.f32.xlu0 %v3001
        %v3003 = vpop.xlane.xlu0 %3002
        %v3004 = vmul.f32 %v3000, %v1580
        %v3005 = vmul.f32 %v3003, %v1580
        %v3006 = vsub.f32 %v2994, %v3004
        %v3007 = vsub.f32 %v2995, %v3005
        %v3008 = vmul.f32 %v3006, %v3006
        %v3009 = vmul.f32 %v3007, %v3007
        %v3010 = vsel %vm1572, %v3008, 0.0
        %3011 = vadd.xlane.f32.xlu0 %v3010
        %v3012 = vpop.xlane.xlu0 %3011
        %v3013 = vsel %vm1576, %v3009, 0.0
        %3014 = vadd.xlane.f32.xlu0 %v3013
        %v3015 = vpop.xlane.xlu0 %3014
        %v3016 = vmul.f32 %v3012, %v1580
        %v3017 = vmul.f32 %v3015, %v1580
        %v3018 = vadd.f32 %v3016, 1e-05
        %v3019 = vadd.f32 %v3017, 1e-05
        %v3020 = vrsqrt.pop %v3018
        %v3021 = vrsqrt.pop %v3019
        %v3022 = vmul.f32 %v3006, %v3020
        %v3023 = vmul.f32 %v3007, %v3021
        %v3025 = vlaneseq
        %v3026 = vshrl.u32 %v3025, 7
        %v3027 = vsub.s32 0, %v3026
        %v3028 = vrot.slane %v2996, %v3027
        %v3030 = vmul.f32 %v3022, %v3028
        %v3031 = vmul.f32 %v3023, %v3028
        %v3033 = vlaneseq
        %v3034 = vshrl.u32 %v3033, 7
        %v3035 = vsub.s32 0, %v3034
        %v3036 = vrot.slane %v2997, %v3035
        %v3038 = vadd.f32 %v3030, %v3036
        %v3039 = vadd.f32 %v3031, %v3036
        %v3040 = vxor.u32 %v3038, 2147483648
        %v3041 = vxor.u32 %v3039, 2147483648
        %v3042 = vmul.f32 %v3040, 1.442695
        %v3043 = vpow.pop %v3042
        %v3044 = vmul.f32 %v3041, 1.442695
        %v3045 = vpow.pop %v3044
        %v3046 = vadd.f32 %v3043, 1.0
        %v3047 = vadd.f32 %v3045, 1.0
        %v3048 = vrcp.pop %v3046
        %v3049 = vmul.f32 1.0, %v3048
        %v3050 = vrcp.pop %v3047
        %v3051 = vmul.f32 1.0, %v3050
        %v3052 = vmul.f32 %v3038, %v3049
        %v3053 = vmul.f32 %v3039, %v3051
        %v3054 = vld [vmem:[%s1519] sm:$0xf]
        %v3055 = vld [vmem:[%s1519 + $0x4] sm:$0xf]
        %v3056 = vld [vmem:[%s1519 + $0x8] sm:$0xf]
        %v3057 = vld [vmem:[%s1519 + $0xc] sm:$0xf]
        %v3058 = vld [vmem:[%s1519 + $0x10] sm:$0xf]
        %v3059 = vld [vmem:[%s1519 + $0x14] sm:$0xf]
        %v3060 = vld [vmem:[%s1519 + $0x18] sm:$0xf]
        %v3061 = vld [vmem:[%s1519 + $0x1c] sm:$0xf]
        %v3062 = vld [vmem:[%s1522] sm:$0x1]
        %v3063 = vpack.c.bf16 %v3053, %v3052
        %v3065 = vlaneseq
        %v3066 = vshrl.u32 %v3065, 7
        %v3067 = vsub.s32 0, %v3066
        %v3068 = vrot.slane %v3062, %v3067
        %v3078 = vunpack.c.l.b16 %v3054
        %v3079 = vunpack.c.l.b16 %v3055
        %v3080 = vunpack.c.l.b16 %v3056
        %v3081 = vunpack.c.l.b16 %v3057
        %v3082 = vunpack.c.l.b16 %v3058
        %v3083 = vunpack.c.l.b16 %v3059
        %v3084 = vunpack.c.l.b16 %v3060
        %v3085 = vunpack.c.l.b16 %v3061
        %v3086 = vpack.c.b16 %v3079, %v3078
        %v3087 = vpack.c.b16 %v3081, %v3080
        %v3088 = vpack.c.b16 %v3083, %v3082
        %v3089 = vpack.c.b16 %v3085, %v3084
        %v3095 = vsel %vm1572, %v3063, 0
        %3097 = vmatprep.subr.bf16.mxu0 0
        %3098 = vmatpush1.bf16.msra.mxu0 %v3086
        %3099 = vmatprep.subr.bf16.mxu0 0
        %3100 = vmatpush1.bf16.msra.mxu0 %v3087
        %3101 = vmatprep.subr.bf16.mxu0 0
        %3102 = vmatpush1.bf16.msra.mxu0 %v3088
        %3103 = vmatprep.subr.bf16.mxu0 0
        %3104 = vmatpush1.bf16.msra.mxu0 %v3089
        %3105 = vmatprep.subr.bf16.mxu0 0
        %3106 = vmatpush1.bf16.msra.mxu0 0
        %3107 = vmatprep.subr.bf16.mxu0 0
        %3108 = vmatpush1.bf16.msra.mxu0 0
        %3109 = vmatprep.subr.bf16.mxu0 0
        %3110 = vmatpush1.bf16.msra.mxu0 0
        %3111 = vmatprep.subr.bf16.mxu0 0
        %3112 = vmatpush1.bf16.msra.mxu0 0
        %3113 = vmatprep.subr.bf16.mxu0 0
        %3114 = vmatpush1.bf16.msra.mxu0 0
        %3115 = vmatprep.subr.bf16.mxu0 0
        %3116 = vmatpush1.bf16.msra.mxu0 0
        %3117 = vmatprep.subr.bf16.mxu0 0
        %3118 = vmatpush1.bf16.msra.mxu0 0
        %3119 = vmatprep.subr.bf16.mxu0 0
        %3120 = vmatpush1.bf16.msra.mxu0 0
        %3121 = vmatprep.subr.bf16.mxu0 0
        %3122 = vmatpush1.bf16.msra.mxu0 0
        %3123 = vmatprep.subr.bf16.mxu0 0
        %3124 = vmatpush1.bf16.msra.mxu0 0
        %3125 = vmatprep.subr.bf16.mxu0 0
        %3126 = vmatpush1.bf16.msra.mxu0 0
        %3127 = vmatprep.subr.bf16.mxu0 0
        %3128 = vmatpush1.bf16.msra.mxu0 0
        %3129 = vmatprep.mubr.bf16.mxu0 0
        %3130 = vmatmul.mubr.bf16.gmra.mrb[0].mxu0 %v3095
        %v3131 = vpop.f32.mrb[0].mxu0
        %v3132 = vadd.f32 %v3068, %v3131
        %v3133 = vpop.f32.mrb[0].mxu0
        %v3134 = vpop.f32.mrb[0].mxu0
        %v3135 = vadd.f32 %v3068, %v3134
        %v3136 = vpop.f32.mrb[0].mxu0
        %3137 = vdwg.mxu0
        %v3138 = vadd.f32 %v2758, %v3132
        %v3139 = vadd.f32 %v2759, %v3135
        %v3140 = vld [vmem:[%s1525] sm:$0x1]
        %v3141 = vld [vmem:[%s1528] sm:$0x1]
        %v3142 = vsel %vm1572, %v3138, 0.0
        %3143 = vadd.xlane.f32.xlu0 %v3142
        %v3144 = vpop.xlane.xlu0 %3143
        %v3145 = vsel %vm1576, %v3139, 0.0
        %3146 = vadd.xlane.f32.xlu0 %v3145
        %v3147 = vpop.xlane.xlu0 %3146
        %v3148 = vmul.f32 %v3144, %v1580
        %v3149 = vmul.f32 %v3147, %v1580
        %v3150 = vsub.f32 %v3138, %v3148
        %v3151 = vsub.f32 %v3139, %v3149
        %v3152 = vmul.f32 %v3150, %v3150
        %v3153 = vmul.f32 %v3151, %v3151
        %v3154 = vsel %vm1572, %v3152, 0.0
        %3155 = vadd.xlane.f32.xlu0 %v3154
        %v3156 = vpop.xlane.xlu0 %3155
        %v3157 = vsel %vm1576, %v3153, 0.0
        %3158 = vadd.xlane.f32.xlu0 %v3157
        %v3159 = vpop.xlane.xlu0 %3158
        %v3160 = vmul.f32 %v3156, %v1580
        %v3161 = vmul.f32 %v3159, %v1580
        %v3162 = vadd.f32 %v3160, 1e-05
        %v3163 = vadd.f32 %v3161, 1e-05
        %v3164 = vrsqrt.pop %v3162
        %v3165 = vrsqrt.pop %v3163
        %v3166 = vmul.f32 %v3150, %v3164
        %v3167 = vmul.f32 %v3151, %v3165
        %v3169 = vlaneseq
        %v3170 = vshrl.u32 %v3169, 7
        %v3171 = vsub.s32 0, %v3170
        %v3172 = vrot.slane %v3140, %v3171
        %v3174 = vmul.f32 %v3166, %v3172
        %v3175 = vmul.f32 %v3167, %v3172
        %v3177 = vlaneseq
        %v3178 = vshrl.u32 %v3177, 7
        %v3179 = vsub.s32 0, %v3178
        %v3180 = vrot.slane %v3141, %v3179
        %v3182 = vadd.f32 %v3174, %v3180
        %v3183 = vadd.f32 %v3175, %v3180
        %v3184 = vld [vmem:[%s1533] sm:$0xf]
        %v3185 = vld [vmem:[%s1533 + $0x4] sm:$0xf]
        %v3186 = vld [vmem:[%s1533 + $0x8] sm:$0xf]
        %v3187 = vld [vmem:[%s1533 + $0xc] sm:$0xf]
        %v3188 = vld [vmem:[%s1533 + $0x10] sm:$0xf]
        %v3189 = vld [vmem:[%s1533 + $0x14] sm:$0xf]
        %v3190 = vld [vmem:[%s1533 + $0x18] sm:$0xf]
        %v3191 = vld [vmem:[%s1533 + $0x1c] sm:$0xf]
        %v3192 = vld [vmem:[%s1536] sm:$0x1]
        %v3193 = vpack.c.bf16 %v3183, %v3182
        %v3195 = vlaneseq
        %v3196 = vshrl.u32 %v3195, 7
        %v3197 = vsub.s32 0, %v3196
        %v3198 = vrot.slane %v3192, %v3197
        %v3208 = vunpack.c.l.b16 %v3184
        %v3209 = vunpack.c.l.b16 %v3185
        %v3210 = vunpack.c.l.b16 %v3186
        %v3211 = vunpack.c.l.b16 %v3187
        %v3212 = vunpack.c.l.b16 %v3188
        %v3213 = vunpack.c.l.b16 %v3189
        %v3214 = vunpack.c.l.b16 %v3190
        %v3215 = vunpack.c.l.b16 %v3191
        %v3216 = vpack.c.b16 %v3209, %v3208
        %v3217 = vpack.c.b16 %v3211, %v3210
        %v3218 = vpack.c.b16 %v3213, %v3212
        %v3219 = vpack.c.b16 %v3215, %v3214
        %v3225 = vsel %vm1572, %v3193, 0
        %3227 = vmatprep.subr.bf16.mxu0 0
        %3228 = vmatpush1.bf16.msra.mxu0 %v3216
        %3229 = vmatprep.subr.bf16.mxu0 0
        %3230 = vmatpush1.bf16.msra.mxu0 %v3217
        %3231 = vmatprep.subr.bf16.mxu0 0
        %3232 = vmatpush1.bf16.msra.mxu0 %v3218
        %3233 = vmatprep.subr.bf16.mxu0 0
        %3234 = vmatpush1.bf16.msra.mxu0 %v3219
        %3235 = vmatprep.subr.bf16.mxu0 0
        %3236 = vmatpush1.bf16.msra.mxu0 0
        %3237 = vmatprep.subr.bf16.mxu0 0
        %3238 = vmatpush1.bf16.msra.mxu0 0
        %3239 = vmatprep.subr.bf16.mxu0 0
        %3240 = vmatpush1.bf16.msra.mxu0 0
        %3241 = vmatprep.subr.bf16.mxu0 0
        %3242 = vmatpush1.bf16.msra.mxu0 0
        %3243 = vmatprep.subr.bf16.mxu0 0
        %3244 = vmatpush1.bf16.msra.mxu0 0
        %3245 = vmatprep.subr.bf16.mxu0 0
        %3246 = vmatpush1.bf16.msra.mxu0 0
        %3247 = vmatprep.subr.bf16.mxu0 0
        %3248 = vmatpush1.bf16.msra.mxu0 0
        %3249 = vmatprep.subr.bf16.mxu0 0
        %3250 = vmatpush1.bf16.msra.mxu0 0
        %3251 = vmatprep.subr.bf16.mxu0 0
        %3252 = vmatpush1.bf16.msra.mxu0 0
        %3253 = vmatprep.subr.bf16.mxu0 0
        %3254 = vmatpush1.bf16.msra.mxu0 0
        %3255 = vmatprep.subr.bf16.mxu0 0
        %3256 = vmatpush1.bf16.msra.mxu0 0
        %3257 = vmatprep.subr.bf16.mxu0 0
        %3258 = vmatpush1.bf16.msra.mxu0 0
        %3259 = vmatprep.mubr.bf16.mxu0 0
        %3260 = vmatmul.mubr.bf16.gmra.mrb[0].mxu0 %v3225
        %v3261 = vpop.f32.mrb[0].mxu0
        %v3262 = vadd.f32 %v3198, %v3261
        %v3263 = vpop.f32.mrb[0].mxu0
        %v3264 = vpop.f32.mrb[0].mxu0
        %v3265 = vadd.f32 %v3198, %v3264
        %v3266 = vpop.f32.mrb[0].mxu0
        %3267 = vdwg.mxu0
        %v3268 = vxor.u32 %v3262, 2147483648
        %v3269 = vxor.u32 %v3265, 2147483648
        %v3270 = vmul.f32 %v3268, 1.442695
        %v3271 = vpow.pop %v3270
        %v3272 = vmul.f32 %v3269, 1.442695
        %v3273 = vpow.pop %v3272
        %v3274 = vadd.f32 %v3271, 1.0
        %v3275 = vadd.f32 %v3273, 1.0
        %v3276 = vrcp.pop %v3274
        %v3277 = vmul.f32 1.0, %v3276
        %v3278 = vrcp.pop %v3275
        %v3279 = vmul.f32 1.0, %v3278
        %v3280 = vmul.f32 %v3262, %v3277
        %v3281 = vmul.f32 %v3265, %v3279
        %v3282 = vld [vmem:[%s1541] sm:$0xf]
        %v3283 = vld [vmem:[%s1541 + $0x4] sm:$0xf]
        %v3284 = vld [vmem:[%s1541 + $0x8] sm:$0xf]
        %v3285 = vld [vmem:[%s1541 + $0xc] sm:$0xf]
        %v3286 = vld [vmem:[%s1541 + $0x10] sm:$0xf]
        %v3287 = vld [vmem:[%s1541 + $0x14] sm:$0xf]
        %v3288 = vld [vmem:[%s1541 + $0x18] sm:$0xf]
        %v3289 = vld [vmem:[%s1541 + $0x1c] sm:$0xf]
        %v3290 = vld [vmem:[%s1541 + $0x20] sm:$0xf]
        %v3291 = vld [vmem:[%s1541 + $0x24] sm:$0xf]
        %v3292 = vld [vmem:[%s1541 + $0x28] sm:$0xf]
        %v3293 = vld [vmem:[%s1541 + $0x2c] sm:$0xf]
        %v3294 = vld [vmem:[%s1541 + $0x30] sm:$0xf]
        %v3295 = vld [vmem:[%s1541 + $0x34] sm:$0xf]
        %v3296 = vld [vmem:[%s1541 + $0x38] sm:$0xf]
        %v3297 = vld [vmem:[%s1541 + $0x3c] sm:$0xf]
        %v3298 = vld [vmem:[%s1544] sm:$0x1]
        %v3299 = vpack.c.bf16 %v3281, %v3280
        %v3301 = vlaneseq
        %v3302 = vshrl.u32 %v3301, 7
        %v3303 = vsub.s32 0, %v3302
        %v3304 = vrot.slane %v3298, %v3303
        %v3322 = vunpack.c.l.b16 %v3282
        %v3323 = vunpack.c.l.b16 %v3283
        %v3324 = vunpack.c.l.b16 %v3284
        %v3325 = vunpack.c.l.b16 %v3285
        %v3326 = vunpack.c.l.b16 %v3286
        %v3327 = vunpack.c.l.b16 %v3287
        %v3328 = vunpack.c.l.b16 %v3288
        %v3329 = vunpack.c.l.b16 %v3289
        %v3330 = vunpack.c.l.b16 %v3290
        %v3331 = vunpack.c.l.b16 %v3291
        %v3332 = vunpack.c.l.b16 %v3292
        %v3333 = vunpack.c.l.b16 %v3293
        %v3334 = vunpack.c.l.b16 %v3294
        %v3335 = vunpack.c.l.b16 %v3295
        %v3336 = vunpack.c.l.b16 %v3296
        %v3337 = vunpack.c.l.b16 %v3297
        %v3338 = vpack.c.b16 %v3323, %v3322
        %v3339 = vpack.c.b16 %v3325, %v3324
        %v3340 = vpack.c.b16 %v3327, %v3326
        %v3341 = vpack.c.b16 %v3329, %v3328
        %v3342 = vpack.c.b16 %v3331, %v3330
        %v3343 = vpack.c.b16 %v3333, %v3332
        %v3344 = vpack.c.b16 %v3335, %v3334
        %v3345 = vpack.c.b16 %v3337, %v3336
        %3354 = vmatprep.subr.bf16.mxu0 0
        %3355 = vmatpush1.bf16.msra.mxu0 %v3338
        %3356 = vmatprep.subr.bf16.mxu0 0
        %3357 = vmatpush1.bf16.msra.mxu0 %v3339
        %3358 = vmatprep.subr.bf16.mxu0 0
        %3359 = vmatpush1.bf16.msra.mxu0 %v3340
        %3360 = vmatprep.subr.bf16.mxu0 0
        %3361 = vmatpush1.bf16.msra.mxu0 %v3341
        %3362 = vmatprep.subr.bf16.mxu0 0
        %3363 = vmatpush1.bf16.msra.mxu0 %v3342
        %3364 = vmatprep.subr.bf16.mxu0 0
        %3365 = vmatpush1.bf16.msra.mxu0 %v3343
        %3366 = vmatprep.subr.bf16.mxu0 0
        %3367 = vmatpush1.bf16.msra.mxu0 %v3344
        %3368 = vmatprep.subr.bf16.mxu0 0
        %3369 = vmatpush1.bf16.msra.mxu0 %v3345
        %3370 = vmatprep.subr.bf16.mxu0 0
        %3371 = vmatpush1.bf16.msra.mxu0 0
        %3372 = vmatprep.subr.bf16.mxu0 0
        %3373 = vmatpush1.bf16.msra.mxu0 0
        %3374 = vmatprep.subr.bf16.mxu0 0
        %3375 = vmatpush1.bf16.msra.mxu0 0
        %3376 = vmatprep.subr.bf16.mxu0 0
        %3377 = vmatpush1.bf16.msra.mxu0 0
        %3378 = vmatprep.subr.bf16.mxu0 0
        %3379 = vmatpush1.bf16.msra.mxu0 0
        %3380 = vmatprep.subr.bf16.mxu0 0
        %3381 = vmatpush1.bf16.msra.mxu0 0
        %3382 = vmatprep.subr.bf16.mxu0 0
        %3383 = vmatpush1.bf16.msra.mxu0 0
        %3384 = vmatprep.subr.bf16.mxu0 0
        %3385 = vmatpush1.bf16.msra.mxu0 0
        %3386 = vmatprep.mubr.bf16.mxu0 0
        %3387 = vmatmul.mubr.bf16.gmra.mrb[0].mxu0 %v3299
        %v3388 = vpop.f32.mrb[0].mxu0
        %v3389 = vadd.f32 %v3304, %v3388
        %v3390 = vpop.f32.mrb[0].mxu0
        %v3391 = vpop.f32.mrb[0].mxu0
        %v3392 = vadd.f32 %v3304, %v3391
        %v3393 = vpop.f32.mrb[0].mxu0
        %3394 = vdwg.mxu0
        %v3395 = vmul.f32 %v3389, 0.5
        %v3396 = vmul.f32 %v3392, 0.5
        %v3397 = vadd.f32 %v3138, %v3395
        %v3398 = vadd.f32 %v3139, %v3396
        %v3399 = vld [vmem:[%s1547] sm:$0x1]
        %v3400 = vld [vmem:[%s1550] sm:$0x1]
        %v3401 = vsel %vm1572, %v3397, 0.0
        %3402 = vadd.xlane.f32.xlu0 %v3401
        %v3403 = vpop.xlane.xlu0 %3402
        %v3404 = vsel %vm1576, %v3398, 0.0
        %3405 = vadd.xlane.f32.xlu0 %v3404
        %v3406 = vpop.xlane.xlu0 %3405
        %v3407 = vmul.f32 %v3403, %v1580
        %v3408 = vmul.f32 %v3406, %v1580
        %v3409 = vsub.f32 %v3397, %v3407
        %v3410 = vsub.f32 %v3398, %v3408
        %v3411 = vmul.f32 %v3409, %v3409
        %v3412 = vmul.f32 %v3410, %v3410
        %v3413 = vsel %vm1572, %v3411, 0.0
        %3414 = vadd.xlane.f32.xlu0 %v3413
        %v3415 = vpop.xlane.xlu0 %3414
        %v3416 = vsel %vm1576, %v3412, 0.0
        %3417 = vadd.xlane.f32.xlu0 %v3416
        %v3418 = vpop.xlane.xlu0 %3417
        %v3419 = vmul.f32 %v3415, %v1580
        %v3420 = vmul.f32 %v3418, %v1580
        %v3421 = vadd.f32 %v3419, 1e-05
        %v3422 = vadd.f32 %v3420, 1e-05
        %v3423 = vrsqrt.pop %v3421
        %v3424 = vrsqrt.pop %v3422
        %v3425 = vmul.f32 %v3409, %v3423
        %v3426 = vmul.f32 %v3410, %v3424
        %v3428 = vlaneseq
        %v3429 = vshrl.u32 %v3428, 7
        %v3430 = vsub.s32 0, %v3429
        %v3431 = vrot.slane %v3399, %v3430
        %v3433 = vmul.f32 %v3425, %v3431
        %v3434 = vmul.f32 %v3426, %v3431
        %v3436 = vlaneseq
        %v3437 = vshrl.u32 %v3436, 7
        %v3438 = vsub.s32 0, %v3437
        %v3439 = vrot.slane %v3400, %v3438
        %v3441 = vadd.f32 %v3433, %v3439
        %v3442 = vadd.f32 %v3434, %v3439
        %3443 = vst.msk [vmem:[#allocation2] sm:$0xff] %vm1572, %v3441
        %3444 = vst.msk [vmem:[#allocation2 + $0x8] sm:$0x7f] %vm1576, %v3442
        %p3445 = scmp.eq.s32.totalorder %s86, 1
        // Predicated region
        $region165: #{model_forward.3} parent=155 // pred_check
          %p3446 = pneg %p3445
        $region166: #{model_forward.3} parent=155 // pred_check_branch
          %3448 = sbr.rel (%p3446) target = $region168
        $region167: #{model_forward.3} parent=155 // pred_region
          %v3449 = vpack.c.bf16 %v3442, %v3441
          %v3450 = vld [vmem:[%s65] sm:$0xf]
          %v3451 = vld [vmem:[%s65 + $0x4] sm:$0xf]
          %v3452 = vld [vmem:[%s65 + $0x8] sm:$0xf]
          %v3453 = vld [vmem:[%s65 + $0xc] sm:$0xf]
          %v3454 = vld [vmem:[%s65 + $0x10] sm:$0xf]
          %v3455 = vld [vmem:[%s65 + $0x14] sm:$0xf]
          %v3456 = vld [vmem:[%s65 + $0x18] sm:$0xf]
          %v3457 = vld [vmem:[%s65 + $0x1c] sm:$0xf]
          %v3458 = vld [vmem:[#allocation4] sm:$0x1]
          %v3460 = vlaneseq
          %v3461 = vshrl.u32 %v3460, 7
          %v3462 = vsub.s32 0, %v3461
          %v3463 = vrot.slane %v3458, %v3462
          %v3473 = vunpack.c.l.b16 %v3450
          %v3474 = vunpack.c.l.b16 %v3451
          %v3475 = vunpack.c.l.b16 %v3452
          %v3476 = vunpack.c.l.b16 %v3453
          %v3477 = vunpack.c.l.b16 %v3454
          %v3478 = vunpack.c.l.b16 %v3455
          %v3479 = vunpack.c.l.b16 %v3456
          %v3480 = vunpack.c.l.b16 %v3457
          %v3481 = vpack.c.b16 %v3474, %v3473
          %v3482 = vpack.c.b16 %v3476, %v3475
          %v3483 = vpack.c.b16 %v3478, %v3477
          %v3484 = vpack.c.b16 %v3480, %v3479
          %v3490 = vsel %vm1572, %v3449, 0
          %3492 = vmatprep.subr.bf16.mxu0 0
          %3493 = vmatpush1.bf16.msra.mxu0 %v3481
          %3494 = vmatprep.subr.bf16.mxu0 0
          %3495 = vmatpush1.bf16.msra.mxu0 %v3482
          %3496 = vmatprep.subr.bf16.mxu0 0
          %3497 = vmatpush1.bf16.msra.mxu0 %v3483
          %3498 = vmatprep.subr.bf16.mxu0 0
          %3499 = vmatpush1.bf16.msra.mxu0 %v3484
          %3500 = vmatprep.subr.bf16.mxu0 0
          %3501 = vmatpush1.bf16.msra.mxu0 0
          %3502 = vmatprep.subr.bf16.mxu0 0
          %3503 = vmatpush1.bf16.msra.mxu0 0
          %3504 = vmatprep.subr.bf16.mxu0 0
          %3505 = vmatpush1.bf16.msra.mxu0 0
          %3506 = vmatprep.subr.bf16.mxu0 0
          %3507 = vmatpush1.bf16.msra.mxu0 0
          %3508 = vmatprep.subr.bf16.mxu0 0
          %3509 = vmatpush1.bf16.msra.mxu0 0
          %3510 = vmatprep.subr.bf16.mxu0 0
          %3511 = vmatpush1.bf16.msra.mxu0 0
          %3512 = vmatprep.subr.bf16.mxu0 0
          %3513 = vmatpush1.bf16.msra.mxu0 0
          %3514 = vmatprep.subr.bf16.mxu0 0
          %3515 = vmatpush1.bf16.msra.mxu0 0
          %3516 = vmatprep.subr.bf16.mxu0 0
          %3517 = vmatpush1.bf16.msra.mxu0 0
          %3518 = vmatprep.subr.bf16.mxu0 0
          %3519 = vmatpush1.bf16.msra.mxu0 0
          %3520 = vmatprep.subr.bf16.mxu0 0
          %3521 = vmatpush1.bf16.msra.mxu0 0
          %3522 = vmatprep.subr.bf16.mxu0 0
          %3523 = vmatpush1.bf16.msra.mxu0 0
          %3524 = vmatprep.mubr.bf16.mxu0 0
          %3525 = vmatmul.mubr.bf16.gmra.mrb[0].mxu0 %v3490
          %v3526 = vpop.f32.mrb[0].mxu0
          %v3527 = vadd.f32 %v3463, %v3526
          %v3528 = vpop.f32.mrb[0].mxu0
          %v3529 = vpop.f32.mrb[0].mxu0
          %v3530 = vadd.f32 %v3463, %v3529
          %v3531 = vpop.f32.mrb[0].mxu0
          %3532 = vdwg.mxu0
          %vm3533 = vcmask 334848
          %v3534 = vsel %vm3533, %v3527, -inf
          %3535 = vmax.xlane.f32.xlu0 %v3534
          %v3536 = vpop.xlane.xlu0 %3535
          %vm3537 = vcmask 333824
          %v3538 = vsel %vm3537, %v3530, -inf
          %3539 = vmax.xlane.f32.xlu0 %v3538
          %v3540 = vpop.xlane.xlu0 %3539
          %v3541 = vsub.f32 %v3527, %v3536
          %v3542 = vsub.f32 %v3530, %v3540
          %v3543 = vmul.f32 %v3541, 1.442695
          %v3544 = vpow.pop %v3543
          %v3545 = vmul.f32 %v3542, 1.442695
          %v3546 = vpow.pop %v3545
          %v3547 = vsel %vm3533, %v3544, 0.0
          %3548 = vadd.xlane.f32.xlu0 %v3547
          %v3549 = vpop.xlane.xlu0 %3548
          %v3550 = vsel %vm3537, %v3546, 0.0
          %3551 = vadd.xlane.f32.xlu0 %v3550
          %v3552 = vpop.xlane.xlu0 %3551
          %v3553 = vlog2.pop %v3549
          %v3554 = vmul.f32 %v3553, 0.6931472
          %v3555 = vlog2.pop %v3552
          %v3556 = vmul.f32 %v3555, 0.6931472
          %v3557 = vsub.f32 %v3541, %v3554
          %v3558 = vsub.f32 %v3542, %v3556
          %3559 = vst.msk [vmem:[%s1555] sm:$0xff] %vm3533, %v3557
          %3560 = vst.msk [vmem:[%s1555 + $0x8] sm:$0x7f] %vm3537, %v3558
        $region168: #{model_forward.3} parent=155 // pred_fallthru
          _
        %p3561 = scmp.lt.s32.totalorder %s85, 1
        %s3562 = scalar_select %p3561, %s85, 1
        %s3563 = smul.addr %s3562, 2
        %s3564 = smul.addr %s3563, 8
        %s3565 = scalar_lea.vmem %s69, %s3564
        // Predicated region
        $region169: #{model_forward.3} parent=155 // pred_check
          %p3566 = pneg %p985
        $region170: #{model_forward.3} parent=155 // pred_check_branch
          %3568 = sbr.rel (%p3566) target = $region172
        $region171: #{model_forward.3} parent=155 // pred_region
          _
        $region172: #{model_forward.3} parent=155 // pred_fallthru
          _
      $region156: #{model_forward.3} parent=5 // pred_fallthru
        _
      %p3569 = scmp.le.s32.totalorder 2, %s76
      // Predicated region
      $region173: #{model_forward.3} parent=5 // pred_check
        %p3570 = pneg %p3569
      $region174: #{model_forward.3} parent=5 // pred_check_branch
        %3572 = sbr.rel (%p3570) target = $region176
      $region175: #{model_forward.3} parent=5 // pred_region
        %s3573 = ssub.s32 %s76, 2
        // Predicated region
        $region177: #{model_forward.3} parent=175 // pred_check
          %p3574 = pneg %p991
        $region178: #{model_forward.3} parent=175 // pred_check_branch
          %3576 = sbr.rel (%p3574) target = $region180
        $region179: #{model_forward.3} parent=175 // pred_region
          %p3577 = scmp.lt.s32.totalorder %s87, 1
          %s3578 = scalar_select %p3577, %s87, 1
          %s3579 = smul.addr %s3578, 2
          %s3580 = smul.addr %s3579, 8
          %s3581 = scalar_lea.vmem %s69, %s3580
        $region180: #{model_forward.3} parent=175 // pred_fallthru
          _
      $region176: #{model_forward.3} parent=5 // pred_fallthru
        _
    $region6: #{model_forward.3} parent=1 // loop_footer
      %s80 = sadd.s32 1, %s76
    $region7: #{model_forward.3} parent=1 // loop_footer_branch
      %75 = sbr.rel target = $region3
    $region8: #{model_forward.3} parent=1 // loop_exit
      _
    %3582 = vsyncpa [#allocation5], 1
    %s3583 = scalar_lea.sflag [#allocation5], 1
    %3584 = vsyncpa %s3583, 1

</llo_original>
